<compile_context>
chip_gen: v6e
topology: v6e:2x2x1
jax: 0.10.0
libtpu: 0.0.40
codegen_flags: <defaults>
</compile_context>

<pallas_src>
import functools

import jax
import jax.numpy as jnp
from jax import lax
from jax.experimental import pallas as pl
from jax.experimental.pallas import tpu as pltpu

_INV_SQRT2 = 0.7071067811865475


def _erf(x):
    """erf via Abramowitz & Stegun 7.1.26 (max abs err 1.5e-7).

    Built from exp / mul / add / div / select only, so it lowers cleanly in Mosaic
    and the transcendental lands on the EUP slot.
    """
    a1, a2, a3, a4, a5 = (0.254829592, -0.284496736, 1.421413741,
                          -1.453152027, 1.061405429)
    p = 0.3275911
    ax = jnp.abs(x)
    t = 1.0 / (1.0 + p * ax)
    poly = ((((a5 * t + a4) * t + a3) * t + a2) * t + a1) * t
    y = 1.0 - poly * jnp.exp(-(ax * ax))
    return jnp.where(x >= 0, y, -y)


def _block_kernel(x_ref, wdw_ref, bdw_ref, w1_ref, b1_ref, w2_ref, b2_ref,
                  out_ref, xpad_ref, *, eps):
    # One grid step = `nb` images, channels-last: (nb, H, W, C), C on the lane axis.
    nb, H, W, C = x_ref.shape
    KH, KW, _ = wdw_ref.shape                        # (5, 5, C)

    x = x_ref[...]                                   # residual + dwconv source, f32

    # ---- build the 2-pixel zero halo in a VMEM scratch (no padded copy from HBM) ----
    xpad_ref[...] = jnp.zeros(xpad_ref.shape, xpad_ref.dtype)
    xpad_ref[:, 2:2 + H, 2:2 + W, :] = x

    # ---- depthwise 5x5 conv (VPU), f32 ----
    # Outer loop over the W (sublane-axis) shifts so only 5 slices need a sublane
    # relayout; the inner H shifts are cheap vreg-row selections.
    wdw = wdw_ref[...]                               # (5, 5, C)
    acc = jnp.zeros((nb, H, W, C), jnp.float32)
    for kw in range(KW):
        slab = xpad_ref[:, :, kw:kw + W, :]          # (nb, H+4, W, C)
        for kh in range(KH):
            acc = acc + slab[:, kh:kh + H, :, :] * wdw[kh, kw]
    acc = acc + bdw_ref[...]                         # (1, C) broadcast

    # ---- LayerNorm over channels: one-pass stats; affine folded into w1'/b1' ----
    mean = jnp.mean(acc, axis=-1, keepdims=True)
    ex2 = jnp.mean(acc * acc, axis=-1, keepdims=True)
    var = ex2 - mean * mean
    y = (acc - mean) * lax.rsqrt(var + eps)

    # ---- pointwise MLP on the MXU: bf16 operands, f32 accumulation ----
    y2 = y.reshape(nb * H * W, C).astype(jnp.bfloat16)
    h1 = jnp.dot(y2, w1_ref[...], preferred_element_type=jnp.float32) + b1_ref[...]
    # exact GELU; the 0.5 factor and the layer-scale gamma are folded into w2'/b2'
    g = h1 * (1.0 + _erf(h1 * _INV_SQRT2))
    h2 = jnp.dot(g.astype(jnp.bfloat16), w2_ref[...],
                 preferred_element_type=jnp.float32) + b2_ref[...]

    # ---- residual add (drop_path = 0.0 -> identity) ----
    out_ref[...] = (x + h2.reshape(nb, H, W, C)).astype(out_ref.dtype)


def convnext_block_forward_nhwc(x_nhwc, params, *, eps=1e-6, images_per_step=1):
    """Channels-last entry point: (B, H, W, C) -> (B, H, W, C). No transposes."""
    wdw, bdw, lnw, lnb, w1, b1, w2, b2, gamma = params
    B, H, W, C = x_nhwc.shape
    nb = images_per_step
    assert B % nb == 0, "images_per_step must divide the batch"

    # Fold LN affine into pwconv1 and (0.5 * layer-scale) into pwconv2 — in f32,
    # then cast the matmul weights to bf16 (halves weight HBM traffic; f32 acc).
    w1f = lnw.reshape(C, 1) * w1                   # row-scale by LN weight
    b1f = b1 + lnb @ w1                            # (1, 4C)
    w2f = 0.5 * w2 * gamma                         # column-scale by 0.5*gamma
    b2f = b2 * gamma                               # (1, C)
    w1_b = w1f.astype(jnp.bfloat16)
    w2_b = w2f.astype(jnp.bfloat16)

    kernel = functools.partial(_block_kernel, eps=eps)

    def const_spec(shape):
        n = len(shape)
        # Constant index_map -> weights stay VMEM-resident across grid steps.
        # TODO(synk): pipeline_mode=pl.Buffered(1) would drop the redundant second
        # buffer for these constants once VMEM headroom matters (larger tiles / v7x).
        return pl.BlockSpec(shape, lambda b: (0,) * n)

    img_spec = pl.BlockSpec((nb, H, W, C), lambda b: (b, 0, 0, 0))

    return pl.pallas_call(
        kernel,
        out_shape=jax.ShapeDtypeStruct((B, H, W, C), x_nhwc.dtype),
        grid=(B // nb,),
        in_specs=[
            img_spec,                   # x: residual + dwconv source
            const_spec(wdw.shape),      # depthwise weights  (5, 5, C)
            const_spec(bdw.shape),      # depthwise bias     (1, C)
            const_spec(w1_b.shape),     # folded pwconv1 w   (C, 4C) bf16
            const_spec(b1f.shape),      # folded pwconv1 b   (1, 4C)
            const_spec(w2_b.shape),     # folded pwconv2 w   (4C, C) bf16
            const_spec(b2f.shape),      # folded pwconv2 b   (1, C)
        ],
        out_specs=pl.BlockSpec((nb, H, W, C), lambda b: (b, 0, 0, 0)),
        scratch_shapes=[pltpu.VMEM((nb, H + 4, W + 4, C), jnp.float32)],
        compiler_params=pltpu.CompilerParams(
            dimension_semantics=("parallel",),   # shard batch across TCs (v7x)
            vmem_limit_bytes=32 << 20,           # re-derive if nb / H*W grow (v7x: 64 MiB phys)
        ),
    )(x_nhwc, wdw, bdw, w1_b, b1f, w2_b, b2f)


def convnext_block_forward(x_nchw, params, *, eps=1e-6, images_per_step=1):
    """Module-parity entry: (B, C, H, W) float32 -> (B, C, H, W).

    Prefer convnext_block_forward_nhwc inside an NHWC pipeline to avoid the two
    full-tensor HBM transposes below (they can exceed the kernel's own traffic).
    """
    x_nhwc = jnp.transpose(x_nchw, (0, 2, 3, 1))
    out_nhwc = convnext_block_forward_nhwc(x_nhwc, params, eps=eps,
                                           images_per_step=images_per_step)
    return jnp.transpose(out_nhwc, (0, 3, 1, 2))


def init_params(key, dim):
    """Deterministic synthetic parameters, same shapes/semantics as the PyTorch module.

    Weight layouts (vs PyTorch):
      dwconv.weight (dim,1,5,5) -> (5,5,dim);  pwconv*.weight (out,in) -> (in,out).
    """
    ks = jax.random.split(key, 7)
    a_dw = 1.0 / jnp.sqrt(25.0)                      # fan_in = (dim/groups)*5*5 = 25
    wdw = jax.random.uniform(ks[0], (5, 5, dim), jnp.float32, -a_dw, a_dw)
    bdw = jax.random.uniform(ks[1], (1, dim), jnp.float32, -a_dw, a_dw)
    lnw = jnp.ones((1, dim), jnp.float32)
    lnb = jnp.zeros((1, dim), jnp.float32)
    a1 = 1.0 / jnp.sqrt(float(dim))
    w1 = jax.random.uniform(ks[2], (dim, 4 * dim), jnp.float32, -a1, a1)
    b1 = jax.random.uniform(ks[3], (1, 4 * dim), jnp.float32, -a1, a1)
    a2 = 1.0 / jnp.sqrt(4.0 * dim)
    w2 = jax.random.uniform(ks[4], (4 * dim, dim), jnp.float32, -a2, a2)
    b2 = jax.random.uniform(ks[5], (1, dim), jnp.float32, -a2, a2)
    # PyTorch inits gamma = 1e-6 * ones(dim); use random values here so the sanity
    # check exercises the full branch (and the gamma fold) instead of only the residual.
    gamma = jax.random.uniform(ks[6], (1, dim), jnp.float32, 0.1, 1.0)
    return (wdw, bdw, lnw, lnb, w1, b1, w2, b2, gamma)


def reference_forward(x_nchw, params, eps=1e-6):
    """Pure-JAX f32 reference matching the PyTorch Block forward."""
    wdw, bdw, lnw, lnb, w1, b1, w2, b2, gamma = params
    B, C, H, W = x_nchw.shape
    x = jnp.transpose(x_nchw, (0, 2, 3, 1))
    dw = lax.conv_general_dilated(
        x, wdw.reshape(5, 5, 1, C), window_strides=(1, 1), padding="SAME",
        dimension_numbers=("NHWC", "HWIO", "NHWC"), feature_group_count=C) + bdw
    mean = jnp.mean(dw, axis=-1, keepdims=True)
    var = jnp.mean(jnp.square(dw - mean), axis=-1, keepdims=True)
    y = (dw - mean) / jnp.sqrt(var + eps) * lnw + lnb
    h1 = y.reshape(-1, C) @ w1 + b1
    h1 = jax.nn.gelu(h1, approximate=False)
    h2 = h1 @ w2 + b2
    out = x + (h2 * gamma).reshape(B, H, W, C)
    return jnp.transpose(out, (0, 3, 1, 2))


if __name__ == "__main__":
    key = jax.random.PRNGKey(0)
    k_x, k_p = jax.random.split(key)

    # Small shapes consistent with the module: batch=2, dim=128 (lane-dense), 16x16.
    B, dim, H, W = 2, 128, 16, 16
    x = jax.random.normal(k_x, (B, dim, H, W), jnp.float32)
    params = init_params(k_p, dim)

    out = convnext_block_forward(x, params)
    out = jax.block_until_ready(out)

    ref = reference_forward(x, params)
    assert out.shape == (B, dim, H, W)
    max_err = float(jnp.max(jnp.abs(out - ref)))
    # bf16 matmul operands with f32 accumulation -> small mixed-precision error.
    assert jnp.allclose(out, ref, atol=3e-2, rtol=3e-2), max_err

    print("KERNEL_OK")
</pallas_src>

<mosaic_0001>
module attributes {stable_mosaic.version = 11 : i64} {
  func.func @_block_kernel(%arg0: i32, %arg1: memref<1x16x16x128xf32, #tpu.memory_space<vmem>>, %arg2: memref<5x5x128xf32, #tpu.memory_space<vmem>>, %arg3: memref<1x128xf32, #tpu.memory_space<vmem>>, %arg4: memref<128x512xbf16, #tpu.memory_space<vmem>>, %arg5: memref<1x512xf32, #tpu.memory_space<vmem>>, %arg6: memref<512x128xbf16, #tpu.memory_space<vmem>>, %arg7: memref<1x128xf32, #tpu.memory_space<vmem>>, %arg8: memref<1x16x16x128xf32, #tpu.memory_space<vmem>>, %arg9: memref<1x20x20x128xf32, #tpu.memory_space<vmem>>) attributes {dimension_semantics = [#tpu.dimension_semantics<parallel>], iteration_bounds = array<i64: 2>, scalar_prefetch = 0 : i64, scratch_operands = 1 : i64, tpu.core_type = #tpu.core_type<tc>, window_params = [{transform_indices = @transform_0, window_bounds = array<i64: 1, 16, 16, 128>}, {pipeline_mode = #tpu.pipeline_mode<synchronous>, transform_indices = @transform_1, window_bounds = array<i64: 5, 5, 128>}, {pipeline_mode = #tpu.pipeline_mode<synchronous>, transform_indices = @transform_2, window_bounds = array<i64: 1, 128>}, {pipeline_mode = #tpu.pipeline_mode<synchronous>, transform_indices = @transform_3, window_bounds = array<i64: 128, 512>}, {pipeline_mode = #tpu.pipeline_mode<synchronous>, transform_indices = @transform_4, window_bounds = array<i64: 1, 512>}, {pipeline_mode = #tpu.pipeline_mode<synchronous>, transform_indices = @transform_5, window_bounds = array<i64: 512, 128>}, {pipeline_mode = #tpu.pipeline_mode<synchronous>, transform_indices = @transform_6, window_bounds = array<i64: 1, 128>}, {transform_indices = @transform_7, window_bounds = array<i64: 1, 16, 16, 128>}]} {
    %c0 = arith.constant 0 : index
    %c0_0 = arith.constant 0 : index
    %c0_1 = arith.constant 0 : index
    %c0_2 = arith.constant 0 : index
    %0 = vector.load %arg1[%c0, %c0_0, %c0_1, %c0_2] : memref<1x16x16x128xf32, #tpu.memory_space<vmem>>, vector<1x16x16x128xf32>
    %cst = arith.constant 0.000000e+00 : f32
    %1 = vector.broadcast %cst : f32 to vector<1x20x20x128xf32>
    %c0_3 = arith.constant 0 : index
    %c0_4 = arith.constant 0 : index
    %c0_5 = arith.constant 0 : index
    %c0_6 = arith.constant 0 : index
    %2 = vector.load %arg9[%c0_3, %c0_4, %c0_5, %c0_6] : memref<1x20x20x128xf32, #tpu.memory_space<vmem>>, vector<1x20x20x128xf32>
    tpu.vector_store %arg9[%c0_3, %c0_4, %c0_5, %c0_6], %1 {strides = array<i32>} : memref<1x20x20x128xf32, #tpu.memory_space<vmem>>, vector<1x20x20x128xf32>,
    %c0_7 = arith.constant 0 : index
    %c2 = arith.constant 2 : index
    %c2_8 = arith.constant 2 : index
    %c0_9 = arith.constant 0 : index
    %3 = vector.load %arg9[%c0_7, %c2, %c2_8, %c0_9] : memref<1x20x20x128xf32, #tpu.memory_space<vmem>>, vector<1x16x16x128xf32>
    tpu.vector_store %arg9[%c0_7, %c2, %c2_8, %c0_9], %0 {strides = array<i32>} : memref<1x20x20x128xf32, #tpu.memory_space<vmem>>, vector<1x16x16x128xf32>,
    %c0_10 = arith.constant 0 : index
    %c0_11 = arith.constant 0 : index
    %c0_12 = arith.constant 0 : index
    %4 = vector.load %arg2[%c0_10, %c0_11, %c0_12] : memref<5x5x128xf32, #tpu.memory_space<vmem>>, vector<5x5x128xf32>
    %cst_13 = arith.constant 0.000000e+00 : f32
    %5 = vector.broadcast %cst_13 : f32 to vector<1x16x16x128xf32>
    %c0_14 = arith.constant 0 : index
    %c0_15 = arith.constant 0 : index
    %c0_16 = arith.constant 0 : index
    %c0_17 = arith.constant 0 : index
    %6 = vector.load %arg9[%c0_14, %c0_15, %c0_16, %c0_17] : memref<1x20x20x128xf32, #tpu.memory_space<vmem>>, vector<1x20x16x128xf32>
    %7 = vector.extract_strided_slice %6 {offsets = [0, 0, 0, 0], sizes = [1, 16, 16, 128], strides = [1, 1, 1, 1]} : vector<1x20x16x128xf32> to vector<1x16x16x128xf32>
    %8 = vector.extract_strided_slice %4 {offsets = [0, 0, 0], sizes = [1, 1, 128], strides = [1, 1, 1]} : vector<5x5x128xf32> to vector<1x1x128xf32>
    %9 = vector.shape_cast %8 : vector<1x1x128xf32> to vector<128xf32>
    %10 = vector.shape_cast %9 : vector<128xf32> to vector<1x1x1x128xf32>
    %11 = vector.broadcast %10 : vector<1x1x1x128xf32> to vector<1x16x16x128xf32>
    %12 = arith.mulf %7, %11 : vector<1x16x16x128xf32>
    %13 = arith.addf %5, %12 : vector<1x16x16x128xf32>
    %14 = vector.extract_strided_slice %6 {offsets = [0, 1, 0, 0], sizes = [1, 16, 16, 128], strides = [1, 1, 1, 1]} : vector<1x20x16x128xf32> to vector<1x16x16x128xf32>
    %15 = vector.extract_strided_slice %4 {offsets = [1, 0, 0], sizes = [1, 1, 128], strides = [1, 1, 1]} : vector<5x5x128xf32> to vector<1x1x128xf32>
    %16 = vector.shape_cast %15 : vector<1x1x128xf32> to vector<128xf32>
    %17 = vector.shape_cast %16 : vector<128xf32> to vector<1x1x1x128xf32>
    %18 = vector.broadcast %17 : vector<1x1x1x128xf32> to vector<1x16x16x128xf32>
    %19 = arith.mulf %14, %18 : vector<1x16x16x128xf32>
    %20 = arith.addf %13, %19 : vector<1x16x16x128xf32>
    %21 = vector.extract_strided_slice %6 {offsets = [0, 2, 0, 0], sizes = [1, 16, 16, 128], strides = [1, 1, 1, 1]} : vector<1x20x16x128xf32> to vector<1x16x16x128xf32>
    %22 = vector.extract_strided_slice %4 {offsets = [2, 0, 0], sizes = [1, 1, 128], strides = [1, 1, 1]} : vector<5x5x128xf32> to vector<1x1x128xf32>
    %23 = vector.shape_cast %22 : vector<1x1x128xf32> to vector<128xf32>
    %24 = vector.shape_cast %23 : vector<128xf32> to vector<1x1x1x128xf32>
    %25 = vector.broadcast %24 : vector<1x1x1x128xf32> to vector<1x16x16x128xf32>
    %26 = arith.mulf %21, %25 : vector<1x16x16x128xf32>
    %27 = arith.addf %20, %26 : vector<1x16x16x128xf32>
    %28 = vector.extract_strided_slice %6 {offsets = [0, 3, 0, 0], sizes = [1, 16, 16, 128], strides = [1, 1, 1, 1]} : vector<1x20x16x128xf32> to vector<1x16x16x128xf32>
    %29 = vector.extract_strided_slice %4 {offsets = [3, 0, 0], sizes = [1, 1, 128], strides = [1, 1, 1]} : vector<5x5x128xf32> to vector<1x1x128xf32>
    %30 = vector.shape_cast %29 : vector<1x1x128xf32> to vector<128xf32>
    %31 = vector.shape_cast %30 : vector<128xf32> to vector<1x1x1x128xf32>
    %32 = vector.broadcast %31 : vector<1x1x1x128xf32> to vector<1x16x16x128xf32>
    %33 = arith.mulf %28, %32 : vector<1x16x16x128xf32>
    %34 = arith.addf %27, %33 : vector<1x16x16x128xf32>
    %35 = vector.extract_strided_slice %6 {offsets = [0, 4, 0, 0], sizes = [1, 16, 16, 128], strides = [1, 1, 1, 1]} : vector<1x20x16x128xf32> to vector<1x16x16x128xf32>
    %36 = vector.extract_strided_slice %4 {offsets = [4, 0, 0], sizes = [1, 1, 128], strides = [1, 1, 1]} : vector<5x5x128xf32> to vector<1x1x128xf32>
    %37 = vector.shape_cast %36 : vector<1x1x128xf32> to vector<128xf32>
    %38 = vector.shape_cast %37 : vector<128xf32> to vector<1x1x1x128xf32>
    %39 = vector.broadcast %38 : vector<1x1x1x128xf32> to vector<1x16x16x128xf32>
    %40 = arith.mulf %35, %39 : vector<1x16x16x128xf32>
    %41 = arith.addf %34, %40 : vector<1x16x16x128xf32>
    %c0_18 = arith.constant 0 : index
    %c0_19 = arith.constant 0 : index
    %c1 = arith.constant 1 : index
    %c0_20 = arith.constant 0 : index
    %42 = vector.load %arg9[%c0_18, %c0_19, %c1, %c0_20] : memref<1x20x20x128xf32, #tpu.memory_space<vmem>>, vector<1x20x16x128xf32>
    %43 = vector.extract_strided_slice %42 {offsets = [0, 0, 0, 0], sizes = [1, 16, 16, 128], strides = [1, 1, 1, 1]} : vector<1x20x16x128xf32> to vector<1x16x16x128xf32>
    %44 = vector.extract_strided_slice %4 {offsets = [0, 1, 0], sizes = [1, 1, 128], strides = [1, 1, 1]} : vector<5x5x128xf32> to vector<1x1x128xf32>
    %45 = vector.shape_cast %44 : vector<1x1x128xf32> to vector<128xf32>
    %46 = vector.shape_cast %45 : vector<128xf32> to vector<1x1x1x128xf32>
    %47 = vector.broadcast %46 : vector<1x1x1x128xf32> to vector<1x16x16x128xf32>
    %48 = arith.mulf %43, %47 : vector<1x16x16x128xf32>
    %49 = arith.addf %41, %48 : vector<1x16x16x128xf32>
    %50 = vector.extract_strided_slice %42 {offsets = [0, 1, 0, 0], sizes = [1, 16, 16, 128], strides = [1, 1, 1, 1]} : vector<1x20x16x128xf32> to vector<1x16x16x128xf32>
    %51 = vector.extract_strided_slice %4 {offsets = [1, 1, 0], sizes = [1, 1, 128], strides = [1, 1, 1]} : vector<5x5x128xf32> to vector<1x1x128xf32>
    %52 = vector.shape_cast %51 : vector<1x1x128xf32> to vector<128xf32>
    %53 = vector.shape_cast %52 : vector<128xf32> to vector<1x1x1x128xf32>
    %54 = vector.broadcast %53 : vector<1x1x1x128xf32> to vector<1x16x16x128xf32>
    %55 = arith.mulf %50, %54 : vector<1x16x16x128xf32>
    %56 = arith.addf %49, %55 : vector<1x16x16x128xf32>
    %57 = vector.extract_strided_slice %42 {offsets = [0, 2, 0, 0], sizes = [1, 16, 16, 128], strides = [1, 1, 1, 1]} : vector<1x20x16x128xf32> to vector<1x16x16x128xf32>
    %58 = vector.extract_strided_slice %4 {offsets = [2, 1, 0], sizes = [1, 1, 128], strides = [1, 1, 1]} : vector<5x5x128xf32> to vector<1x1x128xf32>
    %59 = vector.shape_cast %58 : vector<1x1x128xf32> to vector<128xf32>
    %60 = vector.shape_cast %59 : vector<128xf32> to vector<1x1x1x128xf32>
    %61 = vector.broadcast %60 : vector<1x1x1x128xf32> to vector<1x16x16x128xf32>
    %62 = arith.mulf %57, %61 : vector<1x16x16x128xf32>
    %63 = arith.addf %56, %62 : vector<1x16x16x128xf32>
    %64 = vector.extract_strided_slice %42 {offsets = [0, 3, 0, 0], sizes = [1, 16, 16, 128], strides = [1, 1, 1, 1]} : vector<1x20x16x128xf32> to vector<1x16x16x128xf32>
    %65 = vector.extract_strided_slice %4 {offsets = [3, 1, 0], sizes = [1, 1, 128], strides = [1, 1, 1]} : vector<5x5x128xf32> to vector<1x1x128xf32>
    %66 = vector.shape_cast %65 : vector<1x1x128xf32> to vector<128xf32>
    %67 = vector.shape_cast %66 : vector<128xf32> to vector<1x1x1x128xf32>
    %68 = vector.broadcast %67 : vector<1x1x1x128xf32> to vector<1x16x16x128xf32>
    %69 = arith.mulf %64, %68 : vector<1x16x16x128xf32>
    %70 = arith.addf %63, %69 : vector<1x16x16x128xf32>
    %71 = vector.extract_strided_slice %42 {offsets = [0, 4, 0, 0], sizes = [1, 16, 16, 128], strides = [1, 1, 1, 1]} : vector<1x20x16x128xf32> to vector<1x16x16x128xf32>
    %72 = vector.extract_strided_slice %4 {offsets = [4, 1, 0], sizes = [1, 1, 128], strides = [1, 1, 1]} : vector<5x5x128xf32> to vector<1x1x128xf32>
    %73 = vector.shape_cast %72 : vector<1x1x128xf32> to vector<128xf32>
    %74 = vector.shape_cast %73 : vector<128xf32> to vector<1x1x1x128xf32>
    %75 = vector.broadcast %74 : vector<1x1x1x128xf32> to vector<1x16x16x128xf32>
    %76 = arith.mulf %71, %75 : vector<1x16x16x128xf32>
    %77 = arith.addf %70, %76 : vector<1x16x16x128xf32>
    %c0_21 = arith.constant 0 : index
    %c0_22 = arith.constant 0 : index
    %c2_23 = arith.constant 2 : index
    %c0_24 = arith.constant 0 : index
    %78 = vector.load %arg9[%c0_21, %c0_22, %c2_23, %c0_24] : memref<1x20x20x128xf32, #tpu.memory_space<vmem>>, vector<1x20x16x128xf32>
    %79 = vector.extract_strided_slice %78 {offsets = [0, 0, 0, 0], sizes = [1, 16, 16, 128], strides = [1, 1, 1, 1]} : vector<1x20x16x128xf32> to vector<1x16x16x128xf32>
    %80 = vector.extract_strided_slice %4 {offsets = [0, 2, 0], sizes = [1, 1, 128], strides = [1, 1, 1]} : vector<5x5x128xf32> to vector<1x1x128xf32>
    %81 = vector.shape_cast %80 : vector<1x1x128xf32> to vector<128xf32>
    %82 = vector.shape_cast %81 : vector<128xf32> to vector<1x1x1x128xf32>
    %83 = vector.broadcast %82 : vector<1x1x1x128xf32> to vector<1x16x16x128xf32>
    %84 = arith.mulf %79, %83 : vector<1x16x16x128xf32>
    %85 = arith.addf %77, %84 : vector<1x16x16x128xf32>
    %86 = vector.extract_strided_slice %78 {offsets = [0, 1, 0, 0], sizes = [1, 16, 16, 128], strides = [1, 1, 1, 1]} : vector<1x20x16x128xf32> to vector<1x16x16x128xf32>
    %87 = vector.extract_strided_slice %4 {offsets = [1, 2, 0], sizes = [1, 1, 128], strides = [1, 1, 1]} : vector<5x5x128xf32> to vector<1x1x128xf32>
    %88 = vector.shape_cast %87 : vector<1x1x128xf32> to vector<128xf32>
    %89 = vector.shape_cast %88 : vector<128xf32> to vector<1x1x1x128xf32>
    %90 = vector.broadcast %89 : vector<1x1x1x128xf32> to vector<1x16x16x128xf32>
    %91 = arith.mulf %86, %90 : vector<1x16x16x128xf32>
    %92 = arith.addf %85, %91 : vector<1x16x16x128xf32>
    %93 = vector.extract_strided_slice %78 {offsets = [0, 2, 0, 0], sizes = [1, 16, 16, 128], strides = [1, 1, 1, 1]} : vector<1x20x16x128xf32> to vector<1x16x16x128xf32>
    %94 = vector.extract_strided_slice %4 {offsets = [2, 2, 0], sizes = [1, 1, 128], strides = [1, 1, 1]} : vector<5x5x128xf32> to vector<1x1x128xf32>
    %95 = vector.shape_cast %94 : vector<1x1x128xf32> to vector<128xf32>
    %96 = vector.shape_cast %95 : vector<128xf32> to vector<1x1x1x128xf32>
    %97 = vector.broadcast %96 : vector<1x1x1x128xf32> to vector<1x16x16x128xf32>
    %98 = arith.mulf %93, %97 : vector<1x16x16x128xf32>
    %99 = arith.addf %92, %98 : vector<1x16x16x128xf32>
    %100 = vector.extract_strided_slice %78 {offsets = [0, 3, 0, 0], sizes = [1, 16, 16, 128], strides = [1, 1, 1, 1]} : vector<1x20x16x128xf32> to vector<1x16x16x128xf32>
    %101 = vector.extract_strided_slice %4 {offsets = [3, 2, 0], sizes = [1, 1, 128], strides = [1, 1, 1]} : vector<5x5x128xf32> to vector<1x1x128xf32>
    %102 = vector.shape_cast %101 : vector<1x1x128xf32> to vector<128xf32>
    %103 = vector.shape_cast %102 : vector<128xf32> to vector<1x1x1x128xf32>
    %104 = vector.broadcast %103 : vector<1x1x1x128xf32> to vector<1x16x16x128xf32>
    %105 = arith.mulf %100, %104 : vector<1x16x16x128xf32>
    %106 = arith.addf %99, %105 : vector<1x16x16x128xf32>
    %107 = vector.extract_strided_slice %78 {offsets = [0, 4, 0, 0], sizes = [1, 16, 16, 128], strides = [1, 1, 1, 1]} : vector<1x20x16x128xf32> to vector<1x16x16x128xf32>
    %108 = vector.extract_strided_slice %4 {offsets = [4, 2, 0], sizes = [1, 1, 128], strides = [1, 1, 1]} : vector<5x5x128xf32> to vector<1x1x128xf32>
    %109 = vector.shape_cast %108 : vector<1x1x128xf32> to vector<128xf32>
    %110 = vector.shape_cast %109 : vector<128xf32> to vector<1x1x1x128xf32>
    %111 = vector.broadcast %110 : vector<1x1x1x128xf32> to vector<1x16x16x128xf32>
    %112 = arith.mulf %107, %111 : vector<1x16x16x128xf32>
    %113 = arith.addf %106, %112 : vector<1x16x16x128xf32>
    %c0_25 = arith.constant 0 : index
    %c0_26 = arith.constant 0 : index
    %c3 = arith.constant 3 : index
    %c0_27 = arith.constant 0 : index
    %114 = vector.load %arg9[%c0_25, %c0_26, %c3, %c0_27] : memref<1x20x20x128xf32, #tpu.memory_space<vmem>>, vector<1x20x16x128xf32>
    %115 = vector.extract_strided_slice %114 {offsets = [0, 0, 0, 0], sizes = [1, 16, 16, 128], strides = [1, 1, 1, 1]} : vector<1x20x16x128xf32> to vector<1x16x16x128xf32>
    %116 = vector.extract_strided_slice %4 {offsets = [0, 3, 0], sizes = [1, 1, 128], strides = [1, 1, 1]} : vector<5x5x128xf32> to vector<1x1x128xf32>
    %117 = vector.shape_cast %116 : vector<1x1x128xf32> to vector<128xf32>
    %118 = vector.shape_cast %117 : vector<128xf32> to vector<1x1x1x128xf32>
    %119 = vector.broadcast %118 : vector<1x1x1x128xf32> to vector<1x16x16x128xf32>
    %120 = arith.mulf %115, %119 : vector<1x16x16x128xf32>
    %121 = arith.addf %113, %120 : vector<1x16x16x128xf32>
    %122 = vector.extract_strided_slice %114 {offsets = [0, 1, 0, 0], sizes = [1, 16, 16, 128], strides = [1, 1, 1, 1]} : vector<1x20x16x128xf32> to vector<1x16x16x128xf32>
    %123 = vector.extract_strided_slice %4 {offsets = [1, 3, 0], sizes = [1, 1, 128], strides = [1, 1, 1]} : vector<5x5x128xf32> to vector<1x1x128xf32>
    %124 = vector.shape_cast %123 : vector<1x1x128xf32> to vector<128xf32>
    %125 = vector.shape_cast %124 : vector<128xf32> to vector<1x1x1x128xf32>
    %126 = vector.broadcast %125 : vector<1x1x1x128xf32> to vector<1x16x16x128xf32>
    %127 = arith.mulf %122, %126 : vector<1x16x16x128xf32>
    %128 = arith.addf %121, %127 : vector<1x16x16x128xf32>
    %129 = vector.extract_strided_slice %114 {offsets = [0, 2, 0, 0], sizes = [1, 16, 16, 128], strides = [1, 1, 1, 1]} : vector<1x20x16x128xf32> to vector<1x16x16x128xf32>
    %130 = vector.extract_strided_slice %4 {offsets = [2, 3, 0], sizes = [1, 1, 128], strides = [1, 1, 1]} : vector<5x5x128xf32> to vector<1x1x128xf32>
    %131 = vector.shape_cast %130 : vector<1x1x128xf32> to vector<128xf32>
    %132 = vector.shape_cast %131 : vector<128xf32> to vector<1x1x1x128xf32>
    %133 = vector.broadcast %132 : vector<1x1x1x128xf32> to vector<1x16x16x128xf32>
    %134 = arith.mulf %129, %133 : vector<1x16x16x128xf32>
    %135 = arith.addf %128, %134 : vector<1x16x16x128xf32>
    %136 = vector.extract_strided_slice %114 {offsets = [0, 3, 0, 0], sizes = [1, 16, 16, 128], strides = [1, 1, 1, 1]} : vector<1x20x16x128xf32> to vector<1x16x16x128xf32>
    %137 = vector.extract_strided_slice %4 {offsets = [3, 3, 0], sizes = [1, 1, 128], strides = [1, 1, 1]} : vector<5x5x128xf32> to vector<1x1x128xf32>
    %138 = vector.shape_cast %137 : vector<1x1x128xf32> to vector<128xf32>
    %139 = vector.shape_cast %138 : vector<128xf32> to vector<1x1x1x128xf32>
    %140 = vector.broadcast %139 : vector<1x1x1x128xf32> to vector<1x16x16x128xf32>
    %141 = arith.mulf %136, %140 : vector<1x16x16x128xf32>
    %142 = arith.addf %135, %141 : vector<1x16x16x128xf32>
    %143 = vector.extract_strided_slice %114 {offsets = [0, 4, 0, 0], sizes = [1, 16, 16, 128], strides = [1, 1, 1, 1]} : vector<1x20x16x128xf32> to vector<1x16x16x128xf32>
    %144 = vector.extract_strided_slice %4 {offsets = [4, 3, 0], sizes = [1, 1, 128], strides = [1, 1, 1]} : vector<5x5x128xf32> to vector<1x1x128xf32>
    %145 = vector.shape_cast %144 : vector<1x1x128xf32> to vector<128xf32>
    %146 = vector.shape_cast %145 : vector<128xf32> to vector<1x1x1x128xf32>
    %147 = vector.broadcast %146 : vector<1x1x1x128xf32> to vector<1x16x16x128xf32>
    %148 = arith.mulf %143, %147 : vector<1x16x16x128xf32>
    %149 = arith.addf %142, %148 : vector<1x16x16x128xf32>
    %c0_28 = arith.constant 0 : index
    %c0_29 = arith.constant 0 : index
    %c4 = arith.constant 4 : index
    %c0_30 = arith.constant 0 : index
    %150 = vector.load %arg9[%c0_28, %c0_29, %c4, %c0_30] : memref<1x20x20x128xf32, #tpu.memory_space<vmem>>, vector<1x20x16x128xf32>
    %151 = vector.extract_strided_slice %150 {offsets = [0, 0, 0, 0], sizes = [1, 16, 16, 128], strides = [1, 1, 1, 1]} : vector<1x20x16x128xf32> to vector<1x16x16x128xf32>
    %152 = vector.extract_strided_slice %4 {offsets = [0, 4, 0], sizes = [1, 1, 128], strides = [1, 1, 1]} : vector<5x5x128xf32> to vector<1x1x128xf32>
    %153 = vector.shape_cast %152 : vector<1x1x128xf32> to vector<128xf32>
    %154 = vector.shape_cast %153 : vector<128xf32> to vector<1x1x1x128xf32>
    %155 = vector.broadcast %154 : vector<1x1x1x128xf32> to vector<1x16x16x128xf32>
    %156 = arith.mulf %151, %155 : vector<1x16x16x128xf32>
    %157 = arith.addf %149, %156 : vector<1x16x16x128xf32>
    %158 = vector.extract_strided_slice %150 {offsets = [0, 1, 0, 0], sizes = [1, 16, 16, 128], strides = [1, 1, 1, 1]} : vector<1x20x16x128xf32> to vector<1x16x16x128xf32>
    %159 = vector.extract_strided_slice %4 {offsets = [1, 4, 0], sizes = [1, 1, 128], strides = [1, 1, 1]} : vector<5x5x128xf32> to vector<1x1x128xf32>
    %160 = vector.shape_cast %159 : vector<1x1x128xf32> to vector<128xf32>
    %161 = vector.shape_cast %160 : vector<128xf32> to vector<1x1x1x128xf32>
    %162 = vector.broadcast %161 : vector<1x1x1x128xf32> to vector<1x16x16x128xf32>
    %163 = arith.mulf %158, %162 : vector<1x16x16x128xf32>
    %164 = arith.addf %157, %163 : vector<1x16x16x128xf32>
    %165 = vector.extract_strided_slice %150 {offsets = [0, 2, 0, 0], sizes = [1, 16, 16, 128], strides = [1, 1, 1, 1]} : vector<1x20x16x128xf32> to vector<1x16x16x128xf32>
    %166 = vector.extract_strided_slice %4 {offsets = [2, 4, 0], sizes = [1, 1, 128], strides = [1, 1, 1]} : vector<5x5x128xf32> to vector<1x1x128xf32>
    %167 = vector.shape_cast %166 : vector<1x1x128xf32> to vector<128xf32>
    %168 = vector.shape_cast %167 : vector<128xf32> to vector<1x1x1x128xf32>
    %169 = vector.broadcast %168 : vector<1x1x1x128xf32> to vector<1x16x16x128xf32>
    %170 = arith.mulf %165, %169 : vector<1x16x16x128xf32>
    %171 = arith.addf %164, %170 : vector<1x16x16x128xf32>
    %172 = vector.extract_strided_slice %150 {offsets = [0, 3, 0, 0], sizes = [1, 16, 16, 128], strides = [1, 1, 1, 1]} : vector<1x20x16x128xf32> to vector<1x16x16x128xf32>
    %173 = vector.extract_strided_slice %4 {offsets = [3, 4, 0], sizes = [1, 1, 128], strides = [1, 1, 1]} : vector<5x5x128xf32> to vector<1x1x128xf32>
    %174 = vector.shape_cast %173 : vector<1x1x128xf32> to vector<128xf32>
    %175 = vector.shape_cast %174 : vector<128xf32> to vector<1x1x1x128xf32>
    %176 = vector.broadcast %175 : vector<1x1x1x128xf32> to vector<1x16x16x128xf32>
    %177 = arith.mulf %172, %176 : vector<1x16x16x128xf32>
    %178 = arith.addf %171, %177 : vector<1x16x16x128xf32>
    %179 = vector.extract_strided_slice %150 {offsets = [0, 4, 0, 0], sizes = [1, 16, 16, 128], strides = [1, 1, 1, 1]} : vector<1x20x16x128xf32> to vector<1x16x16x128xf32>
    %180 = vector.extract_strided_slice %4 {offsets = [4, 4, 0], sizes = [1, 1, 128], strides = [1, 1, 1]} : vector<5x5x128xf32> to vector<1x1x128xf32>
    %181 = vector.shape_cast %180 : vector<1x1x128xf32> to vector<128xf32>
    %182 = vector.shape_cast %181 : vector<128xf32> to vector<1x1x1x128xf32>
    %183 = vector.broadcast %182 : vector<1x1x1x128xf32> to vector<1x16x16x128xf32>
    %184 = arith.mulf %179, %183 : vector<1x16x16x128xf32>
    %185 = arith.addf %178, %184 : vector<1x16x16x128xf32>
    %c0_31 = arith.constant 0 : index
    %c0_32 = arith.constant 0 : index
    %186 = vector.load %arg3[%c0_31, %c0_32] : memref<1x128xf32, #tpu.memory_space<vmem>>, vector<1x128xf32>
    %187 = vector.shape_cast %186 : vector<1x128xf32> to vector<1x1x1x128xf32>
    %188 = vector.broadcast %187 : vector<1x1x1x128xf32> to vector<1x16x16x128xf32>
    %189 = arith.addf %185, %188 : vector<1x16x16x128xf32>
    %cst_33 = arith.constant dense<0.000000e+00> : vector<1x16x16xf32>
    %190 = vector.multi_reduction <add>, %189, %cst_33 [3] : vector<1x16x16x128xf32> to vector<1x16x16xf32>
    %191 = vector.shape_cast %190 : vector<1x16x16xf32> to vector<1x16x16x1xf32>
    %cst_34 = arith.constant 1.280000e+02 : f32
    %192 = vector.broadcast %cst_34 : f32 to vector<1x16x16x1xf32>
    %193 = arith.divf %191, %192 : vector<1x16x16x1xf32>
    %194 = arith.mulf %189, %189 : vector<1x16x16x128xf32>
    %cst_35 = arith.constant dense<0.000000e+00> : vector<1x16x16xf32>
    %195 = vector.multi_reduction <add>, %194, %cst_35 [3] : vector<1x16x16x128xf32> to vector<1x16x16xf32>
    %196 = vector.shape_cast %195 : vector<1x16x16xf32> to vector<1x16x16x1xf32>
    %cst_36 = arith.constant 1.280000e+02 : f32
    %197 = vector.broadcast %cst_36 : f32 to vector<1x16x16x1xf32>
    %198 = arith.divf %196, %197 : vector<1x16x16x1xf32>
    %199 = arith.mulf %193, %193 : vector<1x16x16x1xf32>
    %200 = arith.subf %198, %199 : vector<1x16x16x1xf32>
    %201 = vector.broadcast %193 : vector<1x16x16x1xf32> to vector<1x16x16x128xf32>
    %202 = arith.subf %189, %201 : vector<1x16x16x128xf32>
    %cst_37 = arith.constant 9.99999997E-7 : f32
    %203 = vector.broadcast %cst_37 : f32 to vector<1x16x16x1xf32>
    %204 = arith.addf %200, %203 : vector<1x16x16x1xf32>
    %205 = math.rsqrt %204 : vector<1x16x16x1xf32>
    %206 = vector.broadcast %205 : vector<1x16x16x1xf32> to vector<1x16x16x128xf32>
    %207 = arith.mulf %202, %206 : vector<1x16x16x128xf32>
    %208 = vector.shape_cast %207 : vector<1x16x16x128xf32> to vector<256x128xf32>
    %209 = arith.truncf %208 : vector<256x128xf32> to vector<256x128xbf16>
    %c0_38 = arith.constant 0 : index
    %c0_39 = arith.constant 0 : index
    %210 = vector.load %arg4[%c0_38, %c0_39] : memref<128x512xbf16, #tpu.memory_space<vmem>>, vector<128x512xbf16>
    %cst_40 = arith.constant dense<0.000000e+00> : vector<256x512xf32>
    %211 = tpu.matmul %209, %210, %cst_40 {dimension_numbers = #tpu.dot_dimension_numbers<[1], [0], [0], [1], [0, 0, 1, 1], [], []>} : vector<256x128xbf16>, vector<128x512xbf16>, vector<256x512xf32> -> vector<256x512xf32>
    %c0_41 = arith.constant 0 : index
    %c0_42 = arith.constant 0 : index
    %212 = vector.load %arg5[%c0_41, %c0_42] : memref<1x512xf32, #tpu.memory_space<vmem>>, vector<1x512xf32>
    %213 = vector.broadcast %212 : vector<1x512xf32> to vector<256x512xf32>
    %214 = arith.addf %211, %213 : vector<256x512xf32>
    %cst_43 = arith.constant 0.707106769 : f32
    %215 = vector.broadcast %cst_43 : f32 to vector<256x512xf32>
    %216 = arith.mulf %214, %215 : vector<256x512xf32>
    %217 = math.absf %216 : vector<256x512xf32>
    %cst_44 = arith.constant 0.327591091 : f32
    %218 = vector.broadcast %cst_44 : f32 to vector<256x512xf32>
    %219 = arith.mulf %218, %217 : vector<256x512xf32>
    %cst_45 = arith.constant 1.000000e+00 : f32
    %220 = vector.broadcast %cst_45 : f32 to vector<256x512xf32>
    %221 = arith.addf %220, %219 : vector<256x512xf32>
    %cst_46 = arith.constant 1.000000e+00 : f32
    %222 = vector.broadcast %cst_46 : f32 to vector<256x512xf32>
    %223 = arith.divf %222, %221 : vector<256x512xf32>
    %cst_47 = arith.constant 1.06140542 : f32
    %224 = vector.broadcast %cst_47 : f32 to vector<256x512xf32>
    %225 = arith.mulf %224, %223 : vector<256x512xf32>
    %cst_48 = arith.constant -1.45315206 : f32
    %226 = vector.broadcast %cst_48 : f32 to vector<256x512xf32>
    %227 = arith.addf %225, %226 : vector<256x512xf32>
    %228 = arith.mulf %227, %223 : vector<256x512xf32>
    %cst_49 = arith.constant 1.42141378 : f32
    %229 = vector.broadcast %cst_49 : f32 to vector<256x512xf32>
    %230 = arith.addf %228, %229 : vector<256x512xf32>
    %231 = arith.mulf %230, %223 : vector<256x512xf32>
    %cst_50 = arith.constant -0.284496725 : f32
    %232 = vector.broadcast %cst_50 : f32 to vector<256x512xf32>
    %233 = arith.addf %231, %232 : vector<256x512xf32>
    %234 = arith.mulf %233, %223 : vector<256x512xf32>
    %cst_51 = arith.constant 0.254829586 : f32
    %235 = vector.broadcast %cst_51 : f32 to vector<256x512xf32>
    %236 = arith.addf %234, %235 : vector<256x512xf32>
    %237 = arith.mulf %236, %223 : vector<256x512xf32>
    %238 = arith.mulf %217, %217 : vector<256x512xf32>
    %cst_52 = arith.constant 0.000000e+00 : f32
    %239 = vector.broadcast %cst_52 : f32 to vector<256x512xf32>
    %240 = arith.subf %239, %238 : vector<256x512xf32>
    %241 = math.exp %240 : vector<256x512xf32>
    %242 = arith.mulf %237, %241 : vector<256x512xf32>
    %cst_53 = arith.constant 1.000000e+00 : f32
    %243 = vector.broadcast %cst_53 : f32 to vector<256x512xf32>
    %244 = arith.subf %243, %242 : vector<256x512xf32>
    %cst_54 = arith.constant 0.000000e+00 : f32
    %245 = vector.broadcast %cst_54 : f32 to vector<256x512xf32>
    %246 = arith.cmpf oge, %216, %245 : vector<256x512xf32>
    %cst_55 = arith.constant 0.000000e+00 : f32
    %247 = vector.broadcast %cst_55 : f32 to vector<256x512xf32>
    %248 = arith.subf %247, %244 : vector<256x512xf32>
    %249 = arith.select %246, %244, %248 : vector<256x512xi1>, vector<256x512xf32>
    %cst_56 = arith.constant 1.000000e+00 : f32
    %250 = vector.broadcast %cst_56 : f32 to vector<256x512xf32>
    %251 = arith.addf %250, %249 : vector<256x512xf32>
    %252 = arith.mulf %214, %251 : vector<256x512xf32>
    %253 = arith.truncf %252 : vector<256x512xf32> to vector<256x512xbf16>
    %c0_57 = arith.constant 0 : index
    %c0_58 = arith.constant 0 : index
    %254 = vector.load %arg6[%c0_57, %c0_58] : memref<512x128xbf16, #tpu.memory_space<vmem>>, vector<512x128xbf16>
    %cst_59 = arith.constant dense<0.000000e+00> : vector<256x128xf32>
    %255 = tpu.matmul %253, %254, %cst_59 {dimension_numbers = #tpu.dot_dimension_numbers<[1], [0], [0], [1], [0, 0, 1, 1], [], []>} : vector<256x512xbf16>, vector<512x128xbf16>, vector<256x128xf32> -> vector<256x128xf32>
    %c0_60 = arith.constant 0 : index
    %c0_61 = arith.constant 0 : index
    %256 = vector.load %arg7[%c0_60, %c0_61] : memref<1x128xf32, #tpu.memory_space<vmem>>, vector<1x128xf32>
    %257 = vector.broadcast %256 : vector<1x128xf32> to vector<256x128xf32>
    %258 = arith.addf %255, %257 : vector<256x128xf32>
    %259 = vector.shape_cast %258 : vector<256x128xf32> to vector<1x16x16x128xf32>
    %260 = arith.addf %0, %259 : vector<1x16x16x128xf32>
    %c0_62 = arith.constant 0 : index
    %c0_63 = arith.constant 0 : index
    %c0_64 = arith.constant 0 : index
    %c0_65 = arith.constant 0 : index
    %261 = vector.load %arg8[%c0_62, %c0_63, %c0_64, %c0_65] : memref<1x16x16x128xf32, #tpu.memory_space<vmem>>, vector<1x16x16x128xf32>
    tpu.vector_store %arg8[%c0_62, %c0_63, %c0_64, %c0_65], %260 {strides = array<i32>} : memref<1x16x16x128xf32, #tpu.memory_space<vmem>>, vector<1x16x16x128xf32>,
    return
  }
  func.func @transform_0(%arg0: i32) -> (i32, i32, i32, i32) {
    %c0_i32 = arith.constant 0 : i32
    %c0_i32_0 = arith.constant 0 : i32
    %c0_i32_1 = arith.constant 0 : i32
    %c0_i32_2 = arith.constant 0 : i32
    return %arg0, %c0_i32, %c0_i32_0, %c0_i32_1 : i32, i32, i32, i32
  }
  func.func @transform_1(%arg0: i32) -> (i32, i32, i32) {
    %c0_i32 = arith.constant 0 : i32
    %c0_i32_0 = arith.constant 0 : i32
    %c0_i32_1 = arith.constant 0 : i32
    %c0_i32_2 = arith.constant 0 : i32
    return %c0_i32, %c0_i32_0, %c0_i32_1 : i32, i32, i32
  }
  func.func @transform_2(%arg0: i32) -> (i32, i32) {
    %c0_i32 = arith.constant 0 : i32
    %c0_i32_0 = arith.constant 0 : i32
    %c0_i32_1 = arith.constant 0 : i32
    return %c0_i32, %c0_i32_0 : i32, i32
  }
  func.func @transform_3(%arg0: i32) -> (i32, i32) {
    %c0_i32 = arith.constant 0 : i32
    %c0_i32_0 = arith.constant 0 : i32
    %c0_i32_1 = arith.constant 0 : i32
    return %c0_i32, %c0_i32_0 : i32, i32
  }
  func.func @transform_4(%arg0: i32) -> (i32, i32) {
    %c0_i32 = arith.constant 0 : i32
    %c0_i32_0 = arith.constant 0 : i32
    %c0_i32_1 = arith.constant 0 : i32
    return %c0_i32, %c0_i32_0 : i32, i32
  }
  func.func @transform_5(%arg0: i32) -> (i32, i32) {
    %c0_i32 = arith.constant 0 : i32
    %c0_i32_0 = arith.constant 0 : i32
    %c0_i32_1 = arith.constant 0 : i32
    return %c0_i32, %c0_i32_0 : i32, i32
  }
  func.func @transform_6(%arg0: i32) -> (i32, i32) {
    %c0_i32 = arith.constant 0 : i32
    %c0_i32_0 = arith.constant 0 : i32
    %c0_i32_1 = arith.constant 0 : i32
    return %c0_i32, %c0_i32_0 : i32, i32
  }
  func.func @transform_7(%arg0: i32) -> (i32, i32, i32, i32) {
    %c0_i32 = arith.constant 0 : i32
    %c0_i32_0 = arith.constant 0 : i32
    %c0_i32_1 = arith.constant 0 : i32
    %c0_i32_2 = arith.constant 0 : i32
    return %arg0, %c0_i32, %c0_i32_0, %c0_i32_1 : i32, i32, i32, i32
  }
}

</mosaic_0001>

<llo_original>
// kernel: tpu_custom_call.1
$region0: #{tpu_custom_call.1}
  #allocation0 [shape = 'u32[]', space=smem, size = 0x4, offset = 0x4, fixed_abs, tag = 'smem constant byte address 0x4 - core index']
  #allocation1 [shape = 'u32[144,128]{1,0:T(1,128)}', space=vmem, size = 0x12000, scoped, tag = 'internal scratch']
  #allocation2 [shape = 'f32[1,20,20,128]{3,2,1,0:T(8,128)}', space=vmem, size = 0x3c000, scoped, tag = 'scratch operand']
  %s0 = inlined_call_operand.hbm [shape: f32[2,16,16,128], index: 0, kind: input, shape index: {}]
  %s1 = inlined_call_operand.hbm [shape: f32[5,5,128], index: 1, kind: input, shape index: {}]
  %s2 = inlined_call_operand.vmem [shape: f32[1,128], index: 2, kind: input, shape index: {}]
  %s3 = inlined_call_operand.hbm [shape: bf16[128,512], index: 3, kind: input, shape index: {}]
  %s4 = inlined_call_operand.vmem [shape: f32[1,512], index: 4, kind: input, shape index: {}]
  %s5 = inlined_call_operand.hbm [shape: bf16[512,128], index: 5, kind: input, shape index: {}]
  %s6 = inlined_call_operand.vmem [shape: f32[1,128], index: 6, kind: input, shape index: {}]
  %s7 = inlined_call_operand.hbm [shape: f32[2,16,16,128], index: 7, kind: output, shape index: {}]
  %s8 = sld [smem:[#allocation0]]
  $region77: #{tpu_custom_call.1} parent=0
    _
  %s10 = ssub.s32 1, %s8
  %s11 = scalar_select 0, %s10, %s8
  $region1: #{tpu_custom_call.1} parent=0
    #allocation3 [shape = 'u8[262144]{0}', space=vmem, size = 0x40000, scoped, tag = 'input window, operand 0']
    #allocation4 [shape = 's32[2]{0}', space=sflag, size = 0x8, scoped, tag = 'scoped memory for tpu_custom_call.1']
    #allocation5 [shape = 's32[2]{0}', space=sflag, size = 0x8, scoped, tag = 'scoped memory for tpu_custom_call.1']
    #allocation6 [shape = 'u8[20480]{0}', space=vmem, size = 0x5000, scoped, tag = 'input window, operand 1, single buffered']
    #allocation7 [shape = 's32[1]{0}', space=sflag, size = 0x4, scoped, tag = 'scoped memory for tpu_custom_call.1']
    #allocation8 [shape = 'u8[131072]{0}', space=vmem, size = 0x20000, scoped, tag = 'input window, operand 3, single buffered']
    #allocation9 [shape = 'u8[131072]{0}', space=vmem, size = 0x20000, scoped, tag = 'input window, operand 5, single buffered']
    #allocation10 [shape = 's32[1]{0}', space=sflag, size = 0x4, scoped, tag = 'scoped memory for tpu_custom_call.1']
    #allocation11 [shape = 'u8[262144]{0}', space=vmem, size = 0x40000, scoped, tag = 'output window, operand 0']
    %12 = vsyncpa [#allocation4], 0
    %s13 = scalar_lea.sflag [#allocation4], 1
    %14 = vsyncpa %s13, 0
    %15 = vsyncpa [#allocation7], 0
    %16 = vsyncpa [#allocation10], 0
    %17 = vsyncpa [#allocation5], 0
    %s18 = scalar_lea.sflag [#allocation5], 1
    %19 = vsyncpa %s18, 0
    loop: start=0, step=1, limit=4
    $region2: #{tpu_custom_call.1} parent=1 // loop_pre_header
      _
    $region3: #{tpu_custom_call.1} parent=1 // loop_header
      %s21 = sphi 0, %s25
      %p22 = scmp.ge.s32.totalorder %s21, 4
      %s31 = sphi 0, %s33
      %s34 = sphi 0, %s31
      %s35 = sphi 0, %s34
      %s51 = sphi 0, %s35
      %s55 = sphi 0, %s55
      %s57 = sphi 0, %s55
      %s58 = sphi 0, %s57
      %s72 = sphi 0, %s58
      %s76 = sphi 0, %s76
      %s78 = sphi 0, %s76
      %s79 = sphi 0, %s78
      %s93 = sphi 0, %s79
      %s97 = sphi 0, %s97
      %s99 = sphi 0, %s97
      %s100 = sphi 0, %s99
      %s114 = sphi 0, %s100
      %s118 = sphi 0, %s118
      %s120 = sphi 0, %s118
      %s121 = sphi 0, %s120
      %s135 = sphi 0, %s121
      %s139 = sphi 0, %s139
      %s141 = sphi 0, %s139
      %s142 = sphi 0, %s141
      %s156 = sphi 0, %s142
      %s160 = sphi 0, %s160
      %s162 = sphi 0, %s160
      %s163 = sphi 0, %s162
      %s177 = sphi 0, %s163
      %s183 = sphi 0, %s185
      %s186 = sphi 0, %s183
      %s187 = sphi 0, %s186
      %s203 = sphi 0, %s187
    $region4: #{tpu_custom_call.1} parent=1 // loop_header_branch
      %24 = sbr.rel (%p22) target = $region8
    $region5: #{tpu_custom_call.1} parent=1 // loop_body
      %s26 = ssub.s32 %s21, 1
      %s27 = ssub.s32 %s21, 2
      %s28 = sadd.s32 %s21, 1
      %s29 = ssub.s32 %s21, %s28
      %p30 = scmp.eq.s32.totalorder %s29, 0
      %s32 = sadd.s32 %s31, 1
      %s33 = scalar_select %p30, %s31, %s32
      %p36 = pneg %p30
      %p37 = scmp.eq.s32.totalorder %s21, 1
      %p38 = por %p36, %p37
      %p39 = scmp.ne.s32.totalorder %s31, %s34
      %p40 = scmp.eq.s32.totalorder %s21, 0
      %p41 = por %p39, %p40
      %p42 = scmp.ne.s32.totalorder %s31, %s34
      %p43 = scmp.eq.s32.totalorder %s26, 1
      %p44 = por %p42, %p43
      %p45 = scmp.ne.s32.totalorder %s34, %s35
      %p46 = scmp.eq.s32.totalorder %s26, 0
      %p47 = por %p45, %p46
      %p48 = scmp.ne.s32.totalorder %s34, %s35
      %p49 = scmp.eq.s32.totalorder %s27, 1
      %p50 = por %p48, %p49
      %p52 = scmp.ne.s32.totalorder %s35, %s51
      %p53 = scmp.eq.s32.totalorder %s27, 0
      %p54 = por %p52, %p53
      %s56 = sadd.s32 %s55, 1
      %p59 = scmp.eq.s32.totalorder %s21, 1
      %p60 = scmp.ne.s32.totalorder %s55, %s57
      %p61 = scmp.eq.s32.totalorder %s21, 0
      %p62 = por %p60, %p61
      %p63 = scmp.ne.s32.totalorder %s55, %s57
      %p64 = scmp.eq.s32.totalorder %s26, 1
      %p65 = por %p63, %p64
      %p66 = scmp.ne.s32.totalorder %s57, %s58
      %p67 = scmp.eq.s32.totalorder %s26, 0
      %p68 = por %p66, %p67
      %p69 = scmp.ne.s32.totalorder %s57, %s58
      %p70 = scmp.eq.s32.totalorder %s27, 1
      %p71 = por %p69, %p70
      %p73 = scmp.ne.s32.totalorder %s58, %s72
      %p74 = scmp.eq.s32.totalorder %s27, 0
      %p75 = por %p73, %p74
      %s77 = sadd.s32 %s76, 1
      %p80 = scmp.eq.s32.totalorder %s21, 1
      %p81 = scmp.ne.s32.totalorder %s76, %s78
      %p82 = scmp.eq.s32.totalorder %s21, 0
      %p83 = por %p81, %p82
      %p84 = scmp.ne.s32.totalorder %s76, %s78
      %p85 = scmp.eq.s32.totalorder %s26, 1
      %p86 = por %p84, %p85
      %p87 = scmp.ne.s32.totalorder %s78, %s79
      %p88 = scmp.eq.s32.totalorder %s26, 0
      %p89 = por %p87, %p88
      %p90 = scmp.ne.s32.totalorder %s78, %s79
      %p91 = scmp.eq.s32.totalorder %s27, 1
      %p92 = por %p90, %p91
      %p94 = scmp.ne.s32.totalorder %s79, %s93
      %p95 = scmp.eq.s32.totalorder %s27, 0
      %p96 = por %p94, %p95
      %s98 = sadd.s32 %s97, 1
      %p101 = scmp.eq.s32.totalorder %s21, 1
      %p102 = scmp.ne.s32.totalorder %s97, %s99
      %p103 = scmp.eq.s32.totalorder %s21, 0
      %p104 = por %p102, %p103
      %p105 = scmp.ne.s32.totalorder %s97, %s99
      %p106 = scmp.eq.s32.totalorder %s26, 1
      %p107 = por %p105, %p106
      %p108 = scmp.ne.s32.totalorder %s99, %s100
      %p109 = scmp.eq.s32.totalorder %s26, 0
      %p110 = por %p108, %p109
      %p111 = scmp.ne.s32.totalorder %s99, %s100
      %p112 = scmp.eq.s32.totalorder %s27, 1
      %p113 = por %p111, %p112
      %p115 = scmp.ne.s32.totalorder %s100, %s114
      %p116 = scmp.eq.s32.totalorder %s27, 0
      %p117 = por %p115, %p116
      %s119 = sadd.s32 %s118, 1
      %p122 = scmp.eq.s32.totalorder %s21, 1
      %p123 = scmp.ne.s32.totalorder %s118, %s120
      %p124 = scmp.eq.s32.totalorder %s21, 0
      %p125 = por %p123, %p124
      %p126 = scmp.ne.s32.totalorder %s118, %s120
      %p127 = scmp.eq.s32.totalorder %s26, 1
      %p128 = por %p126, %p127
      %p129 = scmp.ne.s32.totalorder %s120, %s121
      %p130 = scmp.eq.s32.totalorder %s26, 0
      %p131 = por %p129, %p130
      %p132 = scmp.ne.s32.totalorder %s120, %s121
      %p133 = scmp.eq.s32.totalorder %s27, 1
      %p134 = por %p132, %p133
      %p136 = scmp.ne.s32.totalorder %s121, %s135
      %p137 = scmp.eq.s32.totalorder %s27, 0
      %p138 = por %p136, %p137
      %s140 = sadd.s32 %s139, 1
      %p143 = scmp.eq.s32.totalorder %s21, 1
      %p144 = scmp.ne.s32.totalorder %s139, %s141
      %p145 = scmp.eq.s32.totalorder %s21, 0
      %p146 = por %p144, %p145
      %p147 = scmp.ne.s32.totalorder %s139, %s141
      %p148 = scmp.eq.s32.totalorder %s26, 1
      %p149 = por %p147, %p148
      %p150 = scmp.ne.s32.totalorder %s141, %s142
      %p151 = scmp.eq.s32.totalorder %s26, 0
      %p152 = por %p150, %p151
      %p153 = scmp.ne.s32.totalorder %s141, %s142
      %p154 = scmp.eq.s32.totalorder %s27, 1
      %p155 = por %p153, %p154
      %p157 = scmp.ne.s32.totalorder %s142, %s156
      %p158 = scmp.eq.s32.totalorder %s27, 0
      %p159 = por %p157, %p158
      %s161 = sadd.s32 %s160, 1
      %p164 = scmp.eq.s32.totalorder %s21, 1
      %p165 = scmp.ne.s32.totalorder %s160, %s162
      %p166 = scmp.eq.s32.totalorder %s21, 0
      %p167 = por %p165, %p166
      %p168 = scmp.ne.s32.totalorder %s160, %s162
      %p169 = scmp.eq.s32.totalorder %s26, 1
      %p170 = por %p168, %p169
      %p171 = scmp.ne.s32.totalorder %s162, %s163
      %p172 = scmp.eq.s32.totalorder %s26, 0
      %p173 = por %p171, %p172
      %p174 = scmp.ne.s32.totalorder %s162, %s163
      %p175 = scmp.eq.s32.totalorder %s27, 1
      %p176 = por %p174, %p175
      %p178 = scmp.ne.s32.totalorder %s163, %s177
      %p179 = scmp.eq.s32.totalorder %s27, 0
      %p180 = por %p178, %p179
      %s181 = ssub.s32 %s21, %s28
      %p182 = scmp.eq.s32.totalorder %s181, 0
      %s184 = sadd.s32 %s183, 1
      %s185 = scalar_select %p182, %s183, %s184
      %p188 = pneg %p182
      %p189 = scmp.eq.s32.totalorder %s21, 1
      %p190 = por %p188, %p189
      %p191 = scmp.ne.s32.totalorder %s183, %s186
      %p192 = scmp.eq.s32.totalorder %s21, 0
      %p193 = por %p191, %p192
      %p194 = scmp.ne.s32.totalorder %s183, %s186
      %p195 = scmp.eq.s32.totalorder %s26, 1
      %p196 = por %p194, %p195
      %p197 = scmp.ne.s32.totalorder %s186, %s187
      %p198 = scmp.eq.s32.totalorder %s26, 0
      %p199 = por %p197, %p198
      %p200 = scmp.ne.s32.totalorder %s186, %s187
      %p201 = scmp.eq.s32.totalorder %s27, 1
      %p202 = por %p200, %p201
      %p204 = scmp.ne.s32.totalorder %s187, %s203
      %p205 = scmp.eq.s32.totalorder %s27, 0
      %p206 = por %p204, %p205
      %p207 = scmp.le.s32.totalorder 1, %s21
      %p208 = scmp.lt.s32.totalorder %s21, 3
      %p209 = pnand %p207, %p208
      %p210 = pneg %p209
      // Predicated region
      $region9: #{tpu_custom_call.1} parent=5 // pred_check
        _
      $region10: #{tpu_custom_call.1} parent=5 // pred_check_branch
        %212 = sbr.rel (%p209) target = $region12
      $region11: #{tpu_custom_call.1} parent=5 // pred_region
        %s213 = ssub.s32 %s21, 1
        // Predicated region
        $region13: #{tpu_custom_call.1} parent=11 // pred_check
          %p214 = pneg %p68
        $region14: #{tpu_custom_call.1} parent=11 // pred_check_branch
          %216 = sbr.rel (%p214) target = $region16
        $region15: #{tpu_custom_call.1} parent=11 // pred_region
          %s218 = ssub.s32 640, 640
          %219 = vsyncadd [#allocation7], %s218
          %s220 = sshll.u32 [#allocation6], 4
          %s221 = int_to_ptr.vmem [resolvable:$true] %s220
          %226 = dma.hbm_to_vmem [thread:$0]  %s1, 640, %s221, [#allocation7], 128, 128, 8
        $region16: #{tpu_custom_call.1} parent=11 // pred_fallthru
          _
        // Predicated region
        $region17: #{tpu_custom_call.1} parent=11 // pred_check
          %p227 = pneg %p89
        $region18: #{tpu_custom_call.1} parent=11 // pred_check_branch
          %229 = sbr.rel (%p227) target = $region20
        $region19: #{tpu_custom_call.1} parent=11 // pred_region
          _
        $region20: #{tpu_custom_call.1} parent=11 // pred_fallthru
          _
        // Predicated region
        $region21: #{tpu_custom_call.1} parent=11 // pred_check
          %p230 = pneg %p110
        $region22: #{tpu_custom_call.1} parent=11 // pred_check_branch
          %232 = sbr.rel (%p230) target = $region24
        $region23: #{tpu_custom_call.1} parent=11 // pred_region
          %s234 = ssub.s32 4096, 4096
          %235 = vsyncadd [#allocation7], %s234
          %s236 = sshll.u32 [#allocation8], 4
          %s237 = int_to_ptr.vmem [resolvable:$true] %s236
          %242 = dma.hbm_to_vmem [thread:$0]  %s3, 4096, %s237, [#allocation7], 256, 256, 16
        $region24: #{tpu_custom_call.1} parent=11 // pred_fallthru
          _
        // Predicated region
        $region25: #{tpu_custom_call.1} parent=11 // pred_check
          %p243 = pneg %p131
        $region26: #{tpu_custom_call.1} parent=11 // pred_check_branch
          %245 = sbr.rel (%p243) target = $region28
        $region27: #{tpu_custom_call.1} parent=11 // pred_region
          _
        $region28: #{tpu_custom_call.1} parent=11 // pred_fallthru
          _
        // Predicated region
        $region29: #{tpu_custom_call.1} parent=11 // pred_check
          %p246 = pneg %p152
        $region30: #{tpu_custom_call.1} parent=11 // pred_check_branch
          %248 = sbr.rel (%p246) target = $region32
        $region31: #{tpu_custom_call.1} parent=11 // pred_region
          %s250 = ssub.s32 4096, 4096
          %251 = vsyncadd [#allocation10], %s250
          %s252 = sshll.u32 [#allocation9], 4
          %s253 = int_to_ptr.vmem [resolvable:$true] %s252
          %258 = dma.hbm_to_vmem [thread:$0]  %s5, 4096, %s253, [#allocation10], 64, 64, 4
        $region32: #{tpu_custom_call.1} parent=11 // pred_fallthru
          _
        // Predicated region
        $region33: #{tpu_custom_call.1} parent=11 // pred_check
          %p259 = pneg %p173
        $region34: #{tpu_custom_call.1} parent=11 // pred_check_branch
          %261 = sbr.rel (%p259) target = $region36
        $region35: #{tpu_custom_call.1} parent=11 // pred_region
          _
        $region36: #{tpu_custom_call.1} parent=11 // pred_fallthru
          _
      $region12: #{tpu_custom_call.1} parent=5 // pred_fallthru
        _
      %p262 = scmp.lt.s32.totalorder %s21, 2
      // Predicated region
      $region37: #{tpu_custom_call.1} parent=5 // pred_check
        %p263 = pneg %p262
      $region38: #{tpu_custom_call.1} parent=5 // pred_check_branch
        %265 = sbr.rel (%p263) target = $region40
      $region39: #{tpu_custom_call.1} parent=5 // pred_region
        // Predicated region
        $region41: #{tpu_custom_call.1} parent=39 // pred_check
          %p266 = pneg %p41
        $region42: #{tpu_custom_call.1} parent=39 // pred_check_branch
          %268 = sbr.rel (%p266) target = $region44
        $region43: #{tpu_custom_call.1} parent=39 // pred_region
          %s269 = sand.u32 %s31, 1
          %s270 = scalar_lea.sflag [#allocation4], %s269
          %s271 = sand.u32 %s31, 1
          %s272 = smul.addr %s271, 256
          %s273 = scalar_lea.vmem [#allocation3], %s272
          %s275 = ssub.s32 4096, 4096
          %276 = vsyncadd %s270, %s275
          %s277 = smul.addr %s21, 32
          %s278 = smul.addr %s277, 128
          %s279 = scalar_lea.hbm %s0, %s278
          %s280 = sshll.u32 %s273, 4
          %s281 = int_to_ptr.vmem [resolvable:$true] %s280
          %286 = dma.hbm_to_vmem [thread:$0]  %s279, 4096, %s281, %s270, 128, 128, 8
        $region44: #{tpu_custom_call.1} parent=39 // pred_fallthru
          _
      $region40: #{tpu_custom_call.1} parent=5 // pred_fallthru
        _
      %p287 = scmp.le.s32.totalorder 1, %s21
      %p288 = scmp.lt.s32.totalorder %s21, 3
      %p289 = pnand %p287, %p288
      %p290 = pneg %p289
      // Predicated region
      $region45: #{tpu_custom_call.1} parent=5 // pred_check
        _
      $region46: #{tpu_custom_call.1} parent=5 // pred_check_branch
        %292 = sbr.rel (%p289) target = $region48
      $region47: #{tpu_custom_call.1} parent=5 // pred_region
        %s293 = ssub.s32 %s21, 1
        %s294 = sand.u32 %s34, 1
        %s295 = scalar_lea.sflag [#allocation4], %s294
        %s296 = sand.u32 %s34, 1
        %s297 = smul.addr %s296, 256
        %s298 = scalar_lea.vmem [#allocation3], %s297
        // Predicated region
        $region49: #{tpu_custom_call.1} parent=47 // pred_check
          %p299 = pneg %p47
        $region50: #{tpu_custom_call.1} parent=47 // pred_check_branch
          %301 = sbr.rel (%p299) target = $region52
        $region51: #{tpu_custom_call.1} parent=47 // pred_region
          %302 = dma.done %s295, 4096
        $region52: #{tpu_custom_call.1} parent=47 // pred_fallthru
          _
        // Predicated region
        $region53: #{tpu_custom_call.1} parent=47 // pred_check
          %p303 = pneg %p68
        $region54: #{tpu_custom_call.1} parent=47 // pred_check_branch
          %305 = sbr.rel (%p303) target = $region56
        $region55: #{tpu_custom_call.1} parent=47 // pred_region
          %306 = dma.done [#allocation7], 640
        $region56: #{tpu_custom_call.1} parent=47 // pred_fallthru
          _
        // Predicated region
        $region57: #{tpu_custom_call.1} parent=47 // pred_check
          %p307 = pneg %p110
        $region58: #{tpu_custom_call.1} parent=47 // pred_check_branch
          %309 = sbr.rel (%p307) target = $region60
        $region59: #{tpu_custom_call.1} parent=47 // pred_region
          %310 = dma.done [#allocation7], 4096
        $region60: #{tpu_custom_call.1} parent=47 // pred_fallthru
          _
        // Predicated region
        $region61: #{tpu_custom_call.1} parent=47 // pred_check
          %p311 = pneg %p152
        $region62: #{tpu_custom_call.1} parent=47 // pred_check_branch
          %313 = sbr.rel (%p311) target = $region64
        $region63: #{tpu_custom_call.1} parent=47 // pred_region
          %314 = dma.done [#allocation10], 4096
        $region64: #{tpu_custom_call.1} parent=47 // pred_fallthru
          _
        %s315 = sand.u32 %s34, 1
        %s316 = scalar_lea.sflag [#allocation4], %s315
        %s317 = sand.u32 %s34, 1
        %s318 = smul.addr %s317, 256
        %s319 = scalar_lea.vmem [#allocation3], %s318
        %p320 = pneg %p47
        %p321 = pneg %p44
        %p322 = pneg %p68
        %p323 = pneg %p65
        %p324 = pneg %p89
        %p325 = pneg %p86
        %p326 = pneg %p110
        %p327 = pneg %p107
        %p328 = pneg %p131
        %p329 = pneg %p128
        %p330 = pneg %p152
        %p331 = pneg %p149
        %p332 = pneg %p173
        %p333 = pneg %p170
        %p334 = pneg %p199
        %p335 = pneg %p196
        %s336 = sand.u32 %s186, 1
        %s337 = scalar_lea.sflag [#allocation5], %s336
        %s338 = sand.u32 %s186, 1
        %s339 = smul.addr %s338, 256
        %s340 = scalar_lea.vmem [#allocation11], %s339
        %v342 = vld [vmem:[%s298] sm:$0xff]
        %v343 = vld [vmem:[%s298 + $0x8] sm:$0xff]
        %v344 = vld [vmem:[%s298 + $0x10] sm:$0xff]
        %v345 = vld [vmem:[%s298 + $0x18] sm:$0xff]
        %v346 = vld [vmem:[%s298 + $0x20] sm:$0xff]
        %v347 = vld [vmem:[%s298 + $0x28] sm:$0xff]
        %v348 = vld [vmem:[%s298 + $0x30] sm:$0xff]
        %v349 = vld [vmem:[%s298 + $0x38] sm:$0xff]
        %v350 = vld [vmem:[%s298 + $0x40] sm:$0xff]
        %v351 = vld [vmem:[%s298 + $0x48] sm:$0xff]
        %v352 = vld [vmem:[%s298 + $0x50] sm:$0xff]
        %v353 = vld [vmem:[%s298 + $0x58] sm:$0xff]
        %v354 = vld [vmem:[%s298 + $0x60] sm:$0xff]
        %v355 = vld [vmem:[%s298 + $0x68] sm:$0xff]
        %v356 = vld [vmem:[%s298 + $0x70] sm:$0xff]
        %v357 = vld [vmem:[%s298 + $0x78] sm:$0xff]
        %v358 = vld [vmem:[%s298 + $0x80] sm:$0xff]
        %v359 = vld [vmem:[%s298 + $0x88] sm:$0xff]
        %v360 = vld [vmem:[%s298 + $0x90] sm:$0xff]
        %v361 = vld [vmem:[%s298 + $0x98] sm:$0xff]
        %v362 = vld [vmem:[%s298 + $0xa0] sm:$0xff]
        %v363 = vld [vmem:[%s298 + $0xa8] sm:$0xff]
        %v364 = vld [vmem:[%s298 + $0xb0] sm:$0xff]
        %v365 = vld [vmem:[%s298 + $0xb8] sm:$0xff]
        %v366 = vld [vmem:[%s298 + $0xc0] sm:$0xff]
        %v367 = vld [vmem:[%s298 + $0xc8] sm:$0xff]
        %v368 = vld [vmem:[%s298 + $0xd0] sm:$0xff]
        %v369 = vld [vmem:[%s298 + $0xd8] sm:$0xff]
        %v370 = vld [vmem:[%s298 + $0xe0] sm:$0xff]
        %v371 = vld [vmem:[%s298 + $0xe8] sm:$0xff]
        %v372 = vld [vmem:[%s298 + $0xf0] sm:$0xff]
        %v373 = vld [vmem:[%s298 + $0xf8] sm:$0xff]
        %374 = vst [vmem:[#allocation2] sm:$0xff] 0.0
        %375 = vst [vmem:[#allocation2 + $0x8] sm:$0xff] 0.0
        %376 = vst [vmem:[#allocation2 + $0x10] sm:$0xf] 0.0
        %377 = vst [vmem:[#allocation2 + $0x18] sm:$0xff] 0.0
        %378 = vst [vmem:[#allocation2 + $0x20] sm:$0xff] 0.0
        %379 = vst [vmem:[#allocation2 + $0x28] sm:$0xf] 0.0
        %380 = vst [vmem:[#allocation2 + $0x30] sm:$0xff] 0.0
        %381 = vst [vmem:[#allocation2 + $0x38] sm:$0xff] 0.0
        %382 = vst [vmem:[#allocation2 + $0x40] sm:$0xf] 0.0
        %383 = vst [vmem:[#allocation2 + $0x48] sm:$0xff] 0.0
        %384 = vst [vmem:[#allocation2 + $0x50] sm:$0xff] 0.0
        %385 = vst [vmem:[#allocation2 + $0x58] sm:$0xf] 0.0
        %386 = vst [vmem:[#allocation2 + $0x60] sm:$0xff] 0.0
        %387 = vst [vmem:[#allocation2 + $0x68] sm:$0xff] 0.0
        %388 = vst [vmem:[#allocation2 + $0x70] sm:$0xf] 0.0
        %389 = vst [vmem:[#allocation2 + $0x78] sm:$0xff] 0.0
        %390 = vst [vmem:[#allocation2 + $0x80] sm:$0xff] 0.0
        %391 = vst [vmem:[#allocation2 + $0x88] sm:$0xf] 0.0
        %392 = vst [vmem:[#allocation2 + $0x90] sm:$0xff] 0.0
        %393 = vst [vmem:[#allocation2 + $0x98] sm:$0xff] 0.0
        %394 = vst [vmem:[#allocation2 + $0xa0] sm:$0xf] 0.0
        %395 = vst [vmem:[#allocation2 + $0xa8] sm:$0xff] 0.0
        %396 = vst [vmem:[#allocation2 + $0xb0] sm:$0xff] 0.0
        %397 = vst [vmem:[#allocation2 + $0xb8] sm:$0xf] 0.0
        %398 = vst [vmem:[#allocation2 + $0xc0] sm:$0xff] 0.0
        %399 = vst [vmem:[#allocation2 + $0xc8] sm:$0xff] 0.0
        %400 = vst [vmem:[#allocation2 + $0xd0] sm:$0xf] 0.0
        %401 = vst [vmem:[#allocation2 + $0xd8] sm:$0xff] 0.0
        %402 = vst [vmem:[#allocation2 + $0xe0] sm:$0xff] 0.0
        %403 = vst [vmem:[#allocation2 + $0xe8] sm:$0xf] 0.0
        %404 = vst [vmem:[#allocation2 + $0xf0] sm:$0xff] 0.0
        %405 = vst [vmem:[#allocation2 + $0xf8] sm:$0xff] 0.0
        %406 = vst [vmem:[#allocation2 + $0x100] sm:$0xf] 0.0
        %407 = vst [vmem:[#allocation2 + $0x108] sm:$0xff] 0.0
        %408 = vst [vmem:[#allocation2 + $0x110] sm:$0xff] 0.0
        %409 = vst [vmem:[#allocation2 + $0x118] sm:$0xf] 0.0
        %410 = vst [vmem:[#allocation2 + $0x120] sm:$0xff] 0.0
        %411 = vst [vmem:[#allocation2 + $0x128] sm:$0xff] 0.0
        %412 = vst [vmem:[#allocation2 + $0x130] sm:$0xf] 0.0
        %413 = vst [vmem:[#allocation2 + $0x138] sm:$0xff] 0.0
        %414 = vst [vmem:[#allocation2 + $0x140] sm:$0xff] 0.0
        %415 = vst [vmem:[#allocation2 + $0x148] sm:$0xf] 0.0
        %416 = vst [vmem:[#allocation2 + $0x150] sm:$0xff] 0.0
        %417 = vst [vmem:[#allocation2 + $0x158] sm:$0xff] 0.0
        %418 = vst [vmem:[#allocation2 + $0x160] sm:$0xf] 0.0
        %419 = vst [vmem:[#allocation2 + $0x168] sm:$0xff] 0.0
        %420 = vst [vmem:[#allocation2 + $0x170] sm:$0xff] 0.0
        %421 = vst [vmem:[#allocation2 + $0x178] sm:$0xf] 0.0
        %422 = vst [vmem:[#allocation2 + $0x180] sm:$0xff] 0.0
        %423 = vst [vmem:[#allocation2 + $0x188] sm:$0xff] 0.0
        %424 = vst [vmem:[#allocation2 + $0x190] sm:$0xf] 0.0
        %425 = vst [vmem:[#allocation2 + $0x198] sm:$0xff] 0.0
        %426 = vst [vmem:[#allocation2 + $0x1a0] sm:$0xff] 0.0
        %427 = vst [vmem:[#allocation2 + $0x1a8] sm:$0xf] 0.0
        %428 = vst [vmem:[#allocation2 + $0x1b0] sm:$0xff] 0.0
        %429 = vst [vmem:[#allocation2 + $0x1b8] sm:$0xff] 0.0
        %430 = vst [vmem:[#allocation2 + $0x1c0] sm:$0xf] 0.0
        %431 = vst [vmem:[#allocation2 + $0x1c8] sm:$0xff] 0.0
        %432 = vst [vmem:[#allocation2 + $0x1d0] sm:$0xff] 0.0
        %433 = vst [vmem:[#allocation2 + $0x1d8] sm:$0xf] 0.0
        %s434 = scalar_lea.vmem [#allocation2], 48
        %435 = vst [vmem:[%s434 + $0x2] sm:$0xff] %v342
        %436 = vst [vmem:[%s434 + $0xa] sm:$0xff] %v343
        %437 = vst [vmem:[%s434 + $0x1a] sm:$0xff] %v344
        %438 = vst [vmem:[%s434 + $0x22] sm:$0xff] %v345
        %439 = vst [vmem:[%s434 + $0x32] sm:$0xff] %v346
        %440 = vst [vmem:[%s434 + $0x3a] sm:$0xff] %v347
        %441 = vst [vmem:[%s434 + $0x4a] sm:$0xff] %v348
        %442 = vst [vmem:[%s434 + $0x52] sm:$0xff] %v349
        %443 = vst [vmem:[%s434 + $0x62] sm:$0xff] %v350
        %444 = vst [vmem:[%s434 + $0x6a] sm:$0xff] %v351
        %445 = vst [vmem:[%s434 + $0x7a] sm:$0xff] %v352
        %446 = vst [vmem:[%s434 + $0x82] sm:$0xff] %v353
        %447 = vst [vmem:[%s434 + $0x92] sm:$0xff] %v354
        %448 = vst [vmem:[%s434 + $0x9a] sm:$0xff] %v355
        %449 = vst [vmem:[%s434 + $0xaa] sm:$0xff] %v356
        %450 = vst [vmem:[%s434 + $0xb2] sm:$0xff] %v357
        %451 = vst [vmem:[%s434 + $0xc2] sm:$0xff] %v358
        %452 = vst [vmem:[%s434 + $0xca] sm:$0xff] %v359
        %453 = vst [vmem:[%s434 + $0xda] sm:$0xff] %v360
        %454 = vst [vmem:[%s434 + $0xe2] sm:$0xff] %v361
        %455 = vst [vmem:[%s434 + $0xf2] sm:$0xff] %v362
        %456 = vst [vmem:[%s434 + $0xfa] sm:$0xff] %v363
        %457 = vst [vmem:[%s434 + $0x10a] sm:$0xff] %v364
        %458 = vst [vmem:[%s434 + $0x112] sm:$0xff] %v365
        %459 = vst [vmem:[%s434 + $0x122] sm:$0xff] %v366
        %460 = vst [vmem:[%s434 + $0x12a] sm:$0xff] %v367
        %461 = vst [vmem:[%s434 + $0x13a] sm:$0xff] %v368
        %462 = vst [vmem:[%s434 + $0x142] sm:$0xff] %v369
        %463 = vst [vmem:[%s434 + $0x152] sm:$0xff] %v370
        %464 = vst [vmem:[%s434 + $0x15a] sm:$0xff] %v371
        %465 = vst [vmem:[%s434 + $0x16a] sm:$0xff] %v372
        %466 = vst [vmem:[%s434 + $0x172] sm:$0xff] %v373
        %v467 = vld [vmem:[#allocation6] sm:$0x1f]
        %v468 = vld [vmem:[#allocation6 + $0x8] sm:$0x1f]
        %v469 = vld [vmem:[#allocation6 + $0x10] sm:$0x1f]
        %v470 = vld [vmem:[#allocation6 + $0x18] sm:$0x1f]
        %v471 = vld [vmem:[#allocation6 + $0x20] sm:$0x1f]
        %v472 = vld [vmem:[#allocation2] sm:$0xff]
        %v473 = vld [vmem:[#allocation2 + $0x8] sm:$0xff]
        %v474 = vld [vmem:[#allocation2 + $0x18] sm:$0xff]
        %v475 = vld [vmem:[#allocation2 + $0x20] sm:$0xff]
        %v476 = vld [vmem:[#allocation2 + $0x30] sm:$0xff]
        %v477 = vld [vmem:[#allocation2 + $0x38] sm:$0xff]
        %v478 = vld [vmem:[#allocation2 + $0x48] sm:$0xff]
        %v479 = vld [vmem:[#allocation2 + $0x50] sm:$0xff]
        %v480 = vld [vmem:[#allocation2 + $0x60] sm:$0xff]
        %v481 = vld [vmem:[#allocation2 + $0x68] sm:$0xff]
        %v482 = vld [vmem:[#allocation2 + $0x78] sm:$0xff]
        %v483 = vld [vmem:[#allocation2 + $0x80] sm:$0xff]
        %v484 = vld [vmem:[#allocation2 + $0x90] sm:$0xff]
        %v485 = vld [vmem:[#allocation2 + $0x98] sm:$0xff]
        %v486 = vld [vmem:[#allocation2 + $0xa8] sm:$0xff]
        %v487 = vld [vmem:[#allocation2 + $0xb0] sm:$0xff]
        %v488 = vld [vmem:[#allocation2 + $0xc0] sm:$0xff]
        %v489 = vld [vmem:[#allocation2 + $0xc8] sm:$0xff]
        %v490 = vld [vmem:[#allocation2 + $0xd8] sm:$0xff]
        %v491 = vld [vmem:[#allocation2 + $0xe0] sm:$0xff]
        %v492 = vld [vmem:[#allocation2 + $0xf0] sm:$0xff]
        %v493 = vld [vmem:[#allocation2 + $0xf8] sm:$0xff]
        %v494 = vld [vmem:[#allocation2 + $0x108] sm:$0xff]
        %v495 = vld [vmem:[#allocation2 + $0x110] sm:$0xff]
        %v496 = vld [vmem:[#allocation2 + $0x120] sm:$0xff]
        %v497 = vld [vmem:[#allocation2 + $0x128] sm:$0xff]
        %v498 = vld [vmem:[#allocation2 + $0x138] sm:$0xff]
        %v499 = vld [vmem:[#allocation2 + $0x140] sm:$0xff]
        %v500 = vld [vmem:[#allocation2 + $0x150] sm:$0xff]
        %v501 = vld [vmem:[#allocation2 + $0x158] sm:$0xff]
        %v502 = vld [vmem:[#allocation2 + $0x168] sm:$0xff]
        %v503 = vld [vmem:[#allocation2 + $0x170] sm:$0xff]
        %v504 = vld [vmem:[#allocation2 + $0x180] sm:$0xff]
        %v505 = vld [vmem:[#allocation2 + $0x188] sm:$0xff]
        %v506 = vld [vmem:[#allocation2 + $0x198] sm:$0xff]
        %v507 = vld [vmem:[#allocation2 + $0x1a0] sm:$0xff]
        %v508 = vld [vmem:[#allocation2 + $0x1b0] sm:$0xff]
        %v509 = vld [vmem:[#allocation2 + $0x1b8] sm:$0xff]
        %v510 = vld [vmem:[#allocation2 + $0x1c8] sm:$0xff]
        %v511 = vld [vmem:[#allocation2 + $0x1d0] sm:$0xff]
        %v512 = vlaneseq
        %v513 = vshrl.u32 %v512, 7
        %v514 = vsub.s32 0, %v513
        %v515 = vrot.slane %v467, %v514
        %v516 = vmul.f32 %v472, %v515
        %v517 = vmul.f32 %v473, %v515
        %v518 = vmul.f32 %v474, %v515
        %v519 = vmul.f32 %v475, %v515
        %v520 = vmul.f32 %v476, %v515
        %v521 = vmul.f32 %v477, %v515
        %v522 = vmul.f32 %v478, %v515
        %v523 = vmul.f32 %v479, %v515
        %v524 = vmul.f32 %v480, %v515
        %v525 = vmul.f32 %v481, %v515
        %v526 = vmul.f32 %v482, %v515
        %v527 = vmul.f32 %v483, %v515
        %v528 = vmul.f32 %v484, %v515
        %v529 = vmul.f32 %v485, %v515
        %v530 = vmul.f32 %v486, %v515
        %v531 = vmul.f32 %v487, %v515
        %v532 = vmul.f32 %v488, %v515
        %v533 = vmul.f32 %v489, %v515
        %v534 = vmul.f32 %v490, %v515
        %v535 = vmul.f32 %v491, %v515
        %v536 = vmul.f32 %v492, %v515
        %v537 = vmul.f32 %v493, %v515
        %v538 = vmul.f32 %v494, %v515
        %v539 = vmul.f32 %v495, %v515
        %v540 = vmul.f32 %v496, %v515
        %v541 = vmul.f32 %v497, %v515
        %v542 = vmul.f32 %v498, %v515
        %v543 = vmul.f32 %v499, %v515
        %v544 = vmul.f32 %v500, %v515
        %v545 = vmul.f32 %v501, %v515
        %v546 = vmul.f32 %v502, %v515
        %v547 = vmul.f32 %v503, %v515
        %v548 = vadd.f32 %v516, 0.0
        %v549 = vadd.f32 %v517, 0.0
        %v550 = vadd.f32 %v518, 0.0
        %v551 = vadd.f32 %v519, 0.0
        %v552 = vadd.f32 %v520, 0.0
        %v553 = vadd.f32 %v521, 0.0
        %v554 = vadd.f32 %v522, 0.0
        %v555 = vadd.f32 %v523, 0.0
        %v556 = vadd.f32 %v524, 0.0
        %v557 = vadd.f32 %v525, 0.0
        %v558 = vadd.f32 %v526, 0.0
        %v559 = vadd.f32 %v527, 0.0
        %v560 = vadd.f32 %v528, 0.0
        %v561 = vadd.f32 %v529, 0.0
        %v562 = vadd.f32 %v530, 0.0
        %v563 = vadd.f32 %v531, 0.0
        %v564 = vadd.f32 %v532, 0.0
        %v565 = vadd.f32 %v533, 0.0
        %v566 = vadd.f32 %v534, 0.0
        %v567 = vadd.f32 %v535, 0.0
        %v568 = vadd.f32 %v536, 0.0
        %v569 = vadd.f32 %v537, 0.0
        %v570 = vadd.f32 %v538, 0.0
        %v571 = vadd.f32 %v539, 0.0
        %v572 = vadd.f32 %v540, 0.0
        %v573 = vadd.f32 %v541, 0.0
        %v574 = vadd.f32 %v542, 0.0
        %v575 = vadd.f32 %v543, 0.0
        %v576 = vadd.f32 %v544, 0.0
        %v577 = vadd.f32 %v545, 0.0
        %v578 = vadd.f32 %v546, 0.0
        %v579 = vadd.f32 %v547, 0.0
        %v580 = vlaneseq
        %v581 = vshrl.u32 %v580, 7
        %v582 = vsub.s32 0, %v581
        %v583 = vrot.slane %v468, %v582
        %v584 = vmul.f32 %v474, %v583
        %v585 = vmul.f32 %v475, %v583
        %v586 = vmul.f32 %v476, %v583
        %v587 = vmul.f32 %v477, %v583
        %v588 = vmul.f32 %v478, %v583
        %v589 = vmul.f32 %v479, %v583
        %v590 = vmul.f32 %v480, %v583
        %v591 = vmul.f32 %v481, %v583
        %v592 = vmul.f32 %v482, %v583
        %v593 = vmul.f32 %v483, %v583
        %v594 = vmul.f32 %v484, %v583
        %v595 = vmul.f32 %v485, %v583
        %v596 = vmul.f32 %v486, %v583
        %v597 = vmul.f32 %v487, %v583
        %v598 = vmul.f32 %v488, %v583
        %v599 = vmul.f32 %v489, %v583
        %v600 = vmul.f32 %v490, %v583
        %v601 = vmul.f32 %v491, %v583
        %v602 = vmul.f32 %v492, %v583
        %v603 = vmul.f32 %v493, %v583
        %v604 = vmul.f32 %v494, %v583
        %v605 = vmul.f32 %v495, %v583
        %v606 = vmul.f32 %v496, %v583
        %v607 = vmul.f32 %v497, %v583
        %v608 = vmul.f32 %v498, %v583
        %v609 = vmul.f32 %v499, %v583
        %v610 = vmul.f32 %v500, %v583
        %v611 = vmul.f32 %v501, %v583
        %v612 = vmul.f32 %v502, %v583
        %v613 = vmul.f32 %v503, %v583
        %v614 = vmul.f32 %v504, %v583
        %v615 = vmul.f32 %v505, %v583
        %v616 = vadd.f32 %v548, %v584
        %v617 = vadd.f32 %v549, %v585
        %v618 = vadd.f32 %v550, %v586
        %v619 = vadd.f32 %v551, %v587
        %v620 = vadd.f32 %v552, %v588
        %v621 = vadd.f32 %v553, %v589
        %v622 = vadd.f32 %v554, %v590
        %v623 = vadd.f32 %v555, %v591
        %v624 = vadd.f32 %v556, %v592
        %v625 = vadd.f32 %v557, %v593
        %v626 = vadd.f32 %v558, %v594
        %v627 = vadd.f32 %v559, %v595
        %v628 = vadd.f32 %v560, %v596
        %v629 = vadd.f32 %v561, %v597
        %v630 = vadd.f32 %v562, %v598
        %v631 = vadd.f32 %v563, %v599
        %v632 = vadd.f32 %v564, %v600
        %v633 = vadd.f32 %v565, %v601
        %v634 = vadd.f32 %v566, %v602
        %v635 = vadd.f32 %v567, %v603
        %v636 = vadd.f32 %v568, %v604
        %v637 = vadd.f32 %v569, %v605
        %v638 = vadd.f32 %v570, %v606
        %v639 = vadd.f32 %v571, %v607
        %v640 = vadd.f32 %v572, %v608
        %v641 = vadd.f32 %v573, %v609
        %v642 = vadd.f32 %v574, %v610
        %v643 = vadd.f32 %v575, %v611
        %v644 = vadd.f32 %v576, %v612
        %v645 = vadd.f32 %v577, %v613
        %v646 = vadd.f32 %v578, %v614
        %v647 = vadd.f32 %v579, %v615
        %v648 = vlaneseq
        %v649 = vshrl.u32 %v648, 7
        %v650 = vsub.s32 0, %v649
        %v651 = vrot.slane %v469, %v650
        %v652 = vmul.f32 %v476, %v651
        %v653 = vmul.f32 %v477, %v651
        %v654 = vmul.f32 %v478, %v651
        %v655 = vmul.f32 %v479, %v651
        %v656 = vmul.f32 %v480, %v651
        %v657 = vmul.f32 %v481, %v651
        %v658 = vmul.f32 %v482, %v651
        %v659 = vmul.f32 %v483, %v651
        %v660 = vmul.f32 %v484, %v651
        %v661 = vmul.f32 %v485, %v651
        %v662 = vmul.f32 %v486, %v651
        %v663 = vmul.f32 %v487, %v651
        %v664 = vmul.f32 %v488, %v651
        %v665 = vmul.f32 %v489, %v651
        %v666 = vmul.f32 %v490, %v651
        %v667 = vmul.f32 %v491, %v651
        %v668 = vmul.f32 %v492, %v651
        %v669 = vmul.f32 %v493, %v651
        %v670 = vmul.f32 %v494, %v651
        %v671 = vmul.f32 %v495, %v651
        %v672 = vmul.f32 %v496, %v651
        %v673 = vmul.f32 %v497, %v651
        %v674 = vmul.f32 %v498, %v651
        %v675 = vmul.f32 %v499, %v651
        %v676 = vmul.f32 %v500, %v651
        %v677 = vmul.f32 %v501, %v651
        %v678 = vmul.f32 %v502, %v651
        %v679 = vmul.f32 %v503, %v651
        %v680 = vmul.f32 %v504, %v651
        %v681 = vmul.f32 %v505, %v651
        %v682 = vmul.f32 %v506, %v651
        %v683 = vmul.f32 %v507, %v651
        %v684 = vadd.f32 %v616, %v652
        %v685 = vadd.f32 %v617, %v653
        %v686 = vadd.f32 %v618, %v654
        %v687 = vadd.f32 %v619, %v655
        %v688 = vadd.f32 %v620, %v656
        %v689 = vadd.f32 %v621, %v657
        %v690 = vadd.f32 %v622, %v658
        %v691 = vadd.f32 %v623, %v659
        %v692 = vadd.f32 %v624, %v660
        %v693 = vadd.f32 %v625, %v661
        %v694 = vadd.f32 %v626, %v662
        %v695 = vadd.f32 %v627, %v663
        %v696 = vadd.f32 %v628, %v664
        %v697 = vadd.f32 %v629, %v665
        %v698 = vadd.f32 %v630, %v666
        %v699 = vadd.f32 %v631, %v667
        %v700 = vadd.f32 %v632, %v668
        %v701 = vadd.f32 %v633, %v669
        %v702 = vadd.f32 %v634, %v670
        %v703 = vadd.f32 %v635, %v671
        %v704 = vadd.f32 %v636, %v672
        %v705 = vadd.f32 %v637, %v673
        %v706 = vadd.f32 %v638, %v674
        %v707 = vadd.f32 %v639, %v675
        %v708 = vadd.f32 %v640, %v676
        %v709 = vadd.f32 %v641, %v677
        %v710 = vadd.f32 %v642, %v678
        %v711 = vadd.f32 %v643, %v679
        %v712 = vadd.f32 %v644, %v680
        %v713 = vadd.f32 %v645, %v681
        %v714 = vadd.f32 %v646, %v682
        %v715 = vadd.f32 %v647, %v683
        %v716 = vlaneseq
        %v717 = vshrl.u32 %v716, 7
        %v718 = vsub.s32 0, %v717
        %v719 = vrot.slane %v470, %v718
        %v720 = vmul.f32 %v478, %v719
        %v721 = vmul.f32 %v479, %v719
        %v722 = vmul.f32 %v480, %v719
        %v723 = vmul.f32 %v481, %v719
        %v724 = vmul.f32 %v482, %v719
        %v725 = vmul.f32 %v483, %v719
        %v726 = vmul.f32 %v484, %v719
        %v727 = vmul.f32 %v485, %v719
        %v728 = vmul.f32 %v486, %v719
        %v729 = vmul.f32 %v487, %v719
        %v730 = vmul.f32 %v488, %v719
        %v731 = vmul.f32 %v489, %v719
        %v732 = vmul.f32 %v490, %v719
        %v733 = vmul.f32 %v491, %v719
        %v734 = vmul.f32 %v492, %v719
        %v735 = vmul.f32 %v493, %v719
        %v736 = vmul.f32 %v494, %v719
        %v737 = vmul.f32 %v495, %v719
        %v738 = vmul.f32 %v496, %v719
        %v739 = vmul.f32 %v497, %v719
        %v740 = vmul.f32 %v498, %v719
        %v741 = vmul.f32 %v499, %v719
        %v742 = vmul.f32 %v500, %v719
        %v743 = vmul.f32 %v501, %v719
        %v744 = vmul.f32 %v502, %v719
        %v745 = vmul.f32 %v503, %v719
        %v746 = vmul.f32 %v504, %v719
        %v747 = vmul.f32 %v505, %v719
        %v748 = vmul.f32 %v506, %v719
        %v749 = vmul.f32 %v507, %v719
        %v750 = vmul.f32 %v508, %v719
        %v751 = vmul.f32 %v509, %v719
        %v752 = vadd.f32 %v684, %v720
        %v753 = vadd.f32 %v685, %v721
        %v754 = vadd.f32 %v686, %v722
        %v755 = vadd.f32 %v687, %v723
        %v756 = vadd.f32 %v688, %v724
        %v757 = vadd.f32 %v689, %v725
        %v758 = vadd.f32 %v690, %v726
        %v759 = vadd.f32 %v691, %v727
        %v760 = vadd.f32 %v692, %v728
        %v761 = vadd.f32 %v693, %v729
        %v762 = vadd.f32 %v694, %v730
        %v763 = vadd.f32 %v695, %v731
        %v764 = vadd.f32 %v696, %v732
        %v765 = vadd.f32 %v697, %v733
        %v766 = vadd.f32 %v698, %v734
        %v767 = vadd.f32 %v699, %v735
        %v768 = vadd.f32 %v700, %v736
        %v769 = vadd.f32 %v701, %v737
        %v770 = vadd.f32 %v702, %v738
        %v771 = vadd.f32 %v703, %v739
        %v772 = vadd.f32 %v704, %v740
        %v773 = vadd.f32 %v705, %v741
        %v774 = vadd.f32 %v706, %v742
        %v775 = vadd.f32 %v707, %v743
        %v776 = vadd.f32 %v708, %v744
        %v777 = vadd.f32 %v709, %v745
        %v778 = vadd.f32 %v710, %v746
        %v779 = vadd.f32 %v711, %v747
        %v780 = vadd.f32 %v712, %v748
        %v781 = vadd.f32 %v713, %v749
        %v782 = vadd.f32 %v714, %v750
        %v783 = vadd.f32 %v715, %v751
        %v784 = vlaneseq
        %v785 = vshrl.u32 %v784, 7
        %v786 = vsub.s32 0, %v785
        %v787 = vrot.slane %v471, %v786
        %v788 = vmul.f32 %v480, %v787
        %v789 = vmul.f32 %v481, %v787
        %v790 = vmul.f32 %v482, %v787
        %v791 = vmul.f32 %v483, %v787
        %v792 = vmul.f32 %v484, %v787
        %v793 = vmul.f32 %v485, %v787
        %v794 = vmul.f32 %v486, %v787
        %v795 = vmul.f32 %v487, %v787
        %v796 = vmul.f32 %v488, %v787
        %v797 = vmul.f32 %v489, %v787
        %v798 = vmul.f32 %v490, %v787
        %v799 = vmul.f32 %v491, %v787
        %v800 = vmul.f32 %v492, %v787
        %v801 = vmul.f32 %v493, %v787
        %v802 = vmul.f32 %v494, %v787
        %v803 = vmul.f32 %v495, %v787
        %v804 = vmul.f32 %v496, %v787
        %v805 = vmul.f32 %v497, %v787
        %v806 = vmul.f32 %v498, %v787
        %v807 = vmul.f32 %v499, %v787
        %v808 = vmul.f32 %v500, %v787
        %v809 = vmul.f32 %v501, %v787
        %v810 = vmul.f32 %v502, %v787
        %v811 = vmul.f32 %v503, %v787
        %v812 = vmul.f32 %v504, %v787
        %v813 = vmul.f32 %v505, %v787
        %v814 = vmul.f32 %v506, %v787
        %v815 = vmul.f32 %v507, %v787
        %v816 = vmul.f32 %v508, %v787
        %v817 = vmul.f32 %v509, %v787
        %v818 = vmul.f32 %v510, %v787
        %v819 = vmul.f32 %v511, %v787
        %v820 = vadd.f32 %v752, %v788
        %v821 = vadd.f32 %v753, %v789
        %v822 = vadd.f32 %v754, %v790
        %v823 = vadd.f32 %v755, %v791
        %v824 = vadd.f32 %v756, %v792
        %v825 = vadd.f32 %v757, %v793
        %v826 = vadd.f32 %v758, %v794
        %v827 = vadd.f32 %v759, %v795
        %v828 = vadd.f32 %v760, %v796
        %v829 = vadd.f32 %v761, %v797
        %v830 = vadd.f32 %v762, %v798
        %v831 = vadd.f32 %v763, %v799
        %v832 = vadd.f32 %v764, %v800
        %v833 = vadd.f32 %v765, %v801
        %v834 = vadd.f32 %v766, %v802
        %v835 = vadd.f32 %v767, %v803
        %v836 = vadd.f32 %v768, %v804
        %v837 = vadd.f32 %v769, %v805
        %v838 = vadd.f32 %v770, %v806
        %v839 = vadd.f32 %v771, %v807
        %v840 = vadd.f32 %v772, %v808
        %v841 = vadd.f32 %v773, %v809
        %v842 = vadd.f32 %v774, %v810
        %v843 = vadd.f32 %v775, %v811
        %v844 = vadd.f32 %v776, %v812
        %v845 = vadd.f32 %v777, %v813
        %v846 = vadd.f32 %v778, %v814
        %v847 = vadd.f32 %v779, %v815
        %v848 = vadd.f32 %v780, %v816
        %v849 = vadd.f32 %v781, %v817
        %v850 = vadd.f32 %v782, %v818
        %v851 = vadd.f32 %v783, %v819
        %v852 = vld [vmem:[#allocation2 + $0x1] sm:$0xff]
        %v853 = vld [vmem:[#allocation2 + $0x9] sm:$0xff]
        %v854 = vld [vmem:[#allocation2 + $0x19] sm:$0xff]
        %v855 = vld [vmem:[#allocation2 + $0x21] sm:$0xff]
        %v856 = vld [vmem:[#allocation2 + $0x31] sm:$0xff]
        %v857 = vld [vmem:[#allocation2 + $0x39] sm:$0xff]
        %v858 = vld [vmem:[#allocation2 + $0x49] sm:$0xff]
        %v859 = vld [vmem:[#allocation2 + $0x51] sm:$0xff]
        %v860 = vld [vmem:[#allocation2 + $0x61] sm:$0xff]
        %v861 = vld [vmem:[#allocation2 + $0x69] sm:$0xff]
        %v862 = vld [vmem:[#allocation2 + $0x79] sm:$0xff]
        %v863 = vld [vmem:[#allocation2 + $0x81] sm:$0xff]
        %v864 = vld [vmem:[#allocation2 + $0x91] sm:$0xff]
        %v865 = vld [vmem:[#allocation2 + $0x99] sm:$0xff]
        %v866 = vld [vmem:[#allocation2 + $0xa9] sm:$0xff]
        %v867 = vld [vmem:[#allocation2 + $0xb1] sm:$0xff]
        %v868 = vld [vmem:[#allocation2 + $0xc1] sm:$0xff]
        %v869 = vld [vmem:[#allocation2 + $0xc9] sm:$0xff]
        %v870 = vld [vmem:[#allocation2 + $0xd9] sm:$0xff]
        %v871 = vld [vmem:[#allocation2 + $0xe1] sm:$0xff]
        %v872 = vld [vmem:[#allocation2 + $0xf1] sm:$0xff]
        %v873 = vld [vmem:[#allocation2 + $0xf9] sm:$0xff]
        %v874 = vld [vmem:[#allocation2 + $0x109] sm:$0xff]
        %v875 = vld [vmem:[#allocation2 + $0x111] sm:$0xff]
        %v876 = vld [vmem:[#allocation2 + $0x121] sm:$0xff]
        %v877 = vld [vmem:[#allocation2 + $0x129] sm:$0xff]
        %v878 = vld [vmem:[#allocation2 + $0x139] sm:$0xff]
        %v879 = vld [vmem:[#allocation2 + $0x141] sm:$0xff]
        %v880 = vld [vmem:[#allocation2 + $0x151] sm:$0xff]
        %v881 = vld [vmem:[#allocation2 + $0x159] sm:$0xff]
        %v882 = vld [vmem:[#allocation2 + $0x169] sm:$0xff]
        %v883 = vld [vmem:[#allocation2 + $0x171] sm:$0xff]
        %v884 = vld [vmem:[#allocation2 + $0x181] sm:$0xff]
        %v885 = vld [vmem:[#allocation2 + $0x189] sm:$0xff]
        %v886 = vld [vmem:[#allocation2 + $0x199] sm:$0xff]
        %v887 = vld [vmem:[#allocation2 + $0x1a1] sm:$0xff]
        %v888 = vld [vmem:[#allocation2 + $0x1b1] sm:$0xff]
        %v889 = vld [vmem:[#allocation2 + $0x1b9] sm:$0xff]
        %v890 = vld [vmem:[#allocation2 + $0x1c9] sm:$0xff]
        %v891 = vld [vmem:[#allocation2 + $0x1d1] sm:$0xff]
        %v892 = vlaneseq
        %v893 = vshrl.u32 %v892, 7
        %v894 = vsub.s32 1, %v893
        %v895 = vrot.slane %v467, %v894
        %v896 = vmul.f32 %v852, %v895
        %v897 = vmul.f32 %v853, %v895
        %v898 = vmul.f32 %v854, %v895
        %v899 = vmul.f32 %v855, %v895
        %v900 = vmul.f32 %v856, %v895
        %v901 = vmul.f32 %v857, %v895
        %v902 = vmul.f32 %v858, %v895
        %v903 = vmul.f32 %v859, %v895
        %v904 = vmul.f32 %v860, %v895
        %v905 = vmul.f32 %v861, %v895
        %v906 = vmul.f32 %v862, %v895
        %v907 = vmul.f32 %v863, %v895
        %v908 = vmul.f32 %v864, %v895
        %v909 = vmul.f32 %v865, %v895
        %v910 = vmul.f32 %v866, %v895
        %v911 = vmul.f32 %v867, %v895
        %v912 = vmul.f32 %v868, %v895
        %v913 = vmul.f32 %v869, %v895
        %v914 = vmul.f32 %v870, %v895
        %v915 = vmul.f32 %v871, %v895
        %v916 = vmul.f32 %v872, %v895
        %v917 = vmul.f32 %v873, %v895
        %v918 = vmul.f32 %v874, %v895
        %v919 = vmul.f32 %v875, %v895
        %v920 = vmul.f32 %v876, %v895
        %v921 = vmul.f32 %v877, %v895
        %v922 = vmul.f32 %v878, %v895
        %v923 = vmul.f32 %v879, %v895
        %v924 = vmul.f32 %v880, %v895
        %v925 = vmul.f32 %v881, %v895
        %v926 = vmul.f32 %v882, %v895
        %v927 = vmul.f32 %v883, %v895
        %v928 = vadd.f32 %v820, %v896
        %v929 = vadd.f32 %v821, %v897
        %v930 = vadd.f32 %v822, %v898
        %v931 = vadd.f32 %v823, %v899
        %v932 = vadd.f32 %v824, %v900
        %v933 = vadd.f32 %v825, %v901
        %v934 = vadd.f32 %v826, %v902
        %v935 = vadd.f32 %v827, %v903
        %v936 = vadd.f32 %v828, %v904
        %v937 = vadd.f32 %v829, %v905
        %v938 = vadd.f32 %v830, %v906
        %v939 = vadd.f32 %v831, %v907
        %v940 = vadd.f32 %v832, %v908
        %v941 = vadd.f32 %v833, %v909
        %v942 = vadd.f32 %v834, %v910
        %v943 = vadd.f32 %v835, %v911
        %v944 = vadd.f32 %v836, %v912
        %v945 = vadd.f32 %v837, %v913
        %v946 = vadd.f32 %v838, %v914
        %v947 = vadd.f32 %v839, %v915
        %v948 = vadd.f32 %v840, %v916
        %v949 = vadd.f32 %v841, %v917
        %v950 = vadd.f32 %v842, %v918
        %v951 = vadd.f32 %v843, %v919
        %v952 = vadd.f32 %v844, %v920
        %v953 = vadd.f32 %v845, %v921
        %v954 = vadd.f32 %v846, %v922
        %v955 = vadd.f32 %v847, %v923
        %v956 = vadd.f32 %v848, %v924
        %v957 = vadd.f32 %v849, %v925
        %v958 = vadd.f32 %v850, %v926
        %v959 = vadd.f32 %v851, %v927
        %v960 = vlaneseq
        %v961 = vshrl.u32 %v960, 7
        %v962 = vsub.s32 1, %v961
        %v963 = vrot.slane %v468, %v962
        %v964 = vmul.f32 %v854, %v963
        %v965 = vmul.f32 %v855, %v963
        %v966 = vmul.f32 %v856, %v963
        %v967 = vmul.f32 %v857, %v963
        %v968 = vmul.f32 %v858, %v963
        %v969 = vmul.f32 %v859, %v963
        %v970 = vmul.f32 %v860, %v963
        %v971 = vmul.f32 %v861, %v963
        %v972 = vmul.f32 %v862, %v963
        %v973 = vmul.f32 %v863, %v963
        %v974 = vmul.f32 %v864, %v963
        %v975 = vmul.f32 %v865, %v963
        %v976 = vmul.f32 %v866, %v963
        %v977 = vmul.f32 %v867, %v963
        %v978 = vmul.f32 %v868, %v963
        %v979 = vmul.f32 %v869, %v963
        %v980 = vmul.f32 %v870, %v963
        %v981 = vmul.f32 %v871, %v963
        %v982 = vmul.f32 %v872, %v963
        %v983 = vmul.f32 %v873, %v963
        %v984 = vmul.f32 %v874, %v963
        %v985 = vmul.f32 %v875, %v963
        %v986 = vmul.f32 %v876, %v963
        %v987 = vmul.f32 %v877, %v963
        %v988 = vmul.f32 %v878, %v963
        %v989 = vmul.f32 %v879, %v963
        %v990 = vmul.f32 %v880, %v963
        %v991 = vmul.f32 %v881, %v963
        %v992 = vmul.f32 %v882, %v963
        %v993 = vmul.f32 %v883, %v963
        %v994 = vmul.f32 %v884, %v963
        %v995 = vmul.f32 %v885, %v963
        %v996 = vadd.f32 %v928, %v964
        %v997 = vadd.f32 %v929, %v965
        %v998 = vadd.f32 %v930, %v966
        %v999 = vadd.f32 %v931, %v967
        %v1000 = vadd.f32 %v932, %v968
        %v1001 = vadd.f32 %v933, %v969
        %v1002 = vadd.f32 %v934, %v970
        %v1003 = vadd.f32 %v935, %v971
        %v1004 = vadd.f32 %v936, %v972
        %v1005 = vadd.f32 %v937, %v973
        %v1006 = vadd.f32 %v938, %v974
        %v1007 = vadd.f32 %v939, %v975
        %v1008 = vadd.f32 %v940, %v976
        %v1009 = vadd.f32 %v941, %v977
        %v1010 = vadd.f32 %v942, %v978
        %v1011 = vadd.f32 %v943, %v979
        %v1012 = vadd.f32 %v944, %v980
        %v1013 = vadd.f32 %v945, %v981
        %v1014 = vadd.f32 %v946, %v982
        %v1015 = vadd.f32 %v947, %v983
        %v1016 = vadd.f32 %v948, %v984
        %v1017 = vadd.f32 %v949, %v985
        %v1018 = vadd.f32 %v950, %v986
        %v1019 = vadd.f32 %v951, %v987
        %v1020 = vadd.f32 %v952, %v988
        %v1021 = vadd.f32 %v953, %v989
        %v1022 = vadd.f32 %v954, %v990
        %v1023 = vadd.f32 %v955, %v991
        %v1024 = vadd.f32 %v956, %v992
        %v1025 = vadd.f32 %v957, %v993
        %v1026 = vadd.f32 %v958, %v994
        %v1027 = vadd.f32 %v959, %v995
        %v1028 = vlaneseq
        %v1029 = vshrl.u32 %v1028, 7
        %v1030 = vsub.s32 1, %v1029
        %v1031 = vrot.slane %v469, %v1030
        %v1032 = vmul.f32 %v856, %v1031
        %v1033 = vmul.f32 %v857, %v1031
        %v1034 = vmul.f32 %v858, %v1031
        %v1035 = vmul.f32 %v859, %v1031
        %v1036 = vmul.f32 %v860, %v1031
        %v1037 = vmul.f32 %v861, %v1031
        %v1038 = vmul.f32 %v862, %v1031
        %v1039 = vmul.f32 %v863, %v1031
        %v1040 = vmul.f32 %v864, %v1031
        %v1041 = vmul.f32 %v865, %v1031
        %v1042 = vmul.f32 %v866, %v1031
        %v1043 = vmul.f32 %v867, %v1031
        %v1044 = vmul.f32 %v868, %v1031
        %v1045 = vmul.f32 %v869, %v1031
        %v1046 = vmul.f32 %v870, %v1031
        %v1047 = vmul.f32 %v871, %v1031
        %v1048 = vmul.f32 %v872, %v1031
        %v1049 = vmul.f32 %v873, %v1031
        %v1050 = vmul.f32 %v874, %v1031
        %v1051 = vmul.f32 %v875, %v1031
        %v1052 = vmul.f32 %v876, %v1031
        %v1053 = vmul.f32 %v877, %v1031
        %v1054 = vmul.f32 %v878, %v1031
        %v1055 = vmul.f32 %v879, %v1031
        %v1056 = vmul.f32 %v880, %v1031
        %v1057 = vmul.f32 %v881, %v1031
        %v1058 = vmul.f32 %v882, %v1031
        %v1059 = vmul.f32 %v883, %v1031
        %v1060 = vmul.f32 %v884, %v1031
        %v1061 = vmul.f32 %v885, %v1031
        %v1062 = vmul.f32 %v886, %v1031
        %v1063 = vmul.f32 %v887, %v1031
        %v1064 = vadd.f32 %v996, %v1032
        %v1065 = vadd.f32 %v997, %v1033
        %v1066 = vadd.f32 %v998, %v1034
        %v1067 = vadd.f32 %v999, %v1035
        %v1068 = vadd.f32 %v1000, %v1036
        %v1069 = vadd.f32 %v1001, %v1037
        %v1070 = vadd.f32 %v1002, %v1038
        %v1071 = vadd.f32 %v1003, %v1039
        %v1072 = vadd.f32 %v1004, %v1040
        %v1073 = vadd.f32 %v1005, %v1041
        %v1074 = vadd.f32 %v1006, %v1042
        %v1075 = vadd.f32 %v1007, %v1043
        %v1076 = vadd.f32 %v1008, %v1044
        %v1077 = vadd.f32 %v1009, %v1045
        %v1078 = vadd.f32 %v1010, %v1046
        %v1079 = vadd.f32 %v1011, %v1047
        %v1080 = vadd.f32 %v1012, %v1048
        %v1081 = vadd.f32 %v1013, %v1049
        %v1082 = vadd.f32 %v1014, %v1050
        %v1083 = vadd.f32 %v1015, %v1051
        %v1084 = vadd.f32 %v1016, %v1052
        %v1085 = vadd.f32 %v1017, %v1053
        %v1086 = vadd.f32 %v1018, %v1054
        %v1087 = vadd.f32 %v1019, %v1055
        %v1088 = vadd.f32 %v1020, %v1056
        %v1089 = vadd.f32 %v1021, %v1057
        %v1090 = vadd.f32 %v1022, %v1058
        %v1091 = vadd.f32 %v1023, %v1059
        %v1092 = vadd.f32 %v1024, %v1060
        %v1093 = vadd.f32 %v1025, %v1061
        %v1094 = vadd.f32 %v1026, %v1062
        %v1095 = vadd.f32 %v1027, %v1063
        %v1096 = vlaneseq
        %v1097 = vshrl.u32 %v1096, 7
        %v1098 = vsub.s32 1, %v1097
        %v1099 = vrot.slane %v470, %v1098
        %v1100 = vmul.f32 %v858, %v1099
        %v1101 = vmul.f32 %v859, %v1099
        %v1102 = vmul.f32 %v860, %v1099
        %v1103 = vmul.f32 %v861, %v1099
        %v1104 = vmul.f32 %v862, %v1099
        %v1105 = vmul.f32 %v863, %v1099
        %v1106 = vmul.f32 %v864, %v1099
        %v1107 = vmul.f32 %v865, %v1099
        %v1108 = vmul.f32 %v866, %v1099
        %v1109 = vmul.f32 %v867, %v1099
        %v1110 = vmul.f32 %v868, %v1099
        %v1111 = vmul.f32 %v869, %v1099
        %v1112 = vmul.f32 %v870, %v1099
        %v1113 = vmul.f32 %v871, %v1099
        %v1114 = vmul.f32 %v872, %v1099
        %v1115 = vmul.f32 %v873, %v1099
        %v1116 = vmul.f32 %v874, %v1099
        %v1117 = vmul.f32 %v875, %v1099
        %v1118 = vmul.f32 %v876, %v1099
        %v1119 = vmul.f32 %v877, %v1099
        %v1120 = vmul.f32 %v878, %v1099
        %v1121 = vmul.f32 %v879, %v1099
        %v1122 = vmul.f32 %v880, %v1099
        %v1123 = vmul.f32 %v881, %v1099
        %v1124 = vmul.f32 %v882, %v1099
        %v1125 = vmul.f32 %v883, %v1099
        %v1126 = vmul.f32 %v884, %v1099
        %v1127 = vmul.f32 %v885, %v1099
        %v1128 = vmul.f32 %v886, %v1099
        %v1129 = vmul.f32 %v887, %v1099
        %v1130 = vmul.f32 %v888, %v1099
        %v1131 = vmul.f32 %v889, %v1099
        %v1132 = vadd.f32 %v1064, %v1100
        %v1133 = vadd.f32 %v1065, %v1101
        %v1134 = vadd.f32 %v1066, %v1102
        %v1135 = vadd.f32 %v1067, %v1103
        %v1136 = vadd.f32 %v1068, %v1104
        %v1137 = vadd.f32 %v1069, %v1105
        %v1138 = vadd.f32 %v1070, %v1106
        %v1139 = vadd.f32 %v1071, %v1107
        %v1140 = vadd.f32 %v1072, %v1108
        %v1141 = vadd.f32 %v1073, %v1109
        %v1142 = vadd.f32 %v1074, %v1110
        %v1143 = vadd.f32 %v1075, %v1111
        %v1144 = vadd.f32 %v1076, %v1112
        %v1145 = vadd.f32 %v1077, %v1113
        %v1146 = vadd.f32 %v1078, %v1114
        %v1147 = vadd.f32 %v1079, %v1115
        %v1148 = vadd.f32 %v1080, %v1116
        %v1149 = vadd.f32 %v1081, %v1117
        %v1150 = vadd.f32 %v1082, %v1118
        %v1151 = vadd.f32 %v1083, %v1119
        %v1152 = vadd.f32 %v1084, %v1120
        %v1153 = vadd.f32 %v1085, %v1121
        %v1154 = vadd.f32 %v1086, %v1122
        %v1155 = vadd.f32 %v1087, %v1123
        %v1156 = vadd.f32 %v1088, %v1124
        %v1157 = vadd.f32 %v1089, %v1125
        %v1158 = vadd.f32 %v1090, %v1126
        %v1159 = vadd.f32 %v1091, %v1127
        %v1160 = vadd.f32 %v1092, %v1128
        %v1161 = vadd.f32 %v1093, %v1129
        %v1162 = vadd.f32 %v1094, %v1130
        %v1163 = vadd.f32 %v1095, %v1131
        %v1164 = vlaneseq
        %v1165 = vshrl.u32 %v1164, 7
        %v1166 = vsub.s32 1, %v1165
        %v1167 = vrot.slane %v471, %v1166
        %v1168 = vmul.f32 %v860, %v1167
        %v1169 = vmul.f32 %v861, %v1167
        %v1170 = vmul.f32 %v862, %v1167
        %v1171 = vmul.f32 %v863, %v1167
        %v1172 = vmul.f32 %v864, %v1167
        %v1173 = vmul.f32 %v865, %v1167
        %v1174 = vmul.f32 %v866, %v1167
        %v1175 = vmul.f32 %v867, %v1167
        %v1176 = vmul.f32 %v868, %v1167
        %v1177 = vmul.f32 %v869, %v1167
        %v1178 = vmul.f32 %v870, %v1167
        %v1179 = vmul.f32 %v871, %v1167
        %v1180 = vmul.f32 %v872, %v1167
        %v1181 = vmul.f32 %v873, %v1167
        %v1182 = vmul.f32 %v874, %v1167
        %v1183 = vmul.f32 %v875, %v1167
        %v1184 = vmul.f32 %v876, %v1167
        %v1185 = vmul.f32 %v877, %v1167
        %v1186 = vmul.f32 %v878, %v1167
        %v1187 = vmul.f32 %v879, %v1167
        %v1188 = vmul.f32 %v880, %v1167
        %v1189 = vmul.f32 %v881, %v1167
        %v1190 = vmul.f32 %v882, %v1167
        %v1191 = vmul.f32 %v883, %v1167
        %v1192 = vmul.f32 %v884, %v1167
        %v1193 = vmul.f32 %v885, %v1167
        %v1194 = vmul.f32 %v886, %v1167
        %v1195 = vmul.f32 %v887, %v1167
        %v1196 = vmul.f32 %v888, %v1167
        %v1197 = vmul.f32 %v889, %v1167
        %v1198 = vmul.f32 %v890, %v1167
        %v1199 = vmul.f32 %v891, %v1167
        %v1200 = vadd.f32 %v1132, %v1168
        %v1201 = vadd.f32 %v1133, %v1169
        %v1202 = vadd.f32 %v1134, %v1170
        %v1203 = vadd.f32 %v1135, %v1171
        %v1204 = vadd.f32 %v1136, %v1172
        %v1205 = vadd.f32 %v1137, %v1173
        %v1206 = vadd.f32 %v1138, %v1174
        %v1207 = vadd.f32 %v1139, %v1175
        %v1208 = vadd.f32 %v1140, %v1176
        %v1209 = vadd.f32 %v1141, %v1177
        %v1210 = vadd.f32 %v1142, %v1178
        %v1211 = vadd.f32 %v1143, %v1179
        %v1212 = vadd.f32 %v1144, %v1180
        %v1213 = vadd.f32 %v1145, %v1181
        %v1214 = vadd.f32 %v1146, %v1182
        %v1215 = vadd.f32 %v1147, %v1183
        %v1216 = vadd.f32 %v1148, %v1184
        %v1217 = vadd.f32 %v1149, %v1185
        %v1218 = vadd.f32 %v1150, %v1186
        %v1219 = vadd.f32 %v1151, %v1187
        %v1220 = vadd.f32 %v1152, %v1188
        %v1221 = vadd.f32 %v1153, %v1189
        %v1222 = vadd.f32 %v1154, %v1190
        %v1223 = vadd.f32 %v1155, %v1191
        %v1224 = vadd.f32 %v1156, %v1192
        %v1225 = vadd.f32 %v1157, %v1193
        %v1226 = vadd.f32 %v1158, %v1194
        %v1227 = vadd.f32 %v1159, %v1195
        %v1228 = vadd.f32 %v1160, %v1196
        %v1229 = vadd.f32 %v1161, %v1197
        %v1230 = vadd.f32 %v1162, %v1198
        %v1231 = vadd.f32 %v1163, %v1199
        %v1232 = vld [vmem:[#allocation2 + $0x2] sm:$0xff]
        %v1233 = vld [vmem:[#allocation2 + $0xa] sm:$0xff]
        %v1234 = vld [vmem:[#allocation2 + $0x1a] sm:$0xff]
        %v1235 = vld [vmem:[#allocation2 + $0x22] sm:$0xff]
        %v1236 = vld [vmem:[#allocation2 + $0x32] sm:$0xff]
        %v1237 = vld [vmem:[#allocation2 + $0x3a] sm:$0xff]
        %v1238 = vld [vmem:[#allocation2 + $0x4a] sm:$0xff]
        %v1239 = vld [vmem:[#allocation2 + $0x52] sm:$0xff]
        %v1240 = vld [vmem:[#allocation2 + $0x62] sm:$0xff]
        %v1241 = vld [vmem:[#allocation2 + $0x6a] sm:$0xff]
        %v1242 = vld [vmem:[#allocation2 + $0x7a] sm:$0xff]
        %v1243 = vld [vmem:[#allocation2 + $0x82] sm:$0xff]
        %v1244 = vld [vmem:[#allocation2 + $0x92] sm:$0xff]
        %v1245 = vld [vmem:[#allocation2 + $0x9a] sm:$0xff]
        %v1246 = vld [vmem:[#allocation2 + $0xaa] sm:$0xff]
        %v1247 = vld [vmem:[#allocation2 + $0xb2] sm:$0xff]
        %v1248 = vld [vmem:[#allocation2 + $0xc2] sm:$0xff]
        %v1249 = vld [vmem:[#allocation2 + $0xca] sm:$0xff]
        %v1250 = vld [vmem:[#allocation2 + $0xda] sm:$0xff]
        %v1251 = vld [vmem:[#allocation2 + $0xe2] sm:$0xff]
        %v1252 = vld [vmem:[#allocation2 + $0xf2] sm:$0xff]
        %v1253 = vld [vmem:[#allocation2 + $0xfa] sm:$0xff]
        %v1254 = vld [vmem:[#allocation2 + $0x10a] sm:$0xff]
        %v1255 = vld [vmem:[#allocation2 + $0x112] sm:$0xff]
        %v1256 = vld [vmem:[#allocation2 + $0x122] sm:$0xff]
        %v1257 = vld [vmem:[#allocation2 + $0x12a] sm:$0xff]
        %v1258 = vld [vmem:[#allocation2 + $0x13a] sm:$0xff]
        %v1259 = vld [vmem:[#allocation2 + $0x142] sm:$0xff]
        %v1260 = vld [vmem:[#allocation2 + $0x152] sm:$0xff]
        %v1261 = vld [vmem:[#allocation2 + $0x15a] sm:$0xff]
        %v1262 = vld [vmem:[#allocation2 + $0x16a] sm:$0xff]
        %v1263 = vld [vmem:[#allocation2 + $0x172] sm:$0xff]
        %v1264 = vld [vmem:[#allocation2 + $0x182] sm:$0xff]
        %v1265 = vld [vmem:[#allocation2 + $0x18a] sm:$0xff]
        %v1266 = vld [vmem:[#allocation2 + $0x19a] sm:$0xff]
        %v1267 = vld [vmem:[#allocation2 + $0x1a2] sm:$0xff]
        %v1268 = vld [vmem:[#allocation2 + $0x1b2] sm:$0xff]
        %v1269 = vld [vmem:[#allocation2 + $0x1ba] sm:$0xff]
        %v1270 = vld [vmem:[#allocation2 + $0x1ca] sm:$0xff]
        %v1271 = vld [vmem:[#allocation2 + $0x1d2] sm:$0xff]
        %v1272 = vlaneseq
        %v1273 = vshrl.u32 %v1272, 7
        %v1274 = vsub.s32 2, %v1273
        %v1275 = vrot.slane %v467, %v1274
        %v1276 = vmul.f32 %v1232, %v1275
        %v1277 = vmul.f32 %v1233, %v1275
        %v1278 = vmul.f32 %v1234, %v1275
        %v1279 = vmul.f32 %v1235, %v1275
        %v1280 = vmul.f32 %v1236, %v1275
        %v1281 = vmul.f32 %v1237, %v1275
        %v1282 = vmul.f32 %v1238, %v1275
        %v1283 = vmul.f32 %v1239, %v1275
        %v1284 = vmul.f32 %v1240, %v1275
        %v1285 = vmul.f32 %v1241, %v1275
        %v1286 = vmul.f32 %v1242, %v1275
        %v1287 = vmul.f32 %v1243, %v1275
        %v1288 = vmul.f32 %v1244, %v1275
        %v1289 = vmul.f32 %v1245, %v1275
        %v1290 = vmul.f32 %v1246, %v1275
        %v1291 = vmul.f32 %v1247, %v1275
        %v1292 = vmul.f32 %v1248, %v1275
        %v1293 = vmul.f32 %v1249, %v1275
        %v1294 = vmul.f32 %v1250, %v1275
        %v1295 = vmul.f32 %v1251, %v1275
        %v1296 = vmul.f32 %v1252, %v1275
        %v1297 = vmul.f32 %v1253, %v1275
        %v1298 = vmul.f32 %v1254, %v1275
        %v1299 = vmul.f32 %v1255, %v1275
        %v1300 = vmul.f32 %v1256, %v1275
        %v1301 = vmul.f32 %v1257, %v1275
        %v1302 = vmul.f32 %v1258, %v1275
        %v1303 = vmul.f32 %v1259, %v1275
        %v1304 = vmul.f32 %v1260, %v1275
        %v1305 = vmul.f32 %v1261, %v1275
        %v1306 = vmul.f32 %v1262, %v1275
        %v1307 = vmul.f32 %v1263, %v1275
        %v1308 = vadd.f32 %v1200, %v1276
        %v1309 = vadd.f32 %v1201, %v1277
        %v1310 = vadd.f32 %v1202, %v1278
        %v1311 = vadd.f32 %v1203, %v1279
        %v1312 = vadd.f32 %v1204, %v1280
        %v1313 = vadd.f32 %v1205, %v1281
        %v1314 = vadd.f32 %v1206, %v1282
        %v1315 = vadd.f32 %v1207, %v1283
        %v1316 = vadd.f32 %v1208, %v1284
        %v1317 = vadd.f32 %v1209, %v1285
        %v1318 = vadd.f32 %v1210, %v1286
        %v1319 = vadd.f32 %v1211, %v1287
        %v1320 = vadd.f32 %v1212, %v1288
        %v1321 = vadd.f32 %v1213, %v1289
        %v1322 = vadd.f32 %v1214, %v1290
        %v1323 = vadd.f32 %v1215, %v1291
        %v1324 = vadd.f32 %v1216, %v1292
        %v1325 = vadd.f32 %v1217, %v1293
        %v1326 = vadd.f32 %v1218, %v1294
        %v1327 = vadd.f32 %v1219, %v1295
        %v1328 = vadd.f32 %v1220, %v1296
        %v1329 = vadd.f32 %v1221, %v1297
        %v1330 = vadd.f32 %v1222, %v1298
        %v1331 = vadd.f32 %v1223, %v1299
        %v1332 = vadd.f32 %v1224, %v1300
        %v1333 = vadd.f32 %v1225, %v1301
        %v1334 = vadd.f32 %v1226, %v1302
        %v1335 = vadd.f32 %v1227, %v1303
        %v1336 = vadd.f32 %v1228, %v1304
        %v1337 = vadd.f32 %v1229, %v1305
        %v1338 = vadd.f32 %v1230, %v1306
        %v1339 = vadd.f32 %v1231, %v1307
        %v1340 = vlaneseq
        %v1341 = vshrl.u32 %v1340, 7
        %v1342 = vsub.s32 2, %v1341
        %v1343 = vrot.slane %v468, %v1342
        %v1344 = vmul.f32 %v1234, %v1343
        %v1345 = vmul.f32 %v1235, %v1343
        %v1346 = vmul.f32 %v1236, %v1343
        %v1347 = vmul.f32 %v1237, %v1343
        %v1348 = vmul.f32 %v1238, %v1343
        %v1349 = vmul.f32 %v1239, %v1343
        %v1350 = vmul.f32 %v1240, %v1343
        %v1351 = vmul.f32 %v1241, %v1343
        %v1352 = vmul.f32 %v1242, %v1343
        %v1353 = vmul.f32 %v1243, %v1343
        %v1354 = vmul.f32 %v1244, %v1343
        %v1355 = vmul.f32 %v1245, %v1343
        %v1356 = vmul.f32 %v1246, %v1343
        %v1357 = vmul.f32 %v1247, %v1343
        %v1358 = vmul.f32 %v1248, %v1343
        %v1359 = vmul.f32 %v1249, %v1343
        %v1360 = vmul.f32 %v1250, %v1343
        %v1361 = vmul.f32 %v1251, %v1343
        %v1362 = vmul.f32 %v1252, %v1343
        %v1363 = vmul.f32 %v1253, %v1343
        %v1364 = vmul.f32 %v1254, %v1343
        %v1365 = vmul.f32 %v1255, %v1343
        %v1366 = vmul.f32 %v1256, %v1343
        %v1367 = vmul.f32 %v1257, %v1343
        %v1368 = vmul.f32 %v1258, %v1343
        %v1369 = vmul.f32 %v1259, %v1343
        %v1370 = vmul.f32 %v1260, %v1343
        %v1371 = vmul.f32 %v1261, %v1343
        %v1372 = vmul.f32 %v1262, %v1343
        %v1373 = vmul.f32 %v1263, %v1343
        %v1374 = vmul.f32 %v1264, %v1343
        %v1375 = vmul.f32 %v1265, %v1343
        %v1376 = vadd.f32 %v1308, %v1344
        %v1377 = vadd.f32 %v1309, %v1345
        %v1378 = vadd.f32 %v1310, %v1346
        %v1379 = vadd.f32 %v1311, %v1347
        %v1380 = vadd.f32 %v1312, %v1348
        %v1381 = vadd.f32 %v1313, %v1349
        %v1382 = vadd.f32 %v1314, %v1350
        %v1383 = vadd.f32 %v1315, %v1351
        %v1384 = vadd.f32 %v1316, %v1352
        %v1385 = vadd.f32 %v1317, %v1353
        %v1386 = vadd.f32 %v1318, %v1354
        %v1387 = vadd.f32 %v1319, %v1355
        %v1388 = vadd.f32 %v1320, %v1356
        %v1389 = vadd.f32 %v1321, %v1357
        %v1390 = vadd.f32 %v1322, %v1358
        %v1391 = vadd.f32 %v1323, %v1359
        %v1392 = vadd.f32 %v1324, %v1360
        %v1393 = vadd.f32 %v1325, %v1361
        %v1394 = vadd.f32 %v1326, %v1362
        %v1395 = vadd.f32 %v1327, %v1363
        %v1396 = vadd.f32 %v1328, %v1364
        %v1397 = vadd.f32 %v1329, %v1365
        %v1398 = vadd.f32 %v1330, %v1366
        %v1399 = vadd.f32 %v1331, %v1367
        %v1400 = vadd.f32 %v1332, %v1368
        %v1401 = vadd.f32 %v1333, %v1369
        %v1402 = vadd.f32 %v1334, %v1370
        %v1403 = vadd.f32 %v1335, %v1371
        %v1404 = vadd.f32 %v1336, %v1372
        %v1405 = vadd.f32 %v1337, %v1373
        %v1406 = vadd.f32 %v1338, %v1374
        %v1407 = vadd.f32 %v1339, %v1375
        %v1408 = vlaneseq
        %v1409 = vshrl.u32 %v1408, 7
        %v1410 = vsub.s32 2, %v1409
        %v1411 = vrot.slane %v469, %v1410
        %v1412 = vmul.f32 %v1236, %v1411
        %v1413 = vmul.f32 %v1237, %v1411
        %v1414 = vmul.f32 %v1238, %v1411
        %v1415 = vmul.f32 %v1239, %v1411
        %v1416 = vmul.f32 %v1240, %v1411
        %v1417 = vmul.f32 %v1241, %v1411
        %v1418 = vmul.f32 %v1242, %v1411
        %v1419 = vmul.f32 %v1243, %v1411
        %v1420 = vmul.f32 %v1244, %v1411
        %v1421 = vmul.f32 %v1245, %v1411
        %v1422 = vmul.f32 %v1246, %v1411
        %v1423 = vmul.f32 %v1247, %v1411
        %v1424 = vmul.f32 %v1248, %v1411
        %v1425 = vmul.f32 %v1249, %v1411
        %v1426 = vmul.f32 %v1250, %v1411
        %v1427 = vmul.f32 %v1251, %v1411
        %v1428 = vmul.f32 %v1252, %v1411
        %v1429 = vmul.f32 %v1253, %v1411
        %v1430 = vmul.f32 %v1254, %v1411
        %v1431 = vmul.f32 %v1255, %v1411
        %v1432 = vmul.f32 %v1256, %v1411
        %v1433 = vmul.f32 %v1257, %v1411
        %v1434 = vmul.f32 %v1258, %v1411
        %v1435 = vmul.f32 %v1259, %v1411
        %v1436 = vmul.f32 %v1260, %v1411
        %v1437 = vmul.f32 %v1261, %v1411
        %v1438 = vmul.f32 %v1262, %v1411
        %v1439 = vmul.f32 %v1263, %v1411
        %v1440 = vmul.f32 %v1264, %v1411
        %v1441 = vmul.f32 %v1265, %v1411
        %v1442 = vmul.f32 %v1266, %v1411
        %v1443 = vmul.f32 %v1267, %v1411
        %v1444 = vadd.f32 %v1376, %v1412
        %v1445 = vadd.f32 %v1377, %v1413
        %v1446 = vadd.f32 %v1378, %v1414
        %v1447 = vadd.f32 %v1379, %v1415
        %v1448 = vadd.f32 %v1380, %v1416
        %v1449 = vadd.f32 %v1381, %v1417
        %v1450 = vadd.f32 %v1382, %v1418
        %v1451 = vadd.f32 %v1383, %v1419
        %v1452 = vadd.f32 %v1384, %v1420
        %v1453 = vadd.f32 %v1385, %v1421
        %v1454 = vadd.f32 %v1386, %v1422
        %v1455 = vadd.f32 %v1387, %v1423
        %v1456 = vadd.f32 %v1388, %v1424
        %v1457 = vadd.f32 %v1389, %v1425
        %v1458 = vadd.f32 %v1390, %v1426
        %v1459 = vadd.f32 %v1391, %v1427
        %v1460 = vadd.f32 %v1392, %v1428
        %v1461 = vadd.f32 %v1393, %v1429
        %v1462 = vadd.f32 %v1394, %v1430
        %v1463 = vadd.f32 %v1395, %v1431
        %v1464 = vadd.f32 %v1396, %v1432
        %v1465 = vadd.f32 %v1397, %v1433
        %v1466 = vadd.f32 %v1398, %v1434
        %v1467 = vadd.f32 %v1399, %v1435
        %v1468 = vadd.f32 %v1400, %v1436
        %v1469 = vadd.f32 %v1401, %v1437
        %v1470 = vadd.f32 %v1402, %v1438
        %v1471 = vadd.f32 %v1403, %v1439
        %v1472 = vadd.f32 %v1404, %v1440
        %v1473 = vadd.f32 %v1405, %v1441
        %v1474 = vadd.f32 %v1406, %v1442
        %v1475 = vadd.f32 %v1407, %v1443
        %v1476 = vlaneseq
        %v1477 = vshrl.u32 %v1476, 7
        %v1478 = vsub.s32 2, %v1477
        %v1479 = vrot.slane %v470, %v1478
        %v1480 = vmul.f32 %v1238, %v1479
        %v1481 = vmul.f32 %v1239, %v1479
        %v1482 = vmul.f32 %v1240, %v1479
        %v1483 = vmul.f32 %v1241, %v1479
        %v1484 = vmul.f32 %v1242, %v1479
        %v1485 = vmul.f32 %v1243, %v1479
        %v1486 = vmul.f32 %v1244, %v1479
        %v1487 = vmul.f32 %v1245, %v1479
        %v1488 = vmul.f32 %v1246, %v1479
        %v1489 = vmul.f32 %v1247, %v1479
        %v1490 = vmul.f32 %v1248, %v1479
        %v1491 = vmul.f32 %v1249, %v1479
        %v1492 = vmul.f32 %v1250, %v1479
        %v1493 = vmul.f32 %v1251, %v1479
        %v1494 = vmul.f32 %v1252, %v1479
        %v1495 = vmul.f32 %v1253, %v1479
        %v1496 = vmul.f32 %v1254, %v1479
        %v1497 = vmul.f32 %v1255, %v1479
        %v1498 = vmul.f32 %v1256, %v1479
        %v1499 = vmul.f32 %v1257, %v1479
        %v1500 = vmul.f32 %v1258, %v1479
        %v1501 = vmul.f32 %v1259, %v1479
        %v1502 = vmul.f32 %v1260, %v1479
        %v1503 = vmul.f32 %v1261, %v1479
        %v1504 = vmul.f32 %v1262, %v1479
        %v1505 = vmul.f32 %v1263, %v1479
        %v1506 = vmul.f32 %v1264, %v1479
        %v1507 = vmul.f32 %v1265, %v1479
        %v1508 = vmul.f32 %v1266, %v1479
        %v1509 = vmul.f32 %v1267, %v1479
        %v1510 = vmul.f32 %v1268, %v1479
        %v1511 = vmul.f32 %v1269, %v1479
        %v1512 = vadd.f32 %v1444, %v1480
        %v1513 = vadd.f32 %v1445, %v1481
        %v1514 = vadd.f32 %v1446, %v1482
        %v1515 = vadd.f32 %v1447, %v1483
        %v1516 = vadd.f32 %v1448, %v1484
        %v1517 = vadd.f32 %v1449, %v1485
        %v1518 = vadd.f32 %v1450, %v1486
        %v1519 = vadd.f32 %v1451, %v1487
        %v1520 = vadd.f32 %v1452, %v1488
        %v1521 = vadd.f32 %v1453, %v1489
        %v1522 = vadd.f32 %v1454, %v1490
        %v1523 = vadd.f32 %v1455, %v1491
        %v1524 = vadd.f32 %v1456, %v1492
        %v1525 = vadd.f32 %v1457, %v1493
        %v1526 = vadd.f32 %v1458, %v1494
        %v1527 = vadd.f32 %v1459, %v1495
        %v1528 = vadd.f32 %v1460, %v1496
        %v1529 = vadd.f32 %v1461, %v1497
        %v1530 = vadd.f32 %v1462, %v1498
        %v1531 = vadd.f32 %v1463, %v1499
        %v1532 = vadd.f32 %v1464, %v1500
        %v1533 = vadd.f32 %v1465, %v1501
        %v1534 = vadd.f32 %v1466, %v1502
        %v1535 = vadd.f32 %v1467, %v1503
        %v1536 = vadd.f32 %v1468, %v1504
        %v1537 = vadd.f32 %v1469, %v1505
        %v1538 = vadd.f32 %v1470, %v1506
        %v1539 = vadd.f32 %v1471, %v1507
        %v1540 = vadd.f32 %v1472, %v1508
        %v1541 = vadd.f32 %v1473, %v1509
        %v1542 = vadd.f32 %v1474, %v1510
        %v1543 = vadd.f32 %v1475, %v1511
        %v1544 = vlaneseq
        %v1545 = vshrl.u32 %v1544, 7
        %v1546 = vsub.s32 2, %v1545
        %v1547 = vrot.slane %v471, %v1546
        %v1548 = vmul.f32 %v1240, %v1547
        %v1549 = vmul.f32 %v1241, %v1547
        %v1550 = vmul.f32 %v1242, %v1547
        %v1551 = vmul.f32 %v1243, %v1547
        %v1552 = vmul.f32 %v1244, %v1547
        %v1553 = vmul.f32 %v1245, %v1547
        %v1554 = vmul.f32 %v1246, %v1547
        %v1555 = vmul.f32 %v1247, %v1547
        %v1556 = vmul.f32 %v1248, %v1547
        %v1557 = vmul.f32 %v1249, %v1547
        %v1558 = vmul.f32 %v1250, %v1547
        %v1559 = vmul.f32 %v1251, %v1547
        %v1560 = vmul.f32 %v1252, %v1547
        %v1561 = vmul.f32 %v1253, %v1547
        %v1562 = vmul.f32 %v1254, %v1547
        %v1563 = vmul.f32 %v1255, %v1547
        %v1564 = vmul.f32 %v1256, %v1547
        %v1565 = vmul.f32 %v1257, %v1547
        %v1566 = vmul.f32 %v1258, %v1547
        %v1567 = vmul.f32 %v1259, %v1547
        %v1568 = vmul.f32 %v1260, %v1547
        %v1569 = vmul.f32 %v1261, %v1547
        %v1570 = vmul.f32 %v1262, %v1547
        %v1571 = vmul.f32 %v1263, %v1547
        %v1572 = vmul.f32 %v1264, %v1547
        %v1573 = vmul.f32 %v1265, %v1547
        %v1574 = vmul.f32 %v1266, %v1547
        %v1575 = vmul.f32 %v1267, %v1547
        %v1576 = vmul.f32 %v1268, %v1547
        %v1577 = vmul.f32 %v1269, %v1547
        %v1578 = vmul.f32 %v1270, %v1547
        %v1579 = vmul.f32 %v1271, %v1547
        %v1580 = vadd.f32 %v1512, %v1548
        %v1581 = vadd.f32 %v1513, %v1549
        %v1582 = vadd.f32 %v1514, %v1550
        %v1583 = vadd.f32 %v1515, %v1551
        %v1584 = vadd.f32 %v1516, %v1552
        %v1585 = vadd.f32 %v1517, %v1553
        %v1586 = vadd.f32 %v1518, %v1554
        %v1587 = vadd.f32 %v1519, %v1555
        %v1588 = vadd.f32 %v1520, %v1556
        %v1589 = vadd.f32 %v1521, %v1557
        %v1590 = vadd.f32 %v1522, %v1558
        %v1591 = vadd.f32 %v1523, %v1559
        %v1592 = vadd.f32 %v1524, %v1560
        %v1593 = vadd.f32 %v1525, %v1561
        %v1594 = vadd.f32 %v1526, %v1562
        %v1595 = vadd.f32 %v1527, %v1563
        %v1596 = vadd.f32 %v1528, %v1564
        %v1597 = vadd.f32 %v1529, %v1565
        %v1598 = vadd.f32 %v1530, %v1566
        %v1599 = vadd.f32 %v1531, %v1567
        %v1600 = vadd.f32 %v1532, %v1568
        %v1601 = vadd.f32 %v1533, %v1569
        %v1602 = vadd.f32 %v1534, %v1570
        %v1603 = vadd.f32 %v1535, %v1571
        %v1604 = vadd.f32 %v1536, %v1572
        %v1605 = vadd.f32 %v1537, %v1573
        %v1606 = vadd.f32 %v1538, %v1574
        %v1607 = vadd.f32 %v1539, %v1575
        %v1608 = vadd.f32 %v1540, %v1576
        %v1609 = vadd.f32 %v1541, %v1577
        %v1610 = vadd.f32 %v1542, %v1578
        %v1611 = vadd.f32 %v1543, %v1579
        %v1612 = vld [vmem:[#allocation2 + $0x3] sm:$0xff]
        %v1613 = vld [vmem:[#allocation2 + $0xb] sm:$0xff]
        %v1614 = vld [vmem:[#allocation2 + $0x1b] sm:$0xff]
        %v1615 = vld [vmem:[#allocation2 + $0x23] sm:$0xff]
        %v1616 = vld [vmem:[#allocation2 + $0x33] sm:$0xff]
        %v1617 = vld [vmem:[#allocation2 + $0x3b] sm:$0xff]
        %v1618 = vld [vmem:[#allocation2 + $0x4b] sm:$0xff]
        %v1619 = vld [vmem:[#allocation2 + $0x53] sm:$0xff]
        %v1620 = vld [vmem:[#allocation2 + $0x63] sm:$0xff]
        %v1621 = vld [vmem:[#allocation2 + $0x6b] sm:$0xff]
        %v1622 = vld [vmem:[#allocation2 + $0x7b] sm:$0xff]
        %v1623 = vld [vmem:[#allocation2 + $0x83] sm:$0xff]
        %v1624 = vld [vmem:[#allocation2 + $0x93] sm:$0xff]
        %v1625 = vld [vmem:[#allocation2 + $0x9b] sm:$0xff]
        %v1626 = vld [vmem:[#allocation2 + $0xab] sm:$0xff]
        %v1627 = vld [vmem:[#allocation2 + $0xb3] sm:$0xff]
        %v1628 = vld [vmem:[#allocation2 + $0xc3] sm:$0xff]
        %v1629 = vld [vmem:[#allocation2 + $0xcb] sm:$0xff]
        %v1630 = vld [vmem:[#allocation2 + $0xdb] sm:$0xff]
        %v1631 = vld [vmem:[#allocation2 + $0xe3] sm:$0xff]
        %v1632 = vld [vmem:[#allocation2 + $0xf3] sm:$0xff]
        %v1633 = vld [vmem:[#allocation2 + $0xfb] sm:$0xff]
        %v1634 = vld [vmem:[#allocation2 + $0x10b] sm:$0xff]
        %v1635 = vld [vmem:[#allocation2 + $0x113] sm:$0xff]
        %v1636 = vld [vmem:[#allocation2 + $0x123] sm:$0xff]
        %v1637 = vld [vmem:[#allocation2 + $0x12b] sm:$0xff]
        %v1638 = vld [vmem:[#allocation2 + $0x13b] sm:$0xff]
        %v1639 = vld [vmem:[#allocation2 + $0x143] sm:$0xff]
        %v1640 = vld [vmem:[#allocation2 + $0x153] sm:$0xff]
        %v1641 = vld [vmem:[#allocation2 + $0x15b] sm:$0xff]
        %v1642 = vld [vmem:[#allocation2 + $0x16b] sm:$0xff]
        %v1643 = vld [vmem:[#allocation2 + $0x173] sm:$0xff]
        %v1644 = vld [vmem:[#allocation2 + $0x183] sm:$0xff]
        %v1645 = vld [vmem:[#allocation2 + $0x18b] sm:$0xff]
        %v1646 = vld [vmem:[#allocation2 + $0x19b] sm:$0xff]
        %v1647 = vld [vmem:[#allocation2 + $0x1a3] sm:$0xff]
        %v1648 = vld [vmem:[#allocation2 + $0x1b3] sm:$0xff]
        %v1649 = vld [vmem:[#allocation2 + $0x1bb] sm:$0xff]
        %v1650 = vld [vmem:[#allocation2 + $0x1cb] sm:$0xff]
        %v1651 = vld [vmem:[#allocation2 + $0x1d3] sm:$0xff]
        %v1652 = vlaneseq
        %v1653 = vshrl.u32 %v1652, 7
        %v1654 = vsub.s32 3, %v1653
        %v1655 = vrot.slane %v467, %v1654
        %v1656 = vmul.f32 %v1612, %v1655
        %v1657 = vmul.f32 %v1613, %v1655
        %v1658 = vmul.f32 %v1614, %v1655
        %v1659 = vmul.f32 %v1615, %v1655
        %v1660 = vmul.f32 %v1616, %v1655
        %v1661 = vmul.f32 %v1617, %v1655
        %v1662 = vmul.f32 %v1618, %v1655
        %v1663 = vmul.f32 %v1619, %v1655
        %v1664 = vmul.f32 %v1620, %v1655
        %v1665 = vmul.f32 %v1621, %v1655
        %v1666 = vmul.f32 %v1622, %v1655
        %v1667 = vmul.f32 %v1623, %v1655
        %v1668 = vmul.f32 %v1624, %v1655
        %v1669 = vmul.f32 %v1625, %v1655
        %v1670 = vmul.f32 %v1626, %v1655
        %v1671 = vmul.f32 %v1627, %v1655
        %v1672 = vmul.f32 %v1628, %v1655
        %v1673 = vmul.f32 %v1629, %v1655
        %v1674 = vmul.f32 %v1630, %v1655
        %v1675 = vmul.f32 %v1631, %v1655
        %v1676 = vmul.f32 %v1632, %v1655
        %v1677 = vmul.f32 %v1633, %v1655
        %v1678 = vmul.f32 %v1634, %v1655
        %v1679 = vmul.f32 %v1635, %v1655
        %v1680 = vmul.f32 %v1636, %v1655
        %v1681 = vmul.f32 %v1637, %v1655
        %v1682 = vmul.f32 %v1638, %v1655
        %v1683 = vmul.f32 %v1639, %v1655
        %v1684 = vmul.f32 %v1640, %v1655
        %v1685 = vmul.f32 %v1641, %v1655
        %v1686 = vmul.f32 %v1642, %v1655
        %v1687 = vmul.f32 %v1643, %v1655
        %v1688 = vadd.f32 %v1580, %v1656
        %v1689 = vadd.f32 %v1581, %v1657
        %v1690 = vadd.f32 %v1582, %v1658
        %v1691 = vadd.f32 %v1583, %v1659
        %v1692 = vadd.f32 %v1584, %v1660
        %v1693 = vadd.f32 %v1585, %v1661
        %v1694 = vadd.f32 %v1586, %v1662
        %v1695 = vadd.f32 %v1587, %v1663
        %v1696 = vadd.f32 %v1588, %v1664
        %v1697 = vadd.f32 %v1589, %v1665
        %v1698 = vadd.f32 %v1590, %v1666
        %v1699 = vadd.f32 %v1591, %v1667
        %v1700 = vadd.f32 %v1592, %v1668
        %v1701 = vadd.f32 %v1593, %v1669
        %v1702 = vadd.f32 %v1594, %v1670
        %v1703 = vadd.f32 %v1595, %v1671
        %v1704 = vadd.f32 %v1596, %v1672
        %v1705 = vadd.f32 %v1597, %v1673
        %v1706 = vadd.f32 %v1598, %v1674
        %v1707 = vadd.f32 %v1599, %v1675
        %v1708 = vadd.f32 %v1600, %v1676
        %v1709 = vadd.f32 %v1601, %v1677
        %v1710 = vadd.f32 %v1602, %v1678
        %v1711 = vadd.f32 %v1603, %v1679
        %v1712 = vadd.f32 %v1604, %v1680
        %v1713 = vadd.f32 %v1605, %v1681
        %v1714 = vadd.f32 %v1606, %v1682
        %v1715 = vadd.f32 %v1607, %v1683
        %v1716 = vadd.f32 %v1608, %v1684
        %v1717 = vadd.f32 %v1609, %v1685
        %v1718 = vadd.f32 %v1610, %v1686
        %v1719 = vadd.f32 %v1611, %v1687
        %v1720 = vlaneseq
        %v1721 = vshrl.u32 %v1720, 7
        %v1722 = vsub.s32 3, %v1721
        %v1723 = vrot.slane %v468, %v1722
        %v1724 = vmul.f32 %v1614, %v1723
        %v1725 = vmul.f32 %v1615, %v1723
        %v1726 = vmul.f32 %v1616, %v1723
        %v1727 = vmul.f32 %v1617, %v1723
        %v1728 = vmul.f32 %v1618, %v1723
        %v1729 = vmul.f32 %v1619, %v1723
        %v1730 = vmul.f32 %v1620, %v1723
        %v1731 = vmul.f32 %v1621, %v1723
        %v1732 = vmul.f32 %v1622, %v1723
        %v1733 = vmul.f32 %v1623, %v1723
        %v1734 = vmul.f32 %v1624, %v1723
        %v1735 = vmul.f32 %v1625, %v1723
        %v1736 = vmul.f32 %v1626, %v1723
        %v1737 = vmul.f32 %v1627, %v1723
        %v1738 = vmul.f32 %v1628, %v1723
        %v1739 = vmul.f32 %v1629, %v1723
        %v1740 = vmul.f32 %v1630, %v1723
        %v1741 = vmul.f32 %v1631, %v1723
        %v1742 = vmul.f32 %v1632, %v1723
        %v1743 = vmul.f32 %v1633, %v1723
        %v1744 = vmul.f32 %v1634, %v1723
        %v1745 = vmul.f32 %v1635, %v1723
        %v1746 = vmul.f32 %v1636, %v1723
        %v1747 = vmul.f32 %v1637, %v1723
        %v1748 = vmul.f32 %v1638, %v1723
        %v1749 = vmul.f32 %v1639, %v1723
        %v1750 = vmul.f32 %v1640, %v1723
        %v1751 = vmul.f32 %v1641, %v1723
        %v1752 = vmul.f32 %v1642, %v1723
        %v1753 = vmul.f32 %v1643, %v1723
        %v1754 = vmul.f32 %v1644, %v1723
        %v1755 = vmul.f32 %v1645, %v1723
        %v1756 = vadd.f32 %v1688, %v1724
        %v1757 = vadd.f32 %v1689, %v1725
        %v1758 = vadd.f32 %v1690, %v1726
        %v1759 = vadd.f32 %v1691, %v1727
        %v1760 = vadd.f32 %v1692, %v1728
        %v1761 = vadd.f32 %v1693, %v1729
        %v1762 = vadd.f32 %v1694, %v1730
        %v1763 = vadd.f32 %v1695, %v1731
        %v1764 = vadd.f32 %v1696, %v1732
        %v1765 = vadd.f32 %v1697, %v1733
        %v1766 = vadd.f32 %v1698, %v1734
        %v1767 = vadd.f32 %v1699, %v1735
        %v1768 = vadd.f32 %v1700, %v1736
        %v1769 = vadd.f32 %v1701, %v1737
        %v1770 = vadd.f32 %v1702, %v1738
        %v1771 = vadd.f32 %v1703, %v1739
        %v1772 = vadd.f32 %v1704, %v1740
        %v1773 = vadd.f32 %v1705, %v1741
        %v1774 = vadd.f32 %v1706, %v1742
        %v1775 = vadd.f32 %v1707, %v1743
        %v1776 = vadd.f32 %v1708, %v1744
        %v1777 = vadd.f32 %v1709, %v1745
        %v1778 = vadd.f32 %v1710, %v1746
        %v1779 = vadd.f32 %v1711, %v1747
        %v1780 = vadd.f32 %v1712, %v1748
        %v1781 = vadd.f32 %v1713, %v1749
        %v1782 = vadd.f32 %v1714, %v1750
        %v1783 = vadd.f32 %v1715, %v1751
        %v1784 = vadd.f32 %v1716, %v1752
        %v1785 = vadd.f32 %v1717, %v1753
        %v1786 = vadd.f32 %v1718, %v1754
        %v1787 = vadd.f32 %v1719, %v1755
        %v1788 = vlaneseq
        %v1789 = vshrl.u32 %v1788, 7
        %v1790 = vsub.s32 3, %v1789
        %v1791 = vrot.slane %v469, %v1790
        %v1792 = vmul.f32 %v1616, %v1791
        %v1793 = vmul.f32 %v1617, %v1791
        %v1794 = vmul.f32 %v1618, %v1791
        %v1795 = vmul.f32 %v1619, %v1791
        %v1796 = vmul.f32 %v1620, %v1791
        %v1797 = vmul.f32 %v1621, %v1791
        %v1798 = vmul.f32 %v1622, %v1791
        %v1799 = vmul.f32 %v1623, %v1791
        %v1800 = vmul.f32 %v1624, %v1791
        %v1801 = vmul.f32 %v1625, %v1791
        %v1802 = vmul.f32 %v1626, %v1791
        %v1803 = vmul.f32 %v1627, %v1791
        %v1804 = vmul.f32 %v1628, %v1791
        %v1805 = vmul.f32 %v1629, %v1791
        %v1806 = vmul.f32 %v1630, %v1791
        %v1807 = vmul.f32 %v1631, %v1791
        %v1808 = vmul.f32 %v1632, %v1791
        %v1809 = vmul.f32 %v1633, %v1791
        %v1810 = vmul.f32 %v1634, %v1791
        %v1811 = vmul.f32 %v1635, %v1791
        %v1812 = vmul.f32 %v1636, %v1791
        %v1813 = vmul.f32 %v1637, %v1791
        %v1814 = vmul.f32 %v1638, %v1791
        %v1815 = vmul.f32 %v1639, %v1791
        %v1816 = vmul.f32 %v1640, %v1791
        %v1817 = vmul.f32 %v1641, %v1791
        %v1818 = vmul.f32 %v1642, %v1791
        %v1819 = vmul.f32 %v1643, %v1791
        %v1820 = vmul.f32 %v1644, %v1791
        %v1821 = vmul.f32 %v1645, %v1791
        %v1822 = vmul.f32 %v1646, %v1791
        %v1823 = vmul.f32 %v1647, %v1791
        %v1824 = vadd.f32 %v1756, %v1792
        %v1825 = vadd.f32 %v1757, %v1793
        %v1826 = vadd.f32 %v1758, %v1794
        %v1827 = vadd.f32 %v1759, %v1795
        %v1828 = vadd.f32 %v1760, %v1796
        %v1829 = vadd.f32 %v1761, %v1797
        %v1830 = vadd.f32 %v1762, %v1798
        %v1831 = vadd.f32 %v1763, %v1799
        %v1832 = vadd.f32 %v1764, %v1800
        %v1833 = vadd.f32 %v1765, %v1801
        %v1834 = vadd.f32 %v1766, %v1802
        %v1835 = vadd.f32 %v1767, %v1803
        %v1836 = vadd.f32 %v1768, %v1804
        %v1837 = vadd.f32 %v1769, %v1805
        %v1838 = vadd.f32 %v1770, %v1806
        %v1839 = vadd.f32 %v1771, %v1807
        %v1840 = vadd.f32 %v1772, %v1808
        %v1841 = vadd.f32 %v1773, %v1809
        %v1842 = vadd.f32 %v1774, %v1810
        %v1843 = vadd.f32 %v1775, %v1811
        %v1844 = vadd.f32 %v1776, %v1812
        %v1845 = vadd.f32 %v1777, %v1813
        %v1846 = vadd.f32 %v1778, %v1814
        %v1847 = vadd.f32 %v1779, %v1815
        %v1848 = vadd.f32 %v1780, %v1816
        %v1849 = vadd.f32 %v1781, %v1817
        %v1850 = vadd.f32 %v1782, %v1818
        %v1851 = vadd.f32 %v1783, %v1819
        %v1852 = vadd.f32 %v1784, %v1820
        %v1853 = vadd.f32 %v1785, %v1821
        %v1854 = vadd.f32 %v1786, %v1822
        %v1855 = vadd.f32 %v1787, %v1823
        %v1856 = vlaneseq
        %v1857 = vshrl.u32 %v1856, 7
        %v1858 = vsub.s32 3, %v1857
        %v1859 = vrot.slane %v470, %v1858
        %v1860 = vmul.f32 %v1618, %v1859
        %v1861 = vmul.f32 %v1619, %v1859
        %v1862 = vmul.f32 %v1620, %v1859
        %v1863 = vmul.f32 %v1621, %v1859
        %v1864 = vmul.f32 %v1622, %v1859
        %v1865 = vmul.f32 %v1623, %v1859
        %v1866 = vmul.f32 %v1624, %v1859
        %v1867 = vmul.f32 %v1625, %v1859
        %v1868 = vmul.f32 %v1626, %v1859
        %v1869 = vmul.f32 %v1627, %v1859
        %v1870 = vmul.f32 %v1628, %v1859
        %v1871 = vmul.f32 %v1629, %v1859
        %v1872 = vmul.f32 %v1630, %v1859
        %v1873 = vmul.f32 %v1631, %v1859
        %v1874 = vmul.f32 %v1632, %v1859
        %v1875 = vmul.f32 %v1633, %v1859
        %v1876 = vmul.f32 %v1634, %v1859
        %v1877 = vmul.f32 %v1635, %v1859
        %v1878 = vmul.f32 %v1636, %v1859
        %v1879 = vmul.f32 %v1637, %v1859
        %v1880 = vmul.f32 %v1638, %v1859
        %v1881 = vmul.f32 %v1639, %v1859
        %v1882 = vmul.f32 %v1640, %v1859
        %v1883 = vmul.f32 %v1641, %v1859
        %v1884 = vmul.f32 %v1642, %v1859
        %v1885 = vmul.f32 %v1643, %v1859
        %v1886 = vmul.f32 %v1644, %v1859
        %v1887 = vmul.f32 %v1645, %v1859
        %v1888 = vmul.f32 %v1646, %v1859
        %v1889 = vmul.f32 %v1647, %v1859
        %v1890 = vmul.f32 %v1648, %v1859
        %v1891 = vmul.f32 %v1649, %v1859
        %v1892 = vadd.f32 %v1824, %v1860
        %v1893 = vadd.f32 %v1825, %v1861
        %v1894 = vadd.f32 %v1826, %v1862
        %v1895 = vadd.f32 %v1827, %v1863
        %v1896 = vadd.f32 %v1828, %v1864
        %v1897 = vadd.f32 %v1829, %v1865
        %v1898 = vadd.f32 %v1830, %v1866
        %v1899 = vadd.f32 %v1831, %v1867
        %v1900 = vadd.f32 %v1832, %v1868
        %v1901 = vadd.f32 %v1833, %v1869
        %v1902 = vadd.f32 %v1834, %v1870
        %v1903 = vadd.f32 %v1835, %v1871
        %v1904 = vadd.f32 %v1836, %v1872
        %v1905 = vadd.f32 %v1837, %v1873
        %v1906 = vadd.f32 %v1838, %v1874
        %v1907 = vadd.f32 %v1839, %v1875
        %v1908 = vadd.f32 %v1840, %v1876
        %v1909 = vadd.f32 %v1841, %v1877
        %v1910 = vadd.f32 %v1842, %v1878
        %v1911 = vadd.f32 %v1843, %v1879
        %v1912 = vadd.f32 %v1844, %v1880
        %v1913 = vadd.f32 %v1845, %v1881
        %v1914 = vadd.f32 %v1846, %v1882
        %v1915 = vadd.f32 %v1847, %v1883
        %v1916 = vadd.f32 %v1848, %v1884
        %v1917 = vadd.f32 %v1849, %v1885
        %v1918 = vadd.f32 %v1850, %v1886
        %v1919 = vadd.f32 %v1851, %v1887
        %v1920 = vadd.f32 %v1852, %v1888
        %v1921 = vadd.f32 %v1853, %v1889
        %v1922 = vadd.f32 %v1854, %v1890
        %v1923 = vadd.f32 %v1855, %v1891
        %v1924 = vlaneseq
        %v1925 = vshrl.u32 %v1924, 7
        %v1926 = vsub.s32 3, %v1925
        %v1927 = vrot.slane %v471, %v1926
        %v1928 = vmul.f32 %v1620, %v1927
        %v1929 = vmul.f32 %v1621, %v1927
        %v1930 = vmul.f32 %v1622, %v1927
        %v1931 = vmul.f32 %v1623, %v1927
        %v1932 = vmul.f32 %v1624, %v1927
        %v1933 = vmul.f32 %v1625, %v1927
        %v1934 = vmul.f32 %v1626, %v1927
        %v1935 = vmul.f32 %v1627, %v1927
        %v1936 = vmul.f32 %v1628, %v1927
        %v1937 = vmul.f32 %v1629, %v1927
        %v1938 = vmul.f32 %v1630, %v1927
        %v1939 = vmul.f32 %v1631, %v1927
        %v1940 = vmul.f32 %v1632, %v1927
        %v1941 = vmul.f32 %v1633, %v1927
        %v1942 = vmul.f32 %v1634, %v1927
        %v1943 = vmul.f32 %v1635, %v1927
        %v1944 = vmul.f32 %v1636, %v1927
        %v1945 = vmul.f32 %v1637, %v1927
        %v1946 = vmul.f32 %v1638, %v1927
        %v1947 = vmul.f32 %v1639, %v1927
        %v1948 = vmul.f32 %v1640, %v1927
        %v1949 = vmul.f32 %v1641, %v1927
        %v1950 = vmul.f32 %v1642, %v1927
        %v1951 = vmul.f32 %v1643, %v1927
        %v1952 = vmul.f32 %v1644, %v1927
        %v1953 = vmul.f32 %v1645, %v1927
        %v1954 = vmul.f32 %v1646, %v1927
        %v1955 = vmul.f32 %v1647, %v1927
        %v1956 = vmul.f32 %v1648, %v1927
        %v1957 = vmul.f32 %v1649, %v1927
        %v1958 = vmul.f32 %v1650, %v1927
        %v1959 = vmul.f32 %v1651, %v1927
        %v1960 = vadd.f32 %v1892, %v1928
        %v1961 = vadd.f32 %v1893, %v1929
        %v1962 = vadd.f32 %v1894, %v1930
        %v1963 = vadd.f32 %v1895, %v1931
        %v1964 = vadd.f32 %v1896, %v1932
        %v1965 = vadd.f32 %v1897, %v1933
        %v1966 = vadd.f32 %v1898, %v1934
        %v1967 = vadd.f32 %v1899, %v1935
        %v1968 = vadd.f32 %v1900, %v1936
        %v1969 = vadd.f32 %v1901, %v1937
        %v1970 = vadd.f32 %v1902, %v1938
        %v1971 = vadd.f32 %v1903, %v1939
        %v1972 = vadd.f32 %v1904, %v1940
        %v1973 = vadd.f32 %v1905, %v1941
        %v1974 = vadd.f32 %v1906, %v1942
        %v1975 = vadd.f32 %v1907, %v1943
        %v1976 = vadd.f32 %v1908, %v1944
        %v1977 = vadd.f32 %v1909, %v1945
        %v1978 = vadd.f32 %v1910, %v1946
        %v1979 = vadd.f32 %v1911, %v1947
        %v1980 = vadd.f32 %v1912, %v1948
        %v1981 = vadd.f32 %v1913, %v1949
        %v1982 = vadd.f32 %v1914, %v1950
        %v1983 = vadd.f32 %v1915, %v1951
        %v1984 = vadd.f32 %v1916, %v1952
        %v1985 = vadd.f32 %v1917, %v1953
        %v1986 = vadd.f32 %v1918, %v1954
        %v1987 = vadd.f32 %v1919, %v1955
        %v1988 = vadd.f32 %v1920, %v1956
        %v1989 = vadd.f32 %v1921, %v1957
        %v1990 = vadd.f32 %v1922, %v1958
        %v1991 = vadd.f32 %v1923, %v1959
        %v1992 = vld [vmem:[#allocation2 + $0x4] sm:$0xff]
        %v1993 = vld [vmem:[#allocation2 + $0xc] sm:$0xff]
        %v1994 = vld [vmem:[#allocation2 + $0x1c] sm:$0xff]
        %v1995 = vld [vmem:[#allocation2 + $0x24] sm:$0xff]
        %v1996 = vld [vmem:[#allocation2 + $0x34] sm:$0xff]
        %v1997 = vld [vmem:[#allocation2 + $0x3c] sm:$0xff]
        %v1998 = vld [vmem:[#allocation2 + $0x4c] sm:$0xff]
        %v1999 = vld [vmem:[#allocation2 + $0x54] sm:$0xff]
        %v2000 = vld [vmem:[#allocation2 + $0x64] sm:$0xff]
        %v2001 = vld [vmem:[#allocation2 + $0x6c] sm:$0xff]
        %v2002 = vld [vmem:[#allocation2 + $0x7c] sm:$0xff]
        %v2003 = vld [vmem:[#allocation2 + $0x84] sm:$0xff]
        %v2004 = vld [vmem:[#allocation2 + $0x94] sm:$0xff]
        %v2005 = vld [vmem:[#allocation2 + $0x9c] sm:$0xff]
        %v2006 = vld [vmem:[#allocation2 + $0xac] sm:$0xff]
        %v2007 = vld [vmem:[#allocation2 + $0xb4] sm:$0xff]
        %v2008 = vld [vmem:[#allocation2 + $0xc4] sm:$0xff]
        %v2009 = vld [vmem:[#allocation2 + $0xcc] sm:$0xff]
        %v2010 = vld [vmem:[#allocation2 + $0xdc] sm:$0xff]
        %v2011 = vld [vmem:[#allocation2 + $0xe4] sm:$0xff]
        %v2012 = vld [vmem:[#allocation2 + $0xf4] sm:$0xff]
        %v2013 = vld [vmem:[#allocation2 + $0xfc] sm:$0xff]
        %v2014 = vld [vmem:[#allocation2 + $0x10c] sm:$0xff]
        %v2015 = vld [vmem:[#allocation2 + $0x114] sm:$0xff]
        %v2016 = vld [vmem:[#allocation2 + $0x124] sm:$0xff]
        %v2017 = vld [vmem:[#allocation2 + $0x12c] sm:$0xff]
        %v2018 = vld [vmem:[#allocation2 + $0x13c] sm:$0xff]
        %v2019 = vld [vmem:[#allocation2 + $0x144] sm:$0xff]
        %v2020 = vld [vmem:[#allocation2 + $0x154] sm:$0xff]
        %v2021 = vld [vmem:[#allocation2 + $0x15c] sm:$0xff]
        %v2022 = vld [vmem:[#allocation2 + $0x16c] sm:$0xff]
        %v2023 = vld [vmem:[#allocation2 + $0x174] sm:$0xff]
        %v2024 = vld [vmem:[#allocation2 + $0x184] sm:$0xff]
        %v2025 = vld [vmem:[#allocation2 + $0x18c] sm:$0xff]
        %v2026 = vld [vmem:[#allocation2 + $0x19c] sm:$0xff]
        %v2027 = vld [vmem:[#allocation2 + $0x1a4] sm:$0xff]
        %v2028 = vld [vmem:[#allocation2 + $0x1b4] sm:$0xff]
        %v2029 = vld [vmem:[#allocation2 + $0x1bc] sm:$0xff]
        %v2030 = vld [vmem:[#allocation2 + $0x1cc] sm:$0xff]
        %v2031 = vld [vmem:[#allocation2 + $0x1d4] sm:$0xff]
        %v2032 = vlaneseq
        %v2033 = vshrl.u32 %v2032, 7
        %v2034 = vsub.s32 4, %v2033
        %v2035 = vrot.slane %v467, %v2034
        %v2036 = vmul.f32 %v1992, %v2035
        %v2037 = vmul.f32 %v1993, %v2035
        %v2038 = vmul.f32 %v1994, %v2035
        %v2039 = vmul.f32 %v1995, %v2035
        %v2040 = vmul.f32 %v1996, %v2035
        %v2041 = vmul.f32 %v1997, %v2035
        %v2042 = vmul.f32 %v1998, %v2035
        %v2043 = vmul.f32 %v1999, %v2035
        %v2044 = vmul.f32 %v2000, %v2035
        %v2045 = vmul.f32 %v2001, %v2035
        %v2046 = vmul.f32 %v2002, %v2035
        %v2047 = vmul.f32 %v2003, %v2035
        %v2048 = vmul.f32 %v2004, %v2035
        %v2049 = vmul.f32 %v2005, %v2035
        %v2050 = vmul.f32 %v2006, %v2035
        %v2051 = vmul.f32 %v2007, %v2035
        %v2052 = vmul.f32 %v2008, %v2035
        %v2053 = vmul.f32 %v2009, %v2035
        %v2054 = vmul.f32 %v2010, %v2035
        %v2055 = vmul.f32 %v2011, %v2035
        %v2056 = vmul.f32 %v2012, %v2035
        %v2057 = vmul.f32 %v2013, %v2035
        %v2058 = vmul.f32 %v2014, %v2035
        %v2059 = vmul.f32 %v2015, %v2035
        %v2060 = vmul.f32 %v2016, %v2035
        %v2061 = vmul.f32 %v2017, %v2035
        %v2062 = vmul.f32 %v2018, %v2035
        %v2063 = vmul.f32 %v2019, %v2035
        %v2064 = vmul.f32 %v2020, %v2035
        %v2065 = vmul.f32 %v2021, %v2035
        %v2066 = vmul.f32 %v2022, %v2035
        %v2067 = vmul.f32 %v2023, %v2035
        %v2068 = vadd.f32 %v1960, %v2036
        %v2069 = vadd.f32 %v1961, %v2037
        %v2070 = vadd.f32 %v1962, %v2038
        %v2071 = vadd.f32 %v1963, %v2039
        %v2072 = vadd.f32 %v1964, %v2040
        %v2073 = vadd.f32 %v1965, %v2041
        %v2074 = vadd.f32 %v1966, %v2042
        %v2075 = vadd.f32 %v1967, %v2043
        %v2076 = vadd.f32 %v1968, %v2044
        %v2077 = vadd.f32 %v1969, %v2045
        %v2078 = vadd.f32 %v1970, %v2046
        %v2079 = vadd.f32 %v1971, %v2047
        %v2080 = vadd.f32 %v1972, %v2048
        %v2081 = vadd.f32 %v1973, %v2049
        %v2082 = vadd.f32 %v1974, %v2050
        %v2083 = vadd.f32 %v1975, %v2051
        %v2084 = vadd.f32 %v1976, %v2052
        %v2085 = vadd.f32 %v1977, %v2053
        %v2086 = vadd.f32 %v1978, %v2054
        %v2087 = vadd.f32 %v1979, %v2055
        %v2088 = vadd.f32 %v1980, %v2056
        %v2089 = vadd.f32 %v1981, %v2057
        %v2090 = vadd.f32 %v1982, %v2058
        %v2091 = vadd.f32 %v1983, %v2059
        %v2092 = vadd.f32 %v1984, %v2060
        %v2093 = vadd.f32 %v1985, %v2061
        %v2094 = vadd.f32 %v1986, %v2062
        %v2095 = vadd.f32 %v1987, %v2063
        %v2096 = vadd.f32 %v1988, %v2064
        %v2097 = vadd.f32 %v1989, %v2065
        %v2098 = vadd.f32 %v1990, %v2066
        %v2099 = vadd.f32 %v1991, %v2067
        %v2100 = vlaneseq
        %v2101 = vshrl.u32 %v2100, 7
        %v2102 = vsub.s32 4, %v2101
        %v2103 = vrot.slane %v468, %v2102
        %v2104 = vmul.f32 %v1994, %v2103
        %v2105 = vmul.f32 %v1995, %v2103
        %v2106 = vmul.f32 %v1996, %v2103
        %v2107 = vmul.f32 %v1997, %v2103
        %v2108 = vmul.f32 %v1998, %v2103
        %v2109 = vmul.f32 %v1999, %v2103
        %v2110 = vmul.f32 %v2000, %v2103
        %v2111 = vmul.f32 %v2001, %v2103
        %v2112 = vmul.f32 %v2002, %v2103
        %v2113 = vmul.f32 %v2003, %v2103
        %v2114 = vmul.f32 %v2004, %v2103
        %v2115 = vmul.f32 %v2005, %v2103
        %v2116 = vmul.f32 %v2006, %v2103
        %v2117 = vmul.f32 %v2007, %v2103
        %v2118 = vmul.f32 %v2008, %v2103
        %v2119 = vmul.f32 %v2009, %v2103
        %v2120 = vmul.f32 %v2010, %v2103
        %v2121 = vmul.f32 %v2011, %v2103
        %v2122 = vmul.f32 %v2012, %v2103
        %v2123 = vmul.f32 %v2013, %v2103
        %v2124 = vmul.f32 %v2014, %v2103
        %v2125 = vmul.f32 %v2015, %v2103
        %v2126 = vmul.f32 %v2016, %v2103
        %v2127 = vmul.f32 %v2017, %v2103
        %v2128 = vmul.f32 %v2018, %v2103
        %v2129 = vmul.f32 %v2019, %v2103
        %v2130 = vmul.f32 %v2020, %v2103
        %v2131 = vmul.f32 %v2021, %v2103
        %v2132 = vmul.f32 %v2022, %v2103
        %v2133 = vmul.f32 %v2023, %v2103
        %v2134 = vmul.f32 %v2024, %v2103
        %v2135 = vmul.f32 %v2025, %v2103
        %v2136 = vadd.f32 %v2068, %v2104
        %v2137 = vadd.f32 %v2069, %v2105
        %v2138 = vadd.f32 %v2070, %v2106
        %v2139 = vadd.f32 %v2071, %v2107
        %v2140 = vadd.f32 %v2072, %v2108
        %v2141 = vadd.f32 %v2073, %v2109
        %v2142 = vadd.f32 %v2074, %v2110
        %v2143 = vadd.f32 %v2075, %v2111
        %v2144 = vadd.f32 %v2076, %v2112
        %v2145 = vadd.f32 %v2077, %v2113
        %v2146 = vadd.f32 %v2078, %v2114
        %v2147 = vadd.f32 %v2079, %v2115
        %v2148 = vadd.f32 %v2080, %v2116
        %v2149 = vadd.f32 %v2081, %v2117
        %v2150 = vadd.f32 %v2082, %v2118
        %v2151 = vadd.f32 %v2083, %v2119
        %v2152 = vadd.f32 %v2084, %v2120
        %v2153 = vadd.f32 %v2085, %v2121
        %v2154 = vadd.f32 %v2086, %v2122
        %v2155 = vadd.f32 %v2087, %v2123
        %v2156 = vadd.f32 %v2088, %v2124
        %v2157 = vadd.f32 %v2089, %v2125
        %v2158 = vadd.f32 %v2090, %v2126
        %v2159 = vadd.f32 %v2091, %v2127
        %v2160 = vadd.f32 %v2092, %v2128
        %v2161 = vadd.f32 %v2093, %v2129
        %v2162 = vadd.f32 %v2094, %v2130
        %v2163 = vadd.f32 %v2095, %v2131
        %v2164 = vadd.f32 %v2096, %v2132
        %v2165 = vadd.f32 %v2097, %v2133
        %v2166 = vadd.f32 %v2098, %v2134
        %v2167 = vadd.f32 %v2099, %v2135
        %v2168 = vlaneseq
        %v2169 = vshrl.u32 %v2168, 7
        %v2170 = vsub.s32 4, %v2169
        %v2171 = vrot.slane %v469, %v2170
        %v2172 = vmul.f32 %v1996, %v2171
        %v2173 = vmul.f32 %v1997, %v2171
        %v2174 = vmul.f32 %v1998, %v2171
        %v2175 = vmul.f32 %v1999, %v2171
        %v2176 = vmul.f32 %v2000, %v2171
        %v2177 = vmul.f32 %v2001, %v2171
        %v2178 = vmul.f32 %v2002, %v2171
        %v2179 = vmul.f32 %v2003, %v2171
        %v2180 = vmul.f32 %v2004, %v2171
        %v2181 = vmul.f32 %v2005, %v2171
        %v2182 = vmul.f32 %v2006, %v2171
        %v2183 = vmul.f32 %v2007, %v2171
        %v2184 = vmul.f32 %v2008, %v2171
        %v2185 = vmul.f32 %v2009, %v2171
        %v2186 = vmul.f32 %v2010, %v2171
        %v2187 = vmul.f32 %v2011, %v2171
        %v2188 = vmul.f32 %v2012, %v2171
        %v2189 = vmul.f32 %v2013, %v2171
        %v2190 = vmul.f32 %v2014, %v2171
        %v2191 = vmul.f32 %v2015, %v2171
        %v2192 = vmul.f32 %v2016, %v2171
        %v2193 = vmul.f32 %v2017, %v2171
        %v2194 = vmul.f32 %v2018, %v2171
        %v2195 = vmul.f32 %v2019, %v2171
        %v2196 = vmul.f32 %v2020, %v2171
        %v2197 = vmul.f32 %v2021, %v2171
        %v2198 = vmul.f32 %v2022, %v2171
        %v2199 = vmul.f32 %v2023, %v2171
        %v2200 = vmul.f32 %v2024, %v2171
        %v2201 = vmul.f32 %v2025, %v2171
        %v2202 = vmul.f32 %v2026, %v2171
        %v2203 = vmul.f32 %v2027, %v2171
        %v2204 = vadd.f32 %v2136, %v2172
        %v2205 = vadd.f32 %v2137, %v2173
        %v2206 = vadd.f32 %v2138, %v2174
        %v2207 = vadd.f32 %v2139, %v2175
        %v2208 = vadd.f32 %v2140, %v2176
        %v2209 = vadd.f32 %v2141, %v2177
        %v2210 = vadd.f32 %v2142, %v2178
        %v2211 = vadd.f32 %v2143, %v2179
        %v2212 = vadd.f32 %v2144, %v2180
        %v2213 = vadd.f32 %v2145, %v2181
        %v2214 = vadd.f32 %v2146, %v2182
        %v2215 = vadd.f32 %v2147, %v2183
        %v2216 = vadd.f32 %v2148, %v2184
        %v2217 = vadd.f32 %v2149, %v2185
        %v2218 = vadd.f32 %v2150, %v2186
        %v2219 = vadd.f32 %v2151, %v2187
        %v2220 = vadd.f32 %v2152, %v2188
        %v2221 = vadd.f32 %v2153, %v2189
        %v2222 = vadd.f32 %v2154, %v2190
        %v2223 = vadd.f32 %v2155, %v2191
        %v2224 = vadd.f32 %v2156, %v2192
        %v2225 = vadd.f32 %v2157, %v2193
        %v2226 = vadd.f32 %v2158, %v2194
        %v2227 = vadd.f32 %v2159, %v2195
        %v2228 = vadd.f32 %v2160, %v2196
        %v2229 = vadd.f32 %v2161, %v2197
        %v2230 = vadd.f32 %v2162, %v2198
        %v2231 = vadd.f32 %v2163, %v2199
        %v2232 = vadd.f32 %v2164, %v2200
        %v2233 = vadd.f32 %v2165, %v2201
        %v2234 = vadd.f32 %v2166, %v2202
        %v2235 = vadd.f32 %v2167, %v2203
        %v2236 = vlaneseq
        %v2237 = vshrl.u32 %v2236, 7
        %v2238 = vsub.s32 4, %v2237
        %v2239 = vrot.slane %v470, %v2238
        %v2240 = vmul.f32 %v1998, %v2239
        %v2241 = vmul.f32 %v1999, %v2239
        %v2242 = vmul.f32 %v2000, %v2239
        %v2243 = vmul.f32 %v2001, %v2239
        %v2244 = vmul.f32 %v2002, %v2239
        %v2245 = vmul.f32 %v2003, %v2239
        %v2246 = vmul.f32 %v2004, %v2239
        %v2247 = vmul.f32 %v2005, %v2239
        %v2248 = vmul.f32 %v2006, %v2239
        %v2249 = vmul.f32 %v2007, %v2239
        %v2250 = vmul.f32 %v2008, %v2239
        %v2251 = vmul.f32 %v2009, %v2239
        %v2252 = vmul.f32 %v2010, %v2239
        %v2253 = vmul.f32 %v2011, %v2239
        %v2254 = vmul.f32 %v2012, %v2239
        %v2255 = vmul.f32 %v2013, %v2239
        %v2256 = vmul.f32 %v2014, %v2239
        %v2257 = vmul.f32 %v2015, %v2239
        %v2258 = vmul.f32 %v2016, %v2239
        %v2259 = vmul.f32 %v2017, %v2239
        %v2260 = vmul.f32 %v2018, %v2239
        %v2261 = vmul.f32 %v2019, %v2239
        %v2262 = vmul.f32 %v2020, %v2239
        %v2263 = vmul.f32 %v2021, %v2239
        %v2264 = vmul.f32 %v2022, %v2239
        %v2265 = vmul.f32 %v2023, %v2239
        %v2266 = vmul.f32 %v2024, %v2239
        %v2267 = vmul.f32 %v2025, %v2239
        %v2268 = vmul.f32 %v2026, %v2239
        %v2269 = vmul.f32 %v2027, %v2239
        %v2270 = vmul.f32 %v2028, %v2239
        %v2271 = vmul.f32 %v2029, %v2239
        %v2272 = vadd.f32 %v2204, %v2240
        %v2273 = vadd.f32 %v2205, %v2241
        %v2274 = vadd.f32 %v2206, %v2242
        %v2275 = vadd.f32 %v2207, %v2243
        %v2276 = vadd.f32 %v2208, %v2244
        %v2277 = vadd.f32 %v2209, %v2245
        %v2278 = vadd.f32 %v2210, %v2246
        %v2279 = vadd.f32 %v2211, %v2247
        %v2280 = vadd.f32 %v2212, %v2248
        %v2281 = vadd.f32 %v2213, %v2249
        %v2282 = vadd.f32 %v2214, %v2250
        %v2283 = vadd.f32 %v2215, %v2251
        %v2284 = vadd.f32 %v2216, %v2252
        %v2285 = vadd.f32 %v2217, %v2253
        %v2286 = vadd.f32 %v2218, %v2254
        %v2287 = vadd.f32 %v2219, %v2255
        %v2288 = vadd.f32 %v2220, %v2256
        %v2289 = vadd.f32 %v2221, %v2257
        %v2290 = vadd.f32 %v2222, %v2258
        %v2291 = vadd.f32 %v2223, %v2259
        %v2292 = vadd.f32 %v2224, %v2260
        %v2293 = vadd.f32 %v2225, %v2261
        %v2294 = vadd.f32 %v2226, %v2262
        %v2295 = vadd.f32 %v2227, %v2263
        %v2296 = vadd.f32 %v2228, %v2264
        %v2297 = vadd.f32 %v2229, %v2265
        %v2298 = vadd.f32 %v2230, %v2266
        %v2299 = vadd.f32 %v2231, %v2267
        %v2300 = vadd.f32 %v2232, %v2268
        %v2301 = vadd.f32 %v2233, %v2269
        %v2302 = vadd.f32 %v2234, %v2270
        %v2303 = vadd.f32 %v2235, %v2271
        %v2304 = vlaneseq
        %v2305 = vshrl.u32 %v2304, 7
        %v2306 = vsub.s32 4, %v2305
        %v2307 = vrot.slane %v471, %v2306
        %v2308 = vmul.f32 %v2000, %v2307
        %v2309 = vmul.f32 %v2001, %v2307
        %v2310 = vmul.f32 %v2002, %v2307
        %v2311 = vmul.f32 %v2003, %v2307
        %v2312 = vmul.f32 %v2004, %v2307
        %v2313 = vmul.f32 %v2005, %v2307
        %v2314 = vmul.f32 %v2006, %v2307
        %v2315 = vmul.f32 %v2007, %v2307
        %v2316 = vmul.f32 %v2008, %v2307
        %v2317 = vmul.f32 %v2009, %v2307
        %v2318 = vmul.f32 %v2010, %v2307
        %v2319 = vmul.f32 %v2011, %v2307
        %v2320 = vmul.f32 %v2012, %v2307
        %v2321 = vmul.f32 %v2013, %v2307
        %v2322 = vmul.f32 %v2014, %v2307
        %v2323 = vmul.f32 %v2015, %v2307
        %v2324 = vmul.f32 %v2016, %v2307
        %v2325 = vmul.f32 %v2017, %v2307
        %v2326 = vmul.f32 %v2018, %v2307
        %v2327 = vmul.f32 %v2019, %v2307
        %v2328 = vmul.f32 %v2020, %v2307
        %v2329 = vmul.f32 %v2021, %v2307
        %v2330 = vmul.f32 %v2022, %v2307
        %v2331 = vmul.f32 %v2023, %v2307
        %v2332 = vmul.f32 %v2024, %v2307
        %v2333 = vmul.f32 %v2025, %v2307
        %v2334 = vmul.f32 %v2026, %v2307
        %v2335 = vmul.f32 %v2027, %v2307
        %v2336 = vmul.f32 %v2028, %v2307
        %v2337 = vmul.f32 %v2029, %v2307
        %v2338 = vmul.f32 %v2030, %v2307
        %v2339 = vmul.f32 %v2031, %v2307
        %v2340 = vadd.f32 %v2272, %v2308
        %v2341 = vadd.f32 %v2273, %v2309
        %v2342 = vadd.f32 %v2274, %v2310
        %v2343 = vadd.f32 %v2275, %v2311
        %v2344 = vadd.f32 %v2276, %v2312
        %v2345 = vadd.f32 %v2277, %v2313
        %v2346 = vadd.f32 %v2278, %v2314
        %v2347 = vadd.f32 %v2279, %v2315
        %v2348 = vadd.f32 %v2280, %v2316
        %v2349 = vadd.f32 %v2281, %v2317
        %v2350 = vadd.f32 %v2282, %v2318
        %v2351 = vadd.f32 %v2283, %v2319
        %v2352 = vadd.f32 %v2284, %v2320
        %v2353 = vadd.f32 %v2285, %v2321
        %v2354 = vadd.f32 %v2286, %v2322
        %v2355 = vadd.f32 %v2287, %v2323
        %v2356 = vadd.f32 %v2288, %v2324
        %v2357 = vadd.f32 %v2289, %v2325
        %v2358 = vadd.f32 %v2290, %v2326
        %v2359 = vadd.f32 %v2291, %v2327
        %v2360 = vadd.f32 %v2292, %v2328
        %v2361 = vadd.f32 %v2293, %v2329
        %v2362 = vadd.f32 %v2294, %v2330
        %v2363 = vadd.f32 %v2295, %v2331
        %v2364 = vadd.f32 %v2296, %v2332
        %v2365 = vadd.f32 %v2297, %v2333
        %v2366 = vadd.f32 %v2298, %v2334
        %v2367 = vadd.f32 %v2299, %v2335
        %v2368 = vadd.f32 %v2300, %v2336
        %v2369 = vadd.f32 %v2301, %v2337
        %v2370 = vadd.f32 %v2302, %v2338
        %v2371 = vadd.f32 %v2303, %v2339
        %v2372 = vld [vmem:[%s2] sm:$0x1]
        %v2374 = vlaneseq
        %v2375 = vshrl.u32 %v2374, 7
        %v2376 = vsub.s32 0, %v2375
        %v2377 = vrot.slane %v2372, %v2376
        %v2379 = vadd.f32 %v2340, %v2377
        %v2380 = vadd.f32 %v2341, %v2377
        %v2381 = vadd.f32 %v2342, %v2377
        %v2382 = vadd.f32 %v2343, %v2377
        %v2383 = vadd.f32 %v2344, %v2377
        %v2384 = vadd.f32 %v2345, %v2377
        %v2385 = vadd.f32 %v2346, %v2377
        %v2386 = vadd.f32 %v2347, %v2377
        %v2387 = vadd.f32 %v2348, %v2377
        %v2388 = vadd.f32 %v2349, %v2377
        %v2389 = vadd.f32 %v2350, %v2377
        %v2390 = vadd.f32 %v2351, %v2377
        %v2391 = vadd.f32 %v2352, %v2377
        %v2392 = vadd.f32 %v2353, %v2377
        %v2393 = vadd.f32 %v2354, %v2377
        %v2394 = vadd.f32 %v2355, %v2377
        %v2395 = vadd.f32 %v2356, %v2377
        %v2396 = vadd.f32 %v2357, %v2377
        %v2397 = vadd.f32 %v2358, %v2377
        %v2398 = vadd.f32 %v2359, %v2377
        %v2399 = vadd.f32 %v2360, %v2377
        %v2400 = vadd.f32 %v2361, %v2377
        %v2401 = vadd.f32 %v2362, %v2377
        %v2402 = vadd.f32 %v2363, %v2377
        %v2403 = vadd.f32 %v2364, %v2377
        %v2404 = vadd.f32 %v2365, %v2377
        %v2405 = vadd.f32 %v2366, %v2377
        %v2406 = vadd.f32 %v2367, %v2377
        %v2407 = vadd.f32 %v2368, %v2377
        %v2408 = vadd.f32 %v2369, %v2377
        %v2409 = vadd.f32 %v2370, %v2377
        %v2410 = vadd.f32 %v2371, %v2377
        %2411 = vadd.xlane.f32.xlu0 %v2379
        %v2412 = vpop.xlane.xlu0 %2411
        %2413 = vadd.xlane.f32.xlu0 %v2380
        %v2414 = vpop.xlane.xlu0 %2413
        %2415 = vadd.xlane.f32.xlu0 %v2381
        %v2416 = vpop.xlane.xlu0 %2415
        %2417 = vadd.xlane.f32.xlu0 %v2382
        %v2418 = vpop.xlane.xlu0 %2417
        %2419 = vadd.xlane.f32.xlu0 %v2383
        %v2420 = vpop.xlane.xlu0 %2419
        %2421 = vadd.xlane.f32.xlu0 %v2384
        %v2422 = vpop.xlane.xlu0 %2421
        %2423 = vadd.xlane.f32.xlu0 %v2385
        %v2424 = vpop.xlane.xlu0 %2423
        %2425 = vadd.xlane.f32.xlu0 %v2386
        %v2426 = vpop.xlane.xlu0 %2425
        %2427 = vadd.xlane.f32.xlu0 %v2387
        %v2428 = vpop.xlane.xlu0 %2427
        %2429 = vadd.xlane.f32.xlu0 %v2388
        %v2430 = vpop.xlane.xlu0 %2429
        %2431 = vadd.xlane.f32.xlu0 %v2389
        %v2432 = vpop.xlane.xlu0 %2431
        %2433 = vadd.xlane.f32.xlu0 %v2390
        %v2434 = vpop.xlane.xlu0 %2433
        %2435 = vadd.xlane.f32.xlu0 %v2391
        %v2436 = vpop.xlane.xlu0 %2435
        %2437 = vadd.xlane.f32.xlu0 %v2392
        %v2438 = vpop.xlane.xlu0 %2437
        %2439 = vadd.xlane.f32.xlu0 %v2393
        %v2440 = vpop.xlane.xlu0 %2439
        %2441 = vadd.xlane.f32.xlu0 %v2394
        %v2442 = vpop.xlane.xlu0 %2441
        %2443 = vadd.xlane.f32.xlu0 %v2395
        %v2444 = vpop.xlane.xlu0 %2443
        %2445 = vadd.xlane.f32.xlu0 %v2396
        %v2446 = vpop.xlane.xlu0 %2445
        %2447 = vadd.xlane.f32.xlu0 %v2397
        %v2448 = vpop.xlane.xlu0 %2447
        %2449 = vadd.xlane.f32.xlu0 %v2398
        %v2450 = vpop.xlane.xlu0 %2449
        %2451 = vadd.xlane.f32.xlu0 %v2399
        %v2452 = vpop.xlane.xlu0 %2451
        %2453 = vadd.xlane.f32.xlu0 %v2400
        %v2454 = vpop.xlane.xlu0 %2453
        %2455 = vadd.xlane.f32.xlu0 %v2401
        %v2456 = vpop.xlane.xlu0 %2455
        %2457 = vadd.xlane.f32.xlu0 %v2402
        %v2458 = vpop.xlane.xlu0 %2457
        %2459 = vadd.xlane.f32.xlu0 %v2403
        %v2460 = vpop.xlane.xlu0 %2459
        %2461 = vadd.xlane.f32.xlu0 %v2404
        %v2462 = vpop.xlane.xlu0 %2461
        %2463 = vadd.xlane.f32.xlu0 %v2405
        %v2464 = vpop.xlane.xlu0 %2463
        %2465 = vadd.xlane.f32.xlu0 %v2406
        %v2466 = vpop.xlane.xlu0 %2465
        %2467 = vadd.xlane.f32.xlu0 %v2407
        %v2468 = vpop.xlane.xlu0 %2467
        %2469 = vadd.xlane.f32.xlu0 %v2408
        %v2470 = vpop.xlane.xlu0 %2469
        %2471 = vadd.xlane.f32.xlu0 %v2409
        %v2472 = vpop.xlane.xlu0 %2471
        %2473 = vadd.xlane.f32.xlu0 %v2410
        %v2474 = vpop.xlane.xlu0 %2473
        %v2475 = vrcp.pop 128.0
        %v2476 = vmul.f32 %v2412, %v2475
        %v2477 = vmul.f32 %v2414, %v2475
        %v2478 = vmul.f32 %v2416, %v2475
        %v2479 = vmul.f32 %v2418, %v2475
        %v2480 = vmul.f32 %v2420, %v2475
        %v2481 = vmul.f32 %v2422, %v2475
        %v2482 = vmul.f32 %v2424, %v2475
        %v2483 = vmul.f32 %v2426, %v2475
        %v2484 = vmul.f32 %v2428, %v2475
        %v2485 = vmul.f32 %v2430, %v2475
        %v2486 = vmul.f32 %v2432, %v2475
        %v2487 = vmul.f32 %v2434, %v2475
        %v2488 = vmul.f32 %v2436, %v2475
        %v2489 = vmul.f32 %v2438, %v2475
        %v2490 = vmul.f32 %v2440, %v2475
        %v2491 = vmul.f32 %v2442, %v2475
        %v2492 = vmul.f32 %v2444, %v2475
        %v2493 = vmul.f32 %v2446, %v2475
        %v2494 = vmul.f32 %v2448, %v2475
        %v2495 = vmul.f32 %v2450, %v2475
        %v2496 = vmul.f32 %v2452, %v2475
        %v2497 = vmul.f32 %v2454, %v2475
        %v2498 = vmul.f32 %v2456, %v2475
        %v2499 = vmul.f32 %v2458, %v2475
        %v2500 = vmul.f32 %v2460, %v2475
        %v2501 = vmul.f32 %v2462, %v2475
        %v2502 = vmul.f32 %v2464, %v2475
        %v2503 = vmul.f32 %v2466, %v2475
        %v2504 = vmul.f32 %v2468, %v2475
        %v2505 = vmul.f32 %v2470, %v2475
        %v2506 = vmul.f32 %v2472, %v2475
        %v2507 = vmul.f32 %v2474, %v2475
        %v2508 = vmul.f32 %v2379, %v2379
        %v2509 = vmul.f32 %v2380, %v2380
        %v2510 = vmul.f32 %v2381, %v2381
        %v2511 = vmul.f32 %v2382, %v2382
        %v2512 = vmul.f32 %v2383, %v2383
        %v2513 = vmul.f32 %v2384, %v2384
        %v2514 = vmul.f32 %v2385, %v2385
        %v2515 = vmul.f32 %v2386, %v2386
        %v2516 = vmul.f32 %v2387, %v2387
        %v2517 = vmul.f32 %v2388, %v2388
        %v2518 = vmul.f32 %v2389, %v2389
        %v2519 = vmul.f32 %v2390, %v2390
        %v2520 = vmul.f32 %v2391, %v2391
        %v2521 = vmul.f32 %v2392, %v2392
        %v2522 = vmul.f32 %v2393, %v2393
        %v2523 = vmul.f32 %v2394, %v2394
        %v2524 = vmul.f32 %v2395, %v2395
        %v2525 = vmul.f32 %v2396, %v2396
        %v2526 = vmul.f32 %v2397, %v2397
        %v2527 = vmul.f32 %v2398, %v2398
        %v2528 = vmul.f32 %v2399, %v2399
        %v2529 = vmul.f32 %v2400, %v2400
        %v2530 = vmul.f32 %v2401, %v2401
        %v2531 = vmul.f32 %v2402, %v2402
        %v2532 = vmul.f32 %v2403, %v2403
        %v2533 = vmul.f32 %v2404, %v2404
        %v2534 = vmul.f32 %v2405, %v2405
        %v2535 = vmul.f32 %v2406, %v2406
        %v2536 = vmul.f32 %v2407, %v2407
        %v2537 = vmul.f32 %v2408, %v2408
        %v2538 = vmul.f32 %v2409, %v2409
        %v2539 = vmul.f32 %v2410, %v2410
        %2540 = vadd.xlane.f32.xlu0 %v2508
        %v2541 = vpop.xlane.xlu0 %2540
        %2542 = vadd.xlane.f32.xlu0 %v2509
        %v2543 = vpop.xlane.xlu0 %2542
        %2544 = vadd.xlane.f32.xlu0 %v2510
        %v2545 = vpop.xlane.xlu0 %2544
        %2546 = vadd.xlane.f32.xlu0 %v2511
        %v2547 = vpop.xlane.xlu0 %2546
        %2548 = vadd.xlane.f32.xlu0 %v2512
        %v2549 = vpop.xlane.xlu0 %2548
        %2550 = vadd.xlane.f32.xlu0 %v2513
        %v2551 = vpop.xlane.xlu0 %2550
        %2552 = vadd.xlane.f32.xlu0 %v2514
        %v2553 = vpop.xlane.xlu0 %2552
        %2554 = vadd.xlane.f32.xlu0 %v2515
        %v2555 = vpop.xlane.xlu0 %2554
        %2556 = vadd.xlane.f32.xlu0 %v2516
        %v2557 = vpop.xlane.xlu0 %2556
        %2558 = vadd.xlane.f32.xlu0 %v2517
        %v2559 = vpop.xlane.xlu0 %2558
        %2560 = vadd.xlane.f32.xlu0 %v2518
        %v2561 = vpop.xlane.xlu0 %2560
        %2562 = vadd.xlane.f32.xlu0 %v2519
        %v2563 = vpop.xlane.xlu0 %2562
        %2564 = vadd.xlane.f32.xlu0 %v2520
        %v2565 = vpop.xlane.xlu0 %2564
        %2566 = vadd.xlane.f32.xlu0 %v2521
        %v2567 = vpop.xlane.xlu0 %2566
        %2568 = vadd.xlane.f32.xlu0 %v2522
        %v2569 = vpop.xlane.xlu0 %2568
        %2570 = vadd.xlane.f32.xlu0 %v2523
        %v2571 = vpop.xlane.xlu0 %2570
        %2572 = vadd.xlane.f32.xlu0 %v2524
        %v2573 = vpop.xlane.xlu0 %2572
        %2574 = vadd.xlane.f32.xlu0 %v2525
        %v2575 = vpop.xlane.xlu0 %2574
        %2576 = vadd.xlane.f32.xlu0 %v2526
        %v2577 = vpop.xlane.xlu0 %2576
        %2578 = vadd.xlane.f32.xlu0 %v2527
        %v2579 = vpop.xlane.xlu0 %2578
        %2580 = vadd.xlane.f32.xlu0 %v2528
        %v2581 = vpop.xlane.xlu0 %2580
        %2582 = vadd.xlane.f32.xlu0 %v2529
        %v2583 = vpop.xlane.xlu0 %2582
        %2584 = vadd.xlane.f32.xlu0 %v2530
        %v2585 = vpop.xlane.xlu0 %2584
        %2586 = vadd.xlane.f32.xlu0 %v2531
        %v2587 = vpop.xlane.xlu0 %2586
        %2588 = vadd.xlane.f32.xlu0 %v2532
        %v2589 = vpop.xlane.xlu0 %2588
        %2590 = vadd.xlane.f32.xlu0 %v2533
        %v2591 = vpop.xlane.xlu0 %2590
        %2592 = vadd.xlane.f32.xlu0 %v2534
        %v2593 = vpop.xlane.xlu0 %2592
        %2594 = vadd.xlane.f32.xlu0 %v2535
        %v2595 = vpop.xlane.xlu0 %2594
        %2596 = vadd.xlane.f32.xlu0 %v2536
        %v2597 = vpop.xlane.xlu0 %2596
        %2598 = vadd.xlane.f32.xlu0 %v2537
        %v2599 = vpop.xlane.xlu0 %2598
        %2600 = vadd.xlane.f32.xlu0 %v2538
        %v2601 = vpop.xlane.xlu0 %2600
        %2602 = vadd.xlane.f32.xlu0 %v2539
        %v2603 = vpop.xlane.xlu0 %2602
        %v2604 = vmul.f32 %v2541, %v2475
        %v2605 = vmul.f32 %v2543, %v2475
        %v2606 = vmul.f32 %v2545, %v2475
        %v2607 = vmul.f32 %v2547, %v2475
        %v2608 = vmul.f32 %v2549, %v2475
        %v2609 = vmul.f32 %v2551, %v2475
        %v2610 = vmul.f32 %v2553, %v2475
        %v2611 = vmul.f32 %v2555, %v2475
        %v2612 = vmul.f32 %v2557, %v2475
        %v2613 = vmul.f32 %v2559, %v2475
        %v2614 = vmul.f32 %v2561, %v2475
        %v2615 = vmul.f32 %v2563, %v2475
        %v2616 = vmul.f32 %v2565, %v2475
        %v2617 = vmul.f32 %v2567, %v2475
        %v2618 = vmul.f32 %v2569, %v2475
        %v2619 = vmul.f32 %v2571, %v2475
        %v2620 = vmul.f32 %v2573, %v2475
        %v2621 = vmul.f32 %v2575, %v2475
        %v2622 = vmul.f32 %v2577, %v2475
        %v2623 = vmul.f32 %v2579, %v2475
        %v2624 = vmul.f32 %v2581, %v2475
        %v2625 = vmul.f32 %v2583, %v2475
        %v2626 = vmul.f32 %v2585, %v2475
        %v2627 = vmul.f32 %v2587, %v2475
        %v2628 = vmul.f32 %v2589, %v2475
        %v2629 = vmul.f32 %v2591, %v2475
        %v2630 = vmul.f32 %v2593, %v2475
        %v2631 = vmul.f32 %v2595, %v2475
        %v2632 = vmul.f32 %v2597, %v2475
        %v2633 = vmul.f32 %v2599, %v2475
        %v2634 = vmul.f32 %v2601, %v2475
        %v2635 = vmul.f32 %v2603, %v2475
        %v2636 = vmul.f32 %v2476, %v2476
        %v2637 = vmul.f32 %v2477, %v2477
        %v2638 = vmul.f32 %v2478, %v2478
        %v2639 = vmul.f32 %v2479, %v2479
        %v2640 = vmul.f32 %v2480, %v2480
        %v2641 = vmul.f32 %v2481, %v2481
        %v2642 = vmul.f32 %v2482, %v2482
        %v2643 = vmul.f32 %v2483, %v2483
        %v2644 = vmul.f32 %v2484, %v2484
        %v2645 = vmul.f32 %v2485, %v2485
        %v2646 = vmul.f32 %v2486, %v2486
        %v2647 = vmul.f32 %v2487, %v2487
        %v2648 = vmul.f32 %v2488, %v2488
        %v2649 = vmul.f32 %v2489, %v2489
        %v2650 = vmul.f32 %v2490, %v2490
        %v2651 = vmul.f32 %v2491, %v2491
        %v2652 = vmul.f32 %v2492, %v2492
        %v2653 = vmul.f32 %v2493, %v2493
        %v2654 = vmul.f32 %v2494, %v2494
        %v2655 = vmul.f32 %v2495, %v2495
        %v2656 = vmul.f32 %v2496, %v2496
        %v2657 = vmul.f32 %v2497, %v2497
        %v2658 = vmul.f32 %v2498, %v2498
        %v2659 = vmul.f32 %v2499, %v2499
        %v2660 = vmul.f32 %v2500, %v2500
        %v2661 = vmul.f32 %v2501, %v2501
        %v2662 = vmul.f32 %v2502, %v2502
        %v2663 = vmul.f32 %v2503, %v2503
        %v2664 = vmul.f32 %v2504, %v2504
        %v2665 = vmul.f32 %v2505, %v2505
        %v2666 = vmul.f32 %v2506, %v2506
        %v2667 = vmul.f32 %v2507, %v2507
        %v2668 = vsub.f32 %v2604, %v2636
        %v2669 = vsub.f32 %v2605, %v2637
        %v2670 = vsub.f32 %v2606, %v2638
        %v2671 = vsub.f32 %v2607, %v2639
        %v2672 = vsub.f32 %v2608, %v2640
        %v2673 = vsub.f32 %v2609, %v2641
        %v2674 = vsub.f32 %v2610, %v2642
        %v2675 = vsub.f32 %v2611, %v2643
        %v2676 = vsub.f32 %v2612, %v2644
        %v2677 = vsub.f32 %v2613, %v2645
        %v2678 = vsub.f32 %v2614, %v2646
        %v2679 = vsub.f32 %v2615, %v2647
        %v2680 = vsub.f32 %v2616, %v2648
        %v2681 = vsub.f32 %v2617, %v2649
        %v2682 = vsub.f32 %v2618, %v2650
        %v2683 = vsub.f32 %v2619, %v2651
        %v2684 = vsub.f32 %v2620, %v2652
        %v2685 = vsub.f32 %v2621, %v2653
        %v2686 = vsub.f32 %v2622, %v2654
        %v2687 = vsub.f32 %v2623, %v2655
        %v2688 = vsub.f32 %v2624, %v2656
        %v2689 = vsub.f32 %v2625, %v2657
        %v2690 = vsub.f32 %v2626, %v2658
        %v2691 = vsub.f32 %v2627, %v2659
        %v2692 = vsub.f32 %v2628, %v2660
        %v2693 = vsub.f32 %v2629, %v2661
        %v2694 = vsub.f32 %v2630, %v2662
        %v2695 = vsub.f32 %v2631, %v2663
        %v2696 = vsub.f32 %v2632, %v2664
        %v2697 = vsub.f32 %v2633, %v2665
        %v2698 = vsub.f32 %v2634, %v2666
        %v2699 = vsub.f32 %v2635, %v2667
        %v2700 = vsub.f32 %v2379, %v2476
        %v2701 = vsub.f32 %v2380, %v2477
        %v2702 = vsub.f32 %v2381, %v2478
        %v2703 = vsub.f32 %v2382, %v2479
        %v2704 = vsub.f32 %v2383, %v2480
        %v2705 = vsub.f32 %v2384, %v2481
        %v2706 = vsub.f32 %v2385, %v2482
        %v2707 = vsub.f32 %v2386, %v2483
        %v2708 = vsub.f32 %v2387, %v2484
        %v2709 = vsub.f32 %v2388, %v2485
        %v2710 = vsub.f32 %v2389, %v2486
        %v2711 = vsub.f32 %v2390, %v2487
        %v2712 = vsub.f32 %v2391, %v2488
        %v2713 = vsub.f32 %v2392, %v2489
        %v2714 = vsub.f32 %v2393, %v2490
        %v2715 = vsub.f32 %v2394, %v2491
        %v2716 = vsub.f32 %v2395, %v2492
        %v2717 = vsub.f32 %v2396, %v2493
        %v2718 = vsub.f32 %v2397, %v2494
        %v2719 = vsub.f32 %v2398, %v2495
        %v2720 = vsub.f32 %v2399, %v2496
        %v2721 = vsub.f32 %v2400, %v2497
        %v2722 = vsub.f32 %v2401, %v2498
        %v2723 = vsub.f32 %v2402, %v2499
        %v2724 = vsub.f32 %v2403, %v2500
        %v2725 = vsub.f32 %v2404, %v2501
        %v2726 = vsub.f32 %v2405, %v2502
        %v2727 = vsub.f32 %v2406, %v2503
        %v2728 = vsub.f32 %v2407, %v2504
        %v2729 = vsub.f32 %v2408, %v2505
        %v2730 = vsub.f32 %v2409, %v2506
        %v2731 = vsub.f32 %v2410, %v2507
        %v2732 = vadd.f32 %v2668, 1e-06
        %v2733 = vadd.f32 %v2669, 1e-06
        %v2734 = vadd.f32 %v2670, 1e-06
        %v2735 = vadd.f32 %v2671, 1e-06
        %v2736 = vadd.f32 %v2672, 1e-06
        %v2737 = vadd.f32 %v2673, 1e-06
        %v2738 = vadd.f32 %v2674, 1e-06
        %v2739 = vadd.f32 %v2675, 1e-06
        %v2740 = vadd.f32 %v2676, 1e-06
        %v2741 = vadd.f32 %v2677, 1e-06
        %v2742 = vadd.f32 %v2678, 1e-06
        %v2743 = vadd.f32 %v2679, 1e-06
        %v2744 = vadd.f32 %v2680, 1e-06
        %v2745 = vadd.f32 %v2681, 1e-06
        %v2746 = vadd.f32 %v2682, 1e-06
        %v2747 = vadd.f32 %v2683, 1e-06
        %v2748 = vadd.f32 %v2684, 1e-06
        %v2749 = vadd.f32 %v2685, 1e-06
        %v2750 = vadd.f32 %v2686, 1e-06
        %v2751 = vadd.f32 %v2687, 1e-06
        %v2752 = vadd.f32 %v2688, 1e-06
        %v2753 = vadd.f32 %v2689, 1e-06
        %v2754 = vadd.f32 %v2690, 1e-06
        %v2755 = vadd.f32 %v2691, 1e-06
        %v2756 = vadd.f32 %v2692, 1e-06
        %v2757 = vadd.f32 %v2693, 1e-06
        %v2758 = vadd.f32 %v2694, 1e-06
        %v2759 = vadd.f32 %v2695, 1e-06
        %v2760 = vadd.f32 %v2696, 1e-06
        %v2761 = vadd.f32 %v2697, 1e-06
        %v2762 = vadd.f32 %v2698, 1e-06
        %v2763 = vadd.f32 %v2699, 1e-06
        %v2764 = vrsqrt.pop %v2732
        %v2765 = vrsqrt.pop %v2733
        %v2766 = vrsqrt.pop %v2734
        %v2767 = vrsqrt.pop %v2735
        %v2768 = vrsqrt.pop %v2736
        %v2769 = vrsqrt.pop %v2737
        %v2770 = vrsqrt.pop %v2738
        %v2771 = vrsqrt.pop %v2739
        %v2772 = vrsqrt.pop %v2740
        %v2773 = vrsqrt.pop %v2741
        %v2774 = vrsqrt.pop %v2742
        %v2775 = vrsqrt.pop %v2743
        %v2776 = vrsqrt.pop %v2744
        %v2777 = vrsqrt.pop %v2745
        %v2778 = vrsqrt.pop %v2746
        %v2779 = vrsqrt.pop %v2747
        %v2780 = vrsqrt.pop %v2748
        %v2781 = vrsqrt.pop %v2749
        %v2782 = vrsqrt.pop %v2750
        %v2783 = vrsqrt.pop %v2751
        %v2784 = vrsqrt.pop %v2752
        %v2785 = vrsqrt.pop %v2753
        %v2786 = vrsqrt.pop %v2754
        %v2787 = vrsqrt.pop %v2755
        %v2788 = vrsqrt.pop %v2756
        %v2789 = vrsqrt.pop %v2757
        %v2790 = vrsqrt.pop %v2758
        %v2791 = vrsqrt.pop %v2759
        %v2792 = vrsqrt.pop %v2760
        %v2793 = vrsqrt.pop %v2761
        %v2794 = vrsqrt.pop %v2762
        %v2795 = vrsqrt.pop %v2763
        %v2796 = vmul.f32 %v2700, %v2764
        %v2797 = vmul.f32 %v2701, %v2765
        %v2798 = vmul.f32 %v2702, %v2766
        %v2799 = vmul.f32 %v2703, %v2767
        %v2800 = vmul.f32 %v2704, %v2768
        %v2801 = vmul.f32 %v2705, %v2769
        %v2802 = vmul.f32 %v2706, %v2770
        %v2803 = vmul.f32 %v2707, %v2771
        %v2804 = vmul.f32 %v2708, %v2772
        %v2805 = vmul.f32 %v2709, %v2773
        %v2806 = vmul.f32 %v2710, %v2774
        %v2807 = vmul.f32 %v2711, %v2775
        %v2808 = vmul.f32 %v2712, %v2776
        %v2809 = vmul.f32 %v2713, %v2777
        %v2810 = vmul.f32 %v2714, %v2778
        %v2811 = vmul.f32 %v2715, %v2779
        %v2812 = vmul.f32 %v2716, %v2780
        %v2813 = vmul.f32 %v2717, %v2781
        %v2814 = vmul.f32 %v2718, %v2782
        %v2815 = vmul.f32 %v2719, %v2783
        %v2816 = vmul.f32 %v2720, %v2784
        %v2817 = vmul.f32 %v2721, %v2785
        %v2818 = vmul.f32 %v2722, %v2786
        %v2819 = vmul.f32 %v2723, %v2787
        %v2820 = vmul.f32 %v2724, %v2788
        %v2821 = vmul.f32 %v2725, %v2789
        %v2822 = vmul.f32 %v2726, %v2790
        %v2823 = vmul.f32 %v2727, %v2791
        %v2824 = vmul.f32 %v2728, %v2792
        %v2825 = vmul.f32 %v2729, %v2793
        %v2826 = vmul.f32 %v2730, %v2794
        %v2827 = vmul.f32 %v2731, %v2795
        %v2828 = vpack.c.bf16 %v2797, %v2796
        %v2829 = vpack.c.bf16 %v2799, %v2798
        %v2830 = vpack.c.bf16 %v2801, %v2800
        %v2831 = vpack.c.bf16 %v2803, %v2802
        %v2832 = vpack.c.bf16 %v2805, %v2804
        %v2833 = vpack.c.bf16 %v2807, %v2806
        %v2834 = vpack.c.bf16 %v2809, %v2808
        %v2835 = vpack.c.bf16 %v2811, %v2810
        %v2836 = vpack.c.bf16 %v2813, %v2812
        %v2837 = vpack.c.bf16 %v2815, %v2814
        %v2838 = vpack.c.bf16 %v2817, %v2816
        %v2839 = vpack.c.bf16 %v2819, %v2818
        %v2840 = vpack.c.bf16 %v2821, %v2820
        %v2841 = vpack.c.bf16 %v2823, %v2822
        %v2842 = vpack.c.bf16 %v2825, %v2824
        %v2843 = vpack.c.bf16 %v2827, %v2826
        %v2844 = vld [vmem:[#allocation8] sm:$0xff]
        %v2845 = vld [vmem:[#allocation8 + $0x8] sm:$0xff]
        %v2846 = vld [vmem:[#allocation8 + $0x10] sm:$0xff]
        %v2847 = vld [vmem:[#allocation8 + $0x18] sm:$0xff]
        %v2848 = vld [vmem:[#allocation8 + $0x20] sm:$0xff]
        %v2849 = vld [vmem:[#allocation8 + $0x28] sm:$0xff]
        %v2850 = vld [vmem:[#allocation8 + $0x30] sm:$0xff]
        %v2851 = vld [vmem:[#allocation8 + $0x38] sm:$0xff]
        %v2852 = vld [vmem:[#allocation8 + $0x40] sm:$0xff]
        %v2853 = vld [vmem:[#allocation8 + $0x48] sm:$0xff]
        %v2854 = vld [vmem:[#allocation8 + $0x50] sm:$0xff]
        %v2855 = vld [vmem:[#allocation8 + $0x58] sm:$0xff]
        %v2856 = vld [vmem:[#allocation8 + $0x60] sm:$0xff]
        %v2857 = vld [vmem:[#allocation8 + $0x68] sm:$0xff]
        %v2858 = vld [vmem:[#allocation8 + $0x70] sm:$0xff]
        %v2859 = vld [vmem:[#allocation8 + $0x78] sm:$0xff]
        %v2860 = vld [vmem:[#allocation8 + $0x80] sm:$0xff]
        %v2861 = vld [vmem:[#allocation8 + $0x88] sm:$0xff]
        %v2862 = vld [vmem:[#allocation8 + $0x90] sm:$0xff]
        %v2863 = vld [vmem:[#allocation8 + $0x98] sm:$0xff]
        %v2864 = vld [vmem:[#allocation8 + $0xa0] sm:$0xff]
        %v2865 = vld [vmem:[#allocation8 + $0xa8] sm:$0xff]
        %v2866 = vld [vmem:[#allocation8 + $0xb0] sm:$0xff]
        %v2867 = vld [vmem:[#allocation8 + $0xb8] sm:$0xff]
        %v2868 = vld [vmem:[#allocation8 + $0xc0] sm:$0xff]
        %v2869 = vld [vmem:[#allocation8 + $0xc8] sm:$0xff]
        %v2870 = vld [vmem:[#allocation8 + $0xd0] sm:$0xff]
        %v2871 = vld [vmem:[#allocation8 + $0xd8] sm:$0xff]
        %v2872 = vld [vmem:[#allocation8 + $0xe0] sm:$0xff]
        %v2873 = vld [vmem:[#allocation8 + $0xe8] sm:$0xff]
        %v2874 = vld [vmem:[#allocation8 + $0xf0] sm:$0xff]
        %v2875 = vld [vmem:[#allocation8 + $0xf8] sm:$0xff]
        %v2876 = vld [vmem:[%s4] sm:$0xf]
        %v2878 = vlaneseq
        %v2879 = vshrl.u32 %v2878, 7
        %v2880 = vsub.s32 0, %v2879
        %v2881 = vrot.slane %v2876, %v2880
        %v2882 = vlaneseq
        %v2883 = vshrl.u32 %v2882, 7
        %v2884 = vsub.s32 1, %v2883
        %v2885 = vrot.slane %v2876, %v2884
        %v2886 = vlaneseq
        %v2887 = vshrl.u32 %v2886, 7
        %v2888 = vsub.s32 2, %v2887
        %v2889 = vrot.slane %v2876, %v2888
        %v2890 = vlaneseq
        %v2891 = vshrl.u32 %v2890, 7
        %v2892 = vsub.s32 3, %v2891
        %v2893 = vrot.slane %v2876, %v2892
        %v2930 = vunpack.c.l.b16 %v2844
        %v2931 = vunpack.c.h.b16 %v2844
        %v2932 = vunpack.c.l.b16 %v2845
        %v2933 = vunpack.c.h.b16 %v2845
        %v2934 = vunpack.c.l.b16 %v2846
        %v2935 = vunpack.c.h.b16 %v2846
        %v2936 = vunpack.c.l.b16 %v2847
        %v2937 = vunpack.c.h.b16 %v2847
        %v2938 = vunpack.c.l.b16 %v2848
        %v2939 = vunpack.c.h.b16 %v2848
        %v2940 = vunpack.c.l.b16 %v2849
        %v2941 = vunpack.c.h.b16 %v2849
        %v2942 = vunpack.c.l.b16 %v2850
        %v2943 = vunpack.c.h.b16 %v2850
        %v2944 = vunpack.c.l.b16 %v2851
        %v2945 = vunpack.c.h.b16 %v2851
        %v2946 = vunpack.c.l.b16 %v2852
        %v2947 = vunpack.c.h.b16 %v2852
        %v2948 = vunpack.c.l.b16 %v2853
        %v2949 = vunpack.c.h.b16 %v2853
        %v2950 = vunpack.c.l.b16 %v2854
        %v2951 = vunpack.c.h.b16 %v2854
        %v2952 = vunpack.c.l.b16 %v2855
        %v2953 = vunpack.c.h.b16 %v2855
        %v2954 = vunpack.c.l.b16 %v2856
        %v2955 = vunpack.c.h.b16 %v2856
        %v2956 = vunpack.c.l.b16 %v2857
        %v2957 = vunpack.c.h.b16 %v2857
        %v2958 = vunpack.c.l.b16 %v2858
        %v2959 = vunpack.c.h.b16 %v2858
        %v2960 = vunpack.c.l.b16 %v2859
        %v2961 = vunpack.c.h.b16 %v2859
        %v2962 = vunpack.c.l.b16 %v2860
        %v2963 = vunpack.c.h.b16 %v2860
        %v2964 = vunpack.c.l.b16 %v2861
        %v2965 = vunpack.c.h.b16 %v2861
        %v2966 = vunpack.c.l.b16 %v2862
        %v2967 = vunpack.c.h.b16 %v2862
        %v2968 = vunpack.c.l.b16 %v2863
        %v2969 = vunpack.c.h.b16 %v2863
        %v2970 = vunpack.c.l.b16 %v2864
        %v2971 = vunpack.c.h.b16 %v2864
        %v2972 = vunpack.c.l.b16 %v2865
        %v2973 = vunpack.c.h.b16 %v2865
        %v2974 = vunpack.c.l.b16 %v2866
        %v2975 = vunpack.c.h.b16 %v2866
        %v2976 = vunpack.c.l.b16 %v2867
        %v2977 = vunpack.c.h.b16 %v2867
        %v2978 = vunpack.c.l.b16 %v2868
        %v2979 = vunpack.c.h.b16 %v2868
        %v2980 = vunpack.c.l.b16 %v2869
        %v2981 = vunpack.c.h.b16 %v2869
        %v2982 = vunpack.c.l.b16 %v2870
        %v2983 = vunpack.c.h.b16 %v2870
        %v2984 = vunpack.c.l.b16 %v2871
        %v2985 = vunpack.c.h.b16 %v2871
        %v2986 = vunpack.c.l.b16 %v2872
        %v2987 = vunpack.c.h.b16 %v2872
        %v2988 = vunpack.c.l.b16 %v2873
        %v2989 = vunpack.c.h.b16 %v2873
        %v2990 = vunpack.c.l.b16 %v2874
        %v2991 = vunpack.c.h.b16 %v2874
        %v2992 = vunpack.c.l.b16 %v2875
        %v2993 = vunpack.c.h.b16 %v2875
        %v2994 = vpack.c.b16 %v2934, %v2930
        %v2995 = vpack.c.b16 %v2935, %v2931
        %v2996 = vpack.c.b16 %v2936, %v2932
        %v2997 = vpack.c.b16 %v2937, %v2933
        %v2998 = vpack.c.b16 %v2942, %v2938
        %v2999 = vpack.c.b16 %v2943, %v2939
        %v3000 = vpack.c.b16 %v2944, %v2940
        %v3001 = vpack.c.b16 %v2945, %v2941
        %v3002 = vpack.c.b16 %v2950, %v2946
        %v3003 = vpack.c.b16 %v2951, %v2947
        %v3004 = vpack.c.b16 %v2952, %v2948
        %v3005 = vpack.c.b16 %v2953, %v2949
        %v3006 = vpack.c.b16 %v2958, %v2954
        %v3007 = vpack.c.b16 %v2959, %v2955
        %v3008 = vpack.c.b16 %v2960, %v2956
        %v3009 = vpack.c.b16 %v2961, %v2957
        %v3010 = vpack.c.b16 %v2966, %v2962
        %v3011 = vpack.c.b16 %v2967, %v2963
        %v3012 = vpack.c.b16 %v2968, %v2964
        %v3013 = vpack.c.b16 %v2969, %v2965
        %v3014 = vpack.c.b16 %v2974, %v2970
        %v3015 = vpack.c.b16 %v2975, %v2971
        %v3016 = vpack.c.b16 %v2976, %v2972
        %v3017 = vpack.c.b16 %v2977, %v2973
        %v3018 = vpack.c.b16 %v2982, %v2978
        %v3019 = vpack.c.b16 %v2983, %v2979
        %v3020 = vpack.c.b16 %v2984, %v2980
        %v3021 = vpack.c.b16 %v2985, %v2981
        %v3022 = vpack.c.b16 %v2990, %v2986
        %v3023 = vpack.c.b16 %v2991, %v2987
        %v3024 = vpack.c.b16 %v2992, %v2988
        %v3025 = vpack.c.b16 %v2993, %v2989
        %3058 = vmatprep.subr.bf16.mxu0 %v3023
        %3059 = vmatpush1.bf16.msra.mxu0 %v3022
        %3060 = vmatprep.subr.bf16.mxu0 %v3019
        %3061 = vmatpush1.bf16.msra.mxu0 %v3018
        %3062 = vmatprep.subr.bf16.mxu0 %v3015
        %3063 = vmatpush1.bf16.msra.mxu0 %v3014
        %3064 = vmatprep.subr.bf16.mxu0 %v3011
        %3065 = vmatpush1.bf16.msra.mxu0 %v3010
        %3066 = vmatprep.subr.bf16.mxu0 %v3007
        %3067 = vmatpush1.bf16.msra.mxu0 %v3006
        %3068 = vmatprep.subr.bf16.mxu0 %v3003
        %3069 = vmatpush1.bf16.msra.mxu0 %v3002
        %3070 = vmatprep.subr.bf16.mxu0 %v2999
        %3071 = vmatpush1.bf16.msra.mxu0 %v2998
        %3072 = vmatprep.subr.bf16.mxu0 %v2995
        %3073 = vmatpush1.bf16.msra.mxu0 %v2994
        %3074 = vmatprep.subr.bf16.mxu0 0
        %3075 = vmatpush2.bf16.msra.mxu0 0
        %3076 = vmatprep.subr.bf16.mxu0 0
        %3077 = vmatpush2.bf16.msra.mxu0 0
        %3078 = vmatprep.subr.bf16.mxu0 0
        %3079 = vmatpush2.bf16.msra.mxu0 0
        %3080 = vmatprep.subr.bf16.mxu0 0
        %3081 = vmatpush2.bf16.msra.mxu0 0
        %3082 = vmatprep.subr.bf16.mxu0 0
        %3083 = vmatpush2.bf16.msra.mxu0 0
        %3084 = vmatprep.subr.bf16.mxu0 0
        %3085 = vmatpush2.bf16.msra.mxu0 0
        %3086 = vmatprep.subr.bf16.mxu0 0
        %3087 = vmatpush2.bf16.msra.mxu0 0
        %3088 = vmatprep.subr.bf16.mxu0 0
        %3089 = vmatpush2.bf16.msra.mxu0 0
        %3090 = vmatprep.mubr.bf16.mxu0 0
        %3091 = vmatmul.mubr.bf16.gmra.mxu0 %v2828
        %v3092 = vpop.f32.mrf.mxu0
        %v3093 = vadd.f32 %v2881, %v3092
        %v3094 = vpop.f32.mrf.mxu0
        %v3095 = vadd.f32 %v2885, %v3094
        %v3096 = vpop.f32.mrf.mxu0
        %v3097 = vadd.f32 %v2881, %v3096
        %v3098 = vpop.f32.mrf.mxu0
        %v3099 = vadd.f32 %v2885, %v3098
        %3100 = vmatprep.mubr.bf16.mxu0 0
        %3101 = vmatmul.mubr.bf16.gmra.mxu0 %v2829
        %v3102 = vpop.f32.mrf.mxu0
        %v3103 = vadd.f32 %v2881, %v3102
        %v3104 = vpop.f32.mrf.mxu0
        %v3105 = vadd.f32 %v2885, %v3104
        %v3106 = vpop.f32.mrf.mxu0
        %v3107 = vadd.f32 %v2881, %v3106
        %v3108 = vpop.f32.mrf.mxu0
        %v3109 = vadd.f32 %v2885, %v3108
        %3110 = vmatprep.mubr.bf16.mxu0 0
        %3111 = vmatmul.mubr.bf16.gmra.mxu0 %v2830
        %v3112 = vpop.f32.mrf.mxu0
        %v3113 = vadd.f32 %v2881, %v3112
        %v3114 = vpop.f32.mrf.mxu0
        %v3115 = vadd.f32 %v2885, %v3114
        %v3116 = vpop.f32.mrf.mxu0
        %v3117 = vadd.f32 %v2881, %v3116
        %v3118 = vpop.f32.mrf.mxu0
        %v3119 = vadd.f32 %v2885, %v3118
        %3120 = vmatprep.mubr.bf16.mxu0 0
        %3121 = vmatmul.mubr.bf16.gmra.mxu0 %v2831
        %v3122 = vpop.f32.mrf.mxu0
        %v3123 = vadd.f32 %v2881, %v3122
        %v3124 = vpop.f32.mrf.mxu0
        %v3125 = vadd.f32 %v2885, %v3124
        %v3126 = vpop.f32.mrf.mxu0
        %v3127 = vadd.f32 %v2881, %v3126
        %v3128 = vpop.f32.mrf.mxu0
        %v3129 = vadd.f32 %v2885, %v3128
        %3130 = vmatprep.mubr.bf16.mxu0 0
        %3131 = vmatmul.mubr.bf16.gmra.mxu0 %v2832
        %v3132 = vpop.f32.mrf.mxu0
        %v3133 = vadd.f32 %v2881, %v3132
        %v3134 = vpop.f32.mrf.mxu0
        %v3135 = vadd.f32 %v2885, %v3134
        %v3136 = vpop.f32.mrf.mxu0
        %v3137 = vadd.f32 %v2881, %v3136
        %v3138 = vpop.f32.mrf.mxu0
        %v3139 = vadd.f32 %v2885, %v3138
        %3140 = vmatprep.mubr.bf16.mxu0 0
        %3141 = vmatmul.mubr.bf16.gmra.mxu0 %v2833
        %v3142 = vpop.f32.mrf.mxu0
        %v3143 = vadd.f32 %v2881, %v3142
        %v3144 = vpop.f32.mrf.mxu0
        %v3145 = vadd.f32 %v2885, %v3144
        %v3146 = vpop.f32.mrf.mxu0
        %v3147 = vadd.f32 %v2881, %v3146
        %v3148 = vpop.f32.mrf.mxu0
        %v3149 = vadd.f32 %v2885, %v3148
        %3150 = vmatprep.mubr.bf16.mxu0 0
        %3151 = vmatmul.mubr.bf16.gmra.mxu0 %v2834
        %v3152 = vpop.f32.mrf.mxu0
        %v3153 = vadd.f32 %v2881, %v3152
        %v3154 = vpop.f32.mrf.mxu0
        %v3155 = vadd.f32 %v2885, %v3154
        %v3156 = vpop.f32.mrf.mxu0
        %v3157 = vadd.f32 %v2881, %v3156
        %v3158 = vpop.f32.mrf.mxu0
        %v3159 = vadd.f32 %v2885, %v3158
        %3160 = vmatprep.mubr.bf16.mxu0 0
        %3161 = vmatmul.mubr.bf16.gmra.mxu0 %v2835
        %v3162 = vpop.f32.mrf.mxu0
        %v3163 = vadd.f32 %v2881, %v3162
        %v3164 = vpop.f32.mrf.mxu0
        %v3165 = vadd.f32 %v2885, %v3164
        %v3166 = vpop.f32.mrf.mxu0
        %v3167 = vadd.f32 %v2881, %v3166
        %v3168 = vpop.f32.mrf.mxu0
        %v3169 = vadd.f32 %v2885, %v3168
        %3170 = vmatprep.mubr.bf16.mxu0 0
        %3171 = vmatmul.mubr.bf16.gmra.mxu0 %v2836
        %v3172 = vpop.f32.mrf.mxu0
        %v3173 = vadd.f32 %v2881, %v3172
        %v3174 = vpop.f32.mrf.mxu0
        %v3175 = vadd.f32 %v2885, %v3174
        %v3176 = vpop.f32.mrf.mxu0
        %v3177 = vadd.f32 %v2881, %v3176
        %v3178 = vpop.f32.mrf.mxu0
        %v3179 = vadd.f32 %v2885, %v3178
        %3180 = vmatprep.mubr.bf16.mxu0 0
        %3181 = vmatmul.mubr.bf16.gmra.mxu0 %v2837
        %v3182 = vpop.f32.mrf.mxu0
        %v3183 = vadd.f32 %v2881, %v3182
        %v3184 = vpop.f32.mrf.mxu0
        %v3185 = vadd.f32 %v2885, %v3184
        %v3186 = vpop.f32.mrf.mxu0
        %v3187 = vadd.f32 %v2881, %v3186
        %v3188 = vpop.f32.mrf.mxu0
        %v3189 = vadd.f32 %v2885, %v3188
        %3190 = vmatprep.mubr.bf16.mxu0 0
        %3191 = vmatmul.mubr.bf16.gmra.mxu0 %v2838
        %v3192 = vpop.f32.mrf.mxu0
        %v3193 = vadd.f32 %v2881, %v3192
        %v3194 = vpop.f32.mrf.mxu0
        %v3195 = vadd.f32 %v2885, %v3194
        %v3196 = vpop.f32.mrf.mxu0
        %v3197 = vadd.f32 %v2881, %v3196
        %v3198 = vpop.f32.mrf.mxu0
        %v3199 = vadd.f32 %v2885, %v3198
        %3200 = vmatprep.mubr.bf16.mxu0 0
        %3201 = vmatmul.mubr.bf16.gmra.mxu0 %v2839
        %v3202 = vpop.f32.mrf.mxu0
        %v3203 = vadd.f32 %v2881, %v3202
        %v3204 = vpop.f32.mrf.mxu0
        %v3205 = vadd.f32 %v2885, %v3204
        %v3206 = vpop.f32.mrf.mxu0
        %v3207 = vadd.f32 %v2881, %v3206
        %v3208 = vpop.f32.mrf.mxu0
        %v3209 = vadd.f32 %v2885, %v3208
        %3210 = vmatprep.mubr.bf16.mxu0 0
        %3211 = vmatmul.mubr.bf16.gmra.mxu0 %v2840
        %v3212 = vpop.f32.mrf.mxu0
        %v3213 = vadd.f32 %v2881, %v3212
        %v3214 = vpop.f32.mrf.mxu0
        %v3215 = vadd.f32 %v2885, %v3214
        %v3216 = vpop.f32.mrf.mxu0
        %v3217 = vadd.f32 %v2881, %v3216
        %v3218 = vpop.f32.mrf.mxu0
        %v3219 = vadd.f32 %v2885, %v3218
        %3220 = vmatprep.mubr.bf16.mxu0 0
        %3221 = vmatmul.mubr.bf16.gmra.mxu0 %v2841
        %v3222 = vpop.f32.mrf.mxu0
        %v3223 = vadd.f32 %v2881, %v3222
        %v3224 = vpop.f32.mrf.mxu0
        %v3225 = vadd.f32 %v2885, %v3224
        %v3226 = vpop.f32.mrf.mxu0
        %v3227 = vadd.f32 %v2881, %v3226
        %v3228 = vpop.f32.mrf.mxu0
        %v3229 = vadd.f32 %v2885, %v3228
        %3230 = vmatprep.mubr.bf16.mxu0 0
        %3231 = vmatmul.mubr.bf16.gmra.mxu0 %v2842
        %v3232 = vpop.f32.mrf.mxu0
        %v3233 = vadd.f32 %v2881, %v3232
        %v3234 = vpop.f32.mrf.mxu0
        %v3235 = vadd.f32 %v2885, %v3234
        %v3236 = vpop.f32.mrf.mxu0
        %v3237 = vadd.f32 %v2881, %v3236
        %v3238 = vpop.f32.mrf.mxu0
        %v3239 = vadd.f32 %v2885, %v3238
        %3240 = vmatprep.mubr.bf16.mxu0 0
        %3241 = vmatmul.mubr.bf16.gmra.mxu0 %v2843
        %v3242 = vpop.f32.mrf.mxu0
        %v3243 = vadd.f32 %v2881, %v3242
        %v3244 = vpop.f32.mrf.mxu0
        %v3245 = vadd.f32 %v2885, %v3244
        %v3246 = vpop.f32.mrf.mxu0
        %v3247 = vadd.f32 %v2881, %v3246
        %v3248 = vpop.f32.mrf.mxu0
        %v3249 = vadd.f32 %v2885, %v3248
        %3250 = vdwg.mxu0
        %3251 = vmatprep.subr.bf16.mxu0 %v3025
        %3252 = vmatpush1.bf16.msra.mxu0 %v3024
        %3253 = vmatprep.subr.bf16.mxu0 %v3021
        %3254 = vmatpush1.bf16.msra.mxu0 %v3020
        %3255 = vmatprep.subr.bf16.mxu0 %v3017
        %3256 = vmatpush1.bf16.msra.mxu0 %v3016
        %3257 = vmatprep.subr.bf16.mxu0 %v3013
        %3258 = vmatpush1.bf16.msra.mxu0 %v3012
        %3259 = vmatprep.subr.bf16.mxu0 %v3009
        %3260 = vmatpush1.bf16.msra.mxu0 %v3008
        %3261 = vmatprep.subr.bf16.mxu0 %v3005
        %3262 = vmatpush1.bf16.msra.mxu0 %v3004
        %3263 = vmatprep.subr.bf16.mxu0 %v3001
        %3264 = vmatpush1.bf16.msra.mxu0 %v3000
        %3265 = vmatprep.subr.bf16.mxu0 %v2997
        %3266 = vmatpush1.bf16.msra.mxu0 %v2996
        %3267 = vmatprep.subr.bf16.mxu0 0
        %3268 = vmatpush2.bf16.msra.mxu0 0
        %3269 = vmatprep.subr.bf16.mxu0 0
        %3270 = vmatpush2.bf16.msra.mxu0 0
        %3271 = vmatprep.subr.bf16.mxu0 0
        %3272 = vmatpush2.bf16.msra.mxu0 0
        %3273 = vmatprep.subr.bf16.mxu0 0
        %3274 = vmatpush2.bf16.msra.mxu0 0
        %3275 = vmatprep.subr.bf16.mxu0 0
        %3276 = vmatpush2.bf16.msra.mxu0 0
        %3277 = vmatprep.subr.bf16.mxu0 0
        %3278 = vmatpush2.bf16.msra.mxu0 0
        %3279 = vmatprep.subr.bf16.mxu0 0
        %3280 = vmatpush2.bf16.msra.mxu0 0
        %3281 = vmatprep.subr.bf16.mxu0 0
        %3282 = vmatpush2.bf16.msra.mxu0 0
        %3283 = vmatprep.mubr.bf16.mxu0 0
        %3284 = vmatmul.mubr.bf16.gmra.mxu0 %v2828
        %v3285 = vpop.f32.mrf.mxu0
        %v3286 = vadd.f32 %v2889, %v3285
        %v3287 = vpop.f32.mrf.mxu0
        %v3288 = vadd.f32 %v2893, %v3287
        %v3289 = vpop.f32.mrf.mxu0
        %v3290 = vadd.f32 %v2889, %v3289
        %v3291 = vpop.f32.mrf.mxu0
        %v3292 = vadd.f32 %v2893, %v3291
        %3293 = vmatprep.mubr.bf16.mxu0 0
        %3294 = vmatmul.mubr.bf16.gmra.mxu0 %v2829
        %v3295 = vpop.f32.mrf.mxu0
        %v3296 = vadd.f32 %v2889, %v3295
        %v3297 = vpop.f32.mrf.mxu0
        %v3298 = vadd.f32 %v2893, %v3297
        %v3299 = vpop.f32.mrf.mxu0
        %v3300 = vadd.f32 %v2889, %v3299
        %v3301 = vpop.f32.mrf.mxu0
        %v3302 = vadd.f32 %v2893, %v3301
        %3303 = vmatprep.mubr.bf16.mxu0 0
        %3304 = vmatmul.mubr.bf16.gmra.mxu0 %v2830
        %v3305 = vpop.f32.mrf.mxu0
        %v3306 = vadd.f32 %v2889, %v3305
        %v3307 = vpop.f32.mrf.mxu0
        %v3308 = vadd.f32 %v2893, %v3307
        %v3309 = vpop.f32.mrf.mxu0
        %v3310 = vadd.f32 %v2889, %v3309
        %v3311 = vpop.f32.mrf.mxu0
        %v3312 = vadd.f32 %v2893, %v3311
        %3313 = vmatprep.mubr.bf16.mxu0 0
        %3314 = vmatmul.mubr.bf16.gmra.mxu0 %v2831
        %v3315 = vpop.f32.mrf.mxu0
        %v3316 = vadd.f32 %v2889, %v3315
        %v3317 = vpop.f32.mrf.mxu0
        %v3318 = vadd.f32 %v2893, %v3317
        %v3319 = vpop.f32.mrf.mxu0
        %v3320 = vadd.f32 %v2889, %v3319
        %v3321 = vpop.f32.mrf.mxu0
        %v3322 = vadd.f32 %v2893, %v3321
        %3323 = vmatprep.mubr.bf16.mxu0 0
        %3324 = vmatmul.mubr.bf16.gmra.mxu0 %v2832
        %v3325 = vpop.f32.mrf.mxu0
        %v3326 = vadd.f32 %v2889, %v3325
        %v3327 = vpop.f32.mrf.mxu0
        %v3328 = vadd.f32 %v2893, %v3327
        %v3329 = vpop.f32.mrf.mxu0
        %v3330 = vadd.f32 %v2889, %v3329
        %v3331 = vpop.f32.mrf.mxu0
        %v3332 = vadd.f32 %v2893, %v3331
        %3333 = vmatprep.mubr.bf16.mxu0 0
        %3334 = vmatmul.mubr.bf16.gmra.mxu0 %v2833
        %v3335 = vpop.f32.mrf.mxu0
        %v3336 = vadd.f32 %v2889, %v3335
        %v3337 = vpop.f32.mrf.mxu0
        %v3338 = vadd.f32 %v2893, %v3337
        %v3339 = vpop.f32.mrf.mxu0
        %v3340 = vadd.f32 %v2889, %v3339
        %v3341 = vpop.f32.mrf.mxu0
        %v3342 = vadd.f32 %v2893, %v3341
        %3343 = vmatprep.mubr.bf16.mxu0 0
        %3344 = vmatmul.mubr.bf16.gmra.mxu0 %v2834
        %v3345 = vpop.f32.mrf.mxu0
        %v3346 = vadd.f32 %v2889, %v3345
        %v3347 = vpop.f32.mrf.mxu0
        %v3348 = vadd.f32 %v2893, %v3347
        %v3349 = vpop.f32.mrf.mxu0
        %v3350 = vadd.f32 %v2889, %v3349
        %v3351 = vpop.f32.mrf.mxu0
        %v3352 = vadd.f32 %v2893, %v3351
        %3353 = vmatprep.mubr.bf16.mxu0 0
        %3354 = vmatmul.mubr.bf16.gmra.mxu0 %v2835
        %v3355 = vpop.f32.mrf.mxu0
        %v3356 = vadd.f32 %v2889, %v3355
        %v3357 = vpop.f32.mrf.mxu0
        %v3358 = vadd.f32 %v2893, %v3357
        %v3359 = vpop.f32.mrf.mxu0
        %v3360 = vadd.f32 %v2889, %v3359
        %v3361 = vpop.f32.mrf.mxu0
        %v3362 = vadd.f32 %v2893, %v3361
        %3363 = vmatprep.mubr.bf16.mxu0 0
        %3364 = vmatmul.mubr.bf16.gmra.mxu0 %v2836
        %v3365 = vpop.f32.mrf.mxu0
        %v3366 = vadd.f32 %v2889, %v3365
        %v3367 = vpop.f32.mrf.mxu0
        %v3368 = vadd.f32 %v2893, %v3367
        %v3369 = vpop.f32.mrf.mxu0
        %v3370 = vadd.f32 %v2889, %v3369
        %v3371 = vpop.f32.mrf.mxu0
        %v3372 = vadd.f32 %v2893, %v3371
        %3373 = vmatprep.mubr.bf16.mxu0 0
        %3374 = vmatmul.mubr.bf16.gmra.mxu0 %v2837
        %v3375 = vpop.f32.mrf.mxu0
        %v3376 = vadd.f32 %v2889, %v3375
        %v3377 = vpop.f32.mrf.mxu0
        %v3378 = vadd.f32 %v2893, %v3377
        %v3379 = vpop.f32.mrf.mxu0
        %v3380 = vadd.f32 %v2889, %v3379
        %v3381 = vpop.f32.mrf.mxu0
        %v3382 = vadd.f32 %v2893, %v3381
        %3383 = vmatprep.mubr.bf16.mxu0 0
        %3384 = vmatmul.mubr.bf16.gmra.mxu0 %v2838
        %v3385 = vpop.f32.mrf.mxu0
        %v3386 = vadd.f32 %v2889, %v3385
        %v3387 = vpop.f32.mrf.mxu0
        %v3388 = vadd.f32 %v2893, %v3387
        %v3389 = vpop.f32.mrf.mxu0
        %v3390 = vadd.f32 %v2889, %v3389
        %v3391 = vpop.f32.mrf.mxu0
        %v3392 = vadd.f32 %v2893, %v3391
        %3393 = vmatprep.mubr.bf16.mxu0 0
        %3394 = vmatmul.mubr.bf16.gmra.mxu0 %v2839
        %v3395 = vpop.f32.mrf.mxu0
        %v3396 = vadd.f32 %v2889, %v3395
        %v3397 = vpop.f32.mrf.mxu0
        %v3398 = vadd.f32 %v2893, %v3397
        %v3399 = vpop.f32.mrf.mxu0
        %v3400 = vadd.f32 %v2889, %v3399
        %v3401 = vpop.f32.mrf.mxu0
        %v3402 = vadd.f32 %v2893, %v3401
        %3403 = vmatprep.mubr.bf16.mxu0 0
        %3404 = vmatmul.mubr.bf16.gmra.mxu0 %v2840
        %v3405 = vpop.f32.mrf.mxu0
        %v3406 = vadd.f32 %v2889, %v3405
        %v3407 = vpop.f32.mrf.mxu0
        %v3408 = vadd.f32 %v2893, %v3407
        %v3409 = vpop.f32.mrf.mxu0
        %v3410 = vadd.f32 %v2889, %v3409
        %v3411 = vpop.f32.mrf.mxu0
        %v3412 = vadd.f32 %v2893, %v3411
        %3413 = vmatprep.mubr.bf16.mxu0 0
        %3414 = vmatmul.mubr.bf16.gmra.mxu0 %v2841
        %v3415 = vpop.f32.mrf.mxu0
        %v3416 = vadd.f32 %v2889, %v3415
        %v3417 = vpop.f32.mrf.mxu0
        %v3418 = vadd.f32 %v2893, %v3417
        %v3419 = vpop.f32.mrf.mxu0
        %v3420 = vadd.f32 %v2889, %v3419
        %v3421 = vpop.f32.mrf.mxu0
        %v3422 = vadd.f32 %v2893, %v3421
        %3423 = vmatprep.mubr.bf16.mxu0 0
        %3424 = vmatmul.mubr.bf16.gmra.mxu0 %v2842
        %v3425 = vpop.f32.mrf.mxu0
        %v3426 = vadd.f32 %v2889, %v3425
        %v3427 = vpop.f32.mrf.mxu0
        %v3428 = vadd.f32 %v2893, %v3427
        %v3429 = vpop.f32.mrf.mxu0
        %v3430 = vadd.f32 %v2889, %v3429
        %v3431 = vpop.f32.mrf.mxu0
        %v3432 = vadd.f32 %v2893, %v3431
        %3433 = vmatprep.mubr.bf16.mxu0 0
        %3434 = vmatmul.mubr.bf16.gmra.mxu0 %v2843
        %v3435 = vpop.f32.mrf.mxu0
        %v3436 = vadd.f32 %v2889, %v3435
        %v3437 = vpop.f32.mrf.mxu0
        %v3438 = vadd.f32 %v2893, %v3437
        %v3439 = vpop.f32.mrf.mxu0
        %v3440 = vadd.f32 %v2889, %v3439
        %v3441 = vpop.f32.mrf.mxu0
        %v3442 = vadd.f32 %v2893, %v3441
        %3443 = vdwg.mxu0
        %v3444 = vmul.f32 %v3093, 0.70710677
        %v3445 = vmul.f32 %v3095, 0.70710677
        %v3446 = vmul.f32 %v3286, 0.70710677
        %v3447 = vmul.f32 %v3288, 0.70710677
        %v3448 = vmul.f32 %v3097, 0.70710677
        %v3449 = vmul.f32 %v3099, 0.70710677
        %v3450 = vmul.f32 %v3290, 0.70710677
        %v3451 = vmul.f32 %v3292, 0.70710677
        %v3452 = vmul.f32 %v3103, 0.70710677
        %v3453 = vmul.f32 %v3105, 0.70710677
        %v3454 = vmul.f32 %v3296, 0.70710677
        %v3455 = vmul.f32 %v3298, 0.70710677
        %v3456 = vmul.f32 %v3107, 0.70710677
        %v3457 = vmul.f32 %v3109, 0.70710677
        %v3458 = vmul.f32 %v3300, 0.70710677
        %v3459 = vmul.f32 %v3302, 0.70710677
        %v3460 = vmul.f32 %v3113, 0.70710677
        %v3461 = vmul.f32 %v3115, 0.70710677
        %v3462 = vmul.f32 %v3306, 0.70710677
        %v3463 = vmul.f32 %v3308, 0.70710677
        %v3464 = vmul.f32 %v3117, 0.70710677
        %v3465 = vmul.f32 %v3119, 0.70710677
        %v3466 = vmul.f32 %v3310, 0.70710677
        %v3467 = vmul.f32 %v3312, 0.70710677
        %v3468 = vmul.f32 %v3123, 0.70710677
        %v3469 = vmul.f32 %v3125, 0.70710677
        %v3470 = vmul.f32 %v3316, 0.70710677
        %v3471 = vmul.f32 %v3318, 0.70710677
        %v3472 = vmul.f32 %v3127, 0.70710677
        %v3473 = vmul.f32 %v3129, 0.70710677
        %v3474 = vmul.f32 %v3320, 0.70710677
        %v3475 = vmul.f32 %v3322, 0.70710677
        %v3476 = vmul.f32 %v3133, 0.70710677
        %v3477 = vmul.f32 %v3135, 0.70710677
        %v3478 = vmul.f32 %v3326, 0.70710677
        %v3479 = vmul.f32 %v3328, 0.70710677
        %v3480 = vmul.f32 %v3137, 0.70710677
        %v3481 = vmul.f32 %v3139, 0.70710677
        %v3482 = vmul.f32 %v3330, 0.70710677
        %v3483 = vmul.f32 %v3332, 0.70710677
        %v3484 = vmul.f32 %v3143, 0.70710677
        %v3485 = vmul.f32 %v3145, 0.70710677
        %v3486 = vmul.f32 %v3336, 0.70710677
        %v3487 = vmul.f32 %v3338, 0.70710677
        %v3488 = vmul.f32 %v3147, 0.70710677
        %v3489 = vmul.f32 %v3149, 0.70710677
        %v3490 = vmul.f32 %v3340, 0.70710677
        %v3491 = vmul.f32 %v3342, 0.70710677
        %v3492 = vmul.f32 %v3153, 0.70710677
        %v3493 = vmul.f32 %v3155, 0.70710677
        %v3494 = vmul.f32 %v3346, 0.70710677
        %v3495 = vmul.f32 %v3348, 0.70710677
        %v3496 = vmul.f32 %v3157, 0.70710677
        %v3497 = vmul.f32 %v3159, 0.70710677
        %v3498 = vmul.f32 %v3350, 0.70710677
        %v3499 = vmul.f32 %v3352, 0.70710677
        %v3500 = vmul.f32 %v3163, 0.70710677
        %v3501 = vmul.f32 %v3165, 0.70710677
        %v3502 = vmul.f32 %v3356, 0.70710677
        %v3503 = vmul.f32 %v3358, 0.70710677
        %v3504 = vmul.f32 %v3167, 0.70710677
        %v3505 = vmul.f32 %v3169, 0.70710677
        %v3506 = vmul.f32 %v3360, 0.70710677
        %v3507 = vmul.f32 %v3362, 0.70710677
        %v3508 = vmul.f32 %v3173, 0.70710677
        %v3509 = vmul.f32 %v3175, 0.70710677
        %v3510 = vmul.f32 %v3366, 0.70710677
        %v3511 = vmul.f32 %v3368, 0.70710677
        %v3512 = vmul.f32 %v3177, 0.70710677
        %v3513 = vmul.f32 %v3179, 0.70710677
        %v3514 = vmul.f32 %v3370, 0.70710677
        %v3515 = vmul.f32 %v3372, 0.70710677
        %v3516 = vmul.f32 %v3183, 0.70710677
        %v3517 = vmul.f32 %v3185, 0.70710677
        %v3518 = vmul.f32 %v3376, 0.70710677
        %v3519 = vmul.f32 %v3378, 0.70710677
        %v3520 = vmul.f32 %v3187, 0.70710677
        %v3521 = vmul.f32 %v3189, 0.70710677
        %v3522 = vmul.f32 %v3380, 0.70710677
        %v3523 = vmul.f32 %v3382, 0.70710677
        %v3524 = vmul.f32 %v3193, 0.70710677
        %v3525 = vmul.f32 %v3195, 0.70710677
        %v3526 = vmul.f32 %v3386, 0.70710677
        %v3527 = vmul.f32 %v3388, 0.70710677
        %v3528 = vmul.f32 %v3197, 0.70710677
        %v3529 = vmul.f32 %v3199, 0.70710677
        %v3530 = vmul.f32 %v3390, 0.70710677
        %v3531 = vmul.f32 %v3392, 0.70710677
        %v3532 = vmul.f32 %v3203, 0.70710677
        %v3533 = vmul.f32 %v3205, 0.70710677
        %v3534 = vmul.f32 %v3396, 0.70710677
        %v3535 = vmul.f32 %v3398, 0.70710677
        %v3536 = vmul.f32 %v3207, 0.70710677
        %v3537 = vmul.f32 %v3209, 0.70710677
        %v3538 = vmul.f32 %v3400, 0.70710677
        %v3539 = vmul.f32 %v3402, 0.70710677
        %v3540 = vmul.f32 %v3213, 0.70710677
        %v3541 = vmul.f32 %v3215, 0.70710677
        %v3542 = vmul.f32 %v3406, 0.70710677
        %v3543 = vmul.f32 %v3408, 0.70710677
        %v3544 = vmul.f32 %v3217, 0.70710677
        %v3545 = vmul.f32 %v3219, 0.70710677
        %v3546 = vmul.f32 %v3410, 0.70710677
        %v3547 = vmul.f32 %v3412, 0.70710677
        %v3548 = vmul.f32 %v3223, 0.70710677
        %v3549 = vmul.f32 %v3225, 0.70710677
        %v3550 = vmul.f32 %v3416, 0.70710677
        %v3551 = vmul.f32 %v3418, 0.70710677
        %v3552 = vmul.f32 %v3227, 0.70710677
        %v3553 = vmul.f32 %v3229, 0.70710677
        %v3554 = vmul.f32 %v3420, 0.70710677
        %v3555 = vmul.f32 %v3422, 0.70710677
        %v3556 = vmul.f32 %v3233, 0.70710677
        %v3557 = vmul.f32 %v3235, 0.70710677
        %v3558 = vmul.f32 %v3426, 0.70710677
        %v3559 = vmul.f32 %v3428, 0.70710677
        %v3560 = vmul.f32 %v3237, 0.70710677
        %v3561 = vmul.f32 %v3239, 0.70710677
        %v3562 = vmul.f32 %v3430, 0.70710677
        %v3563 = vmul.f32 %v3432, 0.70710677
        %v3564 = vmul.f32 %v3243, 0.70710677
        %v3565 = vmul.f32 %v3245, 0.70710677
        %v3566 = vmul.f32 %v3436, 0.70710677
        %v3567 = vmul.f32 %v3438, 0.70710677
        %v3568 = vmul.f32 %v3247, 0.70710677
        %v3569 = vmul.f32 %v3249, 0.70710677
        %v3570 = vmul.f32 %v3440, 0.70710677
        %v3571 = vmul.f32 %v3442, 0.70710677
        %v3572 = vand.u32 2147483647, %v3444
        %v3573 = vand.u32 2147483647, %v3445
        %v3574 = vand.u32 2147483647, %v3446
        %v3575 = vand.u32 2147483647, %v3447
        %v3576 = vand.u32 2147483647, %v3448
        %v3577 = vand.u32 2147483647, %v3449
        %v3578 = vand.u32 2147483647, %v3450
        %v3579 = vand.u32 2147483647, %v3451
        %v3580 = vand.u32 2147483647, %v3452
        %v3581 = vand.u32 2147483647, %v3453
        %v3582 = vand.u32 2147483647, %v3454
        %v3583 = vand.u32 2147483647, %v3455
        %v3584 = vand.u32 2147483647, %v3456
        %v3585 = vand.u32 2147483647, %v3457
        %v3586 = vand.u32 2147483647, %v3458
        %v3587 = vand.u32 2147483647, %v3459
        %v3588 = vand.u32 2147483647, %v3460
        %v3589 = vand.u32 2147483647, %v3461
        %v3590 = vand.u32 2147483647, %v3462
        %v3591 = vand.u32 2147483647, %v3463
        %v3592 = vand.u32 2147483647, %v3464
        %v3593 = vand.u32 2147483647, %v3465
        %v3594 = vand.u32 2147483647, %v3466
        %v3595 = vand.u32 2147483647, %v3467
        %v3596 = vand.u32 2147483647, %v3468
        %v3597 = vand.u32 2147483647, %v3469
        %v3598 = vand.u32 2147483647, %v3470
        %v3599 = vand.u32 2147483647, %v3471
        %v3600 = vand.u32 2147483647, %v3472
        %v3601 = vand.u32 2147483647, %v3473
        %v3602 = vand.u32 2147483647, %v3474
        %v3603 = vand.u32 2147483647, %v3475
        %v3604 = vand.u32 2147483647, %v3476
        %v3605 = vand.u32 2147483647, %v3477
        %v3606 = vand.u32 2147483647, %v3478
        %v3607 = vand.u32 2147483647, %v3479
        %v3608 = vand.u32 2147483647, %v3480
        %v3609 = vand.u32 2147483647, %v3481
        %v3610 = vand.u32 2147483647, %v3482
        %v3611 = vand.u32 2147483647, %v3483
        %v3612 = vand.u32 2147483647, %v3484
        %v3613 = vand.u32 2147483647, %v3485
        %v3614 = vand.u32 2147483647, %v3486
        %v3615 = vand.u32 2147483647, %v3487
        %v3616 = vand.u32 2147483647, %v3488
        %v3617 = vand.u32 2147483647, %v3489
        %v3618 = vand.u32 2147483647, %v3490
        %v3619 = vand.u32 2147483647, %v3491
        %v3620 = vand.u32 2147483647, %v3492
        %v3621 = vand.u32 2147483647, %v3493
        %v3622 = vand.u32 2147483647, %v3494
        %v3623 = vand.u32 2147483647, %v3495
        %v3624 = vand.u32 2147483647, %v3496
        %v3625 = vand.u32 2147483647, %v3497
        %v3626 = vand.u32 2147483647, %v3498
        %v3627 = vand.u32 2147483647, %v3499
        %v3628 = vand.u32 2147483647, %v3500
        %v3629 = vand.u32 2147483647, %v3501
        %v3630 = vand.u32 2147483647, %v3502
        %v3631 = vand.u32 2147483647, %v3503
        %v3632 = vand.u32 2147483647, %v3504
        %v3633 = vand.u32 2147483647, %v3505
        %v3634 = vand.u32 2147483647, %v3506
        %v3635 = vand.u32 2147483647, %v3507
        %v3636 = vand.u32 2147483647, %v3508
        %v3637 = vand.u32 2147483647, %v3509
        %v3638 = vand.u32 2147483647, %v3510
        %v3639 = vand.u32 2147483647, %v3511
        %v3640 = vand.u32 2147483647, %v3512
        %v3641 = vand.u32 2147483647, %v3513
        %v3642 = vand.u32 2147483647, %v3514
        %v3643 = vand.u32 2147483647, %v3515
        %v3644 = vand.u32 2147483647, %v3516
        %v3645 = vand.u32 2147483647, %v3517
        %v3646 = vand.u32 2147483647, %v3518
        %v3647 = vand.u32 2147483647, %v3519
        %v3648 = vand.u32 2147483647, %v3520
        %v3649 = vand.u32 2147483647, %v3521
        %v3650 = vand.u32 2147483647, %v3522
        %v3651 = vand.u32 2147483647, %v3523
        %v3652 = vand.u32 2147483647, %v3524
        %v3653 = vand.u32 2147483647, %v3525
        %v3654 = vand.u32 2147483647, %v3526
        %v3655 = vand.u32 2147483647, %v3527
        %v3656 = vand.u32 2147483647, %v3528
        %v3657 = vand.u32 2147483647, %v3529
        %v3658 = vand.u32 2147483647, %v3530
        %v3659 = vand.u32 2147483647, %v3531
        %v3660 = vand.u32 2147483647, %v3532
        %v3661 = vand.u32 2147483647, %v3533
        %v3662 = vand.u32 2147483647, %v3534
        %v3663 = vand.u32 2147483647, %v3535
        %v3664 = vand.u32 2147483647, %v3536
        %v3665 = vand.u32 2147483647, %v3537
        %v3666 = vand.u32 2147483647, %v3538
        %v3667 = vand.u32 2147483647, %v3539
        %v3668 = vand.u32 2147483647, %v3540
        %v3669 = vand.u32 2147483647, %v3541
        %v3670 = vand.u32 2147483647, %v3542
        %v3671 = vand.u32 2147483647, %v3543
        %v3672 = vand.u32 2147483647, %v3544
        %v3673 = vand.u32 2147483647, %v3545
        %v3674 = vand.u32 2147483647, %v3546
        %v3675 = vand.u32 2147483647, %v3547
        %v3676 = vand.u32 2147483647, %v3548
        %v3677 = vand.u32 2147483647, %v3549
        %v3678 = vand.u32 2147483647, %v3550
        %v3679 = vand.u32 2147483647, %v3551
        %v3680 = vand.u32 2147483647, %v3552
        %v3681 = vand.u32 2147483647, %v3553
        %v3682 = vand.u32 2147483647, %v3554
        %v3683 = vand.u32 2147483647, %v3555
        %v3684 = vand.u32 2147483647, %v3556
        %v3685 = vand.u32 2147483647, %v3557
        %v3686 = vand.u32 2147483647, %v3558
        %v3687 = vand.u32 2147483647, %v3559
        %v3688 = vand.u32 2147483647, %v3560
        %v3689 = vand.u32 2147483647, %v3561
        %v3690 = vand.u32 2147483647, %v3562
        %v3691 = vand.u32 2147483647, %v3563
        %v3692 = vand.u32 2147483647, %v3564
        %v3693 = vand.u32 2147483647, %v3565
        %v3694 = vand.u32 2147483647, %v3566
        %v3695 = vand.u32 2147483647, %v3567
        %v3696 = vand.u32 2147483647, %v3568
        %v3697 = vand.u32 2147483647, %v3569
        %v3698 = vand.u32 2147483647, %v3570
        %v3699 = vand.u32 2147483647, %v3571
        %v3700 = vmul.f32 %v3572, 0.3275911
        %v3701 = vmul.f32 %v3573, 0.3275911
        %v3702 = vmul.f32 %v3574, 0.3275911
        %v3703 = vmul.f32 %v3575, 0.3275911
        %v3704 = vmul.f32 %v3576, 0.3275911
        %v3705 = vmul.f32 %v3577, 0.3275911
        %v3706 = vmul.f32 %v3578, 0.3275911
        %v3707 = vmul.f32 %v3579, 0.3275911
        %v3708 = vmul.f32 %v3580, 0.3275911
        %v3709 = vmul.f32 %v3581, 0.3275911
        %v3710 = vmul.f32 %v3582, 0.3275911
        %v3711 = vmul.f32 %v3583, 0.3275911
        %v3712 = vmul.f32 %v3584, 0.3275911
        %v3713 = vmul.f32 %v3585, 0.3275911
        %v3714 = vmul.f32 %v3586, 0.3275911
        %v3715 = vmul.f32 %v3587, 0.3275911
        %v3716 = vmul.f32 %v3588, 0.3275911
        %v3717 = vmul.f32 %v3589, 0.3275911
        %v3718 = vmul.f32 %v3590, 0.3275911
        %v3719 = vmul.f32 %v3591, 0.3275911
        %v3720 = vmul.f32 %v3592, 0.3275911
        %v3721 = vmul.f32 %v3593, 0.3275911
        %v3722 = vmul.f32 %v3594, 0.3275911
        %v3723 = vmul.f32 %v3595, 0.3275911
        %v3724 = vmul.f32 %v3596, 0.3275911
        %v3725 = vmul.f32 %v3597, 0.3275911
        %v3726 = vmul.f32 %v3598, 0.3275911
        %v3727 = vmul.f32 %v3599, 0.3275911
        %v3728 = vmul.f32 %v3600, 0.3275911
        %v3729 = vmul.f32 %v3601, 0.3275911
        %v3730 = vmul.f32 %v3602, 0.3275911
        %v3731 = vmul.f32 %v3603, 0.3275911
        %v3732 = vmul.f32 %v3604, 0.3275911
        %v3733 = vmul.f32 %v3605, 0.3275911
        %v3734 = vmul.f32 %v3606, 0.3275911
        %v3735 = vmul.f32 %v3607, 0.3275911
        %v3736 = vmul.f32 %v3608, 0.3275911
        %v3737 = vmul.f32 %v3609, 0.3275911
        %v3738 = vmul.f32 %v3610, 0.3275911
        %v3739 = vmul.f32 %v3611, 0.3275911
        %v3740 = vmul.f32 %v3612, 0.3275911
        %v3741 = vmul.f32 %v3613, 0.3275911
        %v3742 = vmul.f32 %v3614, 0.3275911
        %v3743 = vmul.f32 %v3615, 0.3275911
        %v3744 = vmul.f32 %v3616, 0.3275911
        %v3745 = vmul.f32 %v3617, 0.3275911
        %v3746 = vmul.f32 %v3618, 0.3275911
        %v3747 = vmul.f32 %v3619, 0.3275911
        %v3748 = vmul.f32 %v3620, 0.3275911
        %v3749 = vmul.f32 %v3621, 0.3275911
        %v3750 = vmul.f32 %v3622, 0.3275911
        %v3751 = vmul.f32 %v3623, 0.3275911
        %v3752 = vmul.f32 %v3624, 0.3275911
        %v3753 = vmul.f32 %v3625, 0.3275911
        %v3754 = vmul.f32 %v3626, 0.3275911
        %v3755 = vmul.f32 %v3627, 0.3275911
        %v3756 = vmul.f32 %v3628, 0.3275911
        %v3757 = vmul.f32 %v3629, 0.3275911
        %v3758 = vmul.f32 %v3630, 0.3275911
        %v3759 = vmul.f32 %v3631, 0.3275911
        %v3760 = vmul.f32 %v3632, 0.3275911
        %v3761 = vmul.f32 %v3633, 0.3275911
        %v3762 = vmul.f32 %v3634, 0.3275911
        %v3763 = vmul.f32 %v3635, 0.3275911
        %v3764 = vmul.f32 %v3636, 0.3275911
        %v3765 = vmul.f32 %v3637, 0.3275911
        %v3766 = vmul.f32 %v3638, 0.3275911
        %v3767 = vmul.f32 %v3639, 0.3275911
        %v3768 = vmul.f32 %v3640, 0.3275911
        %v3769 = vmul.f32 %v3641, 0.3275911
        %v3770 = vmul.f32 %v3642, 0.3275911
        %v3771 = vmul.f32 %v3643, 0.3275911
        %v3772 = vmul.f32 %v3644, 0.3275911
        %v3773 = vmul.f32 %v3645, 0.3275911
        %v3774 = vmul.f32 %v3646, 0.3275911
        %v3775 = vmul.f32 %v3647, 0.3275911
        %v3776 = vmul.f32 %v3648, 0.3275911
        %v3777 = vmul.f32 %v3649, 0.3275911
        %v3778 = vmul.f32 %v3650, 0.3275911
        %v3779 = vmul.f32 %v3651, 0.3275911
        %v3780 = vmul.f32 %v3652, 0.3275911
        %v3781 = vmul.f32 %v3653, 0.3275911
        %v3782 = vmul.f32 %v3654, 0.3275911
        %v3783 = vmul.f32 %v3655, 0.3275911
        %v3784 = vmul.f32 %v3656, 0.3275911
        %v3785 = vmul.f32 %v3657, 0.3275911
        %v3786 = vmul.f32 %v3658, 0.3275911
        %v3787 = vmul.f32 %v3659, 0.3275911
        %v3788 = vmul.f32 %v3660, 0.3275911
        %v3789 = vmul.f32 %v3661, 0.3275911
        %v3790 = vmul.f32 %v3662, 0.3275911
        %v3791 = vmul.f32 %v3663, 0.3275911
        %v3792 = vmul.f32 %v3664, 0.3275911
        %v3793 = vmul.f32 %v3665, 0.3275911
        %v3794 = vmul.f32 %v3666, 0.3275911
        %v3795 = vmul.f32 %v3667, 0.3275911
        %v3796 = vmul.f32 %v3668, 0.3275911
        %v3797 = vmul.f32 %v3669, 0.3275911
        %v3798 = vmul.f32 %v3670, 0.3275911
        %v3799 = vmul.f32 %v3671, 0.3275911
        %v3800 = vmul.f32 %v3672, 0.3275911
        %v3801 = vmul.f32 %v3673, 0.3275911
        %v3802 = vmul.f32 %v3674, 0.3275911
        %v3803 = vmul.f32 %v3675, 0.3275911
        %v3804 = vmul.f32 %v3676, 0.3275911
        %v3805 = vmul.f32 %v3677, 0.3275911
        %v3806 = vmul.f32 %v3678, 0.3275911
        %v3807 = vmul.f32 %v3679, 0.3275911
        %v3808 = vmul.f32 %v3680, 0.3275911
        %v3809 = vmul.f32 %v3681, 0.3275911
        %v3810 = vmul.f32 %v3682, 0.3275911
        %v3811 = vmul.f32 %v3683, 0.3275911
        %v3812 = vmul.f32 %v3684, 0.3275911
        %v3813 = vmul.f32 %v3685, 0.3275911
        %v3814 = vmul.f32 %v3686, 0.3275911
        %v3815 = vmul.f32 %v3687, 0.3275911
        %v3816 = vmul.f32 %v3688, 0.3275911
        %v3817 = vmul.f32 %v3689, 0.3275911
        %v3818 = vmul.f32 %v3690, 0.3275911
        %v3819 = vmul.f32 %v3691, 0.3275911
        %v3820 = vmul.f32 %v3692, 0.3275911
        %v3821 = vmul.f32 %v3693, 0.3275911
        %v3822 = vmul.f32 %v3694, 0.3275911
        %v3823 = vmul.f32 %v3695, 0.3275911
        %v3824 = vmul.f32 %v3696, 0.3275911
        %v3825 = vmul.f32 %v3697, 0.3275911
        %v3826 = vmul.f32 %v3698, 0.3275911
        %v3827 = vmul.f32 %v3699, 0.3275911
        %v3828 = vadd.f32 %v3700, 1.0
        %v3829 = vadd.f32 %v3701, 1.0
        %v3830 = vadd.f32 %v3702, 1.0
        %v3831 = vadd.f32 %v3703, 1.0
        %v3832 = vadd.f32 %v3704, 1.0
        %v3833 = vadd.f32 %v3705, 1.0
        %v3834 = vadd.f32 %v3706, 1.0
        %v3835 = vadd.f32 %v3707, 1.0
        %v3836 = vadd.f32 %v3708, 1.0
        %v3837 = vadd.f32 %v3709, 1.0
        %v3838 = vadd.f32 %v3710, 1.0
        %v3839 = vadd.f32 %v3711, 1.0
        %v3840 = vadd.f32 %v3712, 1.0
        %v3841 = vadd.f32 %v3713, 1.0
        %v3842 = vadd.f32 %v3714, 1.0
        %v3843 = vadd.f32 %v3715, 1.0
        %v3844 = vadd.f32 %v3716, 1.0
        %v3845 = vadd.f32 %v3717, 1.0
        %v3846 = vadd.f32 %v3718, 1.0
        %v3847 = vadd.f32 %v3719, 1.0
        %v3848 = vadd.f32 %v3720, 1.0
        %v3849 = vadd.f32 %v3721, 1.0
        %v3850 = vadd.f32 %v3722, 1.0
        %v3851 = vadd.f32 %v3723, 1.0
        %v3852 = vadd.f32 %v3724, 1.0
        %v3853 = vadd.f32 %v3725, 1.0
        %v3854 = vadd.f32 %v3726, 1.0
        %v3855 = vadd.f32 %v3727, 1.0
        %v3856 = vadd.f32 %v3728, 1.0
        %v3857 = vadd.f32 %v3729, 1.0
        %v3858 = vadd.f32 %v3730, 1.0
        %v3859 = vadd.f32 %v3731, 1.0
        %v3860 = vadd.f32 %v3732, 1.0
        %v3861 = vadd.f32 %v3733, 1.0
        %v3862 = vadd.f32 %v3734, 1.0
        %v3863 = vadd.f32 %v3735, 1.0
        %v3864 = vadd.f32 %v3736, 1.0
        %v3865 = vadd.f32 %v3737, 1.0
        %v3866 = vadd.f32 %v3738, 1.0
        %v3867 = vadd.f32 %v3739, 1.0
        %v3868 = vadd.f32 %v3740, 1.0
        %v3869 = vadd.f32 %v3741, 1.0
        %v3870 = vadd.f32 %v3742, 1.0
        %v3871 = vadd.f32 %v3743, 1.0
        %v3872 = vadd.f32 %v3744, 1.0
        %v3873 = vadd.f32 %v3745, 1.0
        %v3874 = vadd.f32 %v3746, 1.0
        %v3875 = vadd.f32 %v3747, 1.0
        %v3876 = vadd.f32 %v3748, 1.0
        %v3877 = vadd.f32 %v3749, 1.0
        %v3878 = vadd.f32 %v3750, 1.0
        %v3879 = vadd.f32 %v3751, 1.0
        %v3880 = vadd.f32 %v3752, 1.0
        %v3881 = vadd.f32 %v3753, 1.0
        %v3882 = vadd.f32 %v3754, 1.0
        %v3883 = vadd.f32 %v3755, 1.0
        %v3884 = vadd.f32 %v3756, 1.0
        %v3885 = vadd.f32 %v3757, 1.0
        %v3886 = vadd.f32 %v3758, 1.0
        %v3887 = vadd.f32 %v3759, 1.0
        %v3888 = vadd.f32 %v3760, 1.0
        %v3889 = vadd.f32 %v3761, 1.0
        %v3890 = vadd.f32 %v3762, 1.0
        %v3891 = vadd.f32 %v3763, 1.0
        %v3892 = vadd.f32 %v3764, 1.0
        %v3893 = vadd.f32 %v3765, 1.0
        %v3894 = vadd.f32 %v3766, 1.0
        %v3895 = vadd.f32 %v3767, 1.0
        %v3896 = vadd.f32 %v3768, 1.0
        %v3897 = vadd.f32 %v3769, 1.0
        %v3898 = vadd.f32 %v3770, 1.0
        %v3899 = vadd.f32 %v3771, 1.0
        %v3900 = vadd.f32 %v3772, 1.0
        %v3901 = vadd.f32 %v3773, 1.0
        %v3902 = vadd.f32 %v3774, 1.0
        %v3903 = vadd.f32 %v3775, 1.0
        %v3904 = vadd.f32 %v3776, 1.0
        %v3905 = vadd.f32 %v3777, 1.0
        %v3906 = vadd.f32 %v3778, 1.0
        %v3907 = vadd.f32 %v3779, 1.0
        %v3908 = vadd.f32 %v3780, 1.0
        %v3909 = vadd.f32 %v3781, 1.0
        %v3910 = vadd.f32 %v3782, 1.0
        %v3911 = vadd.f32 %v3783, 1.0
        %v3912 = vadd.f32 %v3784, 1.0
        %v3913 = vadd.f32 %v3785, 1.0
        %v3914 = vadd.f32 %v3786, 1.0
        %v3915 = vadd.f32 %v3787, 1.0
        %v3916 = vadd.f32 %v3788, 1.0
        %v3917 = vadd.f32 %v3789, 1.0
        %v3918 = vadd.f32 %v3790, 1.0
        %v3919 = vadd.f32 %v3791, 1.0
        %v3920 = vadd.f32 %v3792, 1.0
        %v3921 = vadd.f32 %v3793, 1.0
        %v3922 = vadd.f32 %v3794, 1.0
        %v3923 = vadd.f32 %v3795, 1.0
        %v3924 = vadd.f32 %v3796, 1.0
        %v3925 = vadd.f32 %v3797, 1.0
        %v3926 = vadd.f32 %v3798, 1.0
        %v3927 = vadd.f32 %v3799, 1.0
        %v3928 = vadd.f32 %v3800, 1.0
        %v3929 = vadd.f32 %v3801, 1.0
        %v3930 = vadd.f32 %v3802, 1.0
        %v3931 = vadd.f32 %v3803, 1.0
        %v3932 = vadd.f32 %v3804, 1.0
        %v3933 = vadd.f32 %v3805, 1.0
        %v3934 = vadd.f32 %v3806, 1.0
        %v3935 = vadd.f32 %v3807, 1.0
        %v3936 = vadd.f32 %v3808, 1.0
        %v3937 = vadd.f32 %v3809, 1.0
        %v3938 = vadd.f32 %v3810, 1.0
        %v3939 = vadd.f32 %v3811, 1.0
        %v3940 = vadd.f32 %v3812, 1.0
        %v3941 = vadd.f32 %v3813, 1.0
        %v3942 = vadd.f32 %v3814, 1.0
        %v3943 = vadd.f32 %v3815, 1.0
        %v3944 = vadd.f32 %v3816, 1.0
        %v3945 = vadd.f32 %v3817, 1.0
        %v3946 = vadd.f32 %v3818, 1.0
        %v3947 = vadd.f32 %v3819, 1.0
        %v3948 = vadd.f32 %v3820, 1.0
        %v3949 = vadd.f32 %v3821, 1.0
        %v3950 = vadd.f32 %v3822, 1.0
        %v3951 = vadd.f32 %v3823, 1.0
        %v3952 = vadd.f32 %v3824, 1.0
        %v3953 = vadd.f32 %v3825, 1.0
        %v3954 = vadd.f32 %v3826, 1.0
        %v3955 = vadd.f32 %v3827, 1.0
        %v3956 = vrcp.pop %v3828
        %v3957 = vmul.f32 1.0, %v3956
        %v3958 = vrcp.pop %v3829
        %v3959 = vmul.f32 1.0, %v3958
        %v3960 = vrcp.pop %v3830
        %v3961 = vmul.f32 1.0, %v3960
        %v3962 = vrcp.pop %v3831
        %v3963 = vmul.f32 1.0, %v3962
        %v3964 = vrcp.pop %v3832
        %v3965 = vmul.f32 1.0, %v3964
        %v3966 = vrcp.pop %v3833
        %v3967 = vmul.f32 1.0, %v3966
        %v3968 = vrcp.pop %v3834
        %v3969 = vmul.f32 1.0, %v3968
        %v3970 = vrcp.pop %v3835
        %v3971 = vmul.f32 1.0, %v3970
        %v3972 = vrcp.pop %v3836
        %v3973 = vmul.f32 1.0, %v3972
        %v3974 = vrcp.pop %v3837
        %v3975 = vmul.f32 1.0, %v3974
        %v3976 = vrcp.pop %v3838
        %v3977 = vmul.f32 1.0, %v3976
        %v3978 = vrcp.pop %v3839
        %v3979 = vmul.f32 1.0, %v3978
        %v3980 = vrcp.pop %v3840
        %v3981 = vmul.f32 1.0, %v3980
        %v3982 = vrcp.pop %v3841
        %v3983 = vmul.f32 1.0, %v3982
        %v3984 = vrcp.pop %v3842
        %v3985 = vmul.f32 1.0, %v3984
        %v3986 = vrcp.pop %v3843
        %v3987 = vmul.f32 1.0, %v3986
        %v3988 = vrcp.pop %v3844
        %v3989 = vmul.f32 1.0, %v3988
        %v3990 = vrcp.pop %v3845
        %v3991 = vmul.f32 1.0, %v3990
        %v3992 = vrcp.pop %v3846
        %v3993 = vmul.f32 1.0, %v3992
        %v3994 = vrcp.pop %v3847
        %v3995 = vmul.f32 1.0, %v3994
        %v3996 = vrcp.pop %v3848
        %v3997 = vmul.f32 1.0, %v3996
        %v3998 = vrcp.pop %v3849
        %v3999 = vmul.f32 1.0, %v3998
        %v4000 = vrcp.pop %v3850
        %v4001 = vmul.f32 1.0, %v4000
        %v4002 = vrcp.pop %v3851
        %v4003 = vmul.f32 1.0, %v4002
        %v4004 = vrcp.pop %v3852
        %v4005 = vmul.f32 1.0, %v4004
        %v4006 = vrcp.pop %v3853
        %v4007 = vmul.f32 1.0, %v4006
        %v4008 = vrcp.pop %v3854
        %v4009 = vmul.f32 1.0, %v4008
        %v4010 = vrcp.pop %v3855
        %v4011 = vmul.f32 1.0, %v4010
        %v4012 = vrcp.pop %v3856
        %v4013 = vmul.f32 1.0, %v4012
        %v4014 = vrcp.pop %v3857
        %v4015 = vmul.f32 1.0, %v4014
        %v4016 = vrcp.pop %v3858
        %v4017 = vmul.f32 1.0, %v4016
        %v4018 = vrcp.pop %v3859
        %v4019 = vmul.f32 1.0, %v4018
        %v4020 = vrcp.pop %v3860
        %v4021 = vmul.f32 1.0, %v4020
        %v4022 = vrcp.pop %v3861
        %v4023 = vmul.f32 1.0, %v4022
        %v4024 = vrcp.pop %v3862
        %v4025 = vmul.f32 1.0, %v4024
        %v4026 = vrcp.pop %v3863
        %v4027 = vmul.f32 1.0, %v4026
        %v4028 = vrcp.pop %v3864
        %v4029 = vmul.f32 1.0, %v4028
        %v4030 = vrcp.pop %v3865
        %v4031 = vmul.f32 1.0, %v4030
        %v4032 = vrcp.pop %v3866
        %v4033 = vmul.f32 1.0, %v4032
        %v4034 = vrcp.pop %v3867
        %v4035 = vmul.f32 1.0, %v4034
        %v4036 = vrcp.pop %v3868
        %v4037 = vmul.f32 1.0, %v4036
        %v4038 = vrcp.pop %v3869
        %v4039 = vmul.f32 1.0, %v4038
        %v4040 = vrcp.pop %v3870
        %v4041 = vmul.f32 1.0, %v4040
        %v4042 = vrcp.pop %v3871
        %v4043 = vmul.f32 1.0, %v4042
        %v4044 = vrcp.pop %v3872
        %v4045 = vmul.f32 1.0, %v4044
        %v4046 = vrcp.pop %v3873
        %v4047 = vmul.f32 1.0, %v4046
        %v4048 = vrcp.pop %v3874
        %v4049 = vmul.f32 1.0, %v4048
        %v4050 = vrcp.pop %v3875
        %v4051 = vmul.f32 1.0, %v4050
        %v4052 = vrcp.pop %v3876
        %v4053 = vmul.f32 1.0, %v4052
        %v4054 = vrcp.pop %v3877
        %v4055 = vmul.f32 1.0, %v4054
        %v4056 = vrcp.pop %v3878
        %v4057 = vmul.f32 1.0, %v4056
        %v4058 = vrcp.pop %v3879
        %v4059 = vmul.f32 1.0, %v4058
        %v4060 = vrcp.pop %v3880
        %v4061 = vmul.f32 1.0, %v4060
        %v4062 = vrcp.pop %v3881
        %v4063 = vmul.f32 1.0, %v4062
        %v4064 = vrcp.pop %v3882
        %v4065 = vmul.f32 1.0, %v4064
        %v4066 = vrcp.pop %v3883
        %v4067 = vmul.f32 1.0, %v4066
        %v4068 = vrcp.pop %v3884
        %v4069 = vmul.f32 1.0, %v4068
        %v4070 = vrcp.pop %v3885
        %v4071 = vmul.f32 1.0, %v4070
        %v4072 = vrcp.pop %v3886
        %v4073 = vmul.f32 1.0, %v4072
        %v4074 = vrcp.pop %v3887
        %v4075 = vmul.f32 1.0, %v4074
        %v4076 = vrcp.pop %v3888
        %v4077 = vmul.f32 1.0, %v4076
        %v4078 = vrcp.pop %v3889
        %v4079 = vmul.f32 1.0, %v4078
        %v4080 = vrcp.pop %v3890
        %v4081 = vmul.f32 1.0, %v4080
        %v4082 = vrcp.pop %v3891
        %v4083 = vmul.f32 1.0, %v4082
        %v4084 = vrcp.pop %v3892
        %v4085 = vmul.f32 1.0, %v4084
        %v4086 = vrcp.pop %v3893
        %v4087 = vmul.f32 1.0, %v4086
        %v4088 = vrcp.pop %v3894
        %v4089 = vmul.f32 1.0, %v4088
        %v4090 = vrcp.pop %v3895
        %v4091 = vmul.f32 1.0, %v4090
        %v4092 = vrcp.pop %v3896
        %v4093 = vmul.f32 1.0, %v4092
        %v4094 = vrcp.pop %v3897
        %v4095 = vmul.f32 1.0, %v4094
        %v4096 = vrcp.pop %v3898
        %v4097 = vmul.f32 1.0, %v4096
        %v4098 = vrcp.pop %v3899
        %v4099 = vmul.f32 1.0, %v4098
        %v4100 = vrcp.pop %v3900
        %v4101 = vmul.f32 1.0, %v4100
        %v4102 = vrcp.pop %v3901
        %v4103 = vmul.f32 1.0, %v4102
        %v4104 = vrcp.pop %v3902
        %v4105 = vmul.f32 1.0, %v4104
        %v4106 = vrcp.pop %v3903
        %v4107 = vmul.f32 1.0, %v4106
        %v4108 = vrcp.pop %v3904
        %v4109 = vmul.f32 1.0, %v4108
        %v4110 = vrcp.pop %v3905
        %v4111 = vmul.f32 1.0, %v4110
        %v4112 = vrcp.pop %v3906
        %v4113 = vmul.f32 1.0, %v4112
        %v4114 = vrcp.pop %v3907
        %v4115 = vmul.f32 1.0, %v4114
        %v4116 = vrcp.pop %v3908
        %v4117 = vmul.f32 1.0, %v4116
        %v4118 = vrcp.pop %v3909
        %v4119 = vmul.f32 1.0, %v4118
        %v4120 = vrcp.pop %v3910
        %v4121 = vmul.f32 1.0, %v4120
        %v4122 = vrcp.pop %v3911
        %v4123 = vmul.f32 1.0, %v4122
        %v4124 = vrcp.pop %v3912
        %v4125 = vmul.f32 1.0, %v4124
        %v4126 = vrcp.pop %v3913
        %v4127 = vmul.f32 1.0, %v4126
        %v4128 = vrcp.pop %v3914
        %v4129 = vmul.f32 1.0, %v4128
        %v4130 = vrcp.pop %v3915
        %v4131 = vmul.f32 1.0, %v4130
        %v4132 = vrcp.pop %v3916
        %v4133 = vmul.f32 1.0, %v4132
        %v4134 = vrcp.pop %v3917
        %v4135 = vmul.f32 1.0, %v4134
        %v4136 = vrcp.pop %v3918
        %v4137 = vmul.f32 1.0, %v4136
        %v4138 = vrcp.pop %v3919
        %v4139 = vmul.f32 1.0, %v4138
        %v4140 = vrcp.pop %v3920
        %v4141 = vmul.f32 1.0, %v4140
        %v4142 = vrcp.pop %v3921
        %v4143 = vmul.f32 1.0, %v4142
        %v4144 = vrcp.pop %v3922
        %v4145 = vmul.f32 1.0, %v4144
        %v4146 = vrcp.pop %v3923
        %v4147 = vmul.f32 1.0, %v4146
        %v4148 = vrcp.pop %v3924
        %v4149 = vmul.f32 1.0, %v4148
        %v4150 = vrcp.pop %v3925
        %v4151 = vmul.f32 1.0, %v4150
        %v4152 = vrcp.pop %v3926
        %v4153 = vmul.f32 1.0, %v4152
        %v4154 = vrcp.pop %v3927
        %v4155 = vmul.f32 1.0, %v4154
        %v4156 = vrcp.pop %v3928
        %v4157 = vmul.f32 1.0, %v4156
        %v4158 = vrcp.pop %v3929
        %v4159 = vmul.f32 1.0, %v4158
        %v4160 = vrcp.pop %v3930
        %v4161 = vmul.f32 1.0, %v4160
        %v4162 = vrcp.pop %v3931
        %v4163 = vmul.f32 1.0, %v4162
        %v4164 = vrcp.pop %v3932
        %v4165 = vmul.f32 1.0, %v4164
        %v4166 = vrcp.pop %v3933
        %v4167 = vmul.f32 1.0, %v4166
        %v4168 = vrcp.pop %v3934
        %v4169 = vmul.f32 1.0, %v4168
        %v4170 = vrcp.pop %v3935
        %v4171 = vmul.f32 1.0, %v4170
        %v4172 = vrcp.pop %v3936
        %v4173 = vmul.f32 1.0, %v4172
        %v4174 = vrcp.pop %v3937
        %v4175 = vmul.f32 1.0, %v4174
        %v4176 = vrcp.pop %v3938
        %v4177 = vmul.f32 1.0, %v4176
        %v4178 = vrcp.pop %v3939
        %v4179 = vmul.f32 1.0, %v4178
        %v4180 = vrcp.pop %v3940
        %v4181 = vmul.f32 1.0, %v4180
        %v4182 = vrcp.pop %v3941
        %v4183 = vmul.f32 1.0, %v4182
        %v4184 = vrcp.pop %v3942
        %v4185 = vmul.f32 1.0, %v4184
        %v4186 = vrcp.pop %v3943
        %v4187 = vmul.f32 1.0, %v4186
        %v4188 = vrcp.pop %v3944
        %v4189 = vmul.f32 1.0, %v4188
        %v4190 = vrcp.pop %v3945
        %v4191 = vmul.f32 1.0, %v4190
        %v4192 = vrcp.pop %v3946
        %v4193 = vmul.f32 1.0, %v4192
        %v4194 = vrcp.pop %v3947
        %v4195 = vmul.f32 1.0, %v4194
        %v4196 = vrcp.pop %v3948
        %v4197 = vmul.f32 1.0, %v4196
        %v4198 = vrcp.pop %v3949
        %v4199 = vmul.f32 1.0, %v4198
        %v4200 = vrcp.pop %v3950
        %v4201 = vmul.f32 1.0, %v4200
        %v4202 = vrcp.pop %v3951
        %v4203 = vmul.f32 1.0, %v4202
        %v4204 = vrcp.pop %v3952
        %v4205 = vmul.f32 1.0, %v4204
        %v4206 = vrcp.pop %v3953
        %v4207 = vmul.f32 1.0, %v4206
        %v4208 = vrcp.pop %v3954
        %v4209 = vmul.f32 1.0, %v4208
        %v4210 = vrcp.pop %v3955
        %v4211 = vmul.f32 1.0, %v4210
        %v4212 = vmul.f32 %v3957, 1.0614054
        %v4213 = vmul.f32 %v3959, 1.0614054
        %v4214 = vmul.f32 %v3961, 1.0614054
        %v4215 = vmul.f32 %v3963, 1.0614054
        %v4216 = vmul.f32 %v3965, 1.0614054
        %v4217 = vmul.f32 %v3967, 1.0614054
        %v4218 = vmul.f32 %v3969, 1.0614054
        %v4219 = vmul.f32 %v3971, 1.0614054
        %v4220 = vmul.f32 %v3973, 1.0614054
        %v4221 = vmul.f32 %v3975, 1.0614054
        %v4222 = vmul.f32 %v3977, 1.0614054
        %v4223 = vmul.f32 %v3979, 1.0614054
        %v4224 = vmul.f32 %v3981, 1.0614054
        %v4225 = vmul.f32 %v3983, 1.0614054
        %v4226 = vmul.f32 %v3985, 1.0614054
        %v4227 = vmul.f32 %v3987, 1.0614054
        %v4228 = vmul.f32 %v3989, 1.0614054
        %v4229 = vmul.f32 %v3991, 1.0614054
        %v4230 = vmul.f32 %v3993, 1.0614054
        %v4231 = vmul.f32 %v3995, 1.0614054
        %v4232 = vmul.f32 %v3997, 1.0614054
        %v4233 = vmul.f32 %v3999, 1.0614054
        %v4234 = vmul.f32 %v4001, 1.0614054
        %v4235 = vmul.f32 %v4003, 1.0614054
        %v4236 = vmul.f32 %v4005, 1.0614054
        %v4237 = vmul.f32 %v4007, 1.0614054
        %v4238 = vmul.f32 %v4009, 1.0614054
        %v4239 = vmul.f32 %v4011, 1.0614054
        %v4240 = vmul.f32 %v4013, 1.0614054
        %v4241 = vmul.f32 %v4015, 1.0614054
        %v4242 = vmul.f32 %v4017, 1.0614054
        %v4243 = vmul.f32 %v4019, 1.0614054
        %v4244 = vmul.f32 %v4021, 1.0614054
        %v4245 = vmul.f32 %v4023, 1.0614054
        %v4246 = vmul.f32 %v4025, 1.0614054
        %v4247 = vmul.f32 %v4027, 1.0614054
        %v4248 = vmul.f32 %v4029, 1.0614054
        %v4249 = vmul.f32 %v4031, 1.0614054
        %v4250 = vmul.f32 %v4033, 1.0614054
        %v4251 = vmul.f32 %v4035, 1.0614054
        %v4252 = vmul.f32 %v4037, 1.0614054
        %v4253 = vmul.f32 %v4039, 1.0614054
        %v4254 = vmul.f32 %v4041, 1.0614054
        %v4255 = vmul.f32 %v4043, 1.0614054
        %v4256 = vmul.f32 %v4045, 1.0614054
        %v4257 = vmul.f32 %v4047, 1.0614054
        %v4258 = vmul.f32 %v4049, 1.0614054
        %v4259 = vmul.f32 %v4051, 1.0614054
        %v4260 = vmul.f32 %v4053, 1.0614054
        %v4261 = vmul.f32 %v4055, 1.0614054
        %v4262 = vmul.f32 %v4057, 1.0614054
        %v4263 = vmul.f32 %v4059, 1.0614054
        %v4264 = vmul.f32 %v4061, 1.0614054
        %v4265 = vmul.f32 %v4063, 1.0614054
        %v4266 = vmul.f32 %v4065, 1.0614054
        %v4267 = vmul.f32 %v4067, 1.0614054
        %v4268 = vmul.f32 %v4069, 1.0614054
        %v4269 = vmul.f32 %v4071, 1.0614054
        %v4270 = vmul.f32 %v4073, 1.0614054
        %v4271 = vmul.f32 %v4075, 1.0614054
        %v4272 = vmul.f32 %v4077, 1.0614054
        %v4273 = vmul.f32 %v4079, 1.0614054
        %v4274 = vmul.f32 %v4081, 1.0614054
        %v4275 = vmul.f32 %v4083, 1.0614054
        %v4276 = vmul.f32 %v4085, 1.0614054
        %v4277 = vmul.f32 %v4087, 1.0614054
        %v4278 = vmul.f32 %v4089, 1.0614054
        %v4279 = vmul.f32 %v4091, 1.0614054
        %v4280 = vmul.f32 %v4093, 1.0614054
        %v4281 = vmul.f32 %v4095, 1.0614054
        %v4282 = vmul.f32 %v4097, 1.0614054
        %v4283 = vmul.f32 %v4099, 1.0614054
        %v4284 = vmul.f32 %v4101, 1.0614054
        %v4285 = vmul.f32 %v4103, 1.0614054
        %v4286 = vmul.f32 %v4105, 1.0614054
        %v4287 = vmul.f32 %v4107, 1.0614054
        %v4288 = vmul.f32 %v4109, 1.0614054
        %v4289 = vmul.f32 %v4111, 1.0614054
        %v4290 = vmul.f32 %v4113, 1.0614054
        %v4291 = vmul.f32 %v4115, 1.0614054
        %v4292 = vmul.f32 %v4117, 1.0614054
        %v4293 = vmul.f32 %v4119, 1.0614054
        %v4294 = vmul.f32 %v4121, 1.0614054
        %v4295 = vmul.f32 %v4123, 1.0614054
        %v4296 = vmul.f32 %v4125, 1.0614054
        %v4297 = vmul.f32 %v4127, 1.0614054
        %v4298 = vmul.f32 %v4129, 1.0614054
        %v4299 = vmul.f32 %v4131, 1.0614054
        %v4300 = vmul.f32 %v4133, 1.0614054
        %v4301 = vmul.f32 %v4135, 1.0614054
        %v4302 = vmul.f32 %v4137, 1.0614054
        %v4303 = vmul.f32 %v4139, 1.0614054
        %v4304 = vmul.f32 %v4141, 1.0614054
        %v4305 = vmul.f32 %v4143, 1.0614054
        %v4306 = vmul.f32 %v4145, 1.0614054
        %v4307 = vmul.f32 %v4147, 1.0614054
        %v4308 = vmul.f32 %v4149, 1.0614054
        %v4309 = vmul.f32 %v4151, 1.0614054
        %v4310 = vmul.f32 %v4153, 1.0614054
        %v4311 = vmul.f32 %v4155, 1.0614054
        %v4312 = vmul.f32 %v4157, 1.0614054
        %v4313 = vmul.f32 %v4159, 1.0614054
        %v4314 = vmul.f32 %v4161, 1.0614054
        %v4315 = vmul.f32 %v4163, 1.0614054
        %v4316 = vmul.f32 %v4165, 1.0614054
        %v4317 = vmul.f32 %v4167, 1.0614054
        %v4318 = vmul.f32 %v4169, 1.0614054
        %v4319 = vmul.f32 %v4171, 1.0614054
        %v4320 = vmul.f32 %v4173, 1.0614054
        %v4321 = vmul.f32 %v4175, 1.0614054
        %v4322 = vmul.f32 %v4177, 1.0614054
        %v4323 = vmul.f32 %v4179, 1.0614054
        %v4324 = vmul.f32 %v4181, 1.0614054
        %v4325 = vmul.f32 %v4183, 1.0614054
        %v4326 = vmul.f32 %v4185, 1.0614054
        %v4327 = vmul.f32 %v4187, 1.0614054
        %v4328 = vmul.f32 %v4189, 1.0614054
        %v4329 = vmul.f32 %v4191, 1.0614054
        %v4330 = vmul.f32 %v4193, 1.0614054
        %v4331 = vmul.f32 %v4195, 1.0614054
        %v4332 = vmul.f32 %v4197, 1.0614054
        %v4333 = vmul.f32 %v4199, 1.0614054
        %v4334 = vmul.f32 %v4201, 1.0614054
        %v4335 = vmul.f32 %v4203, 1.0614054
        %v4336 = vmul.f32 %v4205, 1.0614054
        %v4337 = vmul.f32 %v4207, 1.0614054
        %v4338 = vmul.f32 %v4209, 1.0614054
        %v4339 = vmul.f32 %v4211, 1.0614054
        %v4340 = vadd.f32 %v4212, -1.4531521
        %v4341 = vadd.f32 %v4213, -1.4531521
        %v4342 = vadd.f32 %v4214, -1.4531521
        %v4343 = vadd.f32 %v4215, -1.4531521
        %v4344 = vadd.f32 %v4216, -1.4531521
        %v4345 = vadd.f32 %v4217, -1.4531521
        %v4346 = vadd.f32 %v4218, -1.4531521
        %v4347 = vadd.f32 %v4219, -1.4531521
        %v4348 = vadd.f32 %v4220, -1.4531521
        %v4349 = vadd.f32 %v4221, -1.4531521
        %v4350 = vadd.f32 %v4222, -1.4531521
        %v4351 = vadd.f32 %v4223, -1.4531521
        %v4352 = vadd.f32 %v4224, -1.4531521
        %v4353 = vadd.f32 %v4225, -1.4531521
        %v4354 = vadd.f32 %v4226, -1.4531521
        %v4355 = vadd.f32 %v4227, -1.4531521
        %v4356 = vadd.f32 %v4228, -1.4531521
        %v4357 = vadd.f32 %v4229, -1.4531521
        %v4358 = vadd.f32 %v4230, -1.4531521
        %v4359 = vadd.f32 %v4231, -1.4531521
        %v4360 = vadd.f32 %v4232, -1.4531521
        %v4361 = vadd.f32 %v4233, -1.4531521
        %v4362 = vadd.f32 %v4234, -1.4531521
        %v4363 = vadd.f32 %v4235, -1.4531521
        %v4364 = vadd.f32 %v4236, -1.4531521
        %v4365 = vadd.f32 %v4237, -1.4531521
        %v4366 = vadd.f32 %v4238, -1.4531521
        %v4367 = vadd.f32 %v4239, -1.4531521
        %v4368 = vadd.f32 %v4240, -1.4531521
        %v4369 = vadd.f32 %v4241, -1.4531521
        %v4370 = vadd.f32 %v4242, -1.4531521
        %v4371 = vadd.f32 %v4243, -1.4531521
        %v4372 = vadd.f32 %v4244, -1.4531521
        %v4373 = vadd.f32 %v4245, -1.4531521
        %v4374 = vadd.f32 %v4246, -1.4531521
        %v4375 = vadd.f32 %v4247, -1.4531521
        %v4376 = vadd.f32 %v4248, -1.4531521
        %v4377 = vadd.f32 %v4249, -1.4531521
        %v4378 = vadd.f32 %v4250, -1.4531521
        %v4379 = vadd.f32 %v4251, -1.4531521
        %v4380 = vadd.f32 %v4252, -1.4531521
        %v4381 = vadd.f32 %v4253, -1.4531521
        %v4382 = vadd.f32 %v4254, -1.4531521
        %v4383 = vadd.f32 %v4255, -1.4531521
        %v4384 = vadd.f32 %v4256, -1.4531521
        %v4385 = vadd.f32 %v4257, -1.4531521
        %v4386 = vadd.f32 %v4258, -1.4531521
        %v4387 = vadd.f32 %v4259, -1.4531521
        %v4388 = vadd.f32 %v4260, -1.4531521
        %v4389 = vadd.f32 %v4261, -1.4531521
        %v4390 = vadd.f32 %v4262, -1.4531521
        %v4391 = vadd.f32 %v4263, -1.4531521
        %v4392 = vadd.f32 %v4264, -1.4531521
        %v4393 = vadd.f32 %v4265, -1.4531521
        %v4394 = vadd.f32 %v4266, -1.4531521
        %v4395 = vadd.f32 %v4267, -1.4531521
        %v4396 = vadd.f32 %v4268, -1.4531521
        %v4397 = vadd.f32 %v4269, -1.4531521
        %v4398 = vadd.f32 %v4270, -1.4531521
        %v4399 = vadd.f32 %v4271, -1.4531521
        %v4400 = vadd.f32 %v4272, -1.4531521
        %v4401 = vadd.f32 %v4273, -1.4531521
        %v4402 = vadd.f32 %v4274, -1.4531521
        %v4403 = vadd.f32 %v4275, -1.4531521
        %v4404 = vadd.f32 %v4276, -1.4531521
        %v4405 = vadd.f32 %v4277, -1.4531521
        %v4406 = vadd.f32 %v4278, -1.4531521
        %v4407 = vadd.f32 %v4279, -1.4531521
        %v4408 = vadd.f32 %v4280, -1.4531521
        %v4409 = vadd.f32 %v4281, -1.4531521
        %v4410 = vadd.f32 %v4282, -1.4531521
        %v4411 = vadd.f32 %v4283, -1.4531521
        %v4412 = vadd.f32 %v4284, -1.4531521
        %v4413 = vadd.f32 %v4285, -1.4531521
        %v4414 = vadd.f32 %v4286, -1.4531521
        %v4415 = vadd.f32 %v4287, -1.4531521
        %v4416 = vadd.f32 %v4288, -1.4531521
        %v4417 = vadd.f32 %v4289, -1.4531521
        %v4418 = vadd.f32 %v4290, -1.4531521
        %v4419 = vadd.f32 %v4291, -1.4531521
        %v4420 = vadd.f32 %v4292, -1.4531521
        %v4421 = vadd.f32 %v4293, -1.4531521
        %v4422 = vadd.f32 %v4294, -1.4531521
        %v4423 = vadd.f32 %v4295, -1.4531521
        %v4424 = vadd.f32 %v4296, -1.4531521
        %v4425 = vadd.f32 %v4297, -1.4531521
        %v4426 = vadd.f32 %v4298, -1.4531521
        %v4427 = vadd.f32 %v4299, -1.4531521
        %v4428 = vadd.f32 %v4300, -1.4531521
        %v4429 = vadd.f32 %v4301, -1.4531521
        %v4430 = vadd.f32 %v4302, -1.4531521
        %v4431 = vadd.f32 %v4303, -1.4531521
        %v4432 = vadd.f32 %v4304, -1.4531521
        %v4433 = vadd.f32 %v4305, -1.4531521
        %v4434 = vadd.f32 %v4306, -1.4531521
        %v4435 = vadd.f32 %v4307, -1.4531521
        %v4436 = vadd.f32 %v4308, -1.4531521
        %v4437 = vadd.f32 %v4309, -1.4531521
        %v4438 = vadd.f32 %v4310, -1.4531521
        %v4439 = vadd.f32 %v4311, -1.4531521
        %v4440 = vadd.f32 %v4312, -1.4531521
        %v4441 = vadd.f32 %v4313, -1.4531521
        %v4442 = vadd.f32 %v4314, -1.4531521
        %v4443 = vadd.f32 %v4315, -1.4531521
        %v4444 = vadd.f32 %v4316, -1.4531521
        %v4445 = vadd.f32 %v4317, -1.4531521
        %v4446 = vadd.f32 %v4318, -1.4531521
        %v4447 = vadd.f32 %v4319, -1.4531521
        %v4448 = vadd.f32 %v4320, -1.4531521
        %v4449 = vadd.f32 %v4321, -1.4531521
        %v4450 = vadd.f32 %v4322, -1.4531521
        %v4451 = vadd.f32 %v4323, -1.4531521
        %v4452 = vadd.f32 %v4324, -1.4531521
        %v4453 = vadd.f32 %v4325, -1.4531521
        %v4454 = vadd.f32 %v4326, -1.4531521
        %v4455 = vadd.f32 %v4327, -1.4531521
        %v4456 = vadd.f32 %v4328, -1.4531521
        %v4457 = vadd.f32 %v4329, -1.4531521
        %v4458 = vadd.f32 %v4330, -1.4531521
        %v4459 = vadd.f32 %v4331, -1.4531521
        %v4460 = vadd.f32 %v4332, -1.4531521
        %v4461 = vadd.f32 %v4333, -1.4531521
        %v4462 = vadd.f32 %v4334, -1.4531521
        %v4463 = vadd.f32 %v4335, -1.4531521
        %v4464 = vadd.f32 %v4336, -1.4531521
        %v4465 = vadd.f32 %v4337, -1.4531521
        %v4466 = vadd.f32 %v4338, -1.4531521
        %v4467 = vadd.f32 %v4339, -1.4531521
        %v4468 = vmul.f32 %v4340, %v3957
        %v4469 = vmul.f32 %v4341, %v3959
        %v4470 = vmul.f32 %v4342, %v3961
        %v4471 = vmul.f32 %v4343, %v3963
        %v4472 = vmul.f32 %v4344, %v3965
        %v4473 = vmul.f32 %v4345, %v3967
        %v4474 = vmul.f32 %v4346, %v3969
        %v4475 = vmul.f32 %v4347, %v3971
        %v4476 = vmul.f32 %v4348, %v3973
        %v4477 = vmul.f32 %v4349, %v3975
        %v4478 = vmul.f32 %v4350, %v3977
        %v4479 = vmul.f32 %v4351, %v3979
        %v4480 = vmul.f32 %v4352, %v3981
        %v4481 = vmul.f32 %v4353, %v3983
        %v4482 = vmul.f32 %v4354, %v3985
        %v4483 = vmul.f32 %v4355, %v3987
        %v4484 = vmul.f32 %v4356, %v3989
        %v4485 = vmul.f32 %v4357, %v3991
        %v4486 = vmul.f32 %v4358, %v3993
        %v4487 = vmul.f32 %v4359, %v3995
        %v4488 = vmul.f32 %v4360, %v3997
        %v4489 = vmul.f32 %v4361, %v3999
        %v4490 = vmul.f32 %v4362, %v4001
        %v4491 = vmul.f32 %v4363, %v4003
        %v4492 = vmul.f32 %v4364, %v4005
        %v4493 = vmul.f32 %v4365, %v4007
        %v4494 = vmul.f32 %v4366, %v4009
        %v4495 = vmul.f32 %v4367, %v4011
        %v4496 = vmul.f32 %v4368, %v4013
        %v4497 = vmul.f32 %v4369, %v4015
        %v4498 = vmul.f32 %v4370, %v4017
        %v4499 = vmul.f32 %v4371, %v4019
        %v4500 = vmul.f32 %v4372, %v4021
        %v4501 = vmul.f32 %v4373, %v4023
        %v4502 = vmul.f32 %v4374, %v4025
        %v4503 = vmul.f32 %v4375, %v4027
        %v4504 = vmul.f32 %v4376, %v4029
        %v4505 = vmul.f32 %v4377, %v4031
        %v4506 = vmul.f32 %v4378, %v4033
        %v4507 = vmul.f32 %v4379, %v4035
        %v4508 = vmul.f32 %v4380, %v4037
        %v4509 = vmul.f32 %v4381, %v4039
        %v4510 = vmul.f32 %v4382, %v4041
        %v4511 = vmul.f32 %v4383, %v4043
        %v4512 = vmul.f32 %v4384, %v4045
        %v4513 = vmul.f32 %v4385, %v4047
        %v4514 = vmul.f32 %v4386, %v4049
        %v4515 = vmul.f32 %v4387, %v4051
        %v4516 = vmul.f32 %v4388, %v4053
        %v4517 = vmul.f32 %v4389, %v4055
        %v4518 = vmul.f32 %v4390, %v4057
        %v4519 = vmul.f32 %v4391, %v4059
        %v4520 = vmul.f32 %v4392, %v4061
        %v4521 = vmul.f32 %v4393, %v4063
        %v4522 = vmul.f32 %v4394, %v4065
        %v4523 = vmul.f32 %v4395, %v4067
        %v4524 = vmul.f32 %v4396, %v4069
        %v4525 = vmul.f32 %v4397, %v4071
        %v4526 = vmul.f32 %v4398, %v4073
        %v4527 = vmul.f32 %v4399, %v4075
        %v4528 = vmul.f32 %v4400, %v4077
        %v4529 = vmul.f32 %v4401, %v4079
        %v4530 = vmul.f32 %v4402, %v4081
        %v4531 = vmul.f32 %v4403, %v4083
        %v4532 = vmul.f32 %v4404, %v4085
        %v4533 = vmul.f32 %v4405, %v4087
        %v4534 = vmul.f32 %v4406, %v4089
        %v4535 = vmul.f32 %v4407, %v4091
        %v4536 = vmul.f32 %v4408, %v4093
        %v4537 = vmul.f32 %v4409, %v4095
        %v4538 = vmul.f32 %v4410, %v4097
        %v4539 = vmul.f32 %v4411, %v4099
        %v4540 = vmul.f32 %v4412, %v4101
        %v4541 = vmul.f32 %v4413, %v4103
        %v4542 = vmul.f32 %v4414, %v4105
        %v4543 = vmul.f32 %v4415, %v4107
        %v4544 = vmul.f32 %v4416, %v4109
        %v4545 = vmul.f32 %v4417, %v4111
        %v4546 = vmul.f32 %v4418, %v4113
        %v4547 = vmul.f32 %v4419, %v4115
        %v4548 = vmul.f32 %v4420, %v4117
        %v4549 = vmul.f32 %v4421, %v4119
        %v4550 = vmul.f32 %v4422, %v4121
        %v4551 = vmul.f32 %v4423, %v4123
        %v4552 = vmul.f32 %v4424, %v4125
        %v4553 = vmul.f32 %v4425, %v4127
        %v4554 = vmul.f32 %v4426, %v4129
        %v4555 = vmul.f32 %v4427, %v4131
        %v4556 = vmul.f32 %v4428, %v4133
        %v4557 = vmul.f32 %v4429, %v4135
        %v4558 = vmul.f32 %v4430, %v4137
        %v4559 = vmul.f32 %v4431, %v4139
        %v4560 = vmul.f32 %v4432, %v4141
        %v4561 = vmul.f32 %v4433, %v4143
        %v4562 = vmul.f32 %v4434, %v4145
        %v4563 = vmul.f32 %v4435, %v4147
        %v4564 = vmul.f32 %v4436, %v4149
        %v4565 = vmul.f32 %v4437, %v4151
        %v4566 = vmul.f32 %v4438, %v4153
        %v4567 = vmul.f32 %v4439, %v4155
        %v4568 = vmul.f32 %v4440, %v4157
        %v4569 = vmul.f32 %v4441, %v4159
        %v4570 = vmul.f32 %v4442, %v4161
        %v4571 = vmul.f32 %v4443, %v4163
        %v4572 = vmul.f32 %v4444, %v4165
        %v4573 = vmul.f32 %v4445, %v4167
        %v4574 = vmul.f32 %v4446, %v4169
        %v4575 = vmul.f32 %v4447, %v4171
        %v4576 = vmul.f32 %v4448, %v4173
        %v4577 = vmul.f32 %v4449, %v4175
        %v4578 = vmul.f32 %v4450, %v4177
        %v4579 = vmul.f32 %v4451, %v4179
        %v4580 = vmul.f32 %v4452, %v4181
        %v4581 = vmul.f32 %v4453, %v4183
        %v4582 = vmul.f32 %v4454, %v4185
        %v4583 = vmul.f32 %v4455, %v4187
        %v4584 = vmul.f32 %v4456, %v4189
        %v4585 = vmul.f32 %v4457, %v4191
        %v4586 = vmul.f32 %v4458, %v4193
        %v4587 = vmul.f32 %v4459, %v4195
        %v4588 = vmul.f32 %v4460, %v4197
        %v4589 = vmul.f32 %v4461, %v4199
        %v4590 = vmul.f32 %v4462, %v4201
        %v4591 = vmul.f32 %v4463, %v4203
        %v4592 = vmul.f32 %v4464, %v4205
        %v4593 = vmul.f32 %v4465, %v4207
        %v4594 = vmul.f32 %v4466, %v4209
        %v4595 = vmul.f32 %v4467, %v4211
        %v4596 = vadd.f32 %v4468, 1.4214138
        %v4597 = vadd.f32 %v4469, 1.4214138
        %v4598 = vadd.f32 %v4470, 1.4214138
        %v4599 = vadd.f32 %v4471, 1.4214138
        %v4600 = vadd.f32 %v4472, 1.4214138
        %v4601 = vadd.f32 %v4473, 1.4214138
        %v4602 = vadd.f32 %v4474, 1.4214138
        %v4603 = vadd.f32 %v4475, 1.4214138
        %v4604 = vadd.f32 %v4476, 1.4214138
        %v4605 = vadd.f32 %v4477, 1.4214138
        %v4606 = vadd.f32 %v4478, 1.4214138
        %v4607 = vadd.f32 %v4479, 1.4214138
        %v4608 = vadd.f32 %v4480, 1.4214138
        %v4609 = vadd.f32 %v4481, 1.4214138
        %v4610 = vadd.f32 %v4482, 1.4214138
        %v4611 = vadd.f32 %v4483, 1.4214138
        %v4612 = vadd.f32 %v4484, 1.4214138
        %v4613 = vadd.f32 %v4485, 1.4214138
        %v4614 = vadd.f32 %v4486, 1.4214138
        %v4615 = vadd.f32 %v4487, 1.4214138
        %v4616 = vadd.f32 %v4488, 1.4214138
        %v4617 = vadd.f32 %v4489, 1.4214138
        %v4618 = vadd.f32 %v4490, 1.4214138
        %v4619 = vadd.f32 %v4491, 1.4214138
        %v4620 = vadd.f32 %v4492, 1.4214138
        %v4621 = vadd.f32 %v4493, 1.4214138
        %v4622 = vadd.f32 %v4494, 1.4214138
        %v4623 = vadd.f32 %v4495, 1.4214138
        %v4624 = vadd.f32 %v4496, 1.4214138
        %v4625 = vadd.f32 %v4497, 1.4214138
        %v4626 = vadd.f32 %v4498, 1.4214138
        %v4627 = vadd.f32 %v4499, 1.4214138
        %v4628 = vadd.f32 %v4500, 1.4214138
        %v4629 = vadd.f32 %v4501, 1.4214138
        %v4630 = vadd.f32 %v4502, 1.4214138
        %v4631 = vadd.f32 %v4503, 1.4214138
        %v4632 = vadd.f32 %v4504, 1.4214138
        %v4633 = vadd.f32 %v4505, 1.4214138
        %v4634 = vadd.f32 %v4506, 1.4214138
        %v4635 = vadd.f32 %v4507, 1.4214138
        %v4636 = vadd.f32 %v4508, 1.4214138
        %v4637 = vadd.f32 %v4509, 1.4214138
        %v4638 = vadd.f32 %v4510, 1.4214138
        %v4639 = vadd.f32 %v4511, 1.4214138
        %v4640 = vadd.f32 %v4512, 1.4214138
        %v4641 = vadd.f32 %v4513, 1.4214138
        %v4642 = vadd.f32 %v4514, 1.4214138
        %v4643 = vadd.f32 %v4515, 1.4214138
        %v4644 = vadd.f32 %v4516, 1.4214138
        %v4645 = vadd.f32 %v4517, 1.4214138
        %v4646 = vadd.f32 %v4518, 1.4214138
        %v4647 = vadd.f32 %v4519, 1.4214138
        %v4648 = vadd.f32 %v4520, 1.4214138
        %v4649 = vadd.f32 %v4521, 1.4214138
        %v4650 = vadd.f32 %v4522, 1.4214138
        %v4651 = vadd.f32 %v4523, 1.4214138
        %v4652 = vadd.f32 %v4524, 1.4214138
        %v4653 = vadd.f32 %v4525, 1.4214138
        %v4654 = vadd.f32 %v4526, 1.4214138
        %v4655 = vadd.f32 %v4527, 1.4214138
        %v4656 = vadd.f32 %v4528, 1.4214138
        %v4657 = vadd.f32 %v4529, 1.4214138
        %v4658 = vadd.f32 %v4530, 1.4214138
        %v4659 = vadd.f32 %v4531, 1.4214138
        %v4660 = vadd.f32 %v4532, 1.4214138
        %v4661 = vadd.f32 %v4533, 1.4214138
        %v4662 = vadd.f32 %v4534, 1.4214138
        %v4663 = vadd.f32 %v4535, 1.4214138
        %v4664 = vadd.f32 %v4536, 1.4214138
        %v4665 = vadd.f32 %v4537, 1.4214138
        %v4666 = vadd.f32 %v4538, 1.4214138
        %v4667 = vadd.f32 %v4539, 1.4214138
        %v4668 = vadd.f32 %v4540, 1.4214138
        %v4669 = vadd.f32 %v4541, 1.4214138
        %v4670 = vadd.f32 %v4542, 1.4214138
        %v4671 = vadd.f32 %v4543, 1.4214138
        %v4672 = vadd.f32 %v4544, 1.4214138
        %v4673 = vadd.f32 %v4545, 1.4214138
        %v4674 = vadd.f32 %v4546, 1.4214138
        %v4675 = vadd.f32 %v4547, 1.4214138
        %v4676 = vadd.f32 %v4548, 1.4214138
        %v4677 = vadd.f32 %v4549, 1.4214138
        %v4678 = vadd.f32 %v4550, 1.4214138
        %v4679 = vadd.f32 %v4551, 1.4214138
        %v4680 = vadd.f32 %v4552, 1.4214138
        %v4681 = vadd.f32 %v4553, 1.4214138
        %v4682 = vadd.f32 %v4554, 1.4214138
        %v4683 = vadd.f32 %v4555, 1.4214138
        %v4684 = vadd.f32 %v4556, 1.4214138
        %v4685 = vadd.f32 %v4557, 1.4214138
        %v4686 = vadd.f32 %v4558, 1.4214138
        %v4687 = vadd.f32 %v4559, 1.4214138
        %v4688 = vadd.f32 %v4560, 1.4214138
        %v4689 = vadd.f32 %v4561, 1.4214138
        %v4690 = vadd.f32 %v4562, 1.4214138
        %v4691 = vadd.f32 %v4563, 1.4214138
        %v4692 = vadd.f32 %v4564, 1.4214138
        %v4693 = vadd.f32 %v4565, 1.4214138
        %v4694 = vadd.f32 %v4566, 1.4214138
        %v4695 = vadd.f32 %v4567, 1.4214138
        %v4696 = vadd.f32 %v4568, 1.4214138
        %v4697 = vadd.f32 %v4569, 1.4214138
        %v4698 = vadd.f32 %v4570, 1.4214138
        %v4699 = vadd.f32 %v4571, 1.4214138
        %v4700 = vadd.f32 %v4572, 1.4214138
        %v4701 = vadd.f32 %v4573, 1.4214138
        %v4702 = vadd.f32 %v4574, 1.4214138
        %v4703 = vadd.f32 %v4575, 1.4214138
        %v4704 = vadd.f32 %v4576, 1.4214138
        %v4705 = vadd.f32 %v4577, 1.4214138
        %v4706 = vadd.f32 %v4578, 1.4214138
        %v4707 = vadd.f32 %v4579, 1.4214138
        %v4708 = vadd.f32 %v4580, 1.4214138
        %v4709 = vadd.f32 %v4581, 1.4214138
        %v4710 = vadd.f32 %v4582, 1.4214138
        %v4711 = vadd.f32 %v4583, 1.4214138
        %v4712 = vadd.f32 %v4584, 1.4214138
        %v4713 = vadd.f32 %v4585, 1.4214138
        %v4714 = vadd.f32 %v4586, 1.4214138
        %v4715 = vadd.f32 %v4587, 1.4214138
        %v4716 = vadd.f32 %v4588, 1.4214138
        %v4717 = vadd.f32 %v4589, 1.4214138
        %v4718 = vadd.f32 %v4590, 1.4214138
        %v4719 = vadd.f32 %v4591, 1.4214138
        %v4720 = vadd.f32 %v4592, 1.4214138
        %v4721 = vadd.f32 %v4593, 1.4214138
        %v4722 = vadd.f32 %v4594, 1.4214138
        %v4723 = vadd.f32 %v4595, 1.4214138
        %v4724 = vmul.f32 %v4596, %v3957
        %v4725 = vmul.f32 %v4597, %v3959
        %v4726 = vmul.f32 %v4598, %v3961
        %v4727 = vmul.f32 %v4599, %v3963
        %v4728 = vmul.f32 %v4600, %v3965
        %v4729 = vmul.f32 %v4601, %v3967
        %v4730 = vmul.f32 %v4602, %v3969
        %v4731 = vmul.f32 %v4603, %v3971
        %v4732 = vmul.f32 %v4604, %v3973
        %v4733 = vmul.f32 %v4605, %v3975
        %v4734 = vmul.f32 %v4606, %v3977
        %v4735 = vmul.f32 %v4607, %v3979
        %v4736 = vmul.f32 %v4608, %v3981
        %v4737 = vmul.f32 %v4609, %v3983
        %v4738 = vmul.f32 %v4610, %v3985
        %v4739 = vmul.f32 %v4611, %v3987
        %v4740 = vmul.f32 %v4612, %v3989
        %v4741 = vmul.f32 %v4613, %v3991
        %v4742 = vmul.f32 %v4614, %v3993
        %v4743 = vmul.f32 %v4615, %v3995
        %v4744 = vmul.f32 %v4616, %v3997
        %v4745 = vmul.f32 %v4617, %v3999
        %v4746 = vmul.f32 %v4618, %v4001
        %v4747 = vmul.f32 %v4619, %v4003
        %v4748 = vmul.f32 %v4620, %v4005
        %v4749 = vmul.f32 %v4621, %v4007
        %v4750 = vmul.f32 %v4622, %v4009
        %v4751 = vmul.f32 %v4623, %v4011
        %v4752 = vmul.f32 %v4624, %v4013
        %v4753 = vmul.f32 %v4625, %v4015
        %v4754 = vmul.f32 %v4626, %v4017
        %v4755 = vmul.f32 %v4627, %v4019
        %v4756 = vmul.f32 %v4628, %v4021
        %v4757 = vmul.f32 %v4629, %v4023
        %v4758 = vmul.f32 %v4630, %v4025
        %v4759 = vmul.f32 %v4631, %v4027
        %v4760 = vmul.f32 %v4632, %v4029
        %v4761 = vmul.f32 %v4633, %v4031
        %v4762 = vmul.f32 %v4634, %v4033
        %v4763 = vmul.f32 %v4635, %v4035
        %v4764 = vmul.f32 %v4636, %v4037
        %v4765 = vmul.f32 %v4637, %v4039
        %v4766 = vmul.f32 %v4638, %v4041
        %v4767 = vmul.f32 %v4639, %v4043
        %v4768 = vmul.f32 %v4640, %v4045
        %v4769 = vmul.f32 %v4641, %v4047
        %v4770 = vmul.f32 %v4642, %v4049
        %v4771 = vmul.f32 %v4643, %v4051
        %v4772 = vmul.f32 %v4644, %v4053
        %v4773 = vmul.f32 %v4645, %v4055
        %v4774 = vmul.f32 %v4646, %v4057
        %v4775 = vmul.f32 %v4647, %v4059
        %v4776 = vmul.f32 %v4648, %v4061
        %v4777 = vmul.f32 %v4649, %v4063
        %v4778 = vmul.f32 %v4650, %v4065
        %v4779 = vmul.f32 %v4651, %v4067
        %v4780 = vmul.f32 %v4652, %v4069
        %v4781 = vmul.f32 %v4653, %v4071
        %v4782 = vmul.f32 %v4654, %v4073
        %v4783 = vmul.f32 %v4655, %v4075
        %v4784 = vmul.f32 %v4656, %v4077
        %v4785 = vmul.f32 %v4657, %v4079
        %v4786 = vmul.f32 %v4658, %v4081
        %v4787 = vmul.f32 %v4659, %v4083
        %v4788 = vmul.f32 %v4660, %v4085
        %v4789 = vmul.f32 %v4661, %v4087
        %v4790 = vmul.f32 %v4662, %v4089
        %v4791 = vmul.f32 %v4663, %v4091
        %v4792 = vmul.f32 %v4664, %v4093
        %v4793 = vmul.f32 %v4665, %v4095
        %v4794 = vmul.f32 %v4666, %v4097
        %v4795 = vmul.f32 %v4667, %v4099
        %v4796 = vmul.f32 %v4668, %v4101
        %v4797 = vmul.f32 %v4669, %v4103
        %v4798 = vmul.f32 %v4670, %v4105
        %v4799 = vmul.f32 %v4671, %v4107
        %v4800 = vmul.f32 %v4672, %v4109
        %v4801 = vmul.f32 %v4673, %v4111
        %v4802 = vmul.f32 %v4674, %v4113
        %v4803 = vmul.f32 %v4675, %v4115
        %v4804 = vmul.f32 %v4676, %v4117
        %v4805 = vmul.f32 %v4677, %v4119
        %v4806 = vmul.f32 %v4678, %v4121
        %v4807 = vmul.f32 %v4679, %v4123
        %v4808 = vmul.f32 %v4680, %v4125
        %v4809 = vmul.f32 %v4681, %v4127
        %v4810 = vmul.f32 %v4682, %v4129
        %v4811 = vmul.f32 %v4683, %v4131
        %v4812 = vmul.f32 %v4684, %v4133
        %v4813 = vmul.f32 %v4685, %v4135
        %v4814 = vmul.f32 %v4686, %v4137
        %v4815 = vmul.f32 %v4687, %v4139
        %v4816 = vmul.f32 %v4688, %v4141
        %v4817 = vmul.f32 %v4689, %v4143
        %v4818 = vmul.f32 %v4690, %v4145
        %v4819 = vmul.f32 %v4691, %v4147
        %v4820 = vmul.f32 %v4692, %v4149
        %v4821 = vmul.f32 %v4693, %v4151
        %v4822 = vmul.f32 %v4694, %v4153
        %v4823 = vmul.f32 %v4695, %v4155
        %v4824 = vmul.f32 %v4696, %v4157
        %v4825 = vmul.f32 %v4697, %v4159
        %v4826 = vmul.f32 %v4698, %v4161
        %v4827 = vmul.f32 %v4699, %v4163
        %v4828 = vmul.f32 %v4700, %v4165
        %v4829 = vmul.f32 %v4701, %v4167
        %v4830 = vmul.f32 %v4702, %v4169
        %v4831 = vmul.f32 %v4703, %v4171
        %v4832 = vmul.f32 %v4704, %v4173
        %v4833 = vmul.f32 %v4705, %v4175
        %v4834 = vmul.f32 %v4706, %v4177
        %v4835 = vmul.f32 %v4707, %v4179
        %v4836 = vmul.f32 %v4708, %v4181
        %v4837 = vmul.f32 %v4709, %v4183
        %v4838 = vmul.f32 %v4710, %v4185
        %v4839 = vmul.f32 %v4711, %v4187
        %v4840 = vmul.f32 %v4712, %v4189
        %v4841 = vmul.f32 %v4713, %v4191
        %v4842 = vmul.f32 %v4714, %v4193
        %v4843 = vmul.f32 %v4715, %v4195
        %v4844 = vmul.f32 %v4716, %v4197
        %v4845 = vmul.f32 %v4717, %v4199
        %v4846 = vmul.f32 %v4718, %v4201
        %v4847 = vmul.f32 %v4719, %v4203
        %v4848 = vmul.f32 %v4720, %v4205
        %v4849 = vmul.f32 %v4721, %v4207
        %v4850 = vmul.f32 %v4722, %v4209
        %v4851 = vmul.f32 %v4723, %v4211
        %v4852 = vadd.f32 %v4724, -0.28449672
        %v4853 = vadd.f32 %v4725, -0.28449672
        %v4854 = vadd.f32 %v4726, -0.28449672
        %v4855 = vadd.f32 %v4727, -0.28449672
        %v4856 = vadd.f32 %v4728, -0.28449672
        %v4857 = vadd.f32 %v4729, -0.28449672
        %v4858 = vadd.f32 %v4730, -0.28449672
        %v4859 = vadd.f32 %v4731, -0.28449672
        %v4860 = vadd.f32 %v4732, -0.28449672
        %v4861 = vadd.f32 %v4733, -0.28449672
        %v4862 = vadd.f32 %v4734, -0.28449672
        %v4863 = vadd.f32 %v4735, -0.28449672
        %v4864 = vadd.f32 %v4736, -0.28449672
        %v4865 = vadd.f32 %v4737, -0.28449672
        %v4866 = vadd.f32 %v4738, -0.28449672
        %v4867 = vadd.f32 %v4739, -0.28449672
        %v4868 = vadd.f32 %v4740, -0.28449672
        %v4869 = vadd.f32 %v4741, -0.28449672
        %v4870 = vadd.f32 %v4742, -0.28449672
        %v4871 = vadd.f32 %v4743, -0.28449672
        %v4872 = vadd.f32 %v4744, -0.28449672
        %v4873 = vadd.f32 %v4745, -0.28449672
        %v4874 = vadd.f32 %v4746, -0.28449672
        %v4875 = vadd.f32 %v4747, -0.28449672
        %v4876 = vadd.f32 %v4748, -0.28449672
        %v4877 = vadd.f32 %v4749, -0.28449672
        %v4878 = vadd.f32 %v4750, -0.28449672
        %v4879 = vadd.f32 %v4751, -0.28449672
        %v4880 = vadd.f32 %v4752, -0.28449672
        %v4881 = vadd.f32 %v4753, -0.28449672
        %v4882 = vadd.f32 %v4754, -0.28449672
        %v4883 = vadd.f32 %v4755, -0.28449672
        %v4884 = vadd.f32 %v4756, -0.28449672
        %v4885 = vadd.f32 %v4757, -0.28449672
        %v4886 = vadd.f32 %v4758, -0.28449672
        %v4887 = vadd.f32 %v4759, -0.28449672
        %v4888 = vadd.f32 %v4760, -0.28449672
        %v4889 = vadd.f32 %v4761, -0.28449672
        %v4890 = vadd.f32 %v4762, -0.28449672
        %v4891 = vadd.f32 %v4763, -0.28449672
        %v4892 = vadd.f32 %v4764, -0.28449672
        %v4893 = vadd.f32 %v4765, -0.28449672
        %v4894 = vadd.f32 %v4766, -0.28449672
        %v4895 = vadd.f32 %v4767, -0.28449672
        %v4896 = vadd.f32 %v4768, -0.28449672
        %v4897 = vadd.f32 %v4769, -0.28449672
        %v4898 = vadd.f32 %v4770, -0.28449672
        %v4899 = vadd.f32 %v4771, -0.28449672
        %v4900 = vadd.f32 %v4772, -0.28449672
        %v4901 = vadd.f32 %v4773, -0.28449672
        %v4902 = vadd.f32 %v4774, -0.28449672
        %v4903 = vadd.f32 %v4775, -0.28449672
        %v4904 = vadd.f32 %v4776, -0.28449672
        %v4905 = vadd.f32 %v4777, -0.28449672
        %v4906 = vadd.f32 %v4778, -0.28449672
        %v4907 = vadd.f32 %v4779, -0.28449672
        %v4908 = vadd.f32 %v4780, -0.28449672
        %v4909 = vadd.f32 %v4781, -0.28449672
        %v4910 = vadd.f32 %v4782, -0.28449672
        %v4911 = vadd.f32 %v4783, -0.28449672
        %v4912 = vadd.f32 %v4784, -0.28449672
        %v4913 = vadd.f32 %v4785, -0.28449672
        %v4914 = vadd.f32 %v4786, -0.28449672
        %v4915 = vadd.f32 %v4787, -0.28449672
        %v4916 = vadd.f32 %v4788, -0.28449672
        %v4917 = vadd.f32 %v4789, -0.28449672
        %v4918 = vadd.f32 %v4790, -0.28449672
        %v4919 = vadd.f32 %v4791, -0.28449672
        %v4920 = vadd.f32 %v4792, -0.28449672
        %v4921 = vadd.f32 %v4793, -0.28449672
        %v4922 = vadd.f32 %v4794, -0.28449672
        %v4923 = vadd.f32 %v4795, -0.28449672
        %v4924 = vadd.f32 %v4796, -0.28449672
        %v4925 = vadd.f32 %v4797, -0.28449672
        %v4926 = vadd.f32 %v4798, -0.28449672
        %v4927 = vadd.f32 %v4799, -0.28449672
        %v4928 = vadd.f32 %v4800, -0.28449672
        %v4929 = vadd.f32 %v4801, -0.28449672
        %v4930 = vadd.f32 %v4802, -0.28449672
        %v4931 = vadd.f32 %v4803, -0.28449672
        %v4932 = vadd.f32 %v4804, -0.28449672
        %v4933 = vadd.f32 %v4805, -0.28449672
        %v4934 = vadd.f32 %v4806, -0.28449672
        %v4935 = vadd.f32 %v4807, -0.28449672
        %v4936 = vadd.f32 %v4808, -0.28449672
        %v4937 = vadd.f32 %v4809, -0.28449672
        %v4938 = vadd.f32 %v4810, -0.28449672
        %v4939 = vadd.f32 %v4811, -0.28449672
        %v4940 = vadd.f32 %v4812, -0.28449672
        %v4941 = vadd.f32 %v4813, -0.28449672
        %v4942 = vadd.f32 %v4814, -0.28449672
        %v4943 = vadd.f32 %v4815, -0.28449672
        %v4944 = vadd.f32 %v4816, -0.28449672
        %v4945 = vadd.f32 %v4817, -0.28449672
        %v4946 = vadd.f32 %v4818, -0.28449672
        %v4947 = vadd.f32 %v4819, -0.28449672
        %v4948 = vadd.f32 %v4820, -0.28449672
        %v4949 = vadd.f32 %v4821, -0.28449672
        %v4950 = vadd.f32 %v4822, -0.28449672
        %v4951 = vadd.f32 %v4823, -0.28449672
        %v4952 = vadd.f32 %v4824, -0.28449672
        %v4953 = vadd.f32 %v4825, -0.28449672
        %v4954 = vadd.f32 %v4826, -0.28449672
        %v4955 = vadd.f32 %v4827, -0.28449672
        %v4956 = vadd.f32 %v4828, -0.28449672
        %v4957 = vadd.f32 %v4829, -0.28449672
        %v4958 = vadd.f32 %v4830, -0.28449672
        %v4959 = vadd.f32 %v4831, -0.28449672
        %v4960 = vadd.f32 %v4832, -0.28449672
        %v4961 = vadd.f32 %v4833, -0.28449672
        %v4962 = vadd.f32 %v4834, -0.28449672
        %v4963 = vadd.f32 %v4835, -0.28449672
        %v4964 = vadd.f32 %v4836, -0.28449672
        %v4965 = vadd.f32 %v4837, -0.28449672
        %v4966 = vadd.f32 %v4838, -0.28449672
        %v4967 = vadd.f32 %v4839, -0.28449672
        %v4968 = vadd.f32 %v4840, -0.28449672
        %v4969 = vadd.f32 %v4841, -0.28449672
        %v4970 = vadd.f32 %v4842, -0.28449672
        %v4971 = vadd.f32 %v4843, -0.28449672
        %v4972 = vadd.f32 %v4844, -0.28449672
        %v4973 = vadd.f32 %v4845, -0.28449672
        %v4974 = vadd.f32 %v4846, -0.28449672
        %v4975 = vadd.f32 %v4847, -0.28449672
        %v4976 = vadd.f32 %v4848, -0.28449672
        %v4977 = vadd.f32 %v4849, -0.28449672
        %v4978 = vadd.f32 %v4850, -0.28449672
        %v4979 = vadd.f32 %v4851, -0.28449672
        %v4980 = vmul.f32 %v4852, %v3957
        %v4981 = vmul.f32 %v4853, %v3959
        %v4982 = vmul.f32 %v4854, %v3961
        %v4983 = vmul.f32 %v4855, %v3963
        %v4984 = vmul.f32 %v4856, %v3965
        %v4985 = vmul.f32 %v4857, %v3967
        %v4986 = vmul.f32 %v4858, %v3969
        %v4987 = vmul.f32 %v4859, %v3971
        %v4988 = vmul.f32 %v4860, %v3973
        %v4989 = vmul.f32 %v4861, %v3975
        %v4990 = vmul.f32 %v4862, %v3977
        %v4991 = vmul.f32 %v4863, %v3979
        %v4992 = vmul.f32 %v4864, %v3981
        %v4993 = vmul.f32 %v4865, %v3983
        %v4994 = vmul.f32 %v4866, %v3985
        %v4995 = vmul.f32 %v4867, %v3987
        %v4996 = vmul.f32 %v4868, %v3989
        %v4997 = vmul.f32 %v4869, %v3991
        %v4998 = vmul.f32 %v4870, %v3993
        %v4999 = vmul.f32 %v4871, %v3995
        %v5000 = vmul.f32 %v4872, %v3997
        %v5001 = vmul.f32 %v4873, %v3999
        %v5002 = vmul.f32 %v4874, %v4001
        %v5003 = vmul.f32 %v4875, %v4003
        %v5004 = vmul.f32 %v4876, %v4005
        %v5005 = vmul.f32 %v4877, %v4007
        %v5006 = vmul.f32 %v4878, %v4009
        %v5007 = vmul.f32 %v4879, %v4011
        %v5008 = vmul.f32 %v4880, %v4013
        %v5009 = vmul.f32 %v4881, %v4015
        %v5010 = vmul.f32 %v4882, %v4017
        %v5011 = vmul.f32 %v4883, %v4019
        %v5012 = vmul.f32 %v4884, %v4021
        %v5013 = vmul.f32 %v4885, %v4023
        %v5014 = vmul.f32 %v4886, %v4025
        %v5015 = vmul.f32 %v4887, %v4027
        %v5016 = vmul.f32 %v4888, %v4029
        %v5017 = vmul.f32 %v4889, %v4031
        %v5018 = vmul.f32 %v4890, %v4033
        %v5019 = vmul.f32 %v4891, %v4035
        %v5020 = vmul.f32 %v4892, %v4037
        %v5021 = vmul.f32 %v4893, %v4039
        %v5022 = vmul.f32 %v4894, %v4041
        %v5023 = vmul.f32 %v4895, %v4043
        %v5024 = vmul.f32 %v4896, %v4045
        %v5025 = vmul.f32 %v4897, %v4047
        %v5026 = vmul.f32 %v4898, %v4049
        %v5027 = vmul.f32 %v4899, %v4051
        %v5028 = vmul.f32 %v4900, %v4053
        %v5029 = vmul.f32 %v4901, %v4055
        %v5030 = vmul.f32 %v4902, %v4057
        %v5031 = vmul.f32 %v4903, %v4059
        %v5032 = vmul.f32 %v4904, %v4061
        %v5033 = vmul.f32 %v4905, %v4063
        %v5034 = vmul.f32 %v4906, %v4065
        %v5035 = vmul.f32 %v4907, %v4067
        %v5036 = vmul.f32 %v4908, %v4069
        %v5037 = vmul.f32 %v4909, %v4071
        %v5038 = vmul.f32 %v4910, %v4073
        %v5039 = vmul.f32 %v4911, %v4075
        %v5040 = vmul.f32 %v4912, %v4077
        %v5041 = vmul.f32 %v4913, %v4079
        %v5042 = vmul.f32 %v4914, %v4081
        %v5043 = vmul.f32 %v4915, %v4083
        %v5044 = vmul.f32 %v4916, %v4085
        %v5045 = vmul.f32 %v4917, %v4087
        %v5046 = vmul.f32 %v4918, %v4089
        %v5047 = vmul.f32 %v4919, %v4091
        %v5048 = vmul.f32 %v4920, %v4093
        %v5049 = vmul.f32 %v4921, %v4095
        %v5050 = vmul.f32 %v4922, %v4097
        %v5051 = vmul.f32 %v4923, %v4099
        %v5052 = vmul.f32 %v4924, %v4101
        %v5053 = vmul.f32 %v4925, %v4103
        %v5054 = vmul.f32 %v4926, %v4105
        %v5055 = vmul.f32 %v4927, %v4107
        %v5056 = vmul.f32 %v4928, %v4109
        %v5057 = vmul.f32 %v4929, %v4111
        %v5058 = vmul.f32 %v4930, %v4113
        %v5059 = vmul.f32 %v4931, %v4115
        %v5060 = vmul.f32 %v4932, %v4117
        %v5061 = vmul.f32 %v4933, %v4119
        %v5062 = vmul.f32 %v4934, %v4121
        %v5063 = vmul.f32 %v4935, %v4123
        %v5064 = vmul.f32 %v4936, %v4125
        %v5065 = vmul.f32 %v4937, %v4127
        %v5066 = vmul.f32 %v4938, %v4129
        %v5067 = vmul.f32 %v4939, %v4131
        %v5068 = vmul.f32 %v4940, %v4133
        %v5069 = vmul.f32 %v4941, %v4135
        %v5070 = vmul.f32 %v4942, %v4137
        %v5071 = vmul.f32 %v4943, %v4139
        %v5072 = vmul.f32 %v4944, %v4141
        %v5073 = vmul.f32 %v4945, %v4143
        %v5074 = vmul.f32 %v4946, %v4145
        %v5075 = vmul.f32 %v4947, %v4147
        %v5076 = vmul.f32 %v4948, %v4149
        %v5077 = vmul.f32 %v4949, %v4151
        %v5078 = vmul.f32 %v4950, %v4153
        %v5079 = vmul.f32 %v4951, %v4155
        %v5080 = vmul.f32 %v4952, %v4157
        %v5081 = vmul.f32 %v4953, %v4159
        %v5082 = vmul.f32 %v4954, %v4161
        %v5083 = vmul.f32 %v4955, %v4163
        %v5084 = vmul.f32 %v4956, %v4165
        %v5085 = vmul.f32 %v4957, %v4167
        %v5086 = vmul.f32 %v4958, %v4169
        %v5087 = vmul.f32 %v4959, %v4171
        %v5088 = vmul.f32 %v4960, %v4173
        %v5089 = vmul.f32 %v4961, %v4175
        %v5090 = vmul.f32 %v4962, %v4177
        %v5091 = vmul.f32 %v4963, %v4179
        %v5092 = vmul.f32 %v4964, %v4181
        %v5093 = vmul.f32 %v4965, %v4183
        %v5094 = vmul.f32 %v4966, %v4185
        %v5095 = vmul.f32 %v4967, %v4187
        %v5096 = vmul.f32 %v4968, %v4189
        %v5097 = vmul.f32 %v4969, %v4191
        %v5098 = vmul.f32 %v4970, %v4193
        %v5099 = vmul.f32 %v4971, %v4195
        %v5100 = vmul.f32 %v4972, %v4197
        %v5101 = vmul.f32 %v4973, %v4199
        %v5102 = vmul.f32 %v4974, %v4201
        %v5103 = vmul.f32 %v4975, %v4203
        %v5104 = vmul.f32 %v4976, %v4205
        %v5105 = vmul.f32 %v4977, %v4207
        %v5106 = vmul.f32 %v4978, %v4209
        %v5107 = vmul.f32 %v4979, %v4211
        %v5108 = vadd.f32 %v4980, 0.2548296
        %v5109 = vadd.f32 %v4981, 0.2548296
        %v5110 = vadd.f32 %v4982, 0.2548296
        %v5111 = vadd.f32 %v4983, 0.2548296
        %v5112 = vadd.f32 %v4984, 0.2548296
        %v5113 = vadd.f32 %v4985, 0.2548296
        %v5114 = vadd.f32 %v4986, 0.2548296
        %v5115 = vadd.f32 %v4987, 0.2548296
        %v5116 = vadd.f32 %v4988, 0.2548296
        %v5117 = vadd.f32 %v4989, 0.2548296
        %v5118 = vadd.f32 %v4990, 0.2548296
        %v5119 = vadd.f32 %v4991, 0.2548296
        %v5120 = vadd.f32 %v4992, 0.2548296
        %v5121 = vadd.f32 %v4993, 0.2548296
        %v5122 = vadd.f32 %v4994, 0.2548296
        %v5123 = vadd.f32 %v4995, 0.2548296
        %v5124 = vadd.f32 %v4996, 0.2548296
        %v5125 = vadd.f32 %v4997, 0.2548296
        %v5126 = vadd.f32 %v4998, 0.2548296
        %v5127 = vadd.f32 %v4999, 0.2548296
        %v5128 = vadd.f32 %v5000, 0.2548296
        %v5129 = vadd.f32 %v5001, 0.2548296
        %v5130 = vadd.f32 %v5002, 0.2548296
        %v5131 = vadd.f32 %v5003, 0.2548296
        %v5132 = vadd.f32 %v5004, 0.2548296
        %v5133 = vadd.f32 %v5005, 0.2548296
        %v5134 = vadd.f32 %v5006, 0.2548296
        %v5135 = vadd.f32 %v5007, 0.2548296
        %v5136 = vadd.f32 %v5008, 0.2548296
        %v5137 = vadd.f32 %v5009, 0.2548296
        %v5138 = vadd.f32 %v5010, 0.2548296
        %v5139 = vadd.f32 %v5011, 0.2548296
        %v5140 = vadd.f32 %v5012, 0.2548296
        %v5141 = vadd.f32 %v5013, 0.2548296
        %v5142 = vadd.f32 %v5014, 0.2548296
        %v5143 = vadd.f32 %v5015, 0.2548296
        %v5144 = vadd.f32 %v5016, 0.2548296
        %v5145 = vadd.f32 %v5017, 0.2548296
        %v5146 = vadd.f32 %v5018, 0.2548296
        %v5147 = vadd.f32 %v5019, 0.2548296
        %v5148 = vadd.f32 %v5020, 0.2548296
        %v5149 = vadd.f32 %v5021, 0.2548296
        %v5150 = vadd.f32 %v5022, 0.2548296
        %v5151 = vadd.f32 %v5023, 0.2548296
        %v5152 = vadd.f32 %v5024, 0.2548296
        %v5153 = vadd.f32 %v5025, 0.2548296
        %v5154 = vadd.f32 %v5026, 0.2548296
        %v5155 = vadd.f32 %v5027, 0.2548296
        %v5156 = vadd.f32 %v5028, 0.2548296
        %v5157 = vadd.f32 %v5029, 0.2548296
        %v5158 = vadd.f32 %v5030, 0.2548296
        %v5159 = vadd.f32 %v5031, 0.2548296
        %v5160 = vadd.f32 %v5032, 0.2548296
        %v5161 = vadd.f32 %v5033, 0.2548296
        %v5162 = vadd.f32 %v5034, 0.2548296
        %v5163 = vadd.f32 %v5035, 0.2548296
        %v5164 = vadd.f32 %v5036, 0.2548296
        %v5165 = vadd.f32 %v5037, 0.2548296
        %v5166 = vadd.f32 %v5038, 0.2548296
        %v5167 = vadd.f32 %v5039, 0.2548296
        %v5168 = vadd.f32 %v5040, 0.2548296
        %v5169 = vadd.f32 %v5041, 0.2548296
        %v5170 = vadd.f32 %v5042, 0.2548296
        %v5171 = vadd.f32 %v5043, 0.2548296
        %v5172 = vadd.f32 %v5044, 0.2548296
        %v5173 = vadd.f32 %v5045, 0.2548296
        %v5174 = vadd.f32 %v5046, 0.2548296
        %v5175 = vadd.f32 %v5047, 0.2548296
        %v5176 = vadd.f32 %v5048, 0.2548296
        %v5177 = vadd.f32 %v5049, 0.2548296
        %v5178 = vadd.f32 %v5050, 0.2548296
        %v5179 = vadd.f32 %v5051, 0.2548296
        %v5180 = vadd.f32 %v5052, 0.2548296
        %v5181 = vadd.f32 %v5053, 0.2548296
        %v5182 = vadd.f32 %v5054, 0.2548296
        %v5183 = vadd.f32 %v5055, 0.2548296
        %v5184 = vadd.f32 %v5056, 0.2548296
        %v5185 = vadd.f32 %v5057, 0.2548296
        %v5186 = vadd.f32 %v5058, 0.2548296
        %v5187 = vadd.f32 %v5059, 0.2548296
        %v5188 = vadd.f32 %v5060, 0.2548296
        %v5189 = vadd.f32 %v5061, 0.2548296
        %v5190 = vadd.f32 %v5062, 0.2548296
        %v5191 = vadd.f32 %v5063, 0.2548296
        %v5192 = vadd.f32 %v5064, 0.2548296
        %v5193 = vadd.f32 %v5065, 0.2548296
        %v5194 = vadd.f32 %v5066, 0.2548296
        %v5195 = vadd.f32 %v5067, 0.2548296
        %v5196 = vadd.f32 %v5068, 0.2548296
        %v5197 = vadd.f32 %v5069, 0.2548296
        %v5198 = vadd.f32 %v5070, 0.2548296
        %v5199 = vadd.f32 %v5071, 0.2548296
        %v5200 = vadd.f32 %v5072, 0.2548296
        %v5201 = vadd.f32 %v5073, 0.2548296
        %v5202 = vadd.f32 %v5074, 0.2548296
        %v5203 = vadd.f32 %v5075, 0.2548296
        %v5204 = vadd.f32 %v5076, 0.2548296
        %v5205 = vadd.f32 %v5077, 0.2548296
        %v5206 = vadd.f32 %v5078, 0.2548296
        %v5207 = vadd.f32 %v5079, 0.2548296
        %v5208 = vadd.f32 %v5080, 0.2548296
        %v5209 = vadd.f32 %v5081, 0.2548296
        %v5210 = vadd.f32 %v5082, 0.2548296
        %v5211 = vadd.f32 %v5083, 0.2548296
        %v5212 = vadd.f32 %v5084, 0.2548296
        %v5213 = vadd.f32 %v5085, 0.2548296
        %v5214 = vadd.f32 %v5086, 0.2548296
        %v5215 = vadd.f32 %v5087, 0.2548296
        %v5216 = vadd.f32 %v5088, 0.2548296
        %v5217 = vadd.f32 %v5089, 0.2548296
        %v5218 = vadd.f32 %v5090, 0.2548296
        %v5219 = vadd.f32 %v5091, 0.2548296
        %v5220 = vadd.f32 %v5092, 0.2548296
        %v5221 = vadd.f32 %v5093, 0.2548296
        %v5222 = vadd.f32 %v5094, 0.2548296
        %v5223 = vadd.f32 %v5095, 0.2548296
        %v5224 = vadd.f32 %v5096, 0.2548296
        %v5225 = vadd.f32 %v5097, 0.2548296
        %v5226 = vadd.f32 %v5098, 0.2548296
        %v5227 = vadd.f32 %v5099, 0.2548296
        %v5228 = vadd.f32 %v5100, 0.2548296
        %v5229 = vadd.f32 %v5101, 0.2548296
        %v5230 = vadd.f32 %v5102, 0.2548296
        %v5231 = vadd.f32 %v5103, 0.2548296
        %v5232 = vadd.f32 %v5104, 0.2548296
        %v5233 = vadd.f32 %v5105, 0.2548296
        %v5234 = vadd.f32 %v5106, 0.2548296
        %v5235 = vadd.f32 %v5107, 0.2548296
        %v5236 = vmul.f32 %v5108, %v3957
        %v5237 = vmul.f32 %v5109, %v3959
        %v5238 = vmul.f32 %v5110, %v3961
        %v5239 = vmul.f32 %v5111, %v3963
        %v5240 = vmul.f32 %v5112, %v3965
        %v5241 = vmul.f32 %v5113, %v3967
        %v5242 = vmul.f32 %v5114, %v3969
        %v5243 = vmul.f32 %v5115, %v3971
        %v5244 = vmul.f32 %v5116, %v3973
        %v5245 = vmul.f32 %v5117, %v3975
        %v5246 = vmul.f32 %v5118, %v3977
        %v5247 = vmul.f32 %v5119, %v3979
        %v5248 = vmul.f32 %v5120, %v3981
        %v5249 = vmul.f32 %v5121, %v3983
        %v5250 = vmul.f32 %v5122, %v3985
        %v5251 = vmul.f32 %v5123, %v3987
        %v5252 = vmul.f32 %v5124, %v3989
        %v5253 = vmul.f32 %v5125, %v3991
        %v5254 = vmul.f32 %v5126, %v3993
        %v5255 = vmul.f32 %v5127, %v3995
        %v5256 = vmul.f32 %v5128, %v3997
        %v5257 = vmul.f32 %v5129, %v3999
        %v5258 = vmul.f32 %v5130, %v4001
        %v5259 = vmul.f32 %v5131, %v4003
        %v5260 = vmul.f32 %v5132, %v4005
        %v5261 = vmul.f32 %v5133, %v4007
        %v5262 = vmul.f32 %v5134, %v4009
        %v5263 = vmul.f32 %v5135, %v4011
        %v5264 = vmul.f32 %v5136, %v4013
        %v5265 = vmul.f32 %v5137, %v4015
        %v5266 = vmul.f32 %v5138, %v4017
        %v5267 = vmul.f32 %v5139, %v4019
        %v5268 = vmul.f32 %v5140, %v4021
        %v5269 = vmul.f32 %v5141, %v4023
        %v5270 = vmul.f32 %v5142, %v4025
        %v5271 = vmul.f32 %v5143, %v4027
        %v5272 = vmul.f32 %v5144, %v4029
        %v5273 = vmul.f32 %v5145, %v4031
        %v5274 = vmul.f32 %v5146, %v4033
        %v5275 = vmul.f32 %v5147, %v4035
        %v5276 = vmul.f32 %v5148, %v4037
        %v5277 = vmul.f32 %v5149, %v4039
        %v5278 = vmul.f32 %v5150, %v4041
        %v5279 = vmul.f32 %v5151, %v4043
        %v5280 = vmul.f32 %v5152, %v4045
        %v5281 = vmul.f32 %v5153, %v4047
        %v5282 = vmul.f32 %v5154, %v4049
        %v5283 = vmul.f32 %v5155, %v4051
        %v5284 = vmul.f32 %v5156, %v4053
        %v5285 = vmul.f32 %v5157, %v4055
        %v5286 = vmul.f32 %v5158, %v4057
        %v5287 = vmul.f32 %v5159, %v4059
        %v5288 = vmul.f32 %v5160, %v4061
        %v5289 = vmul.f32 %v5161, %v4063
        %v5290 = vmul.f32 %v5162, %v4065
        %v5291 = vmul.f32 %v5163, %v4067
        %v5292 = vmul.f32 %v5164, %v4069
        %v5293 = vmul.f32 %v5165, %v4071
        %v5294 = vmul.f32 %v5166, %v4073
        %v5295 = vmul.f32 %v5167, %v4075
        %v5296 = vmul.f32 %v5168, %v4077
        %v5297 = vmul.f32 %v5169, %v4079
        %v5298 = vmul.f32 %v5170, %v4081
        %v5299 = vmul.f32 %v5171, %v4083
        %v5300 = vmul.f32 %v5172, %v4085
        %v5301 = vmul.f32 %v5173, %v4087
        %v5302 = vmul.f32 %v5174, %v4089
        %v5303 = vmul.f32 %v5175, %v4091
        %v5304 = vmul.f32 %v5176, %v4093
        %v5305 = vmul.f32 %v5177, %v4095
        %v5306 = vmul.f32 %v5178, %v4097
        %v5307 = vmul.f32 %v5179, %v4099
        %v5308 = vmul.f32 %v5180, %v4101
        %v5309 = vmul.f32 %v5181, %v4103
        %v5310 = vmul.f32 %v5182, %v4105
        %v5311 = vmul.f32 %v5183, %v4107
        %v5312 = vmul.f32 %v5184, %v4109
        %v5313 = vmul.f32 %v5185, %v4111
        %v5314 = vmul.f32 %v5186, %v4113
        %v5315 = vmul.f32 %v5187, %v4115
        %v5316 = vmul.f32 %v5188, %v4117
        %v5317 = vmul.f32 %v5189, %v4119
        %v5318 = vmul.f32 %v5190, %v4121
        %v5319 = vmul.f32 %v5191, %v4123
        %v5320 = vmul.f32 %v5192, %v4125
        %v5321 = vmul.f32 %v5193, %v4127
        %v5322 = vmul.f32 %v5194, %v4129
        %v5323 = vmul.f32 %v5195, %v4131
        %v5324 = vmul.f32 %v5196, %v4133
        %v5325 = vmul.f32 %v5197, %v4135
        %v5326 = vmul.f32 %v5198, %v4137
        %v5327 = vmul.f32 %v5199, %v4139
        %v5328 = vmul.f32 %v5200, %v4141
        %v5329 = vmul.f32 %v5201, %v4143
        %v5330 = vmul.f32 %v5202, %v4145
        %v5331 = vmul.f32 %v5203, %v4147
        %v5332 = vmul.f32 %v5204, %v4149
        %v5333 = vmul.f32 %v5205, %v4151
        %v5334 = vmul.f32 %v5206, %v4153
        %v5335 = vmul.f32 %v5207, %v4155
        %v5336 = vmul.f32 %v5208, %v4157
        %v5337 = vmul.f32 %v5209, %v4159
        %v5338 = vmul.f32 %v5210, %v4161
        %v5339 = vmul.f32 %v5211, %v4163
        %v5340 = vmul.f32 %v5212, %v4165
        %v5341 = vmul.f32 %v5213, %v4167
        %v5342 = vmul.f32 %v5214, %v4169
        %v5343 = vmul.f32 %v5215, %v4171
        %v5344 = vmul.f32 %v5216, %v4173
        %v5345 = vmul.f32 %v5217, %v4175
        %v5346 = vmul.f32 %v5218, %v4177
        %v5347 = vmul.f32 %v5219, %v4179
        %v5348 = vmul.f32 %v5220, %v4181
        %v5349 = vmul.f32 %v5221, %v4183
        %v5350 = vmul.f32 %v5222, %v4185
        %v5351 = vmul.f32 %v5223, %v4187
        %v5352 = vmul.f32 %v5224, %v4189
        %v5353 = vmul.f32 %v5225, %v4191
        %v5354 = vmul.f32 %v5226, %v4193
        %v5355 = vmul.f32 %v5227, %v4195
        %v5356 = vmul.f32 %v5228, %v4197
        %v5357 = vmul.f32 %v5229, %v4199
        %v5358 = vmul.f32 %v5230, %v4201
        %v5359 = vmul.f32 %v5231, %v4203
        %v5360 = vmul.f32 %v5232, %v4205
        %v5361 = vmul.f32 %v5233, %v4207
        %v5362 = vmul.f32 %v5234, %v4209
        %v5363 = vmul.f32 %v5235, %v4211
        %v5364 = vmul.f32 %v3572, %v3572
        %v5365 = vmul.f32 %v3573, %v3573
        %v5366 = vmul.f32 %v3574, %v3574
        %v5367 = vmul.f32 %v3575, %v3575
        %v5368 = vmul.f32 %v3576, %v3576
        %v5369 = vmul.f32 %v3577, %v3577
        %v5370 = vmul.f32 %v3578, %v3578
        %v5371 = vmul.f32 %v3579, %v3579
        %v5372 = vmul.f32 %v3580, %v3580
        %v5373 = vmul.f32 %v3581, %v3581
        %v5374 = vmul.f32 %v3582, %v3582
        %v5375 = vmul.f32 %v3583, %v3583
        %v5376 = vmul.f32 %v3584, %v3584
        %v5377 = vmul.f32 %v3585, %v3585
        %v5378 = vmul.f32 %v3586, %v3586
        %v5379 = vmul.f32 %v3587, %v3587
        %v5380 = vmul.f32 %v3588, %v3588
        %v5381 = vmul.f32 %v3589, %v3589
        %v5382 = vmul.f32 %v3590, %v3590
        %v5383 = vmul.f32 %v3591, %v3591
        %v5384 = vmul.f32 %v3592, %v3592
        %v5385 = vmul.f32 %v3593, %v3593
        %v5386 = vmul.f32 %v3594, %v3594
        %v5387 = vmul.f32 %v3595, %v3595
        %v5388 = vmul.f32 %v3596, %v3596
        %v5389 = vmul.f32 %v3597, %v3597
        %v5390 = vmul.f32 %v3598, %v3598
        %v5391 = vmul.f32 %v3599, %v3599
        %v5392 = vmul.f32 %v3600, %v3600
        %v5393 = vmul.f32 %v3601, %v3601
        %v5394 = vmul.f32 %v3602, %v3602
        %v5395 = vmul.f32 %v3603, %v3603
        %v5396 = vmul.f32 %v3604, %v3604
        %v5397 = vmul.f32 %v3605, %v3605
        %v5398 = vmul.f32 %v3606, %v3606
        %v5399 = vmul.f32 %v3607, %v3607
        %v5400 = vmul.f32 %v3608, %v3608
        %v5401 = vmul.f32 %v3609, %v3609
        %v5402 = vmul.f32 %v3610, %v3610
        %v5403 = vmul.f32 %v3611, %v3611
        %v5404 = vmul.f32 %v3612, %v3612
        %v5405 = vmul.f32 %v3613, %v3613
        %v5406 = vmul.f32 %v3614, %v3614
        %v5407 = vmul.f32 %v3615, %v3615
        %v5408 = vmul.f32 %v3616, %v3616
        %v5409 = vmul.f32 %v3617, %v3617
        %v5410 = vmul.f32 %v3618, %v3618
        %v5411 = vmul.f32 %v3619, %v3619
        %v5412 = vmul.f32 %v3620, %v3620
        %v5413 = vmul.f32 %v3621, %v3621
        %v5414 = vmul.f32 %v3622, %v3622
        %v5415 = vmul.f32 %v3623, %v3623
        %v5416 = vmul.f32 %v3624, %v3624
        %v5417 = vmul.f32 %v3625, %v3625
        %v5418 = vmul.f32 %v3626, %v3626
        %v5419 = vmul.f32 %v3627, %v3627
        %v5420 = vmul.f32 %v3628, %v3628
        %v5421 = vmul.f32 %v3629, %v3629
        %v5422 = vmul.f32 %v3630, %v3630
        %v5423 = vmul.f32 %v3631, %v3631
        %v5424 = vmul.f32 %v3632, %v3632
        %v5425 = vmul.f32 %v3633, %v3633
        %v5426 = vmul.f32 %v3634, %v3634
        %v5427 = vmul.f32 %v3635, %v3635
        %v5428 = vmul.f32 %v3636, %v3636
        %v5429 = vmul.f32 %v3637, %v3637
        %v5430 = vmul.f32 %v3638, %v3638
        %v5431 = vmul.f32 %v3639, %v3639
        %v5432 = vmul.f32 %v3640, %v3640
        %v5433 = vmul.f32 %v3641, %v3641
        %v5434 = vmul.f32 %v3642, %v3642
        %v5435 = vmul.f32 %v3643, %v3643
        %v5436 = vmul.f32 %v3644, %v3644
        %v5437 = vmul.f32 %v3645, %v3645
        %v5438 = vmul.f32 %v3646, %v3646
        %v5439 = vmul.f32 %v3647, %v3647
        %v5440 = vmul.f32 %v3648, %v3648
        %v5441 = vmul.f32 %v3649, %v3649
        %v5442 = vmul.f32 %v3650, %v3650
        %v5443 = vmul.f32 %v3651, %v3651
        %v5444 = vmul.f32 %v3652, %v3652
        %v5445 = vmul.f32 %v3653, %v3653
        %v5446 = vmul.f32 %v3654, %v3654
        %v5447 = vmul.f32 %v3655, %v3655
        %v5448 = vmul.f32 %v3656, %v3656
        %v5449 = vmul.f32 %v3657, %v3657
        %v5450 = vmul.f32 %v3658, %v3658
        %v5451 = vmul.f32 %v3659, %v3659
        %v5452 = vmul.f32 %v3660, %v3660
        %v5453 = vmul.f32 %v3661, %v3661
        %v5454 = vmul.f32 %v3662, %v3662
        %v5455 = vmul.f32 %v3663, %v3663
        %v5456 = vmul.f32 %v3664, %v3664
        %v5457 = vmul.f32 %v3665, %v3665
        %v5458 = vmul.f32 %v3666, %v3666
        %v5459 = vmul.f32 %v3667, %v3667
        %v5460 = vmul.f32 %v3668, %v3668
        %v5461 = vmul.f32 %v3669, %v3669
        %v5462 = vmul.f32 %v3670, %v3670
        %v5463 = vmul.f32 %v3671, %v3671
        %v5464 = vmul.f32 %v3672, %v3672
        %v5465 = vmul.f32 %v3673, %v3673
        %v5466 = vmul.f32 %v3674, %v3674
        %v5467 = vmul.f32 %v3675, %v3675
        %v5468 = vmul.f32 %v3676, %v3676
        %v5469 = vmul.f32 %v3677, %v3677
        %v5470 = vmul.f32 %v3678, %v3678
        %v5471 = vmul.f32 %v3679, %v3679
        %v5472 = vmul.f32 %v3680, %v3680
        %v5473 = vmul.f32 %v3681, %v3681
        %v5474 = vmul.f32 %v3682, %v3682
        %v5475 = vmul.f32 %v3683, %v3683
        %v5476 = vmul.f32 %v3684, %v3684
        %v5477 = vmul.f32 %v3685, %v3685
        %v5478 = vmul.f32 %v3686, %v3686
        %v5479 = vmul.f32 %v3687, %v3687
        %v5480 = vmul.f32 %v3688, %v3688
        %v5481 = vmul.f32 %v3689, %v3689
        %v5482 = vmul.f32 %v3690, %v3690
        %v5483 = vmul.f32 %v3691, %v3691
        %v5484 = vmul.f32 %v3692, %v3692
        %v5485 = vmul.f32 %v3693, %v3693
        %v5486 = vmul.f32 %v3694, %v3694
        %v5487 = vmul.f32 %v3695, %v3695
        %v5488 = vmul.f32 %v3696, %v3696
        %v5489 = vmul.f32 %v3697, %v3697
        %v5490 = vmul.f32 %v3698, %v3698
        %v5491 = vmul.f32 %v3699, %v3699
        %v5492 = vsub.f32 0.0, %v5364
        %v5493 = vsub.f32 0.0, %v5365
        %v5494 = vsub.f32 0.0, %v5366
        %v5495 = vsub.f32 0.0, %v5367
        %v5496 = vsub.f32 0.0, %v5368
        %v5497 = vsub.f32 0.0, %v5369
        %v5498 = vsub.f32 0.0, %v5370
        %v5499 = vsub.f32 0.0, %v5371
        %v5500 = vsub.f32 0.0, %v5372
        %v5501 = vsub.f32 0.0, %v5373
        %v5502 = vsub.f32 0.0, %v5374
        %v5503 = vsub.f32 0.0, %v5375
        %v5504 = vsub.f32 0.0, %v5376
        %v5505 = vsub.f32 0.0, %v5377
        %v5506 = vsub.f32 0.0, %v5378
        %v5507 = vsub.f32 0.0, %v5379
        %v5508 = vsub.f32 0.0, %v5380
        %v5509 = vsub.f32 0.0, %v5381
        %v5510 = vsub.f32 0.0, %v5382
        %v5511 = vsub.f32 0.0, %v5383
        %v5512 = vsub.f32 0.0, %v5384
        %v5513 = vsub.f32 0.0, %v5385
        %v5514 = vsub.f32 0.0, %v5386
        %v5515 = vsub.f32 0.0, %v5387
        %v5516 = vsub.f32 0.0, %v5388
        %v5517 = vsub.f32 0.0, %v5389
        %v5518 = vsub.f32 0.0, %v5390
        %v5519 = vsub.f32 0.0, %v5391
        %v5520 = vsub.f32 0.0, %v5392
        %v5521 = vsub.f32 0.0, %v5393
        %v5522 = vsub.f32 0.0, %v5394
        %v5523 = vsub.f32 0.0, %v5395
        %v5524 = vsub.f32 0.0, %v5396
        %v5525 = vsub.f32 0.0, %v5397
        %v5526 = vsub.f32 0.0, %v5398
        %v5527 = vsub.f32 0.0, %v5399
        %v5528 = vsub.f32 0.0, %v5400
        %v5529 = vsub.f32 0.0, %v5401
        %v5530 = vsub.f32 0.0, %v5402
        %v5531 = vsub.f32 0.0, %v5403
        %v5532 = vsub.f32 0.0, %v5404
        %v5533 = vsub.f32 0.0, %v5405
        %v5534 = vsub.f32 0.0, %v5406
        %v5535 = vsub.f32 0.0, %v5407
        %v5536 = vsub.f32 0.0, %v5408
        %v5537 = vsub.f32 0.0, %v5409
        %v5538 = vsub.f32 0.0, %v5410
        %v5539 = vsub.f32 0.0, %v5411
        %v5540 = vsub.f32 0.0, %v5412
        %v5541 = vsub.f32 0.0, %v5413
        %v5542 = vsub.f32 0.0, %v5414
        %v5543 = vsub.f32 0.0, %v5415
        %v5544 = vsub.f32 0.0, %v5416
        %v5545 = vsub.f32 0.0, %v5417
        %v5546 = vsub.f32 0.0, %v5418
        %v5547 = vsub.f32 0.0, %v5419
        %v5548 = vsub.f32 0.0, %v5420
        %v5549 = vsub.f32 0.0, %v5421
        %v5550 = vsub.f32 0.0, %v5422
        %v5551 = vsub.f32 0.0, %v5423
        %v5552 = vsub.f32 0.0, %v5424
        %v5553 = vsub.f32 0.0, %v5425
        %v5554 = vsub.f32 0.0, %v5426
        %v5555 = vsub.f32 0.0, %v5427
        %v5556 = vsub.f32 0.0, %v5428
        %v5557 = vsub.f32 0.0, %v5429
        %v5558 = vsub.f32 0.0, %v5430
        %v5559 = vsub.f32 0.0, %v5431
        %v5560 = vsub.f32 0.0, %v5432
        %v5561 = vsub.f32 0.0, %v5433
        %v5562 = vsub.f32 0.0, %v5434
        %v5563 = vsub.f32 0.0, %v5435
        %v5564 = vsub.f32 0.0, %v5436
        %v5565 = vsub.f32 0.0, %v5437
        %v5566 = vsub.f32 0.0, %v5438
        %v5567 = vsub.f32 0.0, %v5439
        %v5568 = vsub.f32 0.0, %v5440
        %v5569 = vsub.f32 0.0, %v5441
        %v5570 = vsub.f32 0.0, %v5442
        %v5571 = vsub.f32 0.0, %v5443
        %v5572 = vsub.f32 0.0, %v5444
        %v5573 = vsub.f32 0.0, %v5445
        %v5574 = vsub.f32 0.0, %v5446
        %v5575 = vsub.f32 0.0, %v5447
        %v5576 = vsub.f32 0.0, %v5448
        %v5577 = vsub.f32 0.0, %v5449
        %v5578 = vsub.f32 0.0, %v5450
        %v5579 = vsub.f32 0.0, %v5451
        %v5580 = vsub.f32 0.0, %v5452
        %v5581 = vsub.f32 0.0, %v5453
        %v5582 = vsub.f32 0.0, %v5454
        %v5583 = vsub.f32 0.0, %v5455
        %v5584 = vsub.f32 0.0, %v5456
        %v5585 = vsub.f32 0.0, %v5457
        %v5586 = vsub.f32 0.0, %v5458
        %v5587 = vsub.f32 0.0, %v5459
        %v5588 = vsub.f32 0.0, %v5460
        %v5589 = vsub.f32 0.0, %v5461
        %v5590 = vsub.f32 0.0, %v5462
        %v5591 = vsub.f32 0.0, %v5463
        %v5592 = vsub.f32 0.0, %v5464
        %v5593 = vsub.f32 0.0, %v5465
        %v5594 = vsub.f32 0.0, %v5466
        %v5595 = vsub.f32 0.0, %v5467
        %v5596 = vsub.f32 0.0, %v5468
        %v5597 = vsub.f32 0.0, %v5469
        %v5598 = vsub.f32 0.0, %v5470
        %v5599 = vsub.f32 0.0, %v5471
        %v5600 = vsub.f32 0.0, %v5472
        %v5601 = vsub.f32 0.0, %v5473
        %v5602 = vsub.f32 0.0, %v5474
        %v5603 = vsub.f32 0.0, %v5475
        %v5604 = vsub.f32 0.0, %v5476
        %v5605 = vsub.f32 0.0, %v5477
        %v5606 = vsub.f32 0.0, %v5478
        %v5607 = vsub.f32 0.0, %v5479
        %v5608 = vsub.f32 0.0, %v5480
        %v5609 = vsub.f32 0.0, %v5481
        %v5610 = vsub.f32 0.0, %v5482
        %v5611 = vsub.f32 0.0, %v5483
        %v5612 = vsub.f32 0.0, %v5484
        %v5613 = vsub.f32 0.0, %v5485
        %v5614 = vsub.f32 0.0, %v5486
        %v5615 = vsub.f32 0.0, %v5487
        %v5616 = vsub.f32 0.0, %v5488
        %v5617 = vsub.f32 0.0, %v5489
        %v5618 = vsub.f32 0.0, %v5490
        %v5619 = vsub.f32 0.0, %v5491
        %v5620 = vmul.f32 %v5492, 1.442695
        %v5621 = vpow.pop %v5620
        %v5622 = vmul.f32 %v5493, 1.442695
        %v5623 = vpow.pop %v5622
        %v5624 = vmul.f32 %v5494, 1.442695
        %v5625 = vpow.pop %v5624
        %v5626 = vmul.f32 %v5495, 1.442695
        %v5627 = vpow.pop %v5626
        %v5628 = vmul.f32 %v5496, 1.442695
        %v5629 = vpow.pop %v5628
        %v5630 = vmul.f32 %v5497, 1.442695
        %v5631 = vpow.pop %v5630
        %v5632 = vmul.f32 %v5498, 1.442695
        %v5633 = vpow.pop %v5632
        %v5634 = vmul.f32 %v5499, 1.442695
        %v5635 = vpow.pop %v5634
        %v5636 = vmul.f32 %v5500, 1.442695
        %v5637 = vpow.pop %v5636
        %v5638 = vmul.f32 %v5501, 1.442695
        %v5639 = vpow.pop %v5638
        %v5640 = vmul.f32 %v5502, 1.442695
        %v5641 = vpow.pop %v5640
        %v5642 = vmul.f32 %v5503, 1.442695
        %v5643 = vpow.pop %v5642
        %v5644 = vmul.f32 %v5504, 1.442695
        %v5645 = vpow.pop %v5644
        %v5646 = vmul.f32 %v5505, 1.442695
        %v5647 = vpow.pop %v5646
        %v5648 = vmul.f32 %v5506, 1.442695
        %v5649 = vpow.pop %v5648
        %v5650 = vmul.f32 %v5507, 1.442695
        %v5651 = vpow.pop %v5650
        %v5652 = vmul.f32 %v5508, 1.442695
        %v5653 = vpow.pop %v5652
        %v5654 = vmul.f32 %v5509, 1.442695
        %v5655 = vpow.pop %v5654
        %v5656 = vmul.f32 %v5510, 1.442695
        %v5657 = vpow.pop %v5656
        %v5658 = vmul.f32 %v5511, 1.442695
        %v5659 = vpow.pop %v5658
        %v5660 = vmul.f32 %v5512, 1.442695
        %v5661 = vpow.pop %v5660
        %v5662 = vmul.f32 %v5513, 1.442695
        %v5663 = vpow.pop %v5662
        %v5664 = vmul.f32 %v5514, 1.442695
        %v5665 = vpow.pop %v5664
        %v5666 = vmul.f32 %v5515, 1.442695
        %v5667 = vpow.pop %v5666
        %v5668 = vmul.f32 %v5516, 1.442695
        %v5669 = vpow.pop %v5668
        %v5670 = vmul.f32 %v5517, 1.442695
        %v5671 = vpow.pop %v5670
        %v5672 = vmul.f32 %v5518, 1.442695
        %v5673 = vpow.pop %v5672
        %v5674 = vmul.f32 %v5519, 1.442695
        %v5675 = vpow.pop %v5674
        %v5676 = vmul.f32 %v5520, 1.442695
        %v5677 = vpow.pop %v5676
        %v5678 = vmul.f32 %v5521, 1.442695
        %v5679 = vpow.pop %v5678
        %v5680 = vmul.f32 %v5522, 1.442695
        %v5681 = vpow.pop %v5680
        %v5682 = vmul.f32 %v5523, 1.442695
        %v5683 = vpow.pop %v5682
        %v5684 = vmul.f32 %v5524, 1.442695
        %v5685 = vpow.pop %v5684
        %v5686 = vmul.f32 %v5525, 1.442695
        %v5687 = vpow.pop %v5686
        %v5688 = vmul.f32 %v5526, 1.442695
        %v5689 = vpow.pop %v5688
        %v5690 = vmul.f32 %v5527, 1.442695
        %v5691 = vpow.pop %v5690
        %v5692 = vmul.f32 %v5528, 1.442695
        %v5693 = vpow.pop %v5692
        %v5694 = vmul.f32 %v5529, 1.442695
        %v5695 = vpow.pop %v5694
        %v5696 = vmul.f32 %v5530, 1.442695
        %v5697 = vpow.pop %v5696
        %v5698 = vmul.f32 %v5531, 1.442695
        %v5699 = vpow.pop %v5698
        %v5700 = vmul.f32 %v5532, 1.442695
        %v5701 = vpow.pop %v5700
        %v5702 = vmul.f32 %v5533, 1.442695
        %v5703 = vpow.pop %v5702
        %v5704 = vmul.f32 %v5534, 1.442695
        %v5705 = vpow.pop %v5704
        %v5706 = vmul.f32 %v5535, 1.442695
        %v5707 = vpow.pop %v5706
        %v5708 = vmul.f32 %v5536, 1.442695
        %v5709 = vpow.pop %v5708
        %v5710 = vmul.f32 %v5537, 1.442695
        %v5711 = vpow.pop %v5710
        %v5712 = vmul.f32 %v5538, 1.442695
        %v5713 = vpow.pop %v5712
        %v5714 = vmul.f32 %v5539, 1.442695
        %v5715 = vpow.pop %v5714
        %v5716 = vmul.f32 %v5540, 1.442695
        %v5717 = vpow.pop %v5716
        %v5718 = vmul.f32 %v5541, 1.442695
        %v5719 = vpow.pop %v5718
        %v5720 = vmul.f32 %v5542, 1.442695
        %v5721 = vpow.pop %v5720
        %v5722 = vmul.f32 %v5543, 1.442695
        %v5723 = vpow.pop %v5722
        %v5724 = vmul.f32 %v5544, 1.442695
        %v5725 = vpow.pop %v5724
        %v5726 = vmul.f32 %v5545, 1.442695
        %v5727 = vpow.pop %v5726
        %v5728 = vmul.f32 %v5546, 1.442695
        %v5729 = vpow.pop %v5728
        %v5730 = vmul.f32 %v5547, 1.442695
        %v5731 = vpow.pop %v5730
        %v5732 = vmul.f32 %v5548, 1.442695
        %v5733 = vpow.pop %v5732
        %v5734 = vmul.f32 %v5549, 1.442695
        %v5735 = vpow.pop %v5734
        %v5736 = vmul.f32 %v5550, 1.442695
        %v5737 = vpow.pop %v5736
        %v5738 = vmul.f32 %v5551, 1.442695
        %v5739 = vpow.pop %v5738
        %v5740 = vmul.f32 %v5552, 1.442695
        %v5741 = vpow.pop %v5740
        %v5742 = vmul.f32 %v5553, 1.442695
        %v5743 = vpow.pop %v5742
        %v5744 = vmul.f32 %v5554, 1.442695
        %v5745 = vpow.pop %v5744
        %v5746 = vmul.f32 %v5555, 1.442695
        %v5747 = vpow.pop %v5746
        %v5748 = vmul.f32 %v5556, 1.442695
        %v5749 = vpow.pop %v5748
        %v5750 = vmul.f32 %v5557, 1.442695
        %v5751 = vpow.pop %v5750
        %v5752 = vmul.f32 %v5558, 1.442695
        %v5753 = vpow.pop %v5752
        %v5754 = vmul.f32 %v5559, 1.442695
        %v5755 = vpow.pop %v5754
        %v5756 = vmul.f32 %v5560, 1.442695
        %v5757 = vpow.pop %v5756
        %v5758 = vmul.f32 %v5561, 1.442695
        %v5759 = vpow.pop %v5758
        %v5760 = vmul.f32 %v5562, 1.442695
        %v5761 = vpow.pop %v5760
        %v5762 = vmul.f32 %v5563, 1.442695
        %v5763 = vpow.pop %v5762
        %v5764 = vmul.f32 %v5564, 1.442695
        %v5765 = vpow.pop %v5764
        %v5766 = vmul.f32 %v5565, 1.442695
        %v5767 = vpow.pop %v5766
        %v5768 = vmul.f32 %v5566, 1.442695
        %v5769 = vpow.pop %v5768
        %v5770 = vmul.f32 %v5567, 1.442695
        %v5771 = vpow.pop %v5770
        %v5772 = vmul.f32 %v5568, 1.442695
        %v5773 = vpow.pop %v5772
        %v5774 = vmul.f32 %v5569, 1.442695
        %v5775 = vpow.pop %v5774
        %v5776 = vmul.f32 %v5570, 1.442695
        %v5777 = vpow.pop %v5776
        %v5778 = vmul.f32 %v5571, 1.442695
        %v5779 = vpow.pop %v5778
        %v5780 = vmul.f32 %v5572, 1.442695
        %v5781 = vpow.pop %v5780
        %v5782 = vmul.f32 %v5573, 1.442695
        %v5783 = vpow.pop %v5782
        %v5784 = vmul.f32 %v5574, 1.442695
        %v5785 = vpow.pop %v5784
        %v5786 = vmul.f32 %v5575, 1.442695
        %v5787 = vpow.pop %v5786
        %v5788 = vmul.f32 %v5576, 1.442695
        %v5789 = vpow.pop %v5788
        %v5790 = vmul.f32 %v5577, 1.442695
        %v5791 = vpow.pop %v5790
        %v5792 = vmul.f32 %v5578, 1.442695
        %v5793 = vpow.pop %v5792
        %v5794 = vmul.f32 %v5579, 1.442695
        %v5795 = vpow.pop %v5794
        %v5796 = vmul.f32 %v5580, 1.442695
        %v5797 = vpow.pop %v5796
        %v5798 = vmul.f32 %v5581, 1.442695
        %v5799 = vpow.pop %v5798
        %v5800 = vmul.f32 %v5582, 1.442695
        %v5801 = vpow.pop %v5800
        %v5802 = vmul.f32 %v5583, 1.442695
        %v5803 = vpow.pop %v5802
        %v5804 = vmul.f32 %v5584, 1.442695
        %v5805 = vpow.pop %v5804
        %v5806 = vmul.f32 %v5585, 1.442695
        %v5807 = vpow.pop %v5806
        %v5808 = vmul.f32 %v5586, 1.442695
        %v5809 = vpow.pop %v5808
        %v5810 = vmul.f32 %v5587, 1.442695
        %v5811 = vpow.pop %v5810
        %v5812 = vmul.f32 %v5588, 1.442695
        %v5813 = vpow.pop %v5812
        %v5814 = vmul.f32 %v5589, 1.442695
        %v5815 = vpow.pop %v5814
        %v5816 = vmul.f32 %v5590, 1.442695
        %v5817 = vpow.pop %v5816
        %v5818 = vmul.f32 %v5591, 1.442695
        %v5819 = vpow.pop %v5818
        %v5820 = vmul.f32 %v5592, 1.442695
        %v5821 = vpow.pop %v5820
        %v5822 = vmul.f32 %v5593, 1.442695
        %v5823 = vpow.pop %v5822
        %v5824 = vmul.f32 %v5594, 1.442695
        %v5825 = vpow.pop %v5824
        %v5826 = vmul.f32 %v5595, 1.442695
        %v5827 = vpow.pop %v5826
        %v5828 = vmul.f32 %v5596, 1.442695
        %v5829 = vpow.pop %v5828
        %v5830 = vmul.f32 %v5597, 1.442695
        %v5831 = vpow.pop %v5830
        %v5832 = vmul.f32 %v5598, 1.442695
        %v5833 = vpow.pop %v5832
        %v5834 = vmul.f32 %v5599, 1.442695
        %v5835 = vpow.pop %v5834
        %v5836 = vmul.f32 %v5600, 1.442695
        %v5837 = vpow.pop %v5836
        %v5838 = vmul.f32 %v5601, 1.442695
        %v5839 = vpow.pop %v5838
        %v5840 = vmul.f32 %v5602, 1.442695
        %v5841 = vpow.pop %v5840
        %v5842 = vmul.f32 %v5603, 1.442695
        %v5843 = vpow.pop %v5842
        %v5844 = vmul.f32 %v5604, 1.442695
        %v5845 = vpow.pop %v5844
        %v5846 = vmul.f32 %v5605, 1.442695
        %v5847 = vpow.pop %v5846
        %v5848 = vmul.f32 %v5606, 1.442695
        %v5849 = vpow.pop %v5848
        %v5850 = vmul.f32 %v5607, 1.442695
        %v5851 = vpow.pop %v5850
        %v5852 = vmul.f32 %v5608, 1.442695
        %v5853 = vpow.pop %v5852
        %v5854 = vmul.f32 %v5609, 1.442695
        %v5855 = vpow.pop %v5854
        %v5856 = vmul.f32 %v5610, 1.442695
        %v5857 = vpow.pop %v5856
        %v5858 = vmul.f32 %v5611, 1.442695
        %v5859 = vpow.pop %v5858
        %v5860 = vmul.f32 %v5612, 1.442695
        %v5861 = vpow.pop %v5860
        %v5862 = vmul.f32 %v5613, 1.442695
        %v5863 = vpow.pop %v5862
        %v5864 = vmul.f32 %v5614, 1.442695
        %v5865 = vpow.pop %v5864
        %v5866 = vmul.f32 %v5615, 1.442695
        %v5867 = vpow.pop %v5866
        %v5868 = vmul.f32 %v5616, 1.442695
        %v5869 = vpow.pop %v5868
        %v5870 = vmul.f32 %v5617, 1.442695
        %v5871 = vpow.pop %v5870
        %v5872 = vmul.f32 %v5618, 1.442695
        %v5873 = vpow.pop %v5872
        %v5874 = vmul.f32 %v5619, 1.442695
        %v5875 = vpow.pop %v5874
        %v5876 = vmul.f32 %v5236, %v5621
        %v5877 = vmul.f32 %v5237, %v5623
        %v5878 = vmul.f32 %v5238, %v5625
        %v5879 = vmul.f32 %v5239, %v5627
        %v5880 = vmul.f32 %v5240, %v5629
        %v5881 = vmul.f32 %v5241, %v5631
        %v5882 = vmul.f32 %v5242, %v5633
        %v5883 = vmul.f32 %v5243, %v5635
        %v5884 = vmul.f32 %v5244, %v5637
        %v5885 = vmul.f32 %v5245, %v5639
        %v5886 = vmul.f32 %v5246, %v5641
        %v5887 = vmul.f32 %v5247, %v5643
        %v5888 = vmul.f32 %v5248, %v5645
        %v5889 = vmul.f32 %v5249, %v5647
        %v5890 = vmul.f32 %v5250, %v5649
        %v5891 = vmul.f32 %v5251, %v5651
        %v5892 = vmul.f32 %v5252, %v5653
        %v5893 = vmul.f32 %v5253, %v5655
        %v5894 = vmul.f32 %v5254, %v5657
        %v5895 = vmul.f32 %v5255, %v5659
        %v5896 = vmul.f32 %v5256, %v5661
        %v5897 = vmul.f32 %v5257, %v5663
        %v5898 = vmul.f32 %v5258, %v5665
        %v5899 = vmul.f32 %v5259, %v5667
        %v5900 = vmul.f32 %v5260, %v5669
        %v5901 = vmul.f32 %v5261, %v5671
        %v5902 = vmul.f32 %v5262, %v5673
        %v5903 = vmul.f32 %v5263, %v5675
        %v5904 = vmul.f32 %v5264, %v5677
        %v5905 = vmul.f32 %v5265, %v5679
        %v5906 = vmul.f32 %v5266, %v5681
        %v5907 = vmul.f32 %v5267, %v5683
        %v5908 = vmul.f32 %v5268, %v5685
        %v5909 = vmul.f32 %v5269, %v5687
        %v5910 = vmul.f32 %v5270, %v5689
        %v5911 = vmul.f32 %v5271, %v5691
        %v5912 = vmul.f32 %v5272, %v5693
        %v5913 = vmul.f32 %v5273, %v5695
        %v5914 = vmul.f32 %v5274, %v5697
        %v5915 = vmul.f32 %v5275, %v5699
        %v5916 = vmul.f32 %v5276, %v5701
        %v5917 = vmul.f32 %v5277, %v5703
        %v5918 = vmul.f32 %v5278, %v5705
        %v5919 = vmul.f32 %v5279, %v5707
        %v5920 = vmul.f32 %v5280, %v5709
        %v5921 = vmul.f32 %v5281, %v5711
        %v5922 = vmul.f32 %v5282, %v5713
        %v5923 = vmul.f32 %v5283, %v5715
        %v5924 = vmul.f32 %v5284, %v5717
        %v5925 = vmul.f32 %v5285, %v5719
        %v5926 = vmul.f32 %v5286, %v5721
        %v5927 = vmul.f32 %v5287, %v5723
        %v5928 = vmul.f32 %v5288, %v5725
        %v5929 = vmul.f32 %v5289, %v5727
        %v5930 = vmul.f32 %v5290, %v5729
        %v5931 = vmul.f32 %v5291, %v5731
        %v5932 = vmul.f32 %v5292, %v5733
        %v5933 = vmul.f32 %v5293, %v5735
        %v5934 = vmul.f32 %v5294, %v5737
        %v5935 = vmul.f32 %v5295, %v5739
        %v5936 = vmul.f32 %v5296, %v5741
        %v5937 = vmul.f32 %v5297, %v5743
        %v5938 = vmul.f32 %v5298, %v5745
        %v5939 = vmul.f32 %v5299, %v5747
        %v5940 = vmul.f32 %v5300, %v5749
        %v5941 = vmul.f32 %v5301, %v5751
        %v5942 = vmul.f32 %v5302, %v5753
        %v5943 = vmul.f32 %v5303, %v5755
        %v5944 = vmul.f32 %v5304, %v5757
        %v5945 = vmul.f32 %v5305, %v5759
        %v5946 = vmul.f32 %v5306, %v5761
        %v5947 = vmul.f32 %v5307, %v5763
        %v5948 = vmul.f32 %v5308, %v5765
        %v5949 = vmul.f32 %v5309, %v5767
        %v5950 = vmul.f32 %v5310, %v5769
        %v5951 = vmul.f32 %v5311, %v5771
        %v5952 = vmul.f32 %v5312, %v5773
        %v5953 = vmul.f32 %v5313, %v5775
        %v5954 = vmul.f32 %v5314, %v5777
        %v5955 = vmul.f32 %v5315, %v5779
        %v5956 = vmul.f32 %v5316, %v5781
        %v5957 = vmul.f32 %v5317, %v5783
        %v5958 = vmul.f32 %v5318, %v5785
        %v5959 = vmul.f32 %v5319, %v5787
        %v5960 = vmul.f32 %v5320, %v5789
        %v5961 = vmul.f32 %v5321, %v5791
        %v5962 = vmul.f32 %v5322, %v5793
        %v5963 = vmul.f32 %v5323, %v5795
        %v5964 = vmul.f32 %v5324, %v5797
        %v5965 = vmul.f32 %v5325, %v5799
        %v5966 = vmul.f32 %v5326, %v5801
        %v5967 = vmul.f32 %v5327, %v5803
        %v5968 = vmul.f32 %v5328, %v5805
        %v5969 = vmul.f32 %v5329, %v5807
        %v5970 = vmul.f32 %v5330, %v5809
        %v5971 = vmul.f32 %v5331, %v5811
        %v5972 = vmul.f32 %v5332, %v5813
        %v5973 = vmul.f32 %v5333, %v5815
        %v5974 = vmul.f32 %v5334, %v5817
        %v5975 = vmul.f32 %v5335, %v5819
        %v5976 = vmul.f32 %v5336, %v5821
        %v5977 = vmul.f32 %v5337, %v5823
        %v5978 = vmul.f32 %v5338, %v5825
        %v5979 = vmul.f32 %v5339, %v5827
        %v5980 = vmul.f32 %v5340, %v5829
        %v5981 = vmul.f32 %v5341, %v5831
        %v5982 = vmul.f32 %v5342, %v5833
        %v5983 = vmul.f32 %v5343, %v5835
        %v5984 = vmul.f32 %v5344, %v5837
        %v5985 = vmul.f32 %v5345, %v5839
        %v5986 = vmul.f32 %v5346, %v5841
        %v5987 = vmul.f32 %v5347, %v5843
        %v5988 = vmul.f32 %v5348, %v5845
        %v5989 = vmul.f32 %v5349, %v5847
        %v5990 = vmul.f32 %v5350, %v5849
        %v5991 = vmul.f32 %v5351, %v5851
        %v5992 = vmul.f32 %v5352, %v5853
        %v5993 = vmul.f32 %v5353, %v5855
        %v5994 = vmul.f32 %v5354, %v5857
        %v5995 = vmul.f32 %v5355, %v5859
        %v5996 = vmul.f32 %v5356, %v5861
        %v5997 = vmul.f32 %v5357, %v5863
        %v5998 = vmul.f32 %v5358, %v5865
        %v5999 = vmul.f32 %v5359, %v5867
        %v6000 = vmul.f32 %v5360, %v5869
        %v6001 = vmul.f32 %v5361, %v5871
        %v6002 = vmul.f32 %v5362, %v5873
        %v6003 = vmul.f32 %v5363, %v5875
        %v6004 = vsub.f32 1.0, %v5876
        %v6005 = vsub.f32 1.0, %v5877
        %v6006 = vsub.f32 1.0, %v5878
        %v6007 = vsub.f32 1.0, %v5879
        %v6008 = vsub.f32 1.0, %v5880
        %v6009 = vsub.f32 1.0, %v5881
        %v6010 = vsub.f32 1.0, %v5882
        %v6011 = vsub.f32 1.0, %v5883
        %v6012 = vsub.f32 1.0, %v5884
        %v6013 = vsub.f32 1.0, %v5885
        %v6014 = vsub.f32 1.0, %v5886
        %v6015 = vsub.f32 1.0, %v5887
        %v6016 = vsub.f32 1.0, %v5888
        %v6017 = vsub.f32 1.0, %v5889
        %v6018 = vsub.f32 1.0, %v5890
        %v6019 = vsub.f32 1.0, %v5891
        %v6020 = vsub.f32 1.0, %v5892
        %v6021 = vsub.f32 1.0, %v5893
        %v6022 = vsub.f32 1.0, %v5894
        %v6023 = vsub.f32 1.0, %v5895
        %v6024 = vsub.f32 1.0, %v5896
        %v6025 = vsub.f32 1.0, %v5897
        %v6026 = vsub.f32 1.0, %v5898
        %v6027 = vsub.f32 1.0, %v5899
        %v6028 = vsub.f32 1.0, %v5900
        %v6029 = vsub.f32 1.0, %v5901
        %v6030 = vsub.f32 1.0, %v5902
        %v6031 = vsub.f32 1.0, %v5903
        %v6032 = vsub.f32 1.0, %v5904
        %v6033 = vsub.f32 1.0, %v5905
        %v6034 = vsub.f32 1.0, %v5906
        %v6035 = vsub.f32 1.0, %v5907
        %v6036 = vsub.f32 1.0, %v5908
        %v6037 = vsub.f32 1.0, %v5909
        %v6038 = vsub.f32 1.0, %v5910
        %v6039 = vsub.f32 1.0, %v5911
        %v6040 = vsub.f32 1.0, %v5912
        %v6041 = vsub.f32 1.0, %v5913
        %v6042 = vsub.f32 1.0, %v5914
        %v6043 = vsub.f32 1.0, %v5915
        %v6044 = vsub.f32 1.0, %v5916
        %v6045 = vsub.f32 1.0, %v5917
        %v6046 = vsub.f32 1.0, %v5918
        %v6047 = vsub.f32 1.0, %v5919
        %v6048 = vsub.f32 1.0, %v5920
        %v6049 = vsub.f32 1.0, %v5921
        %v6050 = vsub.f32 1.0, %v5922
        %v6051 = vsub.f32 1.0, %v5923
        %v6052 = vsub.f32 1.0, %v5924
        %v6053 = vsub.f32 1.0, %v5925
        %v6054 = vsub.f32 1.0, %v5926
        %v6055 = vsub.f32 1.0, %v5927
        %v6056 = vsub.f32 1.0, %v5928
        %v6057 = vsub.f32 1.0, %v5929
        %v6058 = vsub.f32 1.0, %v5930
        %v6059 = vsub.f32 1.0, %v5931
        %v6060 = vsub.f32 1.0, %v5932
        %v6061 = vsub.f32 1.0, %v5933
        %v6062 = vsub.f32 1.0, %v5934
        %v6063 = vsub.f32 1.0, %v5935
        %v6064 = vsub.f32 1.0, %v5936
        %v6065 = vsub.f32 1.0, %v5937
        %v6066 = vsub.f32 1.0, %v5938
        %v6067 = vsub.f32 1.0, %v5939
        %v6068 = vsub.f32 1.0, %v5940
        %v6069 = vsub.f32 1.0, %v5941
        %v6070 = vsub.f32 1.0, %v5942
        %v6071 = vsub.f32 1.0, %v5943
        %v6072 = vsub.f32 1.0, %v5944
        %v6073 = vsub.f32 1.0, %v5945
        %v6074 = vsub.f32 1.0, %v5946
        %v6075 = vsub.f32 1.0, %v5947
        %v6076 = vsub.f32 1.0, %v5948
        %v6077 = vsub.f32 1.0, %v5949
        %v6078 = vsub.f32 1.0, %v5950
        %v6079 = vsub.f32 1.0, %v5951
        %v6080 = vsub.f32 1.0, %v5952
        %v6081 = vsub.f32 1.0, %v5953
        %v6082 = vsub.f32 1.0, %v5954
        %v6083 = vsub.f32 1.0, %v5955
        %v6084 = vsub.f32 1.0, %v5956
        %v6085 = vsub.f32 1.0, %v5957
        %v6086 = vsub.f32 1.0, %v5958
        %v6087 = vsub.f32 1.0, %v5959
        %v6088 = vsub.f32 1.0, %v5960
        %v6089 = vsub.f32 1.0, %v5961
        %v6090 = vsub.f32 1.0, %v5962
        %v6091 = vsub.f32 1.0, %v5963
        %v6092 = vsub.f32 1.0, %v5964
        %v6093 = vsub.f32 1.0, %v5965
        %v6094 = vsub.f32 1.0, %v5966
        %v6095 = vsub.f32 1.0, %v5967
        %v6096 = vsub.f32 1.0, %v5968
        %v6097 = vsub.f32 1.0, %v5969
        %v6098 = vsub.f32 1.0, %v5970
        %v6099 = vsub.f32 1.0, %v5971
        %v6100 = vsub.f32 1.0, %v5972
        %v6101 = vsub.f32 1.0, %v5973
        %v6102 = vsub.f32 1.0, %v5974
        %v6103 = vsub.f32 1.0, %v5975
        %v6104 = vsub.f32 1.0, %v5976
        %v6105 = vsub.f32 1.0, %v5977
        %v6106 = vsub.f32 1.0, %v5978
        %v6107 = vsub.f32 1.0, %v5979
        %v6108 = vsub.f32 1.0, %v5980
        %v6109 = vsub.f32 1.0, %v5981
        %v6110 = vsub.f32 1.0, %v5982
        %v6111 = vsub.f32 1.0, %v5983
        %v6112 = vsub.f32 1.0, %v5984
        %v6113 = vsub.f32 1.0, %v5985
        %v6114 = vsub.f32 1.0, %v5986
        %v6115 = vsub.f32 1.0, %v5987
        %v6116 = vsub.f32 1.0, %v5988
        %v6117 = vsub.f32 1.0, %v5989
        %v6118 = vsub.f32 1.0, %v5990
        %v6119 = vsub.f32 1.0, %v5991
        %v6120 = vsub.f32 1.0, %v5992
        %v6121 = vsub.f32 1.0, %v5993
        %v6122 = vsub.f32 1.0, %v5994
        %v6123 = vsub.f32 1.0, %v5995
        %v6124 = vsub.f32 1.0, %v5996
        %v6125 = vsub.f32 1.0, %v5997
        %v6126 = vsub.f32 1.0, %v5998
        %v6127 = vsub.f32 1.0, %v5999
        %v6128 = vsub.f32 1.0, %v6000
        %v6129 = vsub.f32 1.0, %v6001
        %v6130 = vsub.f32 1.0, %v6002
        %v6131 = vsub.f32 1.0, %v6003
        %vm6132 = vcmp.ge.f32.partialorder %v3444, 0.0
        %vm6133 = vcmp.ge.f32.partialorder %v3445, 0.0
        %vm6134 = vcmp.ge.f32.partialorder %v3446, 0.0
        %vm6135 = vcmp.ge.f32.partialorder %v3447, 0.0
        %vm6136 = vcmp.ge.f32.partialorder %v3448, 0.0
        %vm6137 = vcmp.ge.f32.partialorder %v3449, 0.0
        %vm6138 = vcmp.ge.f32.partialorder %v3450, 0.0
        %vm6139 = vcmp.ge.f32.partialorder %v3451, 0.0
        %vm6140 = vcmp.ge.f32.partialorder %v3452, 0.0
        %vm6141 = vcmp.ge.f32.partialorder %v3453, 0.0
        %vm6142 = vcmp.ge.f32.partialorder %v3454, 0.0
        %vm6143 = vcmp.ge.f32.partialorder %v3455, 0.0
        %vm6144 = vcmp.ge.f32.partialorder %v3456, 0.0
        %vm6145 = vcmp.ge.f32.partialorder %v3457, 0.0
        %vm6146 = vcmp.ge.f32.partialorder %v3458, 0.0
        %vm6147 = vcmp.ge.f32.partialorder %v3459, 0.0
        %vm6148 = vcmp.ge.f32.partialorder %v3460, 0.0
        %vm6149 = vcmp.ge.f32.partialorder %v3461, 0.0
        %vm6150 = vcmp.ge.f32.partialorder %v3462, 0.0
        %vm6151 = vcmp.ge.f32.partialorder %v3463, 0.0
        %vm6152 = vcmp.ge.f32.partialorder %v3464, 0.0
        %vm6153 = vcmp.ge.f32.partialorder %v3465, 0.0
        %vm6154 = vcmp.ge.f32.partialorder %v3466, 0.0
        %vm6155 = vcmp.ge.f32.partialorder %v3467, 0.0
        %vm6156 = vcmp.ge.f32.partialorder %v3468, 0.0
        %vm6157 = vcmp.ge.f32.partialorder %v3469, 0.0
        %vm6158 = vcmp.ge.f32.partialorder %v3470, 0.0
        %vm6159 = vcmp.ge.f32.partialorder %v3471, 0.0
        %vm6160 = vcmp.ge.f32.partialorder %v3472, 0.0
        %vm6161 = vcmp.ge.f32.partialorder %v3473, 0.0
        %vm6162 = vcmp.ge.f32.partialorder %v3474, 0.0
        %vm6163 = vcmp.ge.f32.partialorder %v3475, 0.0
        %vm6164 = vcmp.ge.f32.partialorder %v3476, 0.0
        %vm6165 = vcmp.ge.f32.partialorder %v3477, 0.0
        %vm6166 = vcmp.ge.f32.partialorder %v3478, 0.0
        %vm6167 = vcmp.ge.f32.partialorder %v3479, 0.0
        %vm6168 = vcmp.ge.f32.partialorder %v3480, 0.0
        %vm6169 = vcmp.ge.f32.partialorder %v3481, 0.0
        %vm6170 = vcmp.ge.f32.partialorder %v3482, 0.0
        %vm6171 = vcmp.ge.f32.partialorder %v3483, 0.0
        %vm6172 = vcmp.ge.f32.partialorder %v3484, 0.0
        %vm6173 = vcmp.ge.f32.partialorder %v3485, 0.0
        %vm6174 = vcmp.ge.f32.partialorder %v3486, 0.0
        %vm6175 = vcmp.ge.f32.partialorder %v3487, 0.0
        %vm6176 = vcmp.ge.f32.partialorder %v3488, 0.0
        %vm6177 = vcmp.ge.f32.partialorder %v3489, 0.0
        %vm6178 = vcmp.ge.f32.partialorder %v3490, 0.0
        %vm6179 = vcmp.ge.f32.partialorder %v3491, 0.0
        %vm6180 = vcmp.ge.f32.partialorder %v3492, 0.0
        %vm6181 = vcmp.ge.f32.partialorder %v3493, 0.0
        %vm6182 = vcmp.ge.f32.partialorder %v3494, 0.0
        %vm6183 = vcmp.ge.f32.partialorder %v3495, 0.0
        %vm6184 = vcmp.ge.f32.partialorder %v3496, 0.0
        %vm6185 = vcmp.ge.f32.partialorder %v3497, 0.0
        %vm6186 = vcmp.ge.f32.partialorder %v3498, 0.0
        %vm6187 = vcmp.ge.f32.partialorder %v3499, 0.0
        %vm6188 = vcmp.ge.f32.partialorder %v3500, 0.0
        %vm6189 = vcmp.ge.f32.partialorder %v3501, 0.0
        %vm6190 = vcmp.ge.f32.partialorder %v3502, 0.0
        %vm6191 = vcmp.ge.f32.partialorder %v3503, 0.0
        %vm6192 = vcmp.ge.f32.partialorder %v3504, 0.0
        %vm6193 = vcmp.ge.f32.partialorder %v3505, 0.0
        %vm6194 = vcmp.ge.f32.partialorder %v3506, 0.0
        %vm6195 = vcmp.ge.f32.partialorder %v3507, 0.0
        %vm6196 = vcmp.ge.f32.partialorder %v3508, 0.0
        %vm6197 = vcmp.ge.f32.partialorder %v3509, 0.0
        %vm6198 = vcmp.ge.f32.partialorder %v3510, 0.0
        %vm6199 = vcmp.ge.f32.partialorder %v3511, 0.0
        %vm6200 = vcmp.ge.f32.partialorder %v3512, 0.0
        %vm6201 = vcmp.ge.f32.partialorder %v3513, 0.0
        %vm6202 = vcmp.ge.f32.partialorder %v3514, 0.0
        %vm6203 = vcmp.ge.f32.partialorder %v3515, 0.0
        %vm6204 = vcmp.ge.f32.partialorder %v3516, 0.0
        %vm6205 = vcmp.ge.f32.partialorder %v3517, 0.0
        %vm6206 = vcmp.ge.f32.partialorder %v3518, 0.0
        %vm6207 = vcmp.ge.f32.partialorder %v3519, 0.0
        %vm6208 = vcmp.ge.f32.partialorder %v3520, 0.0
        %vm6209 = vcmp.ge.f32.partialorder %v3521, 0.0
        %vm6210 = vcmp.ge.f32.partialorder %v3522, 0.0
        %vm6211 = vcmp.ge.f32.partialorder %v3523, 0.0
        %vm6212 = vcmp.ge.f32.partialorder %v3524, 0.0
        %vm6213 = vcmp.ge.f32.partialorder %v3525, 0.0
        %vm6214 = vcmp.ge.f32.partialorder %v3526, 0.0
        %vm6215 = vcmp.ge.f32.partialorder %v3527, 0.0
        %vm6216 = vcmp.ge.f32.partialorder %v3528, 0.0
        %vm6217 = vcmp.ge.f32.partialorder %v3529, 0.0
        %vm6218 = vcmp.ge.f32.partialorder %v3530, 0.0
        %vm6219 = vcmp.ge.f32.partialorder %v3531, 0.0
        %vm6220 = vcmp.ge.f32.partialorder %v3532, 0.0
        %vm6221 = vcmp.ge.f32.partialorder %v3533, 0.0
        %vm6222 = vcmp.ge.f32.partialorder %v3534, 0.0
        %vm6223 = vcmp.ge.f32.partialorder %v3535, 0.0
        %vm6224 = vcmp.ge.f32.partialorder %v3536, 0.0
        %vm6225 = vcmp.ge.f32.partialorder %v3537, 0.0
        %vm6226 = vcmp.ge.f32.partialorder %v3538, 0.0
        %vm6227 = vcmp.ge.f32.partialorder %v3539, 0.0
        %vm6228 = vcmp.ge.f32.partialorder %v3540, 0.0
        %vm6229 = vcmp.ge.f32.partialorder %v3541, 0.0
        %vm6230 = vcmp.ge.f32.partialorder %v3542, 0.0
        %vm6231 = vcmp.ge.f32.partialorder %v3543, 0.0
        %vm6232 = vcmp.ge.f32.partialorder %v3544, 0.0
        %vm6233 = vcmp.ge.f32.partialorder %v3545, 0.0
        %vm6234 = vcmp.ge.f32.partialorder %v3546, 0.0
        %vm6235 = vcmp.ge.f32.partialorder %v3547, 0.0
        %vm6236 = vcmp.ge.f32.partialorder %v3548, 0.0
        %vm6237 = vcmp.ge.f32.partialorder %v3549, 0.0
        %vm6238 = vcmp.ge.f32.partialorder %v3550, 0.0
        %vm6239 = vcmp.ge.f32.partialorder %v3551, 0.0
        %vm6240 = vcmp.ge.f32.partialorder %v3552, 0.0
        %vm6241 = vcmp.ge.f32.partialorder %v3553, 0.0
        %vm6242 = vcmp.ge.f32.partialorder %v3554, 0.0
        %vm6243 = vcmp.ge.f32.partialorder %v3555, 0.0
        %vm6244 = vcmp.ge.f32.partialorder %v3556, 0.0
        %vm6245 = vcmp.ge.f32.partialorder %v3557, 0.0
        %vm6246 = vcmp.ge.f32.partialorder %v3558, 0.0
        %vm6247 = vcmp.ge.f32.partialorder %v3559, 0.0
        %vm6248 = vcmp.ge.f32.partialorder %v3560, 0.0
        %vm6249 = vcmp.ge.f32.partialorder %v3561, 0.0
        %vm6250 = vcmp.ge.f32.partialorder %v3562, 0.0
        %vm6251 = vcmp.ge.f32.partialorder %v3563, 0.0
        %vm6252 = vcmp.ge.f32.partialorder %v3564, 0.0
        %vm6253 = vcmp.ge.f32.partialorder %v3565, 0.0
        %vm6254 = vcmp.ge.f32.partialorder %v3566, 0.0
        %vm6255 = vcmp.ge.f32.partialorder %v3567, 0.0
        %vm6256 = vcmp.ge.f32.partialorder %v3568, 0.0
        %vm6257 = vcmp.ge.f32.partialorder %v3569, 0.0
        %vm6258 = vcmp.ge.f32.partialorder %v3570, 0.0
        %vm6259 = vcmp.ge.f32.partialorder %v3571, 0.0
        %v6260 = vsub.f32 0.0, %v6004
        %v6261 = vsub.f32 0.0, %v6005
        %v6262 = vsub.f32 0.0, %v6006
        %v6263 = vsub.f32 0.0, %v6007
        %v6264 = vsub.f32 0.0, %v6008
        %v6265 = vsub.f32 0.0, %v6009
        %v6266 = vsub.f32 0.0, %v6010
        %v6267 = vsub.f32 0.0, %v6011
        %v6268 = vsub.f32 0.0, %v6012
        %v6269 = vsub.f32 0.0, %v6013
        %v6270 = vsub.f32 0.0, %v6014
        %v6271 = vsub.f32 0.0, %v6015
        %v6272 = vsub.f32 0.0, %v6016
        %v6273 = vsub.f32 0.0, %v6017
        %v6274 = vsub.f32 0.0, %v6018
        %v6275 = vsub.f32 0.0, %v6019
        %v6276 = vsub.f32 0.0, %v6020
        %v6277 = vsub.f32 0.0, %v6021
        %v6278 = vsub.f32 0.0, %v6022
        %v6279 = vsub.f32 0.0, %v6023
        %v6280 = vsub.f32 0.0, %v6024
        %v6281 = vsub.f32 0.0, %v6025
        %v6282 = vsub.f32 0.0, %v6026
        %v6283 = vsub.f32 0.0, %v6027
        %v6284 = vsub.f32 0.0, %v6028
        %v6285 = vsub.f32 0.0, %v6029
        %v6286 = vsub.f32 0.0, %v6030
        %v6287 = vsub.f32 0.0, %v6031
        %v6288 = vsub.f32 0.0, %v6032
        %v6289 = vsub.f32 0.0, %v6033
        %v6290 = vsub.f32 0.0, %v6034
        %v6291 = vsub.f32 0.0, %v6035
        %v6292 = vsub.f32 0.0, %v6036
        %v6293 = vsub.f32 0.0, %v6037
        %v6294 = vsub.f32 0.0, %v6038
        %v6295 = vsub.f32 0.0, %v6039
        %v6296 = vsub.f32 0.0, %v6040
        %v6297 = vsub.f32 0.0, %v6041
        %v6298 = vsub.f32 0.0, %v6042
        %v6299 = vsub.f32 0.0, %v6043
        %v6300 = vsub.f32 0.0, %v6044
        %v6301 = vsub.f32 0.0, %v6045
        %v6302 = vsub.f32 0.0, %v6046
        %v6303 = vsub.f32 0.0, %v6047
        %v6304 = vsub.f32 0.0, %v6048
        %v6305 = vsub.f32 0.0, %v6049
        %v6306 = vsub.f32 0.0, %v6050
        %v6307 = vsub.f32 0.0, %v6051
        %v6308 = vsub.f32 0.0, %v6052
        %v6309 = vsub.f32 0.0, %v6053
        %v6310 = vsub.f32 0.0, %v6054
        %v6311 = vsub.f32 0.0, %v6055
        %v6312 = vsub.f32 0.0, %v6056
        %v6313 = vsub.f32 0.0, %v6057
        %v6314 = vsub.f32 0.0, %v6058
        %v6315 = vsub.f32 0.0, %v6059
        %v6316 = vsub.f32 0.0, %v6060
        %v6317 = vsub.f32 0.0, %v6061
        %v6318 = vsub.f32 0.0, %v6062
        %v6319 = vsub.f32 0.0, %v6063
        %v6320 = vsub.f32 0.0, %v6064
        %v6321 = vsub.f32 0.0, %v6065
        %v6322 = vsub.f32 0.0, %v6066
        %v6323 = vsub.f32 0.0, %v6067
        %v6324 = vsub.f32 0.0, %v6068
        %v6325 = vsub.f32 0.0, %v6069
        %v6326 = vsub.f32 0.0, %v6070
        %v6327 = vsub.f32 0.0, %v6071
        %v6328 = vsub.f32 0.0, %v6072
        %v6329 = vsub.f32 0.0, %v6073
        %v6330 = vsub.f32 0.0, %v6074
        %v6331 = vsub.f32 0.0, %v6075
        %v6332 = vsub.f32 0.0, %v6076
        %v6333 = vsub.f32 0.0, %v6077
        %v6334 = vsub.f32 0.0, %v6078
        %v6335 = vsub.f32 0.0, %v6079
        %v6336 = vsub.f32 0.0, %v6080
        %v6337 = vsub.f32 0.0, %v6081
        %v6338 = vsub.f32 0.0, %v6082
        %v6339 = vsub.f32 0.0, %v6083
        %v6340 = vsub.f32 0.0, %v6084
        %v6341 = vsub.f32 0.0, %v6085
        %v6342 = vsub.f32 0.0, %v6086
        %v6343 = vsub.f32 0.0, %v6087
        %v6344 = vsub.f32 0.0, %v6088
        %v6345 = vsub.f32 0.0, %v6089
        %v6346 = vsub.f32 0.0, %v6090
        %v6347 = vsub.f32 0.0, %v6091
        %v6348 = vsub.f32 0.0, %v6092
        %v6349 = vsub.f32 0.0, %v6093
        %v6350 = vsub.f32 0.0, %v6094
        %v6351 = vsub.f32 0.0, %v6095
        %v6352 = vsub.f32 0.0, %v6096
        %v6353 = vsub.f32 0.0, %v6097
        %v6354 = vsub.f32 0.0, %v6098
        %v6355 = vsub.f32 0.0, %v6099
        %v6356 = vsub.f32 0.0, %v6100
        %v6357 = vsub.f32 0.0, %v6101
        %v6358 = vsub.f32 0.0, %v6102
        %v6359 = vsub.f32 0.0, %v6103
        %v6360 = vsub.f32 0.0, %v6104
        %v6361 = vsub.f32 0.0, %v6105
        %v6362 = vsub.f32 0.0, %v6106
        %v6363 = vsub.f32 0.0, %v6107
        %v6364 = vsub.f32 0.0, %v6108
        %v6365 = vsub.f32 0.0, %v6109
        %v6366 = vsub.f32 0.0, %v6110
        %v6367 = vsub.f32 0.0, %v6111
        %v6368 = vsub.f32 0.0, %v6112
        %v6369 = vsub.f32 0.0, %v6113
        %v6370 = vsub.f32 0.0, %v6114
        %v6371 = vsub.f32 0.0, %v6115
        %v6372 = vsub.f32 0.0, %v6116
        %v6373 = vsub.f32 0.0, %v6117
        %v6374 = vsub.f32 0.0, %v6118
        %v6375 = vsub.f32 0.0, %v6119
        %v6376 = vsub.f32 0.0, %v6120
        %v6377 = vsub.f32 0.0, %v6121
        %v6378 = vsub.f32 0.0, %v6122
        %v6379 = vsub.f32 0.0, %v6123
        %v6380 = vsub.f32 0.0, %v6124
        %v6381 = vsub.f32 0.0, %v6125
        %v6382 = vsub.f32 0.0, %v6126
        %v6383 = vsub.f32 0.0, %v6127
        %v6384 = vsub.f32 0.0, %v6128
        %v6385 = vsub.f32 0.0, %v6129
        %v6386 = vsub.f32 0.0, %v6130
        %v6387 = vsub.f32 0.0, %v6131
        %v6388 = vsel %vm6132, %v6004, %v6260
        %v6389 = vsel %vm6133, %v6005, %v6261
        %v6390 = vsel %vm6134, %v6006, %v6262
        %v6391 = vsel %vm6135, %v6007, %v6263
        %v6392 = vsel %vm6136, %v6008, %v6264
        %v6393 = vsel %vm6137, %v6009, %v6265
        %v6394 = vsel %vm6138, %v6010, %v6266
        %v6395 = vsel %vm6139, %v6011, %v6267
        %v6396 = vsel %vm6140, %v6012, %v6268
        %v6397 = vsel %vm6141, %v6013, %v6269
        %v6398 = vsel %vm6142, %v6014, %v6270
        %v6399 = vsel %vm6143, %v6015, %v6271
        %v6400 = vsel %vm6144, %v6016, %v6272
        %v6401 = vsel %vm6145, %v6017, %v6273
        %v6402 = vsel %vm6146, %v6018, %v6274
        %v6403 = vsel %vm6147, %v6019, %v6275
        %v6404 = vsel %vm6148, %v6020, %v6276
        %v6405 = vsel %vm6149, %v6021, %v6277
        %v6406 = vsel %vm6150, %v6022, %v6278
        %v6407 = vsel %vm6151, %v6023, %v6279
        %v6408 = vsel %vm6152, %v6024, %v6280
        %v6409 = vsel %vm6153, %v6025, %v6281
        %v6410 = vsel %vm6154, %v6026, %v6282
        %v6411 = vsel %vm6155, %v6027, %v6283
        %v6412 = vsel %vm6156, %v6028, %v6284
        %v6413 = vsel %vm6157, %v6029, %v6285
        %v6414 = vsel %vm6158, %v6030, %v6286
        %v6415 = vsel %vm6159, %v6031, %v6287
        %v6416 = vsel %vm6160, %v6032, %v6288
        %v6417 = vsel %vm6161, %v6033, %v6289
        %v6418 = vsel %vm6162, %v6034, %v6290
        %v6419 = vsel %vm6163, %v6035, %v6291
        %v6420 = vsel %vm6164, %v6036, %v6292
        %v6421 = vsel %vm6165, %v6037, %v6293
        %v6422 = vsel %vm6166, %v6038, %v6294
        %v6423 = vsel %vm6167, %v6039, %v6295
        %v6424 = vsel %vm6168, %v6040, %v6296
        %v6425 = vsel %vm6169, %v6041, %v6297
        %v6426 = vsel %vm6170, %v6042, %v6298
        %v6427 = vsel %vm6171, %v6043, %v6299
        %v6428 = vsel %vm6172, %v6044, %v6300
        %v6429 = vsel %vm6173, %v6045, %v6301
        %v6430 = vsel %vm6174, %v6046, %v6302
        %v6431 = vsel %vm6175, %v6047, %v6303
        %v6432 = vsel %vm6176, %v6048, %v6304
        %v6433 = vsel %vm6177, %v6049, %v6305
        %v6434 = vsel %vm6178, %v6050, %v6306
        %v6435 = vsel %vm6179, %v6051, %v6307
        %v6436 = vsel %vm6180, %v6052, %v6308
        %v6437 = vsel %vm6181, %v6053, %v6309
        %v6438 = vsel %vm6182, %v6054, %v6310
        %v6439 = vsel %vm6183, %v6055, %v6311
        %v6440 = vsel %vm6184, %v6056, %v6312
        %v6441 = vsel %vm6185, %v6057, %v6313
        %v6442 = vsel %vm6186, %v6058, %v6314
        %v6443 = vsel %vm6187, %v6059, %v6315
        %v6444 = vsel %vm6188, %v6060, %v6316
        %v6445 = vsel %vm6189, %v6061, %v6317
        %v6446 = vsel %vm6190, %v6062, %v6318
        %v6447 = vsel %vm6191, %v6063, %v6319
        %v6448 = vsel %vm6192, %v6064, %v6320
        %v6449 = vsel %vm6193, %v6065, %v6321
        %v6450 = vsel %vm6194, %v6066, %v6322
        %v6451 = vsel %vm6195, %v6067, %v6323
        %v6452 = vsel %vm6196, %v6068, %v6324
        %v6453 = vsel %vm6197, %v6069, %v6325
        %v6454 = vsel %vm6198, %v6070, %v6326
        %v6455 = vsel %vm6199, %v6071, %v6327
        %v6456 = vsel %vm6200, %v6072, %v6328
        %v6457 = vsel %vm6201, %v6073, %v6329
        %v6458 = vsel %vm6202, %v6074, %v6330
        %v6459 = vsel %vm6203, %v6075, %v6331
        %v6460 = vsel %vm6204, %v6076, %v6332
        %v6461 = vsel %vm6205, %v6077, %v6333
        %v6462 = vsel %vm6206, %v6078, %v6334
        %v6463 = vsel %vm6207, %v6079, %v6335
        %v6464 = vsel %vm6208, %v6080, %v6336
        %v6465 = vsel %vm6209, %v6081, %v6337
        %v6466 = vsel %vm6210, %v6082, %v6338
        %v6467 = vsel %vm6211, %v6083, %v6339
        %v6468 = vsel %vm6212, %v6084, %v6340
        %v6469 = vsel %vm6213, %v6085, %v6341
        %v6470 = vsel %vm6214, %v6086, %v6342
        %v6471 = vsel %vm6215, %v6087, %v6343
        %v6472 = vsel %vm6216, %v6088, %v6344
        %v6473 = vsel %vm6217, %v6089, %v6345
        %v6474 = vsel %vm6218, %v6090, %v6346
        %v6475 = vsel %vm6219, %v6091, %v6347
        %v6476 = vsel %vm6220, %v6092, %v6348
        %v6477 = vsel %vm6221, %v6093, %v6349
        %v6478 = vsel %vm6222, %v6094, %v6350
        %v6479 = vsel %vm6223, %v6095, %v6351
        %v6480 = vsel %vm6224, %v6096, %v6352
        %v6481 = vsel %vm6225, %v6097, %v6353
        %v6482 = vsel %vm6226, %v6098, %v6354
        %v6483 = vsel %vm6227, %v6099, %v6355
        %v6484 = vsel %vm6228, %v6100, %v6356
        %v6485 = vsel %vm6229, %v6101, %v6357
        %v6486 = vsel %vm6230, %v6102, %v6358
        %v6487 = vsel %vm6231, %v6103, %v6359
        %v6488 = vsel %vm6232, %v6104, %v6360
        %v6489 = vsel %vm6233, %v6105, %v6361
        %v6490 = vsel %vm6234, %v6106, %v6362
        %v6491 = vsel %vm6235, %v6107, %v6363
        %v6492 = vsel %vm6236, %v6108, %v6364
        %v6493 = vsel %vm6237, %v6109, %v6365
        %v6494 = vsel %vm6238, %v6110, %v6366
        %v6495 = vsel %vm6239, %v6111, %v6367
        %v6496 = vsel %vm6240, %v6112, %v6368
        %v6497 = vsel %vm6241, %v6113, %v6369
        %v6498 = vsel %vm6242, %v6114, %v6370
        %v6499 = vsel %vm6243, %v6115, %v6371
        %v6500 = vsel %vm6244, %v6116, %v6372
        %v6501 = vsel %vm6245, %v6117, %v6373
        %v6502 = vsel %vm6246, %v6118, %v6374
        %v6503 = vsel %vm6247, %v6119, %v6375
        %v6504 = vsel %vm6248, %v6120, %v6376
        %v6505 = vsel %vm6249, %v6121, %v6377
        %v6506 = vsel %vm6250, %v6122, %v6378
        %v6507 = vsel %vm6251, %v6123, %v6379
        %v6508 = vsel %vm6252, %v6124, %v6380
        %v6509 = vsel %vm6253, %v6125, %v6381
        %v6510 = vsel %vm6254, %v6126, %v6382
        %v6511 = vsel %vm6255, %v6127, %v6383
        %v6512 = vsel %vm6256, %v6128, %v6384
        %v6513 = vsel %vm6257, %v6129, %v6385
        %v6514 = vsel %vm6258, %v6130, %v6386
        %v6515 = vsel %vm6259, %v6131, %v6387
        %v6516 = vadd.f32 %v6388, 1.0
        %v6517 = vadd.f32 %v6389, 1.0
        %v6518 = vadd.f32 %v6390, 1.0
        %v6519 = vadd.f32 %v6391, 1.0
        %v6520 = vadd.f32 %v6392, 1.0
        %v6521 = vadd.f32 %v6393, 1.0
        %v6522 = vadd.f32 %v6394, 1.0
        %v6523 = vadd.f32 %v6395, 1.0
        %v6524 = vadd.f32 %v6396, 1.0
        %v6525 = vadd.f32 %v6397, 1.0
        %v6526 = vadd.f32 %v6398, 1.0
        %v6527 = vadd.f32 %v6399, 1.0
        %v6528 = vadd.f32 %v6400, 1.0
        %v6529 = vadd.f32 %v6401, 1.0
        %v6530 = vadd.f32 %v6402, 1.0
        %v6531 = vadd.f32 %v6403, 1.0
        %v6532 = vadd.f32 %v6404, 1.0
        %v6533 = vadd.f32 %v6405, 1.0
        %v6534 = vadd.f32 %v6406, 1.0
        %v6535 = vadd.f32 %v6407, 1.0
        %v6536 = vadd.f32 %v6408, 1.0
        %v6537 = vadd.f32 %v6409, 1.0
        %v6538 = vadd.f32 %v6410, 1.0
        %v6539 = vadd.f32 %v6411, 1.0
        %v6540 = vadd.f32 %v6412, 1.0
        %v6541 = vadd.f32 %v6413, 1.0
        %v6542 = vadd.f32 %v6414, 1.0
        %v6543 = vadd.f32 %v6415, 1.0
        %v6544 = vadd.f32 %v6416, 1.0
        %v6545 = vadd.f32 %v6417, 1.0
        %v6546 = vadd.f32 %v6418, 1.0
        %v6547 = vadd.f32 %v6419, 1.0
        %v6548 = vadd.f32 %v6420, 1.0
        %v6549 = vadd.f32 %v6421, 1.0
        %v6550 = vadd.f32 %v6422, 1.0
        %v6551 = vadd.f32 %v6423, 1.0
        %v6552 = vadd.f32 %v6424, 1.0
        %v6553 = vadd.f32 %v6425, 1.0
        %v6554 = vadd.f32 %v6426, 1.0
        %v6555 = vadd.f32 %v6427, 1.0
        %v6556 = vadd.f32 %v6428, 1.0
        %v6557 = vadd.f32 %v6429, 1.0
        %v6558 = vadd.f32 %v6430, 1.0
        %v6559 = vadd.f32 %v6431, 1.0
        %v6560 = vadd.f32 %v6432, 1.0
        %v6561 = vadd.f32 %v6433, 1.0
        %v6562 = vadd.f32 %v6434, 1.0
        %v6563 = vadd.f32 %v6435, 1.0
        %v6564 = vadd.f32 %v6436, 1.0
        %v6565 = vadd.f32 %v6437, 1.0
        %v6566 = vadd.f32 %v6438, 1.0
        %v6567 = vadd.f32 %v6439, 1.0
        %v6568 = vadd.f32 %v6440, 1.0
        %v6569 = vadd.f32 %v6441, 1.0
        %v6570 = vadd.f32 %v6442, 1.0
        %v6571 = vadd.f32 %v6443, 1.0
        %v6572 = vadd.f32 %v6444, 1.0
        %v6573 = vadd.f32 %v6445, 1.0
        %v6574 = vadd.f32 %v6446, 1.0
        %v6575 = vadd.f32 %v6447, 1.0
        %v6576 = vadd.f32 %v6448, 1.0
        %v6577 = vadd.f32 %v6449, 1.0
        %v6578 = vadd.f32 %v6450, 1.0
        %v6579 = vadd.f32 %v6451, 1.0
        %v6580 = vadd.f32 %v6452, 1.0
        %v6581 = vadd.f32 %v6453, 1.0
        %v6582 = vadd.f32 %v6454, 1.0
        %v6583 = vadd.f32 %v6455, 1.0
        %v6584 = vadd.f32 %v6456, 1.0
        %v6585 = vadd.f32 %v6457, 1.0
        %v6586 = vadd.f32 %v6458, 1.0
        %v6587 = vadd.f32 %v6459, 1.0
        %v6588 = vadd.f32 %v6460, 1.0
        %v6589 = vadd.f32 %v6461, 1.0
        %v6590 = vadd.f32 %v6462, 1.0
        %v6591 = vadd.f32 %v6463, 1.0
        %v6592 = vadd.f32 %v6464, 1.0
        %v6593 = vadd.f32 %v6465, 1.0
        %v6594 = vadd.f32 %v6466, 1.0
        %v6595 = vadd.f32 %v6467, 1.0
        %v6596 = vadd.f32 %v6468, 1.0
        %v6597 = vadd.f32 %v6469, 1.0
        %v6598 = vadd.f32 %v6470, 1.0
        %v6599 = vadd.f32 %v6471, 1.0
        %v6600 = vadd.f32 %v6472, 1.0
        %v6601 = vadd.f32 %v6473, 1.0
        %v6602 = vadd.f32 %v6474, 1.0
        %v6603 = vadd.f32 %v6475, 1.0
        %v6604 = vadd.f32 %v6476, 1.0
        %v6605 = vadd.f32 %v6477, 1.0
        %v6606 = vadd.f32 %v6478, 1.0
        %v6607 = vadd.f32 %v6479, 1.0
        %v6608 = vadd.f32 %v6480, 1.0
        %v6609 = vadd.f32 %v6481, 1.0
        %v6610 = vadd.f32 %v6482, 1.0
        %v6611 = vadd.f32 %v6483, 1.0
        %v6612 = vadd.f32 %v6484, 1.0
        %v6613 = vadd.f32 %v6485, 1.0
        %v6614 = vadd.f32 %v6486, 1.0
        %v6615 = vadd.f32 %v6487, 1.0
        %v6616 = vadd.f32 %v6488, 1.0
        %v6617 = vadd.f32 %v6489, 1.0
        %v6618 = vadd.f32 %v6490, 1.0
        %v6619 = vadd.f32 %v6491, 1.0
        %v6620 = vadd.f32 %v6492, 1.0
        %v6621 = vadd.f32 %v6493, 1.0
        %v6622 = vadd.f32 %v6494, 1.0
        %v6623 = vadd.f32 %v6495, 1.0
        %v6624 = vadd.f32 %v6496, 1.0
        %v6625 = vadd.f32 %v6497, 1.0
        %v6626 = vadd.f32 %v6498, 1.0
        %v6627 = vadd.f32 %v6499, 1.0
        %v6628 = vadd.f32 %v6500, 1.0
        %v6629 = vadd.f32 %v6501, 1.0
        %v6630 = vadd.f32 %v6502, 1.0
        %v6631 = vadd.f32 %v6503, 1.0
        %v6632 = vadd.f32 %v6504, 1.0
        %v6633 = vadd.f32 %v6505, 1.0
        %v6634 = vadd.f32 %v6506, 1.0
        %v6635 = vadd.f32 %v6507, 1.0
        %v6636 = vadd.f32 %v6508, 1.0
        %v6637 = vadd.f32 %v6509, 1.0
        %v6638 = vadd.f32 %v6510, 1.0
        %v6639 = vadd.f32 %v6511, 1.0
        %v6640 = vadd.f32 %v6512, 1.0
        %v6641 = vadd.f32 %v6513, 1.0
        %v6642 = vadd.f32 %v6514, 1.0
        %v6643 = vadd.f32 %v6515, 1.0
        %v6644 = vmul.f32 %v3093, %v6516
        %v6645 = vmul.f32 %v3095, %v6517
        %v6646 = vmul.f32 %v3286, %v6518
        %v6647 = vmul.f32 %v3288, %v6519
        %v6648 = vmul.f32 %v3097, %v6520
        %v6649 = vmul.f32 %v3099, %v6521
        %v6650 = vmul.f32 %v3290, %v6522
        %v6651 = vmul.f32 %v3292, %v6523
        %v6652 = vmul.f32 %v3103, %v6524
        %v6653 = vmul.f32 %v3105, %v6525
        %v6654 = vmul.f32 %v3296, %v6526
        %v6655 = vmul.f32 %v3298, %v6527
        %v6656 = vmul.f32 %v3107, %v6528
        %v6657 = vmul.f32 %v3109, %v6529
        %v6658 = vmul.f32 %v3300, %v6530
        %v6659 = vmul.f32 %v3302, %v6531
        %v6660 = vmul.f32 %v3113, %v6532
        %v6661 = vmul.f32 %v3115, %v6533
        %v6662 = vmul.f32 %v3306, %v6534
        %v6663 = vmul.f32 %v3308, %v6535
        %v6664 = vmul.f32 %v3117, %v6536
        %v6665 = vmul.f32 %v3119, %v6537
        %v6666 = vmul.f32 %v3310, %v6538
        %v6667 = vmul.f32 %v3312, %v6539
        %v6668 = vmul.f32 %v3123, %v6540
        %v6669 = vmul.f32 %v3125, %v6541
        %v6670 = vmul.f32 %v3316, %v6542
        %v6671 = vmul.f32 %v3318, %v6543
        %v6672 = vmul.f32 %v3127, %v6544
        %v6673 = vmul.f32 %v3129, %v6545
        %v6674 = vmul.f32 %v3320, %v6546
        %v6675 = vmul.f32 %v3322, %v6547
        %v6676 = vmul.f32 %v3133, %v6548
        %v6677 = vmul.f32 %v3135, %v6549
        %v6678 = vmul.f32 %v3326, %v6550
        %v6679 = vmul.f32 %v3328, %v6551
        %v6680 = vmul.f32 %v3137, %v6552
        %v6681 = vmul.f32 %v3139, %v6553
        %v6682 = vmul.f32 %v3330, %v6554
        %v6683 = vmul.f32 %v3332, %v6555
        %v6684 = vmul.f32 %v3143, %v6556
        %v6685 = vmul.f32 %v3145, %v6557
        %v6686 = vmul.f32 %v3336, %v6558
        %v6687 = vmul.f32 %v3338, %v6559
        %v6688 = vmul.f32 %v3147, %v6560
        %v6689 = vmul.f32 %v3149, %v6561
        %v6690 = vmul.f32 %v3340, %v6562
        %v6691 = vmul.f32 %v3342, %v6563
        %v6692 = vmul.f32 %v3153, %v6564
        %v6693 = vmul.f32 %v3155, %v6565
        %v6694 = vmul.f32 %v3346, %v6566
        %v6695 = vmul.f32 %v3348, %v6567
        %v6696 = vmul.f32 %v3157, %v6568
        %v6697 = vmul.f32 %v3159, %v6569
        %v6698 = vmul.f32 %v3350, %v6570
        %v6699 = vmul.f32 %v3352, %v6571
        %v6700 = vmul.f32 %v3163, %v6572
        %v6701 = vmul.f32 %v3165, %v6573
        %v6702 = vmul.f32 %v3356, %v6574
        %v6703 = vmul.f32 %v3358, %v6575
        %v6704 = vmul.f32 %v3167, %v6576
        %v6705 = vmul.f32 %v3169, %v6577
        %v6706 = vmul.f32 %v3360, %v6578
        %v6707 = vmul.f32 %v3362, %v6579
        %v6708 = vmul.f32 %v3173, %v6580
        %v6709 = vmul.f32 %v3175, %v6581
        %v6710 = vmul.f32 %v3366, %v6582
        %v6711 = vmul.f32 %v3368, %v6583
        %v6712 = vmul.f32 %v3177, %v6584
        %v6713 = vmul.f32 %v3179, %v6585
        %v6714 = vmul.f32 %v3370, %v6586
        %v6715 = vmul.f32 %v3372, %v6587
        %v6716 = vmul.f32 %v3183, %v6588
        %v6717 = vmul.f32 %v3185, %v6589
        %v6718 = vmul.f32 %v3376, %v6590
        %v6719 = vmul.f32 %v3378, %v6591
        %v6720 = vmul.f32 %v3187, %v6592
        %v6721 = vmul.f32 %v3189, %v6593
        %v6722 = vmul.f32 %v3380, %v6594
        %v6723 = vmul.f32 %v3382, %v6595
        %v6724 = vmul.f32 %v3193, %v6596
        %v6725 = vmul.f32 %v3195, %v6597
        %v6726 = vmul.f32 %v3386, %v6598
        %v6727 = vmul.f32 %v3388, %v6599
        %v6728 = vmul.f32 %v3197, %v6600
        %v6729 = vmul.f32 %v3199, %v6601
        %v6730 = vmul.f32 %v3390, %v6602
        %v6731 = vmul.f32 %v3392, %v6603
        %v6732 = vmul.f32 %v3203, %v6604
        %v6733 = vmul.f32 %v3205, %v6605
        %v6734 = vmul.f32 %v3396, %v6606
        %v6735 = vmul.f32 %v3398, %v6607
        %v6736 = vmul.f32 %v3207, %v6608
        %v6737 = vmul.f32 %v3209, %v6609
        %v6738 = vmul.f32 %v3400, %v6610
        %v6739 = vmul.f32 %v3402, %v6611
        %v6740 = vmul.f32 %v3213, %v6612
        %v6741 = vmul.f32 %v3215, %v6613
        %v6742 = vmul.f32 %v3406, %v6614
        %v6743 = vmul.f32 %v3408, %v6615
        %v6744 = vmul.f32 %v3217, %v6616
        %v6745 = vmul.f32 %v3219, %v6617
        %v6746 = vmul.f32 %v3410, %v6618
        %v6747 = vmul.f32 %v3412, %v6619
        %v6748 = vmul.f32 %v3223, %v6620
        %v6749 = vmul.f32 %v3225, %v6621
        %v6750 = vmul.f32 %v3416, %v6622
        %v6751 = vmul.f32 %v3418, %v6623
        %v6752 = vmul.f32 %v3227, %v6624
        %v6753 = vmul.f32 %v3229, %v6625
        %v6754 = vmul.f32 %v3420, %v6626
        %v6755 = vmul.f32 %v3422, %v6627
        %v6756 = vmul.f32 %v3233, %v6628
        %v6757 = vmul.f32 %v3235, %v6629
        %v6758 = vmul.f32 %v3426, %v6630
        %v6759 = vmul.f32 %v3428, %v6631
        %v6760 = vmul.f32 %v3237, %v6632
        %v6761 = vmul.f32 %v3239, %v6633
        %v6762 = vmul.f32 %v3430, %v6634
        %v6763 = vmul.f32 %v3432, %v6635
        %v6764 = vmul.f32 %v3243, %v6636
        %v6765 = vmul.f32 %v3245, %v6637
        %v6766 = vmul.f32 %v3436, %v6638
        %v6767 = vmul.f32 %v3438, %v6639
        %v6768 = vmul.f32 %v3247, %v6640
        %v6769 = vmul.f32 %v3249, %v6641
        %v6770 = vmul.f32 %v3440, %v6642
        %v6771 = vmul.f32 %v3442, %v6643
        %v6772 = vpack.c.bf16 %v6648, %v6644
        %v6773 = vpack.c.bf16 %v6649, %v6645
        %v6774 = vpack.c.bf16 %v6650, %v6646
        %v6775 = vpack.c.bf16 %v6651, %v6647
        %v6776 = vpack.c.bf16 %v6656, %v6652
        %v6777 = vpack.c.bf16 %v6657, %v6653
        %v6778 = vpack.c.bf16 %v6658, %v6654
        %v6779 = vpack.c.bf16 %v6659, %v6655
        %v6780 = vpack.c.bf16 %v6664, %v6660
        %v6781 = vpack.c.bf16 %v6665, %v6661
        %v6782 = vpack.c.bf16 %v6666, %v6662
        %v6783 = vpack.c.bf16 %v6667, %v6663
        %v6784 = vpack.c.bf16 %v6672, %v6668
        %v6785 = vpack.c.bf16 %v6673, %v6669
        %v6786 = vpack.c.bf16 %v6674, %v6670
        %v6787 = vpack.c.bf16 %v6675, %v6671
        %v6788 = vpack.c.bf16 %v6680, %v6676
        %v6789 = vpack.c.bf16 %v6681, %v6677
        %v6790 = vpack.c.bf16 %v6682, %v6678
        %v6791 = vpack.c.bf16 %v6683, %v6679
        %v6792 = vpack.c.bf16 %v6688, %v6684
        %v6793 = vpack.c.bf16 %v6689, %v6685
        %v6794 = vpack.c.bf16 %v6690, %v6686
        %v6795 = vpack.c.bf16 %v6691, %v6687
        %v6796 = vpack.c.bf16 %v6696, %v6692
        %v6797 = vpack.c.bf16 %v6697, %v6693
        %v6798 = vpack.c.bf16 %v6698, %v6694
        %v6799 = vpack.c.bf16 %v6699, %v6695
        %v6800 = vpack.c.bf16 %v6704, %v6700
        %v6801 = vpack.c.bf16 %v6705, %v6701
        %v6802 = vpack.c.bf16 %v6706, %v6702
        %v6803 = vpack.c.bf16 %v6707, %v6703
        %v6804 = vpack.c.bf16 %v6712, %v6708
        %v6805 = vpack.c.bf16 %v6713, %v6709
        %v6806 = vpack.c.bf16 %v6714, %v6710
        %v6807 = vpack.c.bf16 %v6715, %v6711
        %v6808 = vpack.c.bf16 %v6720, %v6716
        %v6809 = vpack.c.bf16 %v6721, %v6717
        %v6810 = vpack.c.bf16 %v6722, %v6718
        %v6811 = vpack.c.bf16 %v6723, %v6719
        %v6812 = vpack.c.bf16 %v6728, %v6724
        %v6813 = vpack.c.bf16 %v6729, %v6725
        %v6814 = vpack.c.bf16 %v6730, %v6726
        %v6815 = vpack.c.bf16 %v6731, %v6727
        %v6816 = vpack.c.bf16 %v6736, %v6732
        %v6817 = vpack.c.bf16 %v6737, %v6733
        %v6818 = vpack.c.bf16 %v6738, %v6734
        %v6819 = vpack.c.bf16 %v6739, %v6735
        %v6820 = vpack.c.bf16 %v6744, %v6740
        %v6821 = vpack.c.bf16 %v6745, %v6741
        %v6822 = vpack.c.bf16 %v6746, %v6742
        %v6823 = vpack.c.bf16 %v6747, %v6743
        %v6824 = vpack.c.bf16 %v6752, %v6748
        %v6825 = vpack.c.bf16 %v6753, %v6749
        %v6826 = vpack.c.bf16 %v6754, %v6750
        %v6827 = vpack.c.bf16 %v6755, %v6751
        %v6828 = vpack.c.bf16 %v6760, %v6756
        %v6829 = vpack.c.bf16 %v6761, %v6757
        %v6830 = vpack.c.bf16 %v6762, %v6758
        %v6831 = vpack.c.bf16 %v6763, %v6759
        %v6832 = vpack.c.bf16 %v6768, %v6764
        %v6833 = vpack.c.bf16 %v6769, %v6765
        %v6834 = vpack.c.bf16 %v6770, %v6766
        %v6835 = vpack.c.bf16 %v6771, %v6767
        %v6836 = vld [vmem:[#allocation9] sm:$0xf]
        %v6837 = vld [vmem:[#allocation9 + $0x4] sm:$0xf]
        %v6838 = vld [vmem:[#allocation9 + $0x8] sm:$0xf]
        %v6839 = vld [vmem:[#allocation9 + $0xc] sm:$0xf]
        %v6840 = vld [vmem:[#allocation9 + $0x10] sm:$0xf]
        %v6841 = vld [vmem:[#allocation9 + $0x14] sm:$0xf]
        %v6842 = vld [vmem:[#allocation9 + $0x18] sm:$0xf]
        %v6843 = vld [vmem:[#allocation9 + $0x1c] sm:$0xf]
        %v6844 = vld [vmem:[#allocation9 + $0x20] sm:$0xf]
        %v6845 = vld [vmem:[#allocation9 + $0x24] sm:$0xf]
        %v6846 = vld [vmem:[#allocation9 + $0x28] sm:$0xf]
        %v6847 = vld [vmem:[#allocation9 + $0x2c] sm:$0xf]
        %v6848 = vld [vmem:[#allocation9 + $0x30] sm:$0xf]
        %v6849 = vld [vmem:[#allocation9 + $0x34] sm:$0xf]
        %v6850 = vld [vmem:[#allocation9 + $0x38] sm:$0xf]
        %v6851 = vld [vmem:[#allocation9 + $0x3c] sm:$0xf]
        %v6852 = vld [vmem:[#allocation9 + $0x40] sm:$0xf]
        %v6853 = vld [vmem:[#allocation9 + $0x44] sm:$0xf]
        %v6854 = vld [vmem:[#allocation9 + $0x48] sm:$0xf]
        %v6855 = vld [vmem:[#allocation9 + $0x4c] sm:$0xf]
        %v6856 = vld [vmem:[#allocation9 + $0x50] sm:$0xf]
        %v6857 = vld [vmem:[#allocation9 + $0x54] sm:$0xf]
        %v6858 = vld [vmem:[#allocation9 + $0x58] sm:$0xf]
        %v6859 = vld [vmem:[#allocation9 + $0x5c] sm:$0xf]
        %v6860 = vld [vmem:[#allocation9 + $0x60] sm:$0xf]
        %v6861 = vld [vmem:[#allocation9 + $0x64] sm:$0xf]
        %v6862 = vld [vmem:[#allocation9 + $0x68] sm:$0xf]
        %v6863 = vld [vmem:[#allocation9 + $0x6c] sm:$0xf]
        %v6864 = vld [vmem:[#allocation9 + $0x70] sm:$0xf]
        %v6865 = vld [vmem:[#allocation9 + $0x74] sm:$0xf]
        %v6866 = vld [vmem:[#allocation9 + $0x78] sm:$0xf]
        %v6867 = vld [vmem:[#allocation9 + $0x7c] sm:$0xf]
        %v6868 = vld [vmem:[#allocation9 + $0x80] sm:$0xf]
        %v6869 = vld [vmem:[#allocation9 + $0x84] sm:$0xf]
        %v6870 = vld [vmem:[#allocation9 + $0x88] sm:$0xf]
        %v6871 = vld [vmem:[#allocation9 + $0x8c] sm:$0xf]
        %v6872 = vld [vmem:[#allocation9 + $0x90] sm:$0xf]
        %v6873 = vld [vmem:[#allocation9 + $0x94] sm:$0xf]
        %v6874 = vld [vmem:[#allocation9 + $0x98] sm:$0xf]
        %v6875 = vld [vmem:[#allocation9 + $0x9c] sm:$0xf]
        %v6876 = vld [vmem:[#allocation9 + $0xa0] sm:$0xf]
        %v6877 = vld [vmem:[#allocation9 + $0xa4] sm:$0xf]
        %v6878 = vld [vmem:[#allocation9 + $0xa8] sm:$0xf]
        %v6879 = vld [vmem:[#allocation9 + $0xac] sm:$0xf]
        %v6880 = vld [vmem:[#allocation9 + $0xb0] sm:$0xf]
        %v6881 = vld [vmem:[#allocation9 + $0xb4] sm:$0xf]
        %v6882 = vld [vmem:[#allocation9 + $0xb8] sm:$0xf]
        %v6883 = vld [vmem:[#allocation9 + $0xbc] sm:$0xf]
        %v6884 = vld [vmem:[#allocation9 + $0xc0] sm:$0xf]
        %v6885 = vld [vmem:[#allocation9 + $0xc4] sm:$0xf]
        %v6886 = vld [vmem:[#allocation9 + $0xc8] sm:$0xf]
        %v6887 = vld [vmem:[#allocation9 + $0xcc] sm:$0xf]
        %v6888 = vld [vmem:[#allocation9 + $0xd0] sm:$0xf]
        %v6889 = vld [vmem:[#allocation9 + $0xd4] sm:$0xf]
        %v6890 = vld [vmem:[#allocation9 + $0xd8] sm:$0xf]
        %v6891 = vld [vmem:[#allocation9 + $0xdc] sm:$0xf]
        %v6892 = vld [vmem:[#allocation9 + $0xe0] sm:$0xf]
        %v6893 = vld [vmem:[#allocation9 + $0xe4] sm:$0xf]
        %v6894 = vld [vmem:[#allocation9 + $0xe8] sm:$0xf]
        %v6895 = vld [vmem:[#allocation9 + $0xec] sm:$0xf]
        %v6896 = vld [vmem:[#allocation9 + $0xf0] sm:$0xf]
        %v6897 = vld [vmem:[#allocation9 + $0xf4] sm:$0xf]
        %v6898 = vld [vmem:[#allocation9 + $0xf8] sm:$0xf]
        %v6899 = vld [vmem:[#allocation9 + $0xfc] sm:$0xf]
        %v6900 = vld [vmem:[%s6] sm:$0x1]
        %v6902 = vlaneseq
        %v6903 = vshrl.u32 %v6902, 7
        %v6904 = vsub.s32 0, %v6903
        %v6905 = vrot.slane %v6900, %v6904
        %v6971 = vunpack.c.l.b16 %v6836
        %v6972 = vunpack.c.l.b16 %v6837
        %v6973 = vunpack.c.l.b16 %v6838
        %v6974 = vunpack.c.l.b16 %v6839
        %v6975 = vunpack.c.l.b16 %v6840
        %v6976 = vunpack.c.l.b16 %v6841
        %v6977 = vunpack.c.l.b16 %v6842
        %v6978 = vunpack.c.l.b16 %v6843
        %v6979 = vunpack.c.l.b16 %v6844
        %v6980 = vunpack.c.l.b16 %v6845
        %v6981 = vunpack.c.l.b16 %v6846
        %v6982 = vunpack.c.l.b16 %v6847
        %v6983 = vunpack.c.l.b16 %v6848
        %v6984 = vunpack.c.l.b16 %v6849
        %v6985 = vunpack.c.l.b16 %v6850
        %v6986 = vunpack.c.l.b16 %v6851
        %v6987 = vunpack.c.l.b16 %v6852
        %v6988 = vunpack.c.l.b16 %v6853
        %v6989 = vunpack.c.l.b16 %v6854
        %v6990 = vunpack.c.l.b16 %v6855
        %v6991 = vunpack.c.l.b16 %v6856
        %v6992 = vunpack.c.l.b16 %v6857
        %v6993 = vunpack.c.l.b16 %v6858
        %v6994 = vunpack.c.l.b16 %v6859
        %v6995 = vunpack.c.l.b16 %v6860
        %v6996 = vunpack.c.l.b16 %v6861
        %v6997 = vunpack.c.l.b16 %v6862
        %v6998 = vunpack.c.l.b16 %v6863
        %v6999 = vunpack.c.l.b16 %v6864
        %v7000 = vunpack.c.l.b16 %v6865
        %v7001 = vunpack.c.l.b16 %v6866
        %v7002 = vunpack.c.l.b16 %v6867
        %v7003 = vunpack.c.l.b16 %v6868
        %v7004 = vunpack.c.l.b16 %v6869
        %v7005 = vunpack.c.l.b16 %v6870
        %v7006 = vunpack.c.l.b16 %v6871
        %v7007 = vunpack.c.l.b16 %v6872
        %v7008 = vunpack.c.l.b16 %v6873
        %v7009 = vunpack.c.l.b16 %v6874
        %v7010 = vunpack.c.l.b16 %v6875
        %v7011 = vunpack.c.l.b16 %v6876
        %v7012 = vunpack.c.l.b16 %v6877
        %v7013 = vunpack.c.l.b16 %v6878
        %v7014 = vunpack.c.l.b16 %v6879
        %v7015 = vunpack.c.l.b16 %v6880
        %v7016 = vunpack.c.l.b16 %v6881
        %v7017 = vunpack.c.l.b16 %v6882
        %v7018 = vunpack.c.l.b16 %v6883
        %v7019 = vunpack.c.l.b16 %v6884
        %v7020 = vunpack.c.l.b16 %v6885
        %v7021 = vunpack.c.l.b16 %v6886
        %v7022 = vunpack.c.l.b16 %v6887
        %v7023 = vunpack.c.l.b16 %v6888
        %v7024 = vunpack.c.l.b16 %v6889
        %v7025 = vunpack.c.l.b16 %v6890
        %v7026 = vunpack.c.l.b16 %v6891
        %v7027 = vunpack.c.l.b16 %v6892
        %v7028 = vunpack.c.l.b16 %v6893
        %v7029 = vunpack.c.l.b16 %v6894
        %v7030 = vunpack.c.l.b16 %v6895
        %v7031 = vunpack.c.l.b16 %v6896
        %v7032 = vunpack.c.l.b16 %v6897
        %v7033 = vunpack.c.l.b16 %v6898
        %v7034 = vunpack.c.l.b16 %v6899
        %v7035 = vpack.c.b16 %v6972, %v6971
        %v7036 = vpack.c.b16 %v6974, %v6973
        %v7037 = vpack.c.b16 %v6976, %v6975
        %v7038 = vpack.c.b16 %v6978, %v6977
        %v7039 = vpack.c.b16 %v6980, %v6979
        %v7040 = vpack.c.b16 %v6982, %v6981
        %v7041 = vpack.c.b16 %v6984, %v6983
        %v7042 = vpack.c.b16 %v6986, %v6985
        %v7043 = vpack.c.b16 %v6988, %v6987
        %v7044 = vpack.c.b16 %v6990, %v6989
        %v7045 = vpack.c.b16 %v6992, %v6991
        %v7046 = vpack.c.b16 %v6994, %v6993
        %v7047 = vpack.c.b16 %v6996, %v6995
        %v7048 = vpack.c.b16 %v6998, %v6997
        %v7049 = vpack.c.b16 %v7000, %v6999
        %v7050 = vpack.c.b16 %v7002, %v7001
        %v7051 = vpack.c.b16 %v7004, %v7003
        %v7052 = vpack.c.b16 %v7006, %v7005
        %v7053 = vpack.c.b16 %v7008, %v7007
        %v7054 = vpack.c.b16 %v7010, %v7009
        %v7055 = vpack.c.b16 %v7012, %v7011
        %v7056 = vpack.c.b16 %v7014, %v7013
        %v7057 = vpack.c.b16 %v7016, %v7015
        %v7058 = vpack.c.b16 %v7018, %v7017
        %v7059 = vpack.c.b16 %v7020, %v7019
        %v7060 = vpack.c.b16 %v7022, %v7021
        %v7061 = vpack.c.b16 %v7024, %v7023
        %v7062 = vpack.c.b16 %v7026, %v7025
        %v7063 = vpack.c.b16 %v7028, %v7027
        %v7064 = vpack.c.b16 %v7030, %v7029
        %v7065 = vpack.c.b16 %v7032, %v7031
        %v7066 = vpack.c.b16 %v7034, %v7033
        %7099 = vmatprep.subr.bf16.mxu0 0
        %7100 = vmatpush1.bf16.msra.mxu0 %v7042
        %7101 = vmatprep.subr.bf16.mxu0 0
        %7102 = vmatpush1.bf16.msra.mxu0 %v7041
        %7103 = vmatprep.subr.bf16.mxu0 0
        %7104 = vmatpush1.bf16.msra.mxu0 %v7040
        %7105 = vmatprep.subr.bf16.mxu0 0
        %7106 = vmatpush1.bf16.msra.mxu0 %v7039
        %7107 = vmatprep.subr.bf16.mxu0 0
        %7108 = vmatpush1.bf16.msra.mxu0 %v7038
        %7109 = vmatprep.subr.bf16.mxu0 0
        %7110 = vmatpush1.bf16.msra.mxu0 %v7037
        %7111 = vmatprep.subr.bf16.mxu0 0
        %7112 = vmatpush1.bf16.msra.mxu0 %v7036
        %7113 = vmatprep.subr.bf16.mxu0 0
        %7114 = vmatpush1.bf16.msra.mxu0 %v7035
        %7115 = vmatprep.subr.bf16.mxu0 0
        %7116 = vmatpush2.bf16.msra.mxu0 %v7050
        %7117 = vmatprep.subr.bf16.mxu0 0
        %7118 = vmatpush2.bf16.msra.mxu0 %v7049
        %7119 = vmatprep.subr.bf16.mxu0 0
        %7120 = vmatpush2.bf16.msra.mxu0 %v7048
        %7121 = vmatprep.subr.bf16.mxu0 0
        %7122 = vmatpush2.bf16.msra.mxu0 %v7047
        %7123 = vmatprep.subr.bf16.mxu0 0
        %7124 = vmatpush2.bf16.msra.mxu0 %v7046
        %7125 = vmatprep.subr.bf16.mxu0 0
        %7126 = vmatpush2.bf16.msra.mxu0 %v7045
        %7127 = vmatprep.subr.bf16.mxu0 0
        %7128 = vmatpush2.bf16.msra.mxu0 %v7044
        %7129 = vmatprep.subr.bf16.mxu0 0
        %7130 = vmatpush2.bf16.msra.mxu0 %v7043
        %7131 = vmatprep.mubr.bf16.mxu0 %v6773
        %7132 = vmatmul.mubr.bf16.gmra.mxu0 %v6772
        %v7133 = vpop.f32.mrf.mxu0
        %v7134 = vadd.f32 %v6905, %v7133
        %v7135 = vpop.f32.mrf.mxu0
        %v7136 = vpop.f32.mrf.mxu0
        %v7137 = vadd.f32 %v6905, %v7136
        %v7138 = vpop.f32.mrf.mxu0
        %7139 = vmatprep.mubr.bf16.mxu0 %v6777
        %7140 = vmatmul.mubr.bf16.gmra.mxu0 %v6776
        %v7141 = vpop.f32.mrf.mxu0
        %v7142 = vadd.f32 %v6905, %v7141
        %v7143 = vpop.f32.mrf.mxu0
        %v7144 = vpop.f32.mrf.mxu0
        %v7145 = vadd.f32 %v6905, %v7144
        %v7146 = vpop.f32.mrf.mxu0
        %7147 = vmatprep.mubr.bf16.mxu0 %v6781
        %7148 = vmatmul.mubr.bf16.gmra.mxu0 %v6780
        %v7149 = vpop.f32.mrf.mxu0
        %v7150 = vadd.f32 %v6905, %v7149
        %v7151 = vpop.f32.mrf.mxu0
        %v7152 = vpop.f32.mrf.mxu0
        %v7153 = vadd.f32 %v6905, %v7152
        %v7154 = vpop.f32.mrf.mxu0
        %7155 = vmatprep.mubr.bf16.mxu0 %v6785
        %7156 = vmatmul.mubr.bf16.gmra.mxu0 %v6784
        %v7157 = vpop.f32.mrf.mxu0
        %v7158 = vadd.f32 %v6905, %v7157
        %v7159 = vpop.f32.mrf.mxu0
        %v7160 = vpop.f32.mrf.mxu0
        %v7161 = vadd.f32 %v6905, %v7160
        %v7162 = vpop.f32.mrf.mxu0
        %7163 = vmatprep.mubr.bf16.mxu0 %v6789
        %7164 = vmatmul.mubr.bf16.gmra.mxu0 %v6788
        %v7165 = vpop.f32.mrf.mxu0
        %v7166 = vadd.f32 %v6905, %v7165
        %v7167 = vpop.f32.mrf.mxu0
        %v7168 = vpop.f32.mrf.mxu0
        %v7169 = vadd.f32 %v6905, %v7168
        %v7170 = vpop.f32.mrf.mxu0
        %7171 = vmatprep.mubr.bf16.mxu0 %v6793
        %7172 = vmatmul.mubr.bf16.gmra.mxu0 %v6792
        %v7173 = vpop.f32.mrf.mxu0
        %v7174 = vadd.f32 %v6905, %v7173
        %v7175 = vpop.f32.mrf.mxu0
        %v7176 = vpop.f32.mrf.mxu0
        %v7177 = vadd.f32 %v6905, %v7176
        %v7178 = vpop.f32.mrf.mxu0
        %7179 = vmatprep.mubr.bf16.mxu0 %v6797
        %7180 = vmatmul.mubr.bf16.gmra.mxu0 %v6796
        %v7181 = vpop.f32.mrf.mxu0
        %v7182 = vadd.f32 %v6905, %v7181
        %v7183 = vpop.f32.mrf.mxu0
        %v7184 = vpop.f32.mrf.mxu0
        %v7185 = vadd.f32 %v6905, %v7184
        %v7186 = vpop.f32.mrf.mxu0
        %7187 = vmatprep.mubr.bf16.mxu0 %v6801
        %7188 = vmatmul.mubr.bf16.gmra.mxu0 %v6800
        %v7189 = vpop.f32.mrf.mxu0
        %v7190 = vadd.f32 %v6905, %v7189
        %v7191 = vpop.f32.mrf.mxu0
        %v7192 = vpop.f32.mrf.mxu0
        %v7193 = vadd.f32 %v6905, %v7192
        %v7194 = vpop.f32.mrf.mxu0
        %7195 = vmatprep.mubr.bf16.mxu0 %v6805
        %7196 = vmatmul.mubr.bf16.gmra.mxu0 %v6804
        %v7197 = vpop.f32.mrf.mxu0
        %v7198 = vadd.f32 %v6905, %v7197
        %v7199 = vpop.f32.mrf.mxu0
        %v7200 = vpop.f32.mrf.mxu0
        %v7201 = vadd.f32 %v6905, %v7200
        %v7202 = vpop.f32.mrf.mxu0
        %7203 = vmatprep.mubr.bf16.mxu0 %v6809
        %7204 = vmatmul.mubr.bf16.gmra.mxu0 %v6808
        %v7205 = vpop.f32.mrf.mxu0
        %v7206 = vadd.f32 %v6905, %v7205
        %v7207 = vpop.f32.mrf.mxu0
        %v7208 = vpop.f32.mrf.mxu0
        %v7209 = vadd.f32 %v6905, %v7208
        %v7210 = vpop.f32.mrf.mxu0
        %7211 = vmatprep.mubr.bf16.mxu0 %v6813
        %7212 = vmatmul.mubr.bf16.gmra.mxu0 %v6812
        %v7213 = vpop.f32.mrf.mxu0
        %v7214 = vadd.f32 %v6905, %v7213
        %v7215 = vpop.f32.mrf.mxu0
        %v7216 = vpop.f32.mrf.mxu0
        %v7217 = vadd.f32 %v6905, %v7216
        %v7218 = vpop.f32.mrf.mxu0
        %7219 = vmatprep.mubr.bf16.mxu0 %v6817
        %7220 = vmatmul.mubr.bf16.gmra.mxu0 %v6816
        %v7221 = vpop.f32.mrf.mxu0
        %v7222 = vadd.f32 %v6905, %v7221
        %v7223 = vpop.f32.mrf.mxu0
        %v7224 = vpop.f32.mrf.mxu0
        %v7225 = vadd.f32 %v6905, %v7224
        %v7226 = vpop.f32.mrf.mxu0
        %7227 = vmatprep.mubr.bf16.mxu0 %v6821
        %7228 = vmatmul.mubr.bf16.gmra.mxu0 %v6820
        %v7229 = vpop.f32.mrf.mxu0
        %v7230 = vadd.f32 %v6905, %v7229
        %v7231 = vpop.f32.mrf.mxu0
        %v7232 = vpop.f32.mrf.mxu0
        %v7233 = vadd.f32 %v6905, %v7232
        %v7234 = vpop.f32.mrf.mxu0
        %7235 = vmatprep.mubr.bf16.mxu0 %v6825
        %7236 = vmatmul.mubr.bf16.gmra.mxu0 %v6824
        %v7237 = vpop.f32.mrf.mxu0
        %v7238 = vadd.f32 %v6905, %v7237
        %v7239 = vpop.f32.mrf.mxu0
        %v7240 = vpop.f32.mrf.mxu0
        %v7241 = vadd.f32 %v6905, %v7240
        %v7242 = vpop.f32.mrf.mxu0
        %7243 = vmatprep.mubr.bf16.mxu0 %v6829
        %7244 = vmatmul.mubr.bf16.gmra.mxu0 %v6828
        %v7245 = vpop.f32.mrf.mxu0
        %v7246 = vadd.f32 %v6905, %v7245
        %v7247 = vpop.f32.mrf.mxu0
        %v7248 = vpop.f32.mrf.mxu0
        %v7249 = vadd.f32 %v6905, %v7248
        %v7250 = vpop.f32.mrf.mxu0
        %7251 = vmatprep.mubr.bf16.mxu0 %v6833
        %7252 = vmatmul.mubr.bf16.gmra.mxu0 %v6832
        %v7253 = vpop.f32.mrf.mxu0
        %v7254 = vadd.f32 %v6905, %v7253
        %v7255 = vpop.f32.mrf.mxu0
        %v7256 = vpop.f32.mrf.mxu0
        %v7257 = vadd.f32 %v6905, %v7256
        %v7258 = vpop.f32.mrf.mxu0
        %7259 = vdwg.mxu0
        %7260 = vmatprep.subr.bf16.mxu0 0
        %7261 = vmatpush1.bf16.msra.mxu0 %v7058
        %7262 = vmatprep.subr.bf16.mxu0 0
        %7263 = vmatpush1.bf16.msra.mxu0 %v7057
        %7264 = vmatprep.subr.bf16.mxu0 0
        %7265 = vmatpush1.bf16.msra.mxu0 %v7056
        %7266 = vmatprep.subr.bf16.mxu0 0
        %7267 = vmatpush1.bf16.msra.mxu0 %v7055
        %7268 = vmatprep.subr.bf16.mxu0 0
        %7269 = vmatpush1.bf16.msra.mxu0 %v7054
        %7270 = vmatprep.subr.bf16.mxu0 0
        %7271 = vmatpush1.bf16.msra.mxu0 %v7053
        %7272 = vmatprep.subr.bf16.mxu0 0
        %7273 = vmatpush1.bf16.msra.mxu0 %v7052
        %7274 = vmatprep.subr.bf16.mxu0 0
        %7275 = vmatpush1.bf16.msra.mxu0 %v7051
        %7276 = vmatprep.subr.bf16.mxu0 0
        %7277 = vmatpush2.bf16.msra.mxu0 %v7066
        %7278 = vmatprep.subr.bf16.mxu0 0
        %7279 = vmatpush2.bf16.msra.mxu0 %v7065
        %7280 = vmatprep.subr.bf16.mxu0 0
        %7281 = vmatpush2.bf16.msra.mxu0 %v7064
        %7282 = vmatprep.subr.bf16.mxu0 0
        %7283 = vmatpush2.bf16.msra.mxu0 %v7063
        %7284 = vmatprep.subr.bf16.mxu0 0
        %7285 = vmatpush2.bf16.msra.mxu0 %v7062
        %7286 = vmatprep.subr.bf16.mxu0 0
        %7287 = vmatpush2.bf16.msra.mxu0 %v7061
        %7288 = vmatprep.subr.bf16.mxu0 0
        %7289 = vmatpush2.bf16.msra.mxu0 %v7060
        %7290 = vmatprep.subr.bf16.mxu0 0
        %7291 = vmatpush2.bf16.msra.mxu0 %v7059
        %7292 = vmatprep.mubr.bf16.mxu0 %v6775
        %7293 = vmatmul.mubr.bf16.gmra.mxu0 %v6774
        %v7294 = vpop.f32.mrf.mxu0
        %v7295 = vadd.f32 %v7134, %v7294
        %v7296 = vpop.f32.mrf.mxu0
        %v7297 = vpop.f32.mrf.mxu0
        %v7298 = vadd.f32 %v7137, %v7297
        %v7299 = vpop.f32.mrf.mxu0
        %7300 = vmatprep.mubr.bf16.mxu0 %v6779
        %7301 = vmatmul.mubr.bf16.gmra.mxu0 %v6778
        %v7302 = vpop.f32.mrf.mxu0
        %v7303 = vadd.f32 %v7142, %v7302
        %v7304 = vpop.f32.mrf.mxu0
        %v7305 = vpop.f32.mrf.mxu0
        %v7306 = vadd.f32 %v7145, %v7305
        %v7307 = vpop.f32.mrf.mxu0
        %7308 = vmatprep.mubr.bf16.mxu0 %v6783
        %7309 = vmatmul.mubr.bf16.gmra.mxu0 %v6782
        %v7310 = vpop.f32.mrf.mxu0
        %v7311 = vadd.f32 %v7150, %v7310
        %v7312 = vpop.f32.mrf.mxu0
        %v7313 = vpop.f32.mrf.mxu0
        %v7314 = vadd.f32 %v7153, %v7313
        %v7315 = vpop.f32.mrf.mxu0
        %7316 = vmatprep.mubr.bf16.mxu0 %v6787
        %7317 = vmatmul.mubr.bf16.gmra.mxu0 %v6786
        %v7318 = vpop.f32.mrf.mxu0
        %v7319 = vadd.f32 %v7158, %v7318
        %v7320 = vpop.f32.mrf.mxu0
        %v7321 = vpop.f32.mrf.mxu0
        %v7322 = vadd.f32 %v7161, %v7321
        %v7323 = vpop.f32.mrf.mxu0
        %7324 = vmatprep.mubr.bf16.mxu0 %v6791
        %7325 = vmatmul.mubr.bf16.gmra.mxu0 %v6790
        %v7326 = vpop.f32.mrf.mxu0
        %v7327 = vadd.f32 %v7166, %v7326
        %v7328 = vpop.f32.mrf.mxu0
        %v7329 = vpop.f32.mrf.mxu0
        %v7330 = vadd.f32 %v7169, %v7329
        %v7331 = vpop.f32.mrf.mxu0
        %7332 = vmatprep.mubr.bf16.mxu0 %v6795
        %7333 = vmatmul.mubr.bf16.gmra.mxu0 %v6794
        %v7334 = vpop.f32.mrf.mxu0
        %v7335 = vadd.f32 %v7174, %v7334
        %v7336 = vpop.f32.mrf.mxu0
        %v7337 = vpop.f32.mrf.mxu0
        %v7338 = vadd.f32 %v7177, %v7337
        %v7339 = vpop.f32.mrf.mxu0
        %7340 = vmatprep.mubr.bf16.mxu0 %v6799
        %7341 = vmatmul.mubr.bf16.gmra.mxu0 %v6798
        %v7342 = vpop.f32.mrf.mxu0
        %v7343 = vadd.f32 %v7182, %v7342
        %v7344 = vpop.f32.mrf.mxu0
        %v7345 = vpop.f32.mrf.mxu0
        %v7346 = vadd.f32 %v7185, %v7345
        %v7347 = vpop.f32.mrf.mxu0
        %7348 = vmatprep.mubr.bf16.mxu0 %v6803
        %7349 = vmatmul.mubr.bf16.gmra.mxu0 %v6802
        %v7350 = vpop.f32.mrf.mxu0
        %v7351 = vadd.f32 %v7190, %v7350
        %v7352 = vpop.f32.mrf.mxu0
        %v7353 = vpop.f32.mrf.mxu0
        %v7354 = vadd.f32 %v7193, %v7353
        %v7355 = vpop.f32.mrf.mxu0
        %7356 = vmatprep.mubr.bf16.mxu0 %v6807
        %7357 = vmatmul.mubr.bf16.gmra.mxu0 %v6806
        %v7358 = vpop.f32.mrf.mxu0
        %v7359 = vadd.f32 %v7198, %v7358
        %v7360 = vpop.f32.mrf.mxu0
        %v7361 = vpop.f32.mrf.mxu0
        %v7362 = vadd.f32 %v7201, %v7361
        %v7363 = vpop.f32.mrf.mxu0
        %7364 = vmatprep.mubr.bf16.mxu0 %v6811
        %7365 = vmatmul.mubr.bf16.gmra.mxu0 %v6810
        %v7366 = vpop.f32.mrf.mxu0
        %v7367 = vadd.f32 %v7206, %v7366
        %v7368 = vpop.f32.mrf.mxu0
        %v7369 = vpop.f32.mrf.mxu0
        %v7370 = vadd.f32 %v7209, %v7369
        %v7371 = vpop.f32.mrf.mxu0
        %7372 = vmatprep.mubr.bf16.mxu0 %v6815
        %7373 = vmatmul.mubr.bf16.gmra.mxu0 %v6814
        %v7374 = vpop.f32.mrf.mxu0
        %v7375 = vadd.f32 %v7214, %v7374
        %v7376 = vpop.f32.mrf.mxu0
        %v7377 = vpop.f32.mrf.mxu0
        %v7378 = vadd.f32 %v7217, %v7377
        %v7379 = vpop.f32.mrf.mxu0
        %7380 = vmatprep.mubr.bf16.mxu0 %v6819
        %7381 = vmatmul.mubr.bf16.gmra.mxu0 %v6818
        %v7382 = vpop.f32.mrf.mxu0
        %v7383 = vadd.f32 %v7222, %v7382
        %v7384 = vpop.f32.mrf.mxu0
        %v7385 = vpop.f32.mrf.mxu0
        %v7386 = vadd.f32 %v7225, %v7385
        %v7387 = vpop.f32.mrf.mxu0
        %7388 = vmatprep.mubr.bf16.mxu0 %v6823
        %7389 = vmatmul.mubr.bf16.gmra.mxu0 %v6822
        %v7390 = vpop.f32.mrf.mxu0
        %v7391 = vadd.f32 %v7230, %v7390
        %v7392 = vpop.f32.mrf.mxu0
        %v7393 = vpop.f32.mrf.mxu0
        %v7394 = vadd.f32 %v7233, %v7393
        %v7395 = vpop.f32.mrf.mxu0
        %7396 = vmatprep.mubr.bf16.mxu0 %v6827
        %7397 = vmatmul.mubr.bf16.gmra.mxu0 %v6826
        %v7398 = vpop.f32.mrf.mxu0
        %v7399 = vadd.f32 %v7238, %v7398
        %v7400 = vpop.f32.mrf.mxu0
        %v7401 = vpop.f32.mrf.mxu0
        %v7402 = vadd.f32 %v7241, %v7401
        %v7403 = vpop.f32.mrf.mxu0
        %7404 = vmatprep.mubr.bf16.mxu0 %v6831
        %7405 = vmatmul.mubr.bf16.gmra.mxu0 %v6830
        %v7406 = vpop.f32.mrf.mxu0
        %v7407 = vadd.f32 %v7246, %v7406
        %v7408 = vpop.f32.mrf.mxu0
        %v7409 = vpop.f32.mrf.mxu0
        %v7410 = vadd.f32 %v7249, %v7409
        %v7411 = vpop.f32.mrf.mxu0
        %7412 = vmatprep.mubr.bf16.mxu0 %v6835
        %7413 = vmatmul.mubr.bf16.gmra.mxu0 %v6834
        %v7414 = vpop.f32.mrf.mxu0
        %v7415 = vadd.f32 %v7254, %v7414
        %v7416 = vpop.f32.mrf.mxu0
        %v7417 = vpop.f32.mrf.mxu0
        %v7418 = vadd.f32 %v7257, %v7417
        %v7419 = vpop.f32.mrf.mxu0
        %7420 = vdwg.mxu0
        %v7421 = vadd.f32 %v342, %v7295
        %v7422 = vadd.f32 %v343, %v7298
        %v7423 = vadd.f32 %v344, %v7303
        %v7424 = vadd.f32 %v345, %v7306
        %v7425 = vadd.f32 %v346, %v7311
        %v7426 = vadd.f32 %v347, %v7314
        %v7427 = vadd.f32 %v348, %v7319
        %v7428 = vadd.f32 %v349, %v7322
        %v7429 = vadd.f32 %v350, %v7327
        %v7430 = vadd.f32 %v351, %v7330
        %v7431 = vadd.f32 %v352, %v7335
        %v7432 = vadd.f32 %v353, %v7338
        %v7433 = vadd.f32 %v354, %v7343
        %v7434 = vadd.f32 %v355, %v7346
        %v7435 = vadd.f32 %v356, %v7351
        %v7436 = vadd.f32 %v357, %v7354
        %v7437 = vadd.f32 %v358, %v7359
        %v7438 = vadd.f32 %v359, %v7362
        %v7439 = vadd.f32 %v360, %v7367
        %v7440 = vadd.f32 %v361, %v7370
        %v7441 = vadd.f32 %v362, %v7375
        %v7442 = vadd.f32 %v363, %v7378
        %v7443 = vadd.f32 %v364, %v7383
        %v7444 = vadd.f32 %v365, %v7386
        %v7445 = vadd.f32 %v366, %v7391
        %v7446 = vadd.f32 %v367, %v7394
        %v7447 = vadd.f32 %v368, %v7399
        %v7448 = vadd.f32 %v369, %v7402
        %v7449 = vadd.f32 %v370, %v7407
        %v7450 = vadd.f32 %v371, %v7410
        %v7451 = vadd.f32 %v372, %v7415
        %v7452 = vadd.f32 %v373, %v7418
        %7453 = vst [vmem:[%s340] sm:$0xff] %v7421
        %7454 = vst [vmem:[%s340 + $0x8] sm:$0xff] %v7422
        %7455 = vst [vmem:[%s340 + $0x10] sm:$0xff] %v7423
        %7456 = vst [vmem:[%s340 + $0x18] sm:$0xff] %v7424
        %7457 = vst [vmem:[%s340 + $0x20] sm:$0xff] %v7425
        %7458 = vst [vmem:[%s340 + $0x28] sm:$0xff] %v7426
        %7459 = vst [vmem:[%s340 + $0x30] sm:$0xff] %v7427
        %7460 = vst [vmem:[%s340 + $0x38] sm:$0xff] %v7428
        %7461 = vst [vmem:[%s340 + $0x40] sm:$0xff] %v7429
        %7462 = vst [vmem:[%s340 + $0x48] sm:$0xff] %v7430
        %7463 = vst [vmem:[%s340 + $0x50] sm:$0xff] %v7431
        %7464 = vst [vmem:[%s340 + $0x58] sm:$0xff] %v7432
        %7465 = vst [vmem:[%s340 + $0x60] sm:$0xff] %v7433
        %7466 = vst [vmem:[%s340 + $0x68] sm:$0xff] %v7434
        %7467 = vst [vmem:[%s340 + $0x70] sm:$0xff] %v7435
        %7468 = vst [vmem:[%s340 + $0x78] sm:$0xff] %v7436
        %7469 = vst [vmem:[%s340 + $0x80] sm:$0xff] %v7437
        %7470 = vst [vmem:[%s340 + $0x88] sm:$0xff] %v7438
        %7471 = vst [vmem:[%s340 + $0x90] sm:$0xff] %v7439
        %7472 = vst [vmem:[%s340 + $0x98] sm:$0xff] %v7440
        %7473 = vst [vmem:[%s340 + $0xa0] sm:$0xff] %v7441
        %7474 = vst [vmem:[%s340 + $0xa8] sm:$0xff] %v7442
        %7475 = vst [vmem:[%s340 + $0xb0] sm:$0xff] %v7443
        %7476 = vst [vmem:[%s340 + $0xb8] sm:$0xff] %v7444
        %7477 = vst [vmem:[%s340 + $0xc0] sm:$0xff] %v7445
        %7478 = vst [vmem:[%s340 + $0xc8] sm:$0xff] %v7446
        %7479 = vst [vmem:[%s340 + $0xd0] sm:$0xff] %v7447
        %7480 = vst [vmem:[%s340 + $0xd8] sm:$0xff] %v7448
        %7481 = vst [vmem:[%s340 + $0xe0] sm:$0xff] %v7449
        %7482 = vst [vmem:[%s340 + $0xe8] sm:$0xff] %v7450
        %7483 = vst [vmem:[%s340 + $0xf0] sm:$0xff] %v7451
        %7484 = vst [vmem:[%s340 + $0xf8] sm:$0xff] %v7452
        %s7485 = sand.u32 %s186, 1
        %s7486 = scalar_lea.sflag [#allocation5], %s7485
        %s7487 = sand.u32 %s186, 1
        %s7488 = smul.addr %s7487, 256
        %s7489 = scalar_lea.vmem [#allocation11], %s7488
        // Predicated region
        $region65: #{tpu_custom_call.1} parent=47 // pred_check
          %p7490 = pneg %p196
        $region66: #{tpu_custom_call.1} parent=47 // pred_check_branch
          %7492 = sbr.rel (%p7490) target = $region68
        $region67: #{tpu_custom_call.1} parent=47 // pred_region
          %s7494 = ssub.s32 4096, 4096
          %7495 = vsyncadd %s7486, %s7494
          %s7496 = smul.addr %s26, 32
          %s7497 = smul.addr %s7496, 128
          %s7498 = scalar_lea.hbm %s7, %s7497
          %s7499 = sshll.u32 %s7489, 4
          %s7500 = int_to_ptr.vmem [resolvable:$true] %s7499
          %7505 = dma.vmem_to_hbm [thread:$0]  %s7500, 4096, %s7498, %s7486, 128, 128, 8
        $region68: #{tpu_custom_call.1} parent=47 // pred_fallthru
          _
      $region48: #{tpu_custom_call.1} parent=5 // pred_fallthru
        _
      %p7506 = scmp.le.s32.totalorder 2, %s21
      // Predicated region
      $region69: #{tpu_custom_call.1} parent=5 // pred_check
        %p7507 = pneg %p7506
      $region70: #{tpu_custom_call.1} parent=5 // pred_check_branch
        %7509 = sbr.rel (%p7507) target = $region72
      $region71: #{tpu_custom_call.1} parent=5 // pred_region
        %s7510 = ssub.s32 %s21, 2
        // Predicated region
        $region73: #{tpu_custom_call.1} parent=71 // pred_check
          %p7511 = pneg %p202
        $region74: #{tpu_custom_call.1} parent=71 // pred_check_branch
          %7513 = sbr.rel (%p7511) target = $region76
        $region75: #{tpu_custom_call.1} parent=71 // pred_region
          %s7514 = sand.u32 %s187, 1
          %s7515 = scalar_lea.sflag [#allocation5], %s7514
          %s7516 = sand.u32 %s187, 1
          %s7517 = smul.addr %s7516, 256
          %s7518 = scalar_lea.vmem [#allocation11], %s7517
          %7519 = dma.done %s7515, 4096
        $region76: #{tpu_custom_call.1} parent=71 // pred_fallthru
          _
      $region72: #{tpu_custom_call.1} parent=5 // pred_fallthru
        _
    $region6: #{tpu_custom_call.1} parent=1 // loop_footer
      %s25 = sadd.s32 1, %s21
    $region7: #{tpu_custom_call.1} parent=1 // loop_footer_branch
      %20 = sbr.rel target = $region3
    $region8: #{tpu_custom_call.1} parent=1 // loop_exit
      _
    %7520 = vsyncpa [#allocation4], 1
    %s7521 = scalar_lea.sflag [#allocation4], 1
    %7522 = vsyncpa %s7521, 1
    %7523 = vsyncpa [#allocation7], 1
    %7524 = vsyncpa [#allocation10], 1
    %7525 = vsyncpa [#allocation5], 1
    %s7526 = scalar_lea.sflag [#allocation5], 1
    %7527 = vsyncpa %s7526, 1

</llo_original>
